<compile_context>
chip_gen: v5e
topology: v5e:2x2
jax: 0.10.0
libtpu: 0.0.40
codegen_flags: <defaults>
</compile_context>

<pallas_src>
import functools

import jax
import jax.numpy as jnp
from jax.experimental import pallas as pl
from jax.experimental.pallas import tpu as pltpu


def _round_up(x, m):
    return ((x + m - 1) // m) * m


# --------------------------------------------------------------------------------------- #
# Kernel 1: temporal conv (Kt x 1) + bias + ReLU.
# Grid = (batch-instance, Cout tile).  Kt taps unrolled inside the kernel as statically
# shifted slices of the T-padded slab; accumulation in an f32 VMEM scratch.
# --------------------------------------------------------------------------------------- #
def _temporal_conv_kernel(x_ref, w_ref, b_ref, o_ref, acc_ref, *, kt, vp, rows):
    # x_ref  : (1, (T+Kt-1)*Vp, Cin)   bf16   T-zero-padded activation slab (one instance)
    # w_ref  : (Kt, Cin, TILE_CO)      bf16
    # b_ref  : (1, TILE_CO)            f32
    # o_ref  : (1, T*Vp, TILE_CO)      bf16   lane-dense output tile
    # acc_ref: (T*Vp, TILE_CO)         f32    VMEM scratch accumulator
    for k in range(kt):  # static unroll over the Kt taps (no extra grid axis, no im2col)
        xs = x_ref[0, pl.ds(k * vp, rows), :]                     # shifted (rows, Cin) view
        contrib = jnp.dot(xs, w_ref[k], preferred_element_type=jnp.float32)
        if k == 0:
            acc_ref[...] = contrib
        else:
            acc_ref[...] += contrib
    # fused epilogue: bias + ReLU in f32 (v5e-safe), single bf16 store
    y = jnp.maximum(acc_ref[...] + b_ref[...], 0.0)
    o_ref[0] = y.astype(o_ref.dtype)


def temporal_conv_relu(x, w, b, *, kt, t, vp):
    """x: (B, T, Vp, Cin) bf16 ; w: (Kt, Cin, Cout_p) bf16 ; b: (1, Cout_p) f32."""
    bsz, _, _, cin = x.shape
    cout_p = w.shape[-1]
    pad_lo = (kt - 1) // 2
    pad_hi = kt - 1 - pad_lo
    tp = t + kt - 1
    xp = jnp.pad(x, ((0, 0), (pad_lo, pad_hi), (0, 0), (0, 0)))   # SAME padding along T
    xp = xp.reshape(bsz, tp * vp, cin)
    rows = t * vp
    # 256-wide output tiles when possible (v6e/v7x 256^2 MXU); 128 otherwise (v5e granularity)
    tile_co = 256 if cout_p % 256 == 0 else 128
    n_co = cout_p // tile_co
    out = pl.pallas_call(
        functools.partial(_temporal_conv_kernel, kt=kt, vp=vp, rows=rows),
        out_shape=jax.ShapeDtypeStruct((bsz, rows, cout_p), jnp.bfloat16),
        grid=(bsz, n_co),
        in_specs=[
            pl.BlockSpec((1, tp * vp, cin), lambda i, j: (i, 0, 0)),
            pl.BlockSpec((kt, cin, tile_co), lambda i, j: (0, 0, j)),
            pl.BlockSpec((1, tile_co), lambda i, j: (0, j)),
        ],
        out_specs=pl.BlockSpec((1, rows, tile_co), lambda i, j: (i, 0, j)),
        scratch_shapes=[pltpu.VMEM((rows, tile_co), jnp.float32)],
        compiler_params=pltpu.CompilerParams(
            dimension_semantics=("parallel", "parallel"),  # both axes independent (v7x 2 TCs)
            vmem_limit_bytes=32 * 1024 * 1024,  # explicit; re-derive for v7x's 64 MiB VMEM
        ),
    )(xp, w, b)
    return out.reshape(bsz, t, vp, cout_p)


# --------------------------------------------------------------------------------------- #
# Kernel 2: fused global-average-pool (over M, T, real V) + pretrain Linear head.
# pooled @ W == (1/MTV) * (Gmask @ Y) @ W  -> two MXU dots, one pallas_call.
# --------------------------------------------------------------------------------------- #
def _pool_head_kernel(g_ref, y_ref, wh_ref, bh_ref, o_ref, *, inv_mtv):
    # g_ref : (N, B*T*Vp)  bf16 0/1 group + joint-validity mask
    # y_ref : (B*T*Vp, Fp) bf16 last-conv activations (flattened rows)
    # wh_ref: (Fp, Cp)     bf16 head weight (lane-dense padded)
    # bh_ref: (1, Cp)      f32  head bias
    # o_ref : (N, Cp)      f32
    pooled = jnp.dot(g_ref[...], y_ref[...], preferred_element_type=jnp.float32) * inv_mtv
    out = jnp.dot(pooled.astype(jnp.bfloat16), wh_ref[...],
                  preferred_element_type=jnp.float32) + bh_ref[...]
    o_ref[...] = out.astype(o_ref.dtype)


def pooled_head(y2d, g, wh, bh, *, inv_mtv):
    n = g.shape[0]
    br, fp = y2d.shape
    cp = wh.shape[-1]
    return pl.pallas_call(
        functools.partial(_pool_head_kernel, inv_mtv=inv_mtv),
        out_shape=jax.ShapeDtypeStruct((n, cp), jnp.float32),
        grid=(1,),
        in_specs=[
            pl.BlockSpec((n, br), lambda i: (0, 0)),
            pl.BlockSpec((br, fp), lambda i: (0, 0)),
            pl.BlockSpec((fp, cp), lambda i: (0, 0)),
            pl.BlockSpec((1, cp), lambda i: (0, 0)),
        ],
        out_specs=pl.BlockSpec((n, cp), lambda i: (0, 0)),
        compiler_params=pltpu.CompilerParams(
            dimension_semantics=("arbitrary",),
            vmem_limit_bytes=32 * 1024 * 1024,
        ),
    )(g, y2d, wh, bh)


# --------------------------------------------------------------------------------------- #
# Full pretrain-stage forward:  (N, C, T, V, M) -> (N, in_channels, num_joints, num_ts)
# --------------------------------------------------------------------------------------- #
def cnn_custom_4_pretrain_forward(params, x, gait_feats, cfg):
    del gait_feats  # only consumed by the stage_2 classification path (not this module's default)
    n, _, t, v, m = x.shape
    c_in = cfg["in_channels"]
    kt = cfg["temporal_kernel_size"]

    x = x[:, :c_in]                                             # x[:, 0:in_channels, ...]
    # single up-front relayout to channels-last; person instances folded into batch
    x = jnp.transpose(x, (0, 4, 2, 3, 1)).reshape(n * m, t, v, c_in)
    vp = _round_up(v, 8)                                        # sublane-aligned joint axis
    cin0 = _round_up(c_in, 8)
    x = jnp.pad(x, ((0, 0), (0, 0), (0, vp - v), (0, cin0 - c_in))).astype(jnp.bfloat16)

    h = x
    for w, b in zip(params["conv_w"], params["conv_b"]):
        h = temporal_conv_relu(h, w, b, kt=kt, t=t, vp=vp)

    # fused global-average-pool + pretrain head
    bsz = n * m
    fp = h.shape[-1]
    y2d = h.reshape(bsz * t * vp, fp)
    r = jnp.arange(bsz * t * vp, dtype=jnp.int32)
    grp = (r // (t * vp)) // m                                  # batch index n for each row
    valid = (r % vp) < v                                        # exclude padded joint rows
    g = ((jnp.arange(n, dtype=jnp.int32)[:, None] == grp[None, :]) &
         valid[None, :]).astype(jnp.bfloat16)
    inv_mtv = 1.0 / float(m * t * v)
    out_p = pooled_head(y2d, g, params["head_w"], params["head_b"], inv_mtv=inv_mtv)

    feat_dim = cfg["num_joints_predicting"] * c_in * cfg["num_ts_predicting"]
    out = out_p[:, :feat_dim]                                   # drop lane padding
    return out.reshape(n, c_in, cfg["num_joints_predicting"], -1)


# --------------------------------------------------------------------------------------- #
# Parameter construction (padded kernel copies + real copies for the pure-JAX reference)
# --------------------------------------------------------------------------------------- #
def init_params(key, cfg, hidden, output_filters):
    c_in = cfg["in_channels"]
    kt = cfg["temporal_kernel_size"]
    feat_dim = cfg["num_joints_predicting"] * c_in * cfg["num_ts_predicting"]
    chans = [c_in] + list(hidden) + [output_filters]
    conv_w, conv_b, conv_w_real, conv_b_real = [], [], [], []
    for layer in range(len(chans) - 1):
        cin_r, cout_r = chans[layer], chans[layer + 1]
        cin_k = _round_up(cin_r, 8) if layer == 0 else _round_up(cin_r, 128)
        cout_p = _round_up(cout_r, 128)
        key, kw, kb = jax.random.split(key, 3)
        std = (2.0 / (cin_r * kt)) ** 0.5
        w_r = jax.random.normal(kw, (kt, cin_r, cout_r), dtype=jnp.float32) * std
        b_r = jax.random.normal(kb, (cout_r,), dtype=jnp.float32) * 0.05
        w_p = jnp.zeros((kt, cin_k, cout_p), jnp.float32).at[:, :cin_r, :cout_r].set(w_r)
        b_p = jnp.zeros((1, cout_p), jnp.float32).at[0, :cout_r].set(b_r)
        conv_w.append(w_p.astype(jnp.bfloat16))
        conv_b.append(b_p)
        conv_w_real.append(w_r.astype(jnp.bfloat16))
        conv_b_real.append(b_r)
    f_r = output_filters
    f_p = _round_up(f_r, 128)
    c_p = _round_up(feat_dim, 128)
    key, kw, kb = jax.random.split(key, 3)
    wh_r = jax.random.normal(kw, (f_r, feat_dim), dtype=jnp.float32) * (1.0 / f_r) ** 0.5
    bh_r = jax.random.normal(kb, (feat_dim,), dtype=jnp.float32) * 0.05
    wh_p = jnp.zeros((f_p, c_p), jnp.float32).at[:f_r, :feat_dim].set(wh_r)
    bh_p = jnp.zeros((1, c_p), jnp.float32).at[0, :feat_dim].set(bh_r)
    params = dict(conv_w=conv_w, conv_b=conv_b,
                  head_w=wh_p.astype(jnp.bfloat16), head_b=bh_p)
    params_real = dict(conv_w=conv_w_real, conv_b=conv_b_real,
                       head_w=wh_r.astype(jnp.bfloat16), head_b=bh_r)
    return params, params_real


# Pure-JAX reference (same bf16/f32 numerics, unpadded shapes) for a correctness check.
def reference_forward(x, params_real, cfg):
    n, _, t, v, m = x.shape
    c_in = cfg["in_channels"]
    kt = cfg["temporal_kernel_size"]
    h = jnp.transpose(x[:, :c_in], (0, 4, 2, 3, 1)).reshape(n * m, t, v, c_in)
    h = h.astype(jnp.bfloat16)
    pad_lo = (kt - 1) // 2
    pad_hi = kt - 1 - pad_lo
    for w, b in zip(params_real["conv_w"], params_real["conv_b"]):
        hp = jnp.pad(h, ((0, 0), (pad_lo, pad_hi), (0, 0), (0, 0)))
        acc = jnp.zeros(h.shape[:3] + (w.shape[-1],), jnp.float32)
        for k in range(kt):
            acc = acc + jnp.einsum("btvc,co->btvo", hp[:, k:k + t], w[k],
                                   preferred_element_type=jnp.float32)
        h = jnp.maximum(acc + b[None, None, None, :], 0.0).astype(jnp.bfloat16)
    pooled = h.astype(jnp.float32).reshape(n, m, t, v, -1).mean(axis=(1, 2, 3))
    out = jnp.dot(pooled.astype(jnp.bfloat16), params_real["head_w"],
                  preferred_element_type=jnp.float32) + params_real["head_b"][None, :]
    return out.reshape(n, c_in, cfg["num_joints_predicting"], -1)


if __name__ == "__main__":
    cfg = dict(in_channels=3, num_class=4, temporal_kernel_size=9,
               num_joints_predicting=13, num_ts_predicting=2)
    n, c_total, t, v, m = 2, 4, 16, 13, 2          # small (N, C, T, V, M) consistent with the module
    hidden = (32, 64)
    output_filters = 64                            # representative encoder width

    key = jax.random.PRNGKey(0)
    key, kx, kp = jax.random.split(key, 3)
    x = jax.random.normal(kx, (n, c_total, t, v, m), dtype=jnp.float32)
    gait_feats = jnp.zeros((n, 4), dtype=jnp.float32)   # unused in the pretrain (stage_2=False) path
    params, params_real = init_params(kp, cfg, hidden, output_filters)

    fwd = jax.jit(functools.partial(cnn_custom_4_pretrain_forward, cfg=cfg))
    out = fwd(params, x, gait_feats)
    out = jax.block_until_ready(out)

    expected_shape = (n, cfg["in_channels"], cfg["num_joints_predicting"],
                      cfg["num_ts_predicting"])
    assert out.shape == expected_shape, (out.shape, expected_shape)

    ref = reference_forward(x, params_real, cfg)
    err = float(jnp.max(jnp.abs(out - ref)))
    scale = float(jnp.max(jnp.abs(ref))) + 1e-6
    assert err <= 5e-2 + 5e-2 * scale, f"mismatch vs reference: max abs err {err}"

    print("KERNEL_OK")
</pallas_src>

<mosaic_0001>
module attributes {stable_mosaic.version = 11 : i64} {
  func.func @_temporal_conv_kernel(%arg0: i32, %arg1: i32, %arg2: memref<1x384x8xbf16, #tpu.memory_space<vmem>>, %arg3: memref<9x8x128xbf16, #tpu.memory_space<vmem>>, %arg4: memref<1x128xf32, #tpu.memory_space<vmem>>, %arg5: memref<1x256x128xbf16, #tpu.memory_space<vmem>>, %arg6: memref<256x128xf32, #tpu.memory_space<vmem>>) attributes {dimension_semantics = [#tpu.dimension_semantics<parallel>, #tpu.dimension_semantics<parallel>], iteration_bounds = array<i64: 4, 1>, scalar_prefetch = 0 : i64, scratch_operands = 1 : i64, tpu.core_type = #tpu.core_type<tc>, window_params = [{transform_indices = @transform_0, window_bounds = array<i64: 1, 384, 8>}, {transform_indices = @transform_1, window_bounds = array<i64: 9, 8, 128>}, {transform_indices = @transform_2, window_bounds = array<i64: 1, 128>}, {transform_indices = @transform_3, window_bounds = array<i64: 1, 256, 128>}]} {
    %c0 = arith.constant 0 : index
    %c0_0 = arith.constant 0 : index
    %c0_1 = arith.constant 0 : index
    %0 = vector.load %arg2[%c0, %c0_0, %c0_1] : memref<1x384x8xbf16, #tpu.memory_space<vmem>>, vector<1x256x8xbf16>
    %1 = vector.shape_cast %0 : vector<1x256x8xbf16> to vector<256x8xbf16>
    %c0_2 = arith.constant 0 : index
    %c0_3 = arith.constant 0 : index
    %c0_4 = arith.constant 0 : index
    %2 = vector.load %arg3[%c0_2, %c0_3, %c0_4] : memref<9x8x128xbf16, #tpu.memory_space<vmem>>, vector<1x8x128xbf16>
    %3 = vector.shape_cast %2 : vector<1x8x128xbf16> to vector<8x128xbf16>
    %cst = arith.constant dense<0.000000e+00> : vector<256x128xf32>
    %4 = tpu.matmul %1, %3, %cst {dimension_numbers = #tpu.dot_dimension_numbers<[1], [0], [0], [1], [0, 0, 1, 1], [], []>} : vector<256x8xbf16>, vector<8x128xbf16>, vector<256x128xf32> -> vector<256x128xf32>
    %c0_5 = arith.constant 0 : index
    %c0_6 = arith.constant 0 : index
    %5 = vector.load %arg6[%c0_5, %c0_6] : memref<256x128xf32, #tpu.memory_space<vmem>>, vector<256x128xf32>
    tpu.vector_store %arg6[%c0_5, %c0_6], %4 {strides = array<i32>} : memref<256x128xf32, #tpu.memory_space<vmem>>, vector<256x128xf32>,
    %c0_7 = arith.constant 0 : index
    %c16 = arith.constant 16 : index
    %c0_8 = arith.constant 0 : index
    %6 = vector.load %arg2[%c0_7, %c16, %c0_8] : memref<1x384x8xbf16, #tpu.memory_space<vmem>>, vector<1x256x8xbf16>
    %7 = vector.shape_cast %6 : vector<1x256x8xbf16> to vector<256x8xbf16>
    %c1 = arith.constant 1 : index
    %c0_9 = arith.constant 0 : index
    %c0_10 = arith.constant 0 : index
    %8 = vector.load %arg3[%c1, %c0_9, %c0_10] : memref<9x8x128xbf16, #tpu.memory_space<vmem>>, vector<1x8x128xbf16>
    %9 = vector.shape_cast %8 : vector<1x8x128xbf16> to vector<8x128xbf16>
    %cst_11 = arith.constant dense<0.000000e+00> : vector<256x128xf32>
    %10 = tpu.matmul %7, %9, %cst_11 {dimension_numbers = #tpu.dot_dimension_numbers<[1], [0], [0], [1], [0, 0, 1, 1], [], []>} : vector<256x8xbf16>, vector<8x128xbf16>, vector<256x128xf32> -> vector<256x128xf32>
    %c0_12 = arith.constant 0 : index
    %c0_13 = arith.constant 0 : index
    %11 = vector.load %arg6[%c0_12, %c0_13] : memref<256x128xf32, #tpu.memory_space<vmem>>, vector<256x128xf32>
    %12 = arith.addf %11, %10 : vector<256x128xf32>
    %c0_14 = arith.constant 0 : index
    %c0_15 = arith.constant 0 : index
    %13 = vector.load %arg6[%c0_14, %c0_15] : memref<256x128xf32, #tpu.memory_space<vmem>>, vector<256x128xf32>
    tpu.vector_store %arg6[%c0_14, %c0_15], %12 {strides = array<i32>} : memref<256x128xf32, #tpu.memory_space<vmem>>, vector<256x128xf32>,
    %c0_16 = arith.constant 0 : index
    %c32 = arith.constant 32 : index
    %c0_17 = arith.constant 0 : index
    %14 = vector.load %arg2[%c0_16, %c32, %c0_17] : memref<1x384x8xbf16, #tpu.memory_space<vmem>>, vector<1x256x8xbf16>
    %15 = vector.shape_cast %14 : vector<1x256x8xbf16> to vector<256x8xbf16>
    %c2 = arith.constant 2 : index
    %c0_18 = arith.constant 0 : index
    %c0_19 = arith.constant 0 : index
    %16 = vector.load %arg3[%c2, %c0_18, %c0_19] : memref<9x8x128xbf16, #tpu.memory_space<vmem>>, vector<1x8x128xbf16>
    %17 = vector.shape_cast %16 : vector<1x8x128xbf16> to vector<8x128xbf16>
    %cst_20 = arith.constant dense<0.000000e+00> : vector<256x128xf32>
    %18 = tpu.matmul %15, %17, %cst_20 {dimension_numbers = #tpu.dot_dimension_numbers<[1], [0], [0], [1], [0, 0, 1, 1], [], []>} : vector<256x8xbf16>, vector<8x128xbf16>, vector<256x128xf32> -> vector<256x128xf32>
    %c0_21 = arith.constant 0 : index
    %c0_22 = arith.constant 0 : index
    %19 = vector.load %arg6[%c0_21, %c0_22] : memref<256x128xf32, #tpu.memory_space<vmem>>, vector<256x128xf32>
    %20 = arith.addf %19, %18 : vector<256x128xf32>
    %c0_23 = arith.constant 0 : index
    %c0_24 = arith.constant 0 : index
    %21 = vector.load %arg6[%c0_23, %c0_24] : memref<256x128xf32, #tpu.memory_space<vmem>>, vector<256x128xf32>
    tpu.vector_store %arg6[%c0_23, %c0_24], %20 {strides = array<i32>} : memref<256x128xf32, #tpu.memory_space<vmem>>, vector<256x128xf32>,
    %c0_25 = arith.constant 0 : index
    %c48 = arith.constant 48 : index
    %c0_26 = arith.constant 0 : index
    %22 = vector.load %arg2[%c0_25, %c48, %c0_26] : memref<1x384x8xbf16, #tpu.memory_space<vmem>>, vector<1x256x8xbf16>
    %23 = vector.shape_cast %22 : vector<1x256x8xbf16> to vector<256x8xbf16>
    %c3 = arith.constant 3 : index
    %c0_27 = arith.constant 0 : index
    %c0_28 = arith.constant 0 : index
    %24 = vector.load %arg3[%c3, %c0_27, %c0_28] : memref<9x8x128xbf16, #tpu.memory_space<vmem>>, vector<1x8x128xbf16>
    %25 = vector.shape_cast %24 : vector<1x8x128xbf16> to vector<8x128xbf16>
    %cst_29 = arith.constant dense<0.000000e+00> : vector<256x128xf32>
    %26 = tpu.matmul %23, %25, %cst_29 {dimension_numbers = #tpu.dot_dimension_numbers<[1], [0], [0], [1], [0, 0, 1, 1], [], []>} : vector<256x8xbf16>, vector<8x128xbf16>, vector<256x128xf32> -> vector<256x128xf32>
    %c0_30 = arith.constant 0 : index
    %c0_31 = arith.constant 0 : index
    %27 = vector.load %arg6[%c0_30, %c0_31] : memref<256x128xf32, #tpu.memory_space<vmem>>, vector<256x128xf32>
    %28 = arith.addf %27, %26 : vector<256x128xf32>
    %c0_32 = arith.constant 0 : index
    %c0_33 = arith.constant 0 : index
    %29 = vector.load %arg6[%c0_32, %c0_33] : memref<256x128xf32, #tpu.memory_space<vmem>>, vector<256x128xf32>
    tpu.vector_store %arg6[%c0_32, %c0_33], %28 {strides = array<i32>} : memref<256x128xf32, #tpu.memory_space<vmem>>, vector<256x128xf32>,
    %c0_34 = arith.constant 0 : index
    %c64 = arith.constant 64 : index
    %c0_35 = arith.constant 0 : index
    %30 = vector.load %arg2[%c0_34, %c64, %c0_35] : memref<1x384x8xbf16, #tpu.memory_space<vmem>>, vector<1x256x8xbf16>
    %31 = vector.shape_cast %30 : vector<1x256x8xbf16> to vector<256x8xbf16>
    %c4 = arith.constant 4 : index
    %c0_36 = arith.constant 0 : index
    %c0_37 = arith.constant 0 : index
    %32 = vector.load %arg3[%c4, %c0_36, %c0_37] : memref<9x8x128xbf16, #tpu.memory_space<vmem>>, vector<1x8x128xbf16>
    %33 = vector.shape_cast %32 : vector<1x8x128xbf16> to vector<8x128xbf16>
    %cst_38 = arith.constant dense<0.000000e+00> : vector<256x128xf32>
    %34 = tpu.matmul %31, %33, %cst_38 {dimension_numbers = #tpu.dot_dimension_numbers<[1], [0], [0], [1], [0, 0, 1, 1], [], []>} : vector<256x8xbf16>, vector<8x128xbf16>, vector<256x128xf32> -> vector<256x128xf32>
    %c0_39 = arith.constant 0 : index
    %c0_40 = arith.constant 0 : index
    %35 = vector.load %arg6[%c0_39, %c0_40] : memref<256x128xf32, #tpu.memory_space<vmem>>, vector<256x128xf32>
    %36 = arith.addf %35, %34 : vector<256x128xf32>
    %c0_41 = arith.constant 0 : index
    %c0_42 = arith.constant 0 : index
    %37 = vector.load %arg6[%c0_41, %c0_42] : memref<256x128xf32, #tpu.memory_space<vmem>>, vector<256x128xf32>
    tpu.vector_store %arg6[%c0_41, %c0_42], %36 {strides = array<i32>} : memref<256x128xf32, #tpu.memory_space<vmem>>, vector<256x128xf32>,
    %c0_43 = arith.constant 0 : index
    %c80 = arith.constant 80 : index
    %c0_44 = arith.constant 0 : index
    %38 = vector.load %arg2[%c0_43, %c80, %c0_44] : memref<1x384x8xbf16, #tpu.memory_space<vmem>>, vector<1x256x8xbf16>
    %39 = vector.shape_cast %38 : vector<1x256x8xbf16> to vector<256x8xbf16>
    %c5 = arith.constant 5 : index
    %c0_45 = arith.constant 0 : index
    %c0_46 = arith.constant 0 : index
    %40 = vector.load %arg3[%c5, %c0_45, %c0_46] : memref<9x8x128xbf16, #tpu.memory_space<vmem>>, vector<1x8x128xbf16>
    %41 = vector.shape_cast %40 : vector<1x8x128xbf16> to vector<8x128xbf16>
    %cst_47 = arith.constant dense<0.000000e+00> : vector<256x128xf32>
    %42 = tpu.matmul %39, %41, %cst_47 {dimension_numbers = #tpu.dot_dimension_numbers<[1], [0], [0], [1], [0, 0, 1, 1], [], []>} : vector<256x8xbf16>, vector<8x128xbf16>, vector<256x128xf32> -> vector<256x128xf32>
    %c0_48 = arith.constant 0 : index
    %c0_49 = arith.constant 0 : index
    %43 = vector.load %arg6[%c0_48, %c0_49] : memref<256x128xf32, #tpu.memory_space<vmem>>, vector<256x128xf32>
    %44 = arith.addf %43, %42 : vector<256x128xf32>
    %c0_50 = arith.constant 0 : index
    %c0_51 = arith.constant 0 : index
    %45 = vector.load %arg6[%c0_50, %c0_51] : memref<256x128xf32, #tpu.memory_space<vmem>>, vector<256x128xf32>
    tpu.vector_store %arg6[%c0_50, %c0_51], %44 {strides = array<i32>} : memref<256x128xf32, #tpu.memory_space<vmem>>, vector<256x128xf32>,
    %c0_52 = arith.constant 0 : index
    %c96 = arith.constant 96 : index
    %c0_53 = arith.constant 0 : index
    %46 = vector.load %arg2[%c0_52, %c96, %c0_53] : memref<1x384x8xbf16, #tpu.memory_space<vmem>>, vector<1x256x8xbf16>
    %47 = vector.shape_cast %46 : vector<1x256x8xbf16> to vector<256x8xbf16>
    %c6 = arith.constant 6 : index
    %c0_54 = arith.constant 0 : index
    %c0_55 = arith.constant 0 : index
    %48 = vector.load %arg3[%c6, %c0_54, %c0_55] : memref<9x8x128xbf16, #tpu.memory_space<vmem>>, vector<1x8x128xbf16>
    %49 = vector.shape_cast %48 : vector<1x8x128xbf16> to vector<8x128xbf16>
    %cst_56 = arith.constant dense<0.000000e+00> : vector<256x128xf32>
    %50 = tpu.matmul %47, %49, %cst_56 {dimension_numbers = #tpu.dot_dimension_numbers<[1], [0], [0], [1], [0, 0, 1, 1], [], []>} : vector<256x8xbf16>, vector<8x128xbf16>, vector<256x128xf32> -> vector<256x128xf32>
    %c0_57 = arith.constant 0 : index
    %c0_58 = arith.constant 0 : index
    %51 = vector.load %arg6[%c0_57, %c0_58] : memref<256x128xf32, #tpu.memory_space<vmem>>, vector<256x128xf32>
    %52 = arith.addf %51, %50 : vector<256x128xf32>
    %c0_59 = arith.constant 0 : index
    %c0_60 = arith.constant 0 : index
    %53 = vector.load %arg6[%c0_59, %c0_60] : memref<256x128xf32, #tpu.memory_space<vmem>>, vector<256x128xf32>
    tpu.vector_store %arg6[%c0_59, %c0_60], %52 {strides = array<i32>} : memref<256x128xf32, #tpu.memory_space<vmem>>, vector<256x128xf32>,
    %c0_61 = arith.constant 0 : index
    %c112 = arith.constant 112 : index
    %c0_62 = arith.constant 0 : index
    %54 = vector.load %arg2[%c0_61, %c112, %c0_62] : memref<1x384x8xbf16, #tpu.memory_space<vmem>>, vector<1x256x8xbf16>
    %55 = vector.shape_cast %54 : vector<1x256x8xbf16> to vector<256x8xbf16>
    %c7 = arith.constant 7 : index
    %c0_63 = arith.constant 0 : index
    %c0_64 = arith.constant 0 : index
    %56 = vector.load %arg3[%c7, %c0_63, %c0_64] : memref<9x8x128xbf16, #tpu.memory_space<vmem>>, vector<1x8x128xbf16>
    %57 = vector.shape_cast %56 : vector<1x8x128xbf16> to vector<8x128xbf16>
    %cst_65 = arith.constant dense<0.000000e+00> : vector<256x128xf32>
    %58 = tpu.matmul %55, %57, %cst_65 {dimension_numbers = #tpu.dot_dimension_numbers<[1], [0], [0], [1], [0, 0, 1, 1], [], []>} : vector<256x8xbf16>, vector<8x128xbf16>, vector<256x128xf32> -> vector<256x128xf32>
    %c0_66 = arith.constant 0 : index
    %c0_67 = arith.constant 0 : index
    %59 = vector.load %arg6[%c0_66, %c0_67] : memref<256x128xf32, #tpu.memory_space<vmem>>, vector<256x128xf32>
    %60 = arith.addf %59, %58 : vector<256x128xf32>
    %c0_68 = arith.constant 0 : index
    %c0_69 = arith.constant 0 : index
    %61 = vector.load %arg6[%c0_68, %c0_69] : memref<256x128xf32, #tpu.memory_space<vmem>>, vector<256x128xf32>
    tpu.vector_store %arg6[%c0_68, %c0_69], %60 {strides = array<i32>} : memref<256x128xf32, #tpu.memory_space<vmem>>, vector<256x128xf32>,
    %c0_70 = arith.constant 0 : index
    %c128 = arith.constant 128 : index
    %c0_71 = arith.constant 0 : index
    %62 = vector.load %arg2[%c0_70, %c128, %c0_71] : memref<1x384x8xbf16, #tpu.memory_space<vmem>>, vector<1x256x8xbf16>
    %63 = vector.shape_cast %62 : vector<1x256x8xbf16> to vector<256x8xbf16>
    %c8 = arith.constant 8 : index
    %c0_72 = arith.constant 0 : index
    %c0_73 = arith.constant 0 : index
    %64 = vector.load %arg3[%c8, %c0_72, %c0_73] : memref<9x8x128xbf16, #tpu.memory_space<vmem>>, vector<1x8x128xbf16>
    %65 = vector.shape_cast %64 : vector<1x8x128xbf16> to vector<8x128xbf16>
    %cst_74 = arith.constant dense<0.000000e+00> : vector<256x128xf32>
    %66 = tpu.matmul %63, %65, %cst_74 {dimension_numbers = #tpu.dot_dimension_numbers<[1], [0], [0], [1], [0, 0, 1, 1], [], []>} : vector<256x8xbf16>, vector<8x128xbf16>, vector<256x128xf32> -> vector<256x128xf32>
    %c0_75 = arith.constant 0 : index
    %c0_76 = arith.constant 0 : index
    %67 = vector.load %arg6[%c0_75, %c0_76] : memref<256x128xf32, #tpu.memory_space<vmem>>, vector<256x128xf32>
    %68 = arith.addf %67, %66 : vector<256x128xf32>
    %c0_77 = arith.constant 0 : index
    %c0_78 = arith.constant 0 : index
    %69 = vector.load %arg6[%c0_77, %c0_78] : memref<256x128xf32, #tpu.memory_space<vmem>>, vector<256x128xf32>
    tpu.vector_store %arg6[%c0_77, %c0_78], %68 {strides = array<i32>} : memref<256x128xf32, #tpu.memory_space<vmem>>, vector<256x128xf32>,
    %c0_79 = arith.constant 0 : index
    %c0_80 = arith.constant 0 : index
    %70 = vector.load %arg6[%c0_79, %c0_80] : memref<256x128xf32, #tpu.memory_space<vmem>>, vector<256x128xf32>
    %c0_81 = arith.constant 0 : index
    %c0_82 = arith.constant 0 : index
    %71 = vector.load %arg4[%c0_81, %c0_82] : memref<1x128xf32, #tpu.memory_space<vmem>>, vector<1x128xf32>
    %72 = vector.broadcast %71 : vector<1x128xf32> to vector<256x128xf32>
    %73 = arith.addf %70, %72 : vector<256x128xf32>
    %cst_83 = arith.constant 0.000000e+00 : f32
    %74 = vector.broadcast %cst_83 : f32 to vector<256x128xf32>
    %75 = arith.maximumf %73, %74 : vector<256x128xf32>
    %76 = arith.truncf %75 : vector<256x128xf32> to vector<256x128xbf16>
    %c0_84 = arith.constant 0 : index
    %c0_85 = arith.constant 0 : index
    %c0_86 = arith.constant 0 : index
    %77 = vector.load %arg5[%c0_84, %c0_85, %c0_86] : memref<1x256x128xbf16, #tpu.memory_space<vmem>>, vector<1x256x128xbf16>
    %78 = vector.shape_cast %77 : vector<1x256x128xbf16> to vector<256x128xbf16>
    %79 = vector.shape_cast %76 : vector<256x128xbf16> to vector<1x256x128xbf16>
    tpu.vector_store %arg5[%c0_84, %c0_85, %c0_86], %79 {strides = array<i32>} : memref<1x256x128xbf16, #tpu.memory_space<vmem>>, vector<1x256x128xbf16>,
    return
  }
  func.func @transform_0(%arg0: i32, %arg1: i32) -> (i32, i32, i32) {
    %c0_i32 = arith.constant 0 : i32
    %c0_i32_0 = arith.constant 0 : i32
    %c0_i32_1 = arith.constant 0 : i32
    return %arg0, %c0_i32, %c0_i32_0 : i32, i32, i32
  }
  func.func @transform_1(%arg0: i32, %arg1: i32) -> (i32, i32, i32) {
    %c0_i32 = arith.constant 0 : i32
    %c0_i32_0 = arith.constant 0 : i32
    %c0_i32_1 = arith.constant 0 : i32
    return %c0_i32, %c0_i32_0, %arg1 : i32, i32, i32
  }
  func.func @transform_2(%arg0: i32, %arg1: i32) -> (i32, i32) {
    %c0_i32 = arith.constant 0 : i32
    %c0_i32_0 = arith.constant 0 : i32
    return %c0_i32, %arg1 : i32, i32
  }
  func.func @transform_3(%arg0: i32, %arg1: i32) -> (i32, i32, i32) {
    %c0_i32 = arith.constant 0 : i32
    %c0_i32_0 = arith.constant 0 : i32
    return %arg0, %c0_i32, %arg1 : i32, i32, i32
  }
}

module attributes {stable_mosaic.version = 11 : i64} {
  func.func @_temporal_conv_kernel(%arg0: i32, %arg1: i32, %arg2: memref<1x384x128xbf16, #tpu.memory_space<vmem>>, %arg3: memref<9x128x128xbf16, #tpu.memory_space<vmem>>, %arg4: memref<1x128xf32, #tpu.memory_space<vmem>>, %arg5: memref<1x256x128xbf16, #tpu.memory_space<vmem>>, %arg6: memref<256x128xf32, #tpu.memory_space<vmem>>) attributes {dimension_semantics = [#tpu.dimension_semantics<parallel>, #tpu.dimension_semantics<parallel>], iteration_bounds = array<i64: 4, 1>, scalar_prefetch = 0 : i64, scratch_operands = 1 : i64, tpu.core_type = #tpu.core_type<tc>, window_params = [{transform_indices = @transform_0, window_bounds = array<i64: 1, 384, 128>}, {transform_indices = @transform_1, window_bounds = array<i64: 9, 128, 128>}, {transform_indices = @transform_2, window_bounds = array<i64: 1, 128>}, {transform_indices = @transform_3, window_bounds = array<i64: 1, 256, 128>}]} {
    %c0 = arith.constant 0 : index
    %c0_0 = arith.constant 0 : index
    %c0_1 = arith.constant 0 : index
    %0 = vector.load %arg2[%c0, %c0_0, %c0_1] : memref<1x384x128xbf16, #tpu.memory_space<vmem>>, vector<1x256x128xbf16>
    %1 = vector.shape_cast %0 : vector<1x256x128xbf16> to vector<256x128xbf16>
    %c0_2 = arith.constant 0 : index
    %c0_3 = arith.constant 0 : index
    %c0_4 = arith.constant 0 : index
    %2 = vector.load %arg3[%c0_2, %c0_3, %c0_4] : memref<9x128x128xbf16, #tpu.memory_space<vmem>>, vector<1x128x128xbf16>
    %3 = vector.shape_cast %2 : vector<1x128x128xbf16> to vector<128x128xbf16>
    %cst = arith.constant dense<0.000000e+00> : vector<256x128xf32>
    %4 = tpu.matmul %1, %3, %cst {dimension_numbers = #tpu.dot_dimension_numbers<[1], [0], [0], [1], [0, 0, 1, 1], [], []>} : vector<256x128xbf16>, vector<128x128xbf16>, vector<256x128xf32> -> vector<256x128xf32>
    %c0_5 = arith.constant 0 : index
    %c0_6 = arith.constant 0 : index
    %5 = vector.load %arg6[%c0_5, %c0_6] : memref<256x128xf32, #tpu.memory_space<vmem>>, vector<256x128xf32>
    tpu.vector_store %arg6[%c0_5, %c0_6], %4 {strides = array<i32>} : memref<256x128xf32, #tpu.memory_space<vmem>>, vector<256x128xf32>,
    %c0_7 = arith.constant 0 : index
    %c16 = arith.constant 16 : index
    %c0_8 = arith.constant 0 : index
    %6 = vector.load %arg2[%c0_7, %c16, %c0_8] : memref<1x384x128xbf16, #tpu.memory_space<vmem>>, vector<1x256x128xbf16>
    %7 = vector.shape_cast %6 : vector<1x256x128xbf16> to vector<256x128xbf16>
    %c1 = arith.constant 1 : index
    %c0_9 = arith.constant 0 : index
    %c0_10 = arith.constant 0 : index
    %8 = vector.load %arg3[%c1, %c0_9, %c0_10] : memref<9x128x128xbf16, #tpu.memory_space<vmem>>, vector<1x128x128xbf16>
    %9 = vector.shape_cast %8 : vector<1x128x128xbf16> to vector<128x128xbf16>
    %cst_11 = arith.constant dense<0.000000e+00> : vector<256x128xf32>
    %10 = tpu.matmul %7, %9, %cst_11 {dimension_numbers = #tpu.dot_dimension_numbers<[1], [0], [0], [1], [0, 0, 1, 1], [], []>} : vector<256x128xbf16>, vector<128x128xbf16>, vector<256x128xf32> -> vector<256x128xf32>
    %c0_12 = arith.constant 0 : index
    %c0_13 = arith.constant 0 : index
    %11 = vector.load %arg6[%c0_12, %c0_13] : memref<256x128xf32, #tpu.memory_space<vmem>>, vector<256x128xf32>
    %12 = arith.addf %11, %10 : vector<256x128xf32>
    %c0_14 = arith.constant 0 : index
    %c0_15 = arith.constant 0 : index
    %13 = vector.load %arg6[%c0_14, %c0_15] : memref<256x128xf32, #tpu.memory_space<vmem>>, vector<256x128xf32>
    tpu.vector_store %arg6[%c0_14, %c0_15], %12 {strides = array<i32>} : memref<256x128xf32, #tpu.memory_space<vmem>>, vector<256x128xf32>,
    %c0_16 = arith.constant 0 : index
    %c32 = arith.constant 32 : index
    %c0_17 = arith.constant 0 : index
    %14 = vector.load %arg2[%c0_16, %c32, %c0_17] : memref<1x384x128xbf16, #tpu.memory_space<vmem>>, vector<1x256x128xbf16>
    %15 = vector.shape_cast %14 : vector<1x256x128xbf16> to vector<256x128xbf16>
    %c2 = arith.constant 2 : index
    %c0_18 = arith.constant 0 : index
    %c0_19 = arith.constant 0 : index
    %16 = vector.load %arg3[%c2, %c0_18, %c0_19] : memref<9x128x128xbf16, #tpu.memory_space<vmem>>, vector<1x128x128xbf16>
    %17 = vector.shape_cast %16 : vector<1x128x128xbf16> to vector<128x128xbf16>
    %cst_20 = arith.constant dense<0.000000e+00> : vector<256x128xf32>
    %18 = tpu.matmul %15, %17, %cst_20 {dimension_numbers = #tpu.dot_dimension_numbers<[1], [0], [0], [1], [0, 0, 1, 1], [], []>} : vector<256x128xbf16>, vector<128x128xbf16>, vector<256x128xf32> -> vector<256x128xf32>
    %c0_21 = arith.constant 0 : index
    %c0_22 = arith.constant 0 : index
    %19 = vector.load %arg6[%c0_21, %c0_22] : memref<256x128xf32, #tpu.memory_space<vmem>>, vector<256x128xf32>
    %20 = arith.addf %19, %18 : vector<256x128xf32>
    %c0_23 = arith.constant 0 : index
    %c0_24 = arith.constant 0 : index
    %21 = vector.load %arg6[%c0_23, %c0_24] : memref<256x128xf32, #tpu.memory_space<vmem>>, vector<256x128xf32>
    tpu.vector_store %arg6[%c0_23, %c0_24], %20 {strides = array<i32>} : memref<256x128xf32, #tpu.memory_space<vmem>>, vector<256x128xf32>,
    %c0_25 = arith.constant 0 : index
    %c48 = arith.constant 48 : index
    %c0_26 = arith.constant 0 : index
    %22 = vector.load %arg2[%c0_25, %c48, %c0_26] : memref<1x384x128xbf16, #tpu.memory_space<vmem>>, vector<1x256x128xbf16>
    %23 = vector.shape_cast %22 : vector<1x256x128xbf16> to vector<256x128xbf16>
    %c3 = arith.constant 3 : index
    %c0_27 = arith.constant 0 : index
    %c0_28 = arith.constant 0 : index
    %24 = vector.load %arg3[%c3, %c0_27, %c0_28] : memref<9x128x128xbf16, #tpu.memory_space<vmem>>, vector<1x128x128xbf16>
    %25 = vector.shape_cast %24 : vector<1x128x128xbf16> to vector<128x128xbf16>
    %cst_29 = arith.constant dense<0.000000e+00> : vector<256x128xf32>
    %26 = tpu.matmul %23, %25, %cst_29 {dimension_numbers = #tpu.dot_dimension_numbers<[1], [0], [0], [1], [0, 0, 1, 1], [], []>} : vector<256x128xbf16>, vector<128x128xbf16>, vector<256x128xf32> -> vector<256x128xf32>
    %c0_30 = arith.constant 0 : index
    %c0_31 = arith.constant 0 : index
    %27 = vector.load %arg6[%c0_30, %c0_31] : memref<256x128xf32, #tpu.memory_space<vmem>>, vector<256x128xf32>
    %28 = arith.addf %27, %26 : vector<256x128xf32>
    %c0_32 = arith.constant 0 : index
    %c0_33 = arith.constant 0 : index
    %29 = vector.load %arg6[%c0_32, %c0_33] : memref<256x128xf32, #tpu.memory_space<vmem>>, vector<256x128xf32>
    tpu.vector_store %arg6[%c0_32, %c0_33], %28 {strides = array<i32>} : memref<256x128xf32, #tpu.memory_space<vmem>>, vector<256x128xf32>,
    %c0_34 = arith.constant 0 : index
    %c64 = arith.constant 64 : index
    %c0_35 = arith.constant 0 : index
    %30 = vector.load %arg2[%c0_34, %c64, %c0_35] : memref<1x384x128xbf16, #tpu.memory_space<vmem>>, vector<1x256x128xbf16>
    %31 = vector.shape_cast %30 : vector<1x256x128xbf16> to vector<256x128xbf16>
    %c4 = arith.constant 4 : index
    %c0_36 = arith.constant 0 : index
    %c0_37 = arith.constant 0 : index
    %32 = vector.load %arg3[%c4, %c0_36, %c0_37] : memref<9x128x128xbf16, #tpu.memory_space<vmem>>, vector<1x128x128xbf16>
    %33 = vector.shape_cast %32 : vector<1x128x128xbf16> to vector<128x128xbf16>
    %cst_38 = arith.constant dense<0.000000e+00> : vector<256x128xf32>
    %34 = tpu.matmul %31, %33, %cst_38 {dimension_numbers = #tpu.dot_dimension_numbers<[1], [0], [0], [1], [0, 0, 1, 1], [], []>} : vector<256x128xbf16>, vector<128x128xbf16>, vector<256x128xf32> -> vector<256x128xf32>
    %c0_39 = arith.constant 0 : index
    %c0_40 = arith.constant 0 : index
    %35 = vector.load %arg6[%c0_39, %c0_40] : memref<256x128xf32, #tpu.memory_space<vmem>>, vector<256x128xf32>
    %36 = arith.addf %35, %34 : vector<256x128xf32>
    %c0_41 = arith.constant 0 : index
    %c0_42 = arith.constant 0 : index
    %37 = vector.load %arg6[%c0_41, %c0_42] : memref<256x128xf32, #tpu.memory_space<vmem>>, vector<256x128xf32>
    tpu.vector_store %arg6[%c0_41, %c0_42], %36 {strides = array<i32>} : memref<256x128xf32, #tpu.memory_space<vmem>>, vector<256x128xf32>,
    %c0_43 = arith.constant 0 : index
    %c80 = arith.constant 80 : index
    %c0_44 = arith.constant 0 : index
    %38 = vector.load %arg2[%c0_43, %c80, %c0_44] : memref<1x384x128xbf16, #tpu.memory_space<vmem>>, vector<1x256x128xbf16>
    %39 = vector.shape_cast %38 : vector<1x256x128xbf16> to vector<256x128xbf16>
    %c5 = arith.constant 5 : index
    %c0_45 = arith.constant 0 : index
    %c0_46 = arith.constant 0 : index
    %40 = vector.load %arg3[%c5, %c0_45, %c0_46] : memref<9x128x128xbf16, #tpu.memory_space<vmem>>, vector<1x128x128xbf16>
    %41 = vector.shape_cast %40 : vector<1x128x128xbf16> to vector<128x128xbf16>
    %cst_47 = arith.constant dense<0.000000e+00> : vector<256x128xf32>
    %42 = tpu.matmul %39, %41, %cst_47 {dimension_numbers = #tpu.dot_dimension_numbers<[1], [0], [0], [1], [0, 0, 1, 1], [], []>} : vector<256x128xbf16>, vector<128x128xbf16>, vector<256x128xf32> -> vector<256x128xf32>
    %c0_48 = arith.constant 0 : index
    %c0_49 = arith.constant 0 : index
    %43 = vector.load %arg6[%c0_48, %c0_49] : memref<256x128xf32, #tpu.memory_space<vmem>>, vector<256x128xf32>
    %44 = arith.addf %43, %42 : vector<256x128xf32>
    %c0_50 = arith.constant 0 : index
    %c0_51 = arith.constant 0 : index
    %45 = vector.load %arg6[%c0_50, %c0_51] : memref<256x128xf32, #tpu.memory_space<vmem>>, vector<256x128xf32>
    tpu.vector_store %arg6[%c0_50, %c0_51], %44 {strides = array<i32>} : memref<256x128xf32, #tpu.memory_space<vmem>>, vector<256x128xf32>,
    %c0_52 = arith.constant 0 : index
    %c96 = arith.constant 96 : index
    %c0_53 = arith.constant 0 : index
    %46 = vector.load %arg2[%c0_52, %c96, %c0_53] : memref<1x384x128xbf16, #tpu.memory_space<vmem>>, vector<1x256x128xbf16>
    %47 = vector.shape_cast %46 : vector<1x256x128xbf16> to vector<256x128xbf16>
    %c6 = arith.constant 6 : index
    %c0_54 = arith.constant 0 : index
    %c0_55 = arith.constant 0 : index
    %48 = vector.load %arg3[%c6, %c0_54, %c0_55] : memref<9x128x128xbf16, #tpu.memory_space<vmem>>, vector<1x128x128xbf16>
    %49 = vector.shape_cast %48 : vector<1x128x128xbf16> to vector<128x128xbf16>
    %cst_56 = arith.constant dense<0.000000e+00> : vector<256x128xf32>
    %50 = tpu.matmul %47, %49, %cst_56 {dimension_numbers = #tpu.dot_dimension_numbers<[1], [0], [0], [1], [0, 0, 1, 1], [], []>} : vector<256x128xbf16>, vector<128x128xbf16>, vector<256x128xf32> -> vector<256x128xf32>
    %c0_57 = arith.constant 0 : index
    %c0_58 = arith.constant 0 : index
    %51 = vector.load %arg6[%c0_57, %c0_58] : memref<256x128xf32, #tpu.memory_space<vmem>>, vector<256x128xf32>
    %52 = arith.addf %51, %50 : vector<256x128xf32>
    %c0_59 = arith.constant 0 : index
    %c0_60 = arith.constant 0 : index
    %53 = vector.load %arg6[%c0_59, %c0_60] : memref<256x128xf32, #tpu.memory_space<vmem>>, vector<256x128xf32>
    tpu.vector_store %arg6[%c0_59, %c0_60], %52 {strides = array<i32>} : memref<256x128xf32, #tpu.memory_space<vmem>>, vector<256x128xf32>,
    %c0_61 = arith.constant 0 : index
    %c112 = arith.constant 112 : index
    %c0_62 = arith.constant 0 : index
    %54 = vector.load %arg2[%c0_61, %c112, %c0_62] : memref<1x384x128xbf16, #tpu.memory_space<vmem>>, vector<1x256x128xbf16>
    %55 = vector.shape_cast %54 : vector<1x256x128xbf16> to vector<256x128xbf16>
    %c7 = arith.constant 7 : index
    %c0_63 = arith.constant 0 : index
    %c0_64 = arith.constant 0 : index
    %56 = vector.load %arg3[%c7, %c0_63, %c0_64] : memref<9x128x128xbf16, #tpu.memory_space<vmem>>, vector<1x128x128xbf16>
    %57 = vector.shape_cast %56 : vector<1x128x128xbf16> to vector<128x128xbf16>
    %cst_65 = arith.constant dense<0.000000e+00> : vector<256x128xf32>
    %58 = tpu.matmul %55, %57, %cst_65 {dimension_numbers = #tpu.dot_dimension_numbers<[1], [0], [0], [1], [0, 0, 1, 1], [], []>} : vector<256x128xbf16>, vector<128x128xbf16>, vector<256x128xf32> -> vector<256x128xf32>
    %c0_66 = arith.constant 0 : index
    %c0_67 = arith.constant 0 : index
    %59 = vector.load %arg6[%c0_66, %c0_67] : memref<256x128xf32, #tpu.memory_space<vmem>>, vector<256x128xf32>
    %60 = arith.addf %59, %58 : vector<256x128xf32>
    %c0_68 = arith.constant 0 : index
    %c0_69 = arith.constant 0 : index
    %61 = vector.load %arg6[%c0_68, %c0_69] : memref<256x128xf32, #tpu.memory_space<vmem>>, vector<256x128xf32>
    tpu.vector_store %arg6[%c0_68, %c0_69], %60 {strides = array<i32>} : memref<256x128xf32, #tpu.memory_space<vmem>>, vector<256x128xf32>,
    %c0_70 = arith.constant 0 : index
    %c128 = arith.constant 128 : index
    %c0_71 = arith.constant 0 : index
    %62 = vector.load %arg2[%c0_70, %c128, %c0_71] : memref<1x384x128xbf16, #tpu.memory_space<vmem>>, vector<1x256x128xbf16>
    %63 = vector.shape_cast %62 : vector<1x256x128xbf16> to vector<256x128xbf16>
    %c8 = arith.constant 8 : index
    %c0_72 = arith.constant 0 : index
    %c0_73 = arith.constant 0 : index
    %64 = vector.load %arg3[%c8, %c0_72, %c0_73] : memref<9x128x128xbf16, #tpu.memory_space<vmem>>, vector<1x128x128xbf16>
    %65 = vector.shape_cast %64 : vector<1x128x128xbf16> to vector<128x128xbf16>
    %cst_74 = arith.constant dense<0.000000e+00> : vector<256x128xf32>
    %66 = tpu.matmul %63, %65, %cst_74 {dimension_numbers = #tpu.dot_dimension_numbers<[1], [0], [0], [1], [0, 0, 1, 1], [], []>} : vector<256x128xbf16>, vector<128x128xbf16>, vector<256x128xf32> -> vector<256x128xf32>
    %c0_75 = arith.constant 0 : index
    %c0_76 = arith.constant 0 : index
    %67 = vector.load %arg6[%c0_75, %c0_76] : memref<256x128xf32, #tpu.memory_space<vmem>>, vector<256x128xf32>
    %68 = arith.addf %67, %66 : vector<256x128xf32>
    %c0_77 = arith.constant 0 : index
    %c0_78 = arith.constant 0 : index
    %69 = vector.load %arg6[%c0_77, %c0_78] : memref<256x128xf32, #tpu.memory_space<vmem>>, vector<256x128xf32>
    tpu.vector_store %arg6[%c0_77, %c0_78], %68 {strides = array<i32>} : memref<256x128xf32, #tpu.memory_space<vmem>>, vector<256x128xf32>,
    %c0_79 = arith.constant 0 : index
    %c0_80 = arith.constant 0 : index
    %70 = vector.load %arg6[%c0_79, %c0_80] : memref<256x128xf32, #tpu.memory_space<vmem>>, vector<256x128xf32>
    %c0_81 = arith.constant 0 : index
    %c0_82 = arith.constant 0 : index
    %71 = vector.load %arg4[%c0_81, %c0_82] : memref<1x128xf32, #tpu.memory_space<vmem>>, vector<1x128xf32>
    %72 = vector.broadcast %71 : vector<1x128xf32> to vector<256x128xf32>
    %73 = arith.addf %70, %72 : vector<256x128xf32>
    %cst_83 = arith.constant 0.000000e+00 : f32
    %74 = vector.broadcast %cst_83 : f32 to vector<256x128xf32>
    %75 = arith.maximumf %73, %74 : vector<256x128xf32>
    %76 = arith.truncf %75 : vector<256x128xf32> to vector<256x128xbf16>
    %c0_84 = arith.constant 0 : index
    %c0_85 = arith.constant 0 : index
    %c0_86 = arith.constant 0 : index
    %77 = vector.load %arg5[%c0_84, %c0_85, %c0_86] : memref<1x256x128xbf16, #tpu.memory_space<vmem>>, vector<1x256x128xbf16>
    %78 = vector.shape_cast %77 : vector<1x256x128xbf16> to vector<256x128xbf16>
    %79 = vector.shape_cast %76 : vector<256x128xbf16> to vector<1x256x128xbf16>
    tpu.vector_store %arg5[%c0_84, %c0_85, %c0_86], %79 {strides = array<i32>} : memref<1x256x128xbf16, #tpu.memory_space<vmem>>, vector<1x256x128xbf16>,
    return
  }
  func.func @transform_0(%arg0: i32, %arg1: i32) -> (i32, i32, i32) {
    %c0_i32 = arith.constant 0 : i32
    %c0_i32_0 = arith.constant 0 : i32
    %c0_i32_1 = arith.constant 0 : i32
    return %arg0, %c0_i32, %c0_i32_0 : i32, i32, i32
  }
  func.func @transform_1(%arg0: i32, %arg1: i32) -> (i32, i32, i32) {
    %c0_i32 = arith.constant 0 : i32
    %c0_i32_0 = arith.constant 0 : i32
    %c0_i32_1 = arith.constant 0 : i32
    return %c0_i32, %c0_i32_0, %arg1 : i32, i32, i32
  }
  func.func @transform_2(%arg0: i32, %arg1: i32) -> (i32, i32) {
    %c0_i32 = arith.constant 0 : i32
    %c0_i32_0 = arith.constant 0 : i32
    return %c0_i32, %arg1 : i32, i32
  }
  func.func @transform_3(%arg0: i32, %arg1: i32) -> (i32, i32, i32) {
    %c0_i32 = arith.constant 0 : i32
    %c0_i32_0 = arith.constant 0 : i32
    return %arg0, %c0_i32, %arg1 : i32, i32, i32
  }
}

module attributes {stable_mosaic.version = 11 : i64} {
  func.func @_pool_head_kernel(%arg0: i32, %arg1: memref<2x1024xbf16, #tpu.memory_space<vmem>>, %arg2: memref<1024x128xbf16, #tpu.memory_space<vmem>>, %arg3: memref<128x128xbf16, #tpu.memory_space<vmem>>, %arg4: memref<1x128xf32, #tpu.memory_space<vmem>>, %arg5: memref<2x128xf32, #tpu.memory_space<vmem>>) attributes {dimension_semantics = [#tpu.dimension_semantics<arbitrary>], iteration_bounds = array<i64: 1>, scalar_prefetch = 0 : i64, scratch_operands = 0 : i64, tpu.core_type = #tpu.core_type<tc>, window_params = [{pipeline_mode = #tpu.pipeline_mode<synchronous>, transform_indices = @transform_0, window_bounds = array<i64: 2, 1024>}, {pipeline_mode = #tpu.pipeline_mode<synchronous>, transform_indices = @transform_1, window_bounds = array<i64: 1024, 128>}, {pipeline_mode = #tpu.pipeline_mode<synchronous>, transform_indices = @transform_2, window_bounds = array<i64: 128, 128>}, {pipeline_mode = #tpu.pipeline_mode<synchronous>, transform_indices = @transform_3, window_bounds = array<i64: 1, 128>}, {pipeline_mode = #tpu.pipeline_mode<synchronous>, transform_indices = @transform_4, window_bounds = array<i64: 2, 128>}]} {
    %c0 = arith.constant 0 : index
    %c0_0 = arith.constant 0 : index
    %0 = vector.load %arg1[%c0, %c0_0] : memref<2x1024xbf16, #tpu.memory_space<vmem>>, vector<2x1024xbf16>
    %c0_1 = arith.constant 0 : index
    %c0_2 = arith.constant 0 : index
    %1 = vector.load %arg2[%c0_1, %c0_2] : memref<1024x128xbf16, #tpu.memory_space<vmem>>, vector<1024x128xbf16>
    %cst = arith.constant dense<0.000000e+00> : vector<2x128xf32>
    %2 = tpu.matmul %0, %1, %cst {dimension_numbers = #tpu.dot_dimension_numbers<[1], [0], [0], [1], [0, 0, 1, 1], [], []>} : vector<2x1024xbf16>, vector<1024x128xbf16>, vector<2x128xf32> -> vector<2x128xf32>
    %cst_3 = arith.constant 0.00240384624 : f32
    %3 = vector.broadcast %cst_3 : f32 to vector<2x128xf32>
    %4 = arith.mulf %2, %3 : vector<2x128xf32>
    %5 = arith.truncf %4 : vector<2x128xf32> to vector<2x128xbf16>
    %c0_4 = arith.constant 0 : index
    %c0_5 = arith.constant 0 : index
    %6 = vector.load %arg3[%c0_4, %c0_5] : memref<128x128xbf16, #tpu.memory_space<vmem>>, vector<128x128xbf16>
    %cst_6 = arith.constant dense<0.000000e+00> : vector<2x128xf32>
    %7 = tpu.matmul %5, %6, %cst_6 {dimension_numbers = #tpu.dot_dimension_numbers<[1], [0], [0], [1], [0, 0, 1, 1], [], []>} : vector<2x128xbf16>, vector<128x128xbf16>, vector<2x128xf32> -> vector<2x128xf32>
    %c0_7 = arith.constant 0 : index
    %c0_8 = arith.constant 0 : index
    %8 = vector.load %arg4[%c0_7, %c0_8] : memref<1x128xf32, #tpu.memory_space<vmem>>, vector<1x128xf32>
    %9 = vector.broadcast %8 : vector<1x128xf32> to vector<2x128xf32>
    %10 = arith.addf %7, %9 : vector<2x128xf32>
    %c0_9 = arith.constant 0 : index
    %c0_10 = arith.constant 0 : index
    %11 = vector.load %arg5[%c0_9, %c0_10] : memref<2x128xf32, #tpu.memory_space<vmem>>, vector<2x128xf32>
    tpu.vector_store %arg5[%c0_9, %c0_10], %10 {strides = array<i32>} : memref<2x128xf32, #tpu.memory_space<vmem>>, vector<2x128xf32>,
    return
  }
  func.func @transform_0(%arg0: i32) -> (i32, i32) {
    %c0_i32 = arith.constant 0 : i32
    %c0_i32_0 = arith.constant 0 : i32
    %c0_i32_1 = arith.constant 0 : i32
    return %c0_i32, %c0_i32_0 : i32, i32
  }
  func.func @transform_1(%arg0: i32) -> (i32, i32) {
    %c0_i32 = arith.constant 0 : i32
    %c0_i32_0 = arith.constant 0 : i32
    %c0_i32_1 = arith.constant 0 : i32
    return %c0_i32, %c0_i32_0 : i32, i32
  }
  func.func @transform_2(%arg0: i32) -> (i32, i32) {
    %c0_i32 = arith.constant 0 : i32
    %c0_i32_0 = arith.constant 0 : i32
    %c0_i32_1 = arith.constant 0 : i32
    return %c0_i32, %c0_i32_0 : i32, i32
  }
  func.func @transform_3(%arg0: i32) -> (i32, i32) {
    %c0_i32 = arith.constant 0 : i32
    %c0_i32_0 = arith.constant 0 : i32
    %c0_i32_1 = arith.constant 0 : i32
    return %c0_i32, %c0_i32_0 : i32, i32
  }
  func.func @transform_4(%arg0: i32) -> (i32, i32) {
    %c0_i32 = arith.constant 0 : i32
    %c0_i32_0 = arith.constant 0 : i32
    %c0_i32_1 = arith.constant 0 : i32
    return %c0_i32, %c0_i32_0 : i32, i32
  }
}

</mosaic_0001>

<llo_original>
// kernel: cnn_custom_4_pretrain_forward.7
$region0: #{cnn_custom_4_pretrain_forward.7}
  #allocation0 [shape = 'u32[]', space=smem, size = 0x4, offset = 0x4, fixed_abs, tag = 'smem constant byte address 0x4 - core index']
  #allocation1 [shape = 'u32[72,128]{1,0:T(1,128)}', space=vmem, size = 0x9000, scoped, tag = 'internal scratch']
  %s0 = inlined_call_operand.vmem [shape: bf16[2,1024], index: 0, kind: input, shape index: {}]
  %s1 = inlined_call_operand.vmem [shape: bf16[1024,128], index: 1, kind: input, shape index: {}]
  %s2 = inlined_call_operand.vmem [shape: bf16[128,128], index: 2, kind: input, shape index: {}]
  %s3 = inlined_call_operand.vmem [shape: f32[1,128], index: 3, kind: input, shape index: {}]
  %s4 = inlined_call_operand.vmem [shape: f32[2,128], index: 4, kind: output, shape index: {}]
  %s5 = sld [smem:[#allocation0]]
  $region26: #{cnn_custom_4_pretrain_forward.7} parent=0
    _
  %s7 = ssub.s32 1, %s5
  %s8 = scalar_select 0, %s7, %s5
  // Predicated region
  $region2: #{cnn_custom_4_pretrain_forward.7} parent=0 // pred_check
    _
  $region3: #{cnn_custom_4_pretrain_forward.7} parent=0 // pred_check_branch
    %10 = sbr.rel (0) target = $region5
  $region4: #{cnn_custom_4_pretrain_forward.7} parent=0 // pred_region
    _
  $region5: #{cnn_custom_4_pretrain_forward.7} parent=0 // pred_fallthru
    _
  // Predicated region
  $region6: #{cnn_custom_4_pretrain_forward.7} parent=0 // pred_check
    _
  $region7: #{cnn_custom_4_pretrain_forward.7} parent=0 // pred_check_branch
    %12 = sbr.rel (0) target = $region9
  $region8: #{cnn_custom_4_pretrain_forward.7} parent=0 // pred_region
    _
  $region9: #{cnn_custom_4_pretrain_forward.7} parent=0 // pred_fallthru
    _
  // Predicated region
  $region10: #{cnn_custom_4_pretrain_forward.7} parent=0 // pred_check
    _
  $region11: #{cnn_custom_4_pretrain_forward.7} parent=0 // pred_check_branch
    %14 = sbr.rel (0) target = $region13
  $region12: #{cnn_custom_4_pretrain_forward.7} parent=0 // pred_region
    _
  $region13: #{cnn_custom_4_pretrain_forward.7} parent=0 // pred_fallthru
    _
  // Predicated region
  $region14: #{cnn_custom_4_pretrain_forward.7} parent=0 // pred_check
    _
  $region15: #{cnn_custom_4_pretrain_forward.7} parent=0 // pred_check_branch
    %16 = sbr.rel (0) target = $region17
  $region16: #{cnn_custom_4_pretrain_forward.7} parent=0 // pred_region
    _
  $region17: #{cnn_custom_4_pretrain_forward.7} parent=0 // pred_fallthru
    _
  %v17 = vld [vmem:[%s0] sm:$0xff]
  %v18 = vld [vmem:[%s1] sm:$0xf]
  %v19 = vld [vmem:[%s1 + $0x4] sm:$0xf]
  %v20 = vld [vmem:[%s1 + $0x8] sm:$0xf]
  %v21 = vld [vmem:[%s1 + $0xc] sm:$0xf]
  %v22 = vld [vmem:[%s1 + $0x10] sm:$0xf]
  %v23 = vld [vmem:[%s1 + $0x14] sm:$0xf]
  %v24 = vld [vmem:[%s1 + $0x18] sm:$0xf]
  %v25 = vld [vmem:[%s1 + $0x1c] sm:$0xf]
  %v26 = vld [vmem:[%s1 + $0x20] sm:$0xf]
  %v27 = vld [vmem:[%s1 + $0x24] sm:$0xf]
  %v28 = vld [vmem:[%s1 + $0x28] sm:$0xf]
  %v29 = vld [vmem:[%s1 + $0x2c] sm:$0xf]
  %v30 = vld [vmem:[%s1 + $0x30] sm:$0xf]
  %v31 = vld [vmem:[%s1 + $0x34] sm:$0xf]
  %v32 = vld [vmem:[%s1 + $0x38] sm:$0xf]
  %v33 = vld [vmem:[%s1 + $0x3c] sm:$0xf]
  %v34 = vld [vmem:[%s1 + $0x40] sm:$0xf]
  %v35 = vld [vmem:[%s1 + $0x44] sm:$0xf]
  %v36 = vld [vmem:[%s1 + $0x48] sm:$0xf]
  %v37 = vld [vmem:[%s1 + $0x4c] sm:$0xf]
  %v38 = vld [vmem:[%s1 + $0x50] sm:$0xf]
  %v39 = vld [vmem:[%s1 + $0x54] sm:$0xf]
  %v40 = vld [vmem:[%s1 + $0x58] sm:$0xf]
  %v41 = vld [vmem:[%s1 + $0x5c] sm:$0xf]
  %v42 = vld [vmem:[%s1 + $0x60] sm:$0xf]
  %v43 = vld [vmem:[%s1 + $0x64] sm:$0xf]
  %v44 = vld [vmem:[%s1 + $0x68] sm:$0xf]
  %v45 = vld [vmem:[%s1 + $0x6c] sm:$0xf]
  %v46 = vld [vmem:[%s1 + $0x70] sm:$0xf]
  %v47 = vld [vmem:[%s1 + $0x74] sm:$0xf]
  %v48 = vld [vmem:[%s1 + $0x78] sm:$0xf]
  %v49 = vld [vmem:[%s1 + $0x7c] sm:$0xf]
  %v50 = vld [vmem:[%s1 + $0x80] sm:$0xf]
  %v51 = vld [vmem:[%s1 + $0x84] sm:$0xf]
  %v52 = vld [vmem:[%s1 + $0x88] sm:$0xf]
  %v53 = vld [vmem:[%s1 + $0x8c] sm:$0xf]
  %v54 = vld [vmem:[%s1 + $0x90] sm:$0xf]
  %v55 = vld [vmem:[%s1 + $0x94] sm:$0xf]
  %v56 = vld [vmem:[%s1 + $0x98] sm:$0xf]
  %v57 = vld [vmem:[%s1 + $0x9c] sm:$0xf]
  %v58 = vld [vmem:[%s1 + $0xa0] sm:$0xf]
  %v59 = vld [vmem:[%s1 + $0xa4] sm:$0xf]
  %v60 = vld [vmem:[%s1 + $0xa8] sm:$0xf]
  %v61 = vld [vmem:[%s1 + $0xac] sm:$0xf]
  %v62 = vld [vmem:[%s1 + $0xb0] sm:$0xf]
  %v63 = vld [vmem:[%s1 + $0xb4] sm:$0xf]
  %v64 = vld [vmem:[%s1 + $0xb8] sm:$0xf]
  %v65 = vld [vmem:[%s1 + $0xbc] sm:$0xf]
  %v66 = vld [vmem:[%s1 + $0xc0] sm:$0xf]
  %v67 = vld [vmem:[%s1 + $0xc4] sm:$0xf]
  %v68 = vld [vmem:[%s1 + $0xc8] sm:$0xf]
  %v69 = vld [vmem:[%s1 + $0xcc] sm:$0xf]
  %v70 = vld [vmem:[%s1 + $0xd0] sm:$0xf]
  %v71 = vld [vmem:[%s1 + $0xd4] sm:$0xf]
  %v72 = vld [vmem:[%s1 + $0xd8] sm:$0xf]
  %v73 = vld [vmem:[%s1 + $0xdc] sm:$0xf]
  %v74 = vld [vmem:[%s1 + $0xe0] sm:$0xf]
  %v75 = vld [vmem:[%s1 + $0xe4] sm:$0xf]
  %v76 = vld [vmem:[%s1 + $0xe8] sm:$0xf]
  %v77 = vld [vmem:[%s1 + $0xec] sm:$0xf]
  %v78 = vld [vmem:[%s1 + $0xf0] sm:$0xf]
  %v79 = vld [vmem:[%s1 + $0xf4] sm:$0xf]
  %v80 = vld [vmem:[%s1 + $0xf8] sm:$0xf]
  %v81 = vld [vmem:[%s1 + $0xfc] sm:$0xf]
  %v82 = vld [vmem:[%s1 + $0x100] sm:$0xf]
  %v83 = vld [vmem:[%s1 + $0x104] sm:$0xf]
  %v84 = vld [vmem:[%s1 + $0x108] sm:$0xf]
  %v85 = vld [vmem:[%s1 + $0x10c] sm:$0xf]
  %v86 = vld [vmem:[%s1 + $0x110] sm:$0xf]
  %v87 = vld [vmem:[%s1 + $0x114] sm:$0xf]
  %v88 = vld [vmem:[%s1 + $0x118] sm:$0xf]
  %v89 = vld [vmem:[%s1 + $0x11c] sm:$0xf]
  %v90 = vld [vmem:[%s1 + $0x120] sm:$0xf]
  %v91 = vld [vmem:[%s1 + $0x124] sm:$0xf]
  %v92 = vld [vmem:[%s1 + $0x128] sm:$0xf]
  %v93 = vld [vmem:[%s1 + $0x12c] sm:$0xf]
  %v94 = vld [vmem:[%s1 + $0x130] sm:$0xf]
  %v95 = vld [vmem:[%s1 + $0x134] sm:$0xf]
  %v96 = vld [vmem:[%s1 + $0x138] sm:$0xf]
  %v97 = vld [vmem:[%s1 + $0x13c] sm:$0xf]
  %v98 = vld [vmem:[%s1 + $0x140] sm:$0xf]
  %v99 = vld [vmem:[%s1 + $0x144] sm:$0xf]
  %v100 = vld [vmem:[%s1 + $0x148] sm:$0xf]
  %v101 = vld [vmem:[%s1 + $0x14c] sm:$0xf]
  %v102 = vld [vmem:[%s1 + $0x150] sm:$0xf]
  %v103 = vld [vmem:[%s1 + $0x154] sm:$0xf]
  %v104 = vld [vmem:[%s1 + $0x158] sm:$0xf]
  %v105 = vld [vmem:[%s1 + $0x15c] sm:$0xf]
  %v106 = vld [vmem:[%s1 + $0x160] sm:$0xf]
  %v107 = vld [vmem:[%s1 + $0x164] sm:$0xf]
  %v108 = vld [vmem:[%s1 + $0x168] sm:$0xf]
  %v109 = vld [vmem:[%s1 + $0x16c] sm:$0xf]
  %v110 = vld [vmem:[%s1 + $0x170] sm:$0xf]
  %v111 = vld [vmem:[%s1 + $0x174] sm:$0xf]
  %v112 = vld [vmem:[%s1 + $0x178] sm:$0xf]
  %v113 = vld [vmem:[%s1 + $0x17c] sm:$0xf]
  %v114 = vld [vmem:[%s1 + $0x180] sm:$0xf]
  %v115 = vld [vmem:[%s1 + $0x184] sm:$0xf]
  %v116 = vld [vmem:[%s1 + $0x188] sm:$0xf]
  %v117 = vld [vmem:[%s1 + $0x18c] sm:$0xf]
  %v118 = vld [vmem:[%s1 + $0x190] sm:$0xf]
  %v119 = vld [vmem:[%s1 + $0x194] sm:$0xf]
  %v120 = vld [vmem:[%s1 + $0x198] sm:$0xf]
  %v121 = vld [vmem:[%s1 + $0x19c] sm:$0xf]
  %v122 = vld [vmem:[%s1 + $0x1a0] sm:$0xf]
  %v123 = vld [vmem:[%s1 + $0x1a4] sm:$0xf]
  %v124 = vld [vmem:[%s1 + $0x1a8] sm:$0xf]
  %v125 = vld [vmem:[%s1 + $0x1ac] sm:$0xf]
  %v126 = vld [vmem:[%s1 + $0x1b0] sm:$0xf]
  %v127 = vld [vmem:[%s1 + $0x1b4] sm:$0xf]
  %v128 = vld [vmem:[%s1 + $0x1b8] sm:$0xf]
  %v129 = vld [vmem:[%s1 + $0x1bc] sm:$0xf]
  %v130 = vld [vmem:[%s1 + $0x1c0] sm:$0xf]
  %v131 = vld [vmem:[%s1 + $0x1c4] sm:$0xf]
  %v132 = vld [vmem:[%s1 + $0x1c8] sm:$0xf]
  %v133 = vld [vmem:[%s1 + $0x1cc] sm:$0xf]
  %v134 = vld [vmem:[%s1 + $0x1d0] sm:$0xf]
  %v135 = vld [vmem:[%s1 + $0x1d4] sm:$0xf]
  %v136 = vld [vmem:[%s1 + $0x1d8] sm:$0xf]
  %v137 = vld [vmem:[%s1 + $0x1dc] sm:$0xf]
  %v138 = vld [vmem:[%s1 + $0x1e0] sm:$0xf]
  %v139 = vld [vmem:[%s1 + $0x1e4] sm:$0xf]
  %v140 = vld [vmem:[%s1 + $0x1e8] sm:$0xf]
  %v141 = vld [vmem:[%s1 + $0x1ec] sm:$0xf]
  %v142 = vld [vmem:[%s1 + $0x1f0] sm:$0xf]
  %v143 = vld [vmem:[%s1 + $0x1f4] sm:$0xf]
  %v144 = vld [vmem:[%s1 + $0x1f8] sm:$0xf]
  %v145 = vld [vmem:[%s1 + $0x1fc] sm:$0xf]
  %147 = vst [vmem:[#allocation1] ss:$9 sm:$0xff] %v17
  %v148 = vld [vmem:[#allocation1] sm:$0xff]
  %v149 = vld [vmem:[#allocation1 + $0x9] sm:$0xff]
  %v150 = vld [vmem:[#allocation1 + $0x12] sm:$0xff]
  %v151 = vld [vmem:[#allocation1 + $0x1b] sm:$0xff]
  %v152 = vld [vmem:[#allocation1 + $0x24] sm:$0xff]
  %v153 = vld [vmem:[#allocation1 + $0x2d] sm:$0xff]
  %v154 = vld [vmem:[#allocation1 + $0x36] sm:$0xff]
  %v155 = vld [vmem:[#allocation1 + $0x3f] sm:$0xff]
  %v292 = vunpack.c.l.b16 %v18
  %v293 = vunpack.c.l.b16 %v19
  %v294 = vunpack.c.l.b16 %v20
  %v295 = vunpack.c.l.b16 %v21
  %v296 = vunpack.c.l.b16 %v22
  %v297 = vunpack.c.l.b16 %v23
  %v298 = vunpack.c.l.b16 %v24
  %v299 = vunpack.c.l.b16 %v25
  %v300 = vunpack.c.l.b16 %v26
  %v301 = vunpack.c.l.b16 %v27
  %v302 = vunpack.c.l.b16 %v28
  %v303 = vunpack.c.l.b16 %v29
  %v304 = vunpack.c.l.b16 %v30
  %v305 = vunpack.c.l.b16 %v31
  %v306 = vunpack.c.l.b16 %v32
  %v307 = vunpack.c.l.b16 %v33
  %v308 = vunpack.c.l.b16 %v34
  %v309 = vunpack.c.l.b16 %v35
  %v310 = vunpack.c.l.b16 %v36
  %v311 = vunpack.c.l.b16 %v37
  %v312 = vunpack.c.l.b16 %v38
  %v313 = vunpack.c.l.b16 %v39
  %v314 = vunpack.c.l.b16 %v40
  %v315 = vunpack.c.l.b16 %v41
  %v316 = vunpack.c.l.b16 %v42
  %v317 = vunpack.c.l.b16 %v43
  %v318 = vunpack.c.l.b16 %v44
  %v319 = vunpack.c.l.b16 %v45
  %v320 = vunpack.c.l.b16 %v46
  %v321 = vunpack.c.l.b16 %v47
  %v322 = vunpack.c.l.b16 %v48
  %v323 = vunpack.c.l.b16 %v49
  %v324 = vunpack.c.l.b16 %v50
  %v325 = vunpack.c.l.b16 %v51
  %v326 = vunpack.c.l.b16 %v52
  %v327 = vunpack.c.l.b16 %v53
  %v328 = vunpack.c.l.b16 %v54
  %v329 = vunpack.c.l.b16 %v55
  %v330 = vunpack.c.l.b16 %v56
  %v331 = vunpack.c.l.b16 %v57
  %v332 = vunpack.c.l.b16 %v58
  %v333 = vunpack.c.l.b16 %v59
  %v334 = vunpack.c.l.b16 %v60
  %v335 = vunpack.c.l.b16 %v61
  %v336 = vunpack.c.l.b16 %v62
  %v337 = vunpack.c.l.b16 %v63
  %v338 = vunpack.c.l.b16 %v64
  %v339 = vunpack.c.l.b16 %v65
  %v340 = vunpack.c.l.b16 %v66
  %v341 = vunpack.c.l.b16 %v67
  %v342 = vunpack.c.l.b16 %v68
  %v343 = vunpack.c.l.b16 %v69
  %v344 = vunpack.c.l.b16 %v70
  %v345 = vunpack.c.l.b16 %v71
  %v346 = vunpack.c.l.b16 %v72
  %v347 = vunpack.c.l.b16 %v73
  %v348 = vunpack.c.l.b16 %v74
  %v349 = vunpack.c.l.b16 %v75
  %v350 = vunpack.c.l.b16 %v76
  %v351 = vunpack.c.l.b16 %v77
  %v352 = vunpack.c.l.b16 %v78
  %v353 = vunpack.c.l.b16 %v79
  %v354 = vunpack.c.l.b16 %v80
  %v355 = vunpack.c.l.b16 %v81
  %v356 = vunpack.c.l.b16 %v82
  %v357 = vunpack.c.l.b16 %v83
  %v358 = vunpack.c.l.b16 %v84
  %v359 = vunpack.c.l.b16 %v85
  %v360 = vunpack.c.l.b16 %v86
  %v361 = vunpack.c.l.b16 %v87
  %v362 = vunpack.c.l.b16 %v88
  %v363 = vunpack.c.l.b16 %v89
  %v364 = vunpack.c.l.b16 %v90
  %v365 = vunpack.c.l.b16 %v91
  %v366 = vunpack.c.l.b16 %v92
  %v367 = vunpack.c.l.b16 %v93
  %v368 = vunpack.c.l.b16 %v94
  %v369 = vunpack.c.l.b16 %v95
  %v370 = vunpack.c.l.b16 %v96
  %v371 = vunpack.c.l.b16 %v97
  %v372 = vunpack.c.l.b16 %v98
  %v373 = vunpack.c.l.b16 %v99
  %v374 = vunpack.c.l.b16 %v100
  %v375 = vunpack.c.l.b16 %v101
  %v376 = vunpack.c.l.b16 %v102
  %v377 = vunpack.c.l.b16 %v103
  %v378 = vunpack.c.l.b16 %v104
  %v379 = vunpack.c.l.b16 %v105
  %v380 = vunpack.c.l.b16 %v106
  %v381 = vunpack.c.l.b16 %v107
  %v382 = vunpack.c.l.b16 %v108
  %v383 = vunpack.c.l.b16 %v109
  %v384 = vunpack.c.l.b16 %v110
  %v385 = vunpack.c.l.b16 %v111
  %v386 = vunpack.c.l.b16 %v112
  %v387 = vunpack.c.l.b16 %v113
  %v388 = vunpack.c.l.b16 %v114
  %v389 = vunpack.c.l.b16 %v115
  %v390 = vunpack.c.l.b16 %v116
  %v391 = vunpack.c.l.b16 %v117
  %v392 = vunpack.c.l.b16 %v118
  %v393 = vunpack.c.l.b16 %v119
  %v394 = vunpack.c.l.b16 %v120
  %v395 = vunpack.c.l.b16 %v121
  %v396 = vunpack.c.l.b16 %v122
  %v397 = vunpack.c.l.b16 %v123
  %v398 = vunpack.c.l.b16 %v124
  %v399 = vunpack.c.l.b16 %v125
  %v400 = vunpack.c.l.b16 %v126
  %v401 = vunpack.c.l.b16 %v127
  %v402 = vunpack.c.l.b16 %v128
  %v403 = vunpack.c.l.b16 %v129
  %v404 = vunpack.c.l.b16 %v130
  %v405 = vunpack.c.l.b16 %v131
  %v406 = vunpack.c.l.b16 %v132
  %v407 = vunpack.c.l.b16 %v133
  %v408 = vunpack.c.l.b16 %v134
  %v409 = vunpack.c.l.b16 %v135
  %v410 = vunpack.c.l.b16 %v136
  %v411 = vunpack.c.l.b16 %v137
  %v412 = vunpack.c.l.b16 %v138
  %v413 = vunpack.c.l.b16 %v139
  %v414 = vunpack.c.l.b16 %v140
  %v415 = vunpack.c.l.b16 %v141
  %v416 = vunpack.c.l.b16 %v142
  %v417 = vunpack.c.l.b16 %v143
  %v418 = vunpack.c.l.b16 %v144
  %v419 = vunpack.c.l.b16 %v145
  %v420 = vpack.c.b16 %v293, %v292
  %v421 = vpack.c.b16 %v295, %v294
  %v422 = vpack.c.b16 %v297, %v296
  %v423 = vpack.c.b16 %v299, %v298
  %v424 = vpack.c.b16 %v301, %v300
  %v425 = vpack.c.b16 %v303, %v302
  %v426 = vpack.c.b16 %v305, %v304
  %v427 = vpack.c.b16 %v307, %v306
  %v428 = vpack.c.b16 %v309, %v308
  %v429 = vpack.c.b16 %v311, %v310
  %v430 = vpack.c.b16 %v313, %v312
  %v431 = vpack.c.b16 %v315, %v314
  %v432 = vpack.c.b16 %v317, %v316
  %v433 = vpack.c.b16 %v319, %v318
  %v434 = vpack.c.b16 %v321, %v320
  %v435 = vpack.c.b16 %v323, %v322
  %v436 = vpack.c.b16 %v325, %v324
  %v437 = vpack.c.b16 %v327, %v326
  %v438 = vpack.c.b16 %v329, %v328
  %v439 = vpack.c.b16 %v331, %v330
  %v440 = vpack.c.b16 %v333, %v332
  %v441 = vpack.c.b16 %v335, %v334
  %v442 = vpack.c.b16 %v337, %v336
  %v443 = vpack.c.b16 %v339, %v338
  %v444 = vpack.c.b16 %v341, %v340
  %v445 = vpack.c.b16 %v343, %v342
  %v446 = vpack.c.b16 %v345, %v344
  %v447 = vpack.c.b16 %v347, %v346
  %v448 = vpack.c.b16 %v349, %v348
  %v449 = vpack.c.b16 %v351, %v350
  %v450 = vpack.c.b16 %v353, %v352
  %v451 = vpack.c.b16 %v355, %v354
  %v452 = vpack.c.b16 %v357, %v356
  %v453 = vpack.c.b16 %v359, %v358
  %v454 = vpack.c.b16 %v361, %v360
  %v455 = vpack.c.b16 %v363, %v362
  %v456 = vpack.c.b16 %v365, %v364
  %v457 = vpack.c.b16 %v367, %v366
  %v458 = vpack.c.b16 %v369, %v368
  %v459 = vpack.c.b16 %v371, %v370
  %v460 = vpack.c.b16 %v373, %v372
  %v461 = vpack.c.b16 %v375, %v374
  %v462 = vpack.c.b16 %v377, %v376
  %v463 = vpack.c.b16 %v379, %v378
  %v464 = vpack.c.b16 %v381, %v380
  %v465 = vpack.c.b16 %v383, %v382
  %v466 = vpack.c.b16 %v385, %v384
  %v467 = vpack.c.b16 %v387, %v386
  %v468 = vpack.c.b16 %v389, %v388
  %v469 = vpack.c.b16 %v391, %v390
  %v470 = vpack.c.b16 %v393, %v392
  %v471 = vpack.c.b16 %v395, %v394
  %v472 = vpack.c.b16 %v397, %v396
  %v473 = vpack.c.b16 %v399, %v398
  %v474 = vpack.c.b16 %v401, %v400
  %v475 = vpack.c.b16 %v403, %v402
  %v476 = vpack.c.b16 %v405, %v404
  %v477 = vpack.c.b16 %v407, %v406
  %v478 = vpack.c.b16 %v409, %v408
  %v479 = vpack.c.b16 %v411, %v410
  %v480 = vpack.c.b16 %v413, %v412
  %v481 = vpack.c.b16 %v415, %v414
  %v482 = vpack.c.b16 %v417, %v416
  %v483 = vpack.c.b16 %v419, %v418
  %548 = vmatpush.bf16.msra.mxu0 %v427
  %549 = vmatpush.bf16.msra.mxu0 %v426
  %550 = vmatpush.bf16.msra.mxu0 %v425
  %551 = vmatpush.bf16.msra.mxu0 %v424
  %552 = vmatpush.bf16.msra.mxu0 %v423
  %553 = vmatpush.bf16.msra.mxu0 %v422
  %554 = vmatpush.bf16.msra.mxu0 %v421
  %555 = vmatpush.bf16.msra.mxu0 %v420
  %556 = vmatmul.bf16.gmra.mxu0 %v148
  %v557 = vpop.f32.mrf.mxu0
  %v558 = vadd.f32 0.0, %v557
  %v559 = vpop.f32.mrf.mxu0
  %560 = vdwg.mxu0
  %561 = vmatpush.bf16.msra.mxu0 %v435
  %562 = vmatpush.bf16.msra.mxu0 %v434
  %563 = vmatpush.bf16.msra.mxu0 %v433
  %564 = vmatpush.bf16.msra.mxu0 %v432
  %565 = vmatpush.bf16.msra.mxu0 %v431
  %566 = vmatpush.bf16.msra.mxu0 %v430
  %567 = vmatpush.bf16.msra.mxu0 %v429
  %568 = vmatpush.bf16.msra.mxu0 %v428
  %569 = vmatmul.bf16.gmra.mxu0 %v149
  %v570 = vpop.f32.mrf.mxu0
  %v571 = vadd.f32 %v558, %v570
  %v572 = vpop.f32.mrf.mxu0
  %573 = vdwg.mxu0
  %574 = vmatpush.bf16.msra.mxu0 %v443
  %575 = vmatpush.bf16.msra.mxu0 %v442
  %576 = vmatpush.bf16.msra.mxu0 %v441
  %577 = vmatpush.bf16.msra.mxu0 %v440
  %578 = vmatpush.bf16.msra.mxu0 %v439
  %579 = vmatpush.bf16.msra.mxu0 %v438
  %580 = vmatpush.bf16.msra.mxu0 %v437
  %581 = vmatpush.bf16.msra.mxu0 %v436
  %582 = vmatmul.bf16.gmra.mxu0 %v150
  %v583 = vpop.f32.mrf.mxu0
  %v584 = vadd.f32 %v571, %v583
  %v585 = vpop.f32.mrf.mxu0
  %586 = vdwg.mxu0
  %587 = vmatpush.bf16.msra.mxu0 %v451
  %588 = vmatpush.bf16.msra.mxu0 %v450
  %589 = vmatpush.bf16.msra.mxu0 %v449
  %590 = vmatpush.bf16.msra.mxu0 %v448
  %591 = vmatpush.bf16.msra.mxu0 %v447
  %592 = vmatpush.bf16.msra.mxu0 %v446
  %593 = vmatpush.bf16.msra.mxu0 %v445
  %594 = vmatpush.bf16.msra.mxu0 %v444
  %595 = vmatmul.bf16.gmra.mxu0 %v151
  %v596 = vpop.f32.mrf.mxu0
  %v597 = vadd.f32 %v584, %v596
  %v598 = vpop.f32.mrf.mxu0
  %599 = vdwg.mxu0
  %600 = vmatpush.bf16.msra.mxu0 %v459
  %601 = vmatpush.bf16.msra.mxu0 %v458
  %602 = vmatpush.bf16.msra.mxu0 %v457
  %603 = vmatpush.bf16.msra.mxu0 %v456
  %604 = vmatpush.bf16.msra.mxu0 %v455
  %605 = vmatpush.bf16.msra.mxu0 %v454
  %606 = vmatpush.bf16.msra.mxu0 %v453
  %607 = vmatpush.bf16.msra.mxu0 %v452
  %608 = vmatmul.bf16.gmra.mxu0 %v152
  %v609 = vpop.f32.mrf.mxu0
  %v610 = vadd.f32 %v597, %v609
  %v611 = vpop.f32.mrf.mxu0
  %612 = vdwg.mxu0
  %613 = vmatpush.bf16.msra.mxu0 %v467
  %614 = vmatpush.bf16.msra.mxu0 %v466
  %615 = vmatpush.bf16.msra.mxu0 %v465
  %616 = vmatpush.bf16.msra.mxu0 %v464
  %617 = vmatpush.bf16.msra.mxu0 %v463
  %618 = vmatpush.bf16.msra.mxu0 %v462
  %619 = vmatpush.bf16.msra.mxu0 %v461
  %620 = vmatpush.bf16.msra.mxu0 %v460
  %621 = vmatmul.bf16.gmra.mxu0 %v153
  %v622 = vpop.f32.mrf.mxu0
  %v623 = vadd.f32 %v610, %v622
  %v624 = vpop.f32.mrf.mxu0
  %625 = vdwg.mxu0
  %626 = vmatpush.bf16.msra.mxu0 %v475
  %627 = vmatpush.bf16.msra.mxu0 %v474
  %628 = vmatpush.bf16.msra.mxu0 %v473
  %629 = vmatpush.bf16.msra.mxu0 %v472
  %630 = vmatpush.bf16.msra.mxu0 %v471
  %631 = vmatpush.bf16.msra.mxu0 %v470
  %632 = vmatpush.bf16.msra.mxu0 %v469
  %633 = vmatpush.bf16.msra.mxu0 %v468
  %634 = vmatmul.bf16.gmra.mxu0 %v154
  %v635 = vpop.f32.mrf.mxu0
  %v636 = vadd.f32 %v623, %v635
  %v637 = vpop.f32.mrf.mxu0
  %638 = vdwg.mxu0
  %639 = vmatpush.bf16.msra.mxu0 %v483
  %640 = vmatpush.bf16.msra.mxu0 %v482
  %641 = vmatpush.bf16.msra.mxu0 %v481
  %642 = vmatpush.bf16.msra.mxu0 %v480
  %643 = vmatpush.bf16.msra.mxu0 %v479
  %644 = vmatpush.bf16.msra.mxu0 %v478
  %645 = vmatpush.bf16.msra.mxu0 %v477
  %646 = vmatpush.bf16.msra.mxu0 %v476
  %647 = vmatmul.bf16.gmra.mxu0 %v155
  %v648 = vpop.f32.mrf.mxu0
  %v649 = vadd.f32 %v636, %v648
  %v650 = vpop.f32.mrf.mxu0
  %651 = vdwg.mxu0
  %v652 = vmul.f32 %v649, 0.0024038462
  %v653 = vpack.c.bf16 %v652, %v652
  %v654 = vld [vmem:[%s2] sm:$0xf]
  %v655 = vld [vmem:[%s2 + $0x4] sm:$0xf]
  %v656 = vld [vmem:[%s2 + $0x8] sm:$0xf]
  %v657 = vld [vmem:[%s2 + $0xc] sm:$0xf]
  %v658 = vld [vmem:[%s2 + $0x10] sm:$0xf]
  %v659 = vld [vmem:[%s2 + $0x14] sm:$0xf]
  %v660 = vld [vmem:[%s2 + $0x18] sm:$0xf]
  %v661 = vld [vmem:[%s2 + $0x1c] sm:$0xf]
  %v662 = vld [vmem:[%s2 + $0x20] sm:$0xf]
  %v663 = vld [vmem:[%s2 + $0x24] sm:$0xf]
  %v664 = vld [vmem:[%s2 + $0x28] sm:$0xf]
  %v665 = vld [vmem:[%s2 + $0x2c] sm:$0xf]
  %v666 = vld [vmem:[%s2 + $0x30] sm:$0xf]
  %v667 = vld [vmem:[%s2 + $0x34] sm:$0xf]
  %v668 = vld [vmem:[%s2 + $0x38] sm:$0xf]
  %v669 = vld [vmem:[%s2 + $0x3c] sm:$0xf]
  %v670 = vld [vmem:[%s3] sm:$0x1]
  %v672 = vperm.slane %v670, 0
  %v690 = vunpack.c.l.b16 %v654
  %v691 = vunpack.c.l.b16 %v655
  %v692 = vunpack.c.l.b16 %v656
  %v693 = vunpack.c.l.b16 %v657
  %v694 = vunpack.c.l.b16 %v658
  %v695 = vunpack.c.l.b16 %v659
  %v696 = vunpack.c.l.b16 %v660
  %v697 = vunpack.c.l.b16 %v661
  %v698 = vunpack.c.l.b16 %v662
  %v699 = vunpack.c.l.b16 %v663
  %v700 = vunpack.c.l.b16 %v664
  %v701 = vunpack.c.l.b16 %v665
  %v702 = vunpack.c.l.b16 %v666
  %v703 = vunpack.c.l.b16 %v667
  %v704 = vunpack.c.l.b16 %v668
  %v705 = vunpack.c.l.b16 %v669
  %v706 = vpack.c.b16 %v691, %v690
  %v707 = vpack.c.b16 %v693, %v692
  %v708 = vpack.c.b16 %v695, %v694
  %v709 = vpack.c.b16 %v697, %v696
  %v710 = vpack.c.b16 %v699, %v698
  %v711 = vpack.c.b16 %v701, %v700
  %v712 = vpack.c.b16 %v703, %v702
  %v713 = vpack.c.b16 %v705, %v704
  %722 = vmatpush.bf16.msra.mxu0 %v713
  %723 = vmatpush.bf16.msra.mxu0 %v712
  %724 = vmatpush.bf16.msra.mxu0 %v711
  %725 = vmatpush.bf16.msra.mxu0 %v710
  %726 = vmatpush.bf16.msra.mxu0 %v709
  %727 = vmatpush.bf16.msra.mxu0 %v708
  %728 = vmatpush.bf16.msra.mxu0 %v707
  %729 = vmatpush.bf16.msra.mxu0 %v706
  %730 = vmatmul.bf16.gmra.mxu0 %v653
  %v731 = vpop.f32.mrf.mxu0
  %v732 = vadd.f32 %v672, %v731
  %v733 = vpop.f32.mrf.mxu0
  %734 = vdwg.mxu0
  %735 = vst [vmem:[%s4] sm:$0x3] %v732
  // Predicated region
  $region18: #{cnn_custom_4_pretrain_forward.7} parent=0 // pred_check
    _
  $region19: #{cnn_custom_4_pretrain_forward.7} parent=0 // pred_check_branch
    %737 = sbr.rel (0) target = $region21
  $region20: #{cnn_custom_4_pretrain_forward.7} parent=0 // pred_region
    _
  $region21: #{cnn_custom_4_pretrain_forward.7} parent=0 // pred_fallthru
    _
  // Predicated region
  $region22: #{cnn_custom_4_pretrain_forward.7} parent=0 // pred_check
    _
  $region23: #{cnn_custom_4_pretrain_forward.7} parent=0 // pred_check_branch
    %739 = sbr.rel (0) target = $region25
  $region24: #{cnn_custom_4_pretrain_forward.7} parent=0 // pred_region
    _
  $region25: #{cnn_custom_4_pretrain_forward.7} parent=0 // pred_fallthru
    _

// kernel: cnn_custom_4_pretrain_forward.5
$region0: #{cnn_custom_4_pretrain_forward.5}
  #allocation0 [shape = 'u32[]', space=smem, size = 0x4, offset = 0x4, fixed_abs, tag = 'smem constant byte address 0x4 - core index']
  #allocation1 [shape = 'u32[72,128]{1,0:T(1,128)}', space=vmem, size = 0x9000, scoped, tag = 'internal scratch']
  #allocation2 [shape = 'f32[256,128]{1,0:T(8,128)}', space=vmem, size = 0x20000, scoped, tag = 'scratch operand']
  %s0 = inlined_call_operand.vmem [shape: bf16[4,384,128], index: 0, kind: input, shape index: {}]
  %s1 = inlined_call_operand.vmem [shape: bf16[9,128,128], index: 1, kind: input, shape index: {}]
  %s2 = inlined_call_operand.vmem [shape: f32[1,128], index: 2, kind: input, shape index: {}]
  %s3 = inlined_call_operand.vmem [shape: bf16[4,256,128], index: 3, kind: output, shape index: {}]
  %s4 = sld [smem:[#allocation0]]
  $region45: #{cnn_custom_4_pretrain_forward.5} parent=0
    _
  %s6 = ssub.s32 1, %s4
  %s7 = scalar_select 0, %s6, %s4
  loop: start=0, step=1, limit=6
  $region2: #{cnn_custom_4_pretrain_forward.5} parent=0 // loop_pre_header
    _
  $region3: #{cnn_custom_4_pretrain_forward.5} parent=0 // loop_header
    %s9 = sphi 0, %s13
    %p10 = scmp.ge.s32.totalorder %s9, 6
    %s16 = sphi 0, %s28
    %s17 = sphi 0, %s24
    %s18 = sphi 0, %s16
    %s19 = sphi 0, %s17
    %s20 = sphi 0, %s18
    %s21 = sphi 0, %s19
    %s31 = sphi 0, %s33
    %s34 = sphi 0, %s31
    %s35 = sphi 0, %s34
    %s51 = sphi 0, %s35
    %s57 = sphi 0, %s59
    %s60 = sphi 0, %s57
    %s61 = sphi 0, %s60
    %s77 = sphi 0, %s61
    %s83 = sphi 0, %s85
    %s86 = sphi 0, %s83
    %s87 = sphi 0, %s86
    %s103 = sphi 0, %s87
    %s111 = sphi 0, %s113
    %s114 = sphi 0, %s111
    %s115 = sphi 0, %s114
    %s131 = sphi 0, %s115
  $region4: #{cnn_custom_4_pretrain_forward.5} parent=0 // loop_header_branch
    %12 = sbr.rel (%p10) target = $region8
  $region5: #{cnn_custom_4_pretrain_forward.5} parent=0 // loop_body
    %s14 = ssub.s32 %s9, 1
    %s15 = ssub.s32 %s9, 2
    %s22 = sadd.s32 1, %s17
    %p23 = scmp.ge.s32.totalorder %s22, 1
    %s24 = scalar_select %p23, 0, %s22
    %s25 = sadd.s32 1, %s16
    %s26 = scalar_select %p23, %s25, %s16
    %p27 = scmp.ge.s32.totalorder %s26, 4
    %s28 = scalar_select %p27, 0, %s26
    %s29 = ssub.s32 %s16, %s28
    %p30 = scmp.eq.s32.totalorder %s29, 0
    %s32 = sadd.s32 %s31, 1
    %s33 = scalar_select %p30, %s31, %s32
    %p36 = pneg %p30
    %p37 = scmp.eq.s32.totalorder %s9, 3
    %p38 = por %p36, %p37
    %p39 = scmp.ne.s32.totalorder %s31, %s34
    %p40 = scmp.eq.s32.totalorder %s9, 0
    %p41 = por %p39, %p40
    %p42 = scmp.ne.s32.totalorder %s31, %s34
    %p43 = scmp.eq.s32.totalorder %s14, 3
    %p44 = por %p42, %p43
    %p45 = scmp.ne.s32.totalorder %s34, %s35
    %p46 = scmp.eq.s32.totalorder %s14, 0
    %p47 = por %p45, %p46
    %p48 = scmp.ne.s32.totalorder %s34, %s35
    %p49 = scmp.eq.s32.totalorder %s15, 3
    %p50 = por %p48, %p49
    %p52 = scmp.ne.s32.totalorder %s35, %s51
    %p53 = scmp.eq.s32.totalorder %s15, 0
    %p54 = por %p52, %p53
    %s55 = ssub.s32 %s17, %s24
    %p56 = scmp.eq.s32.totalorder %s55, 0
    %s58 = sadd.s32 %s57, 1
    %s59 = scalar_select %p56, %s57, %s58
    %p62 = pneg %p56
    %p63 = scmp.eq.s32.totalorder %s9, 3
    %p64 = por %p62, %p63
    %p65 = scmp.ne.s32.totalorder %s57, %s60
    %p66 = scmp.eq.s32.totalorder %s9, 0
    %p67 = por %p65, %p66
    %p68 = scmp.ne.s32.totalorder %s57, %s60
    %p69 = scmp.eq.s32.totalorder %s14, 3
    %p70 = por %p68, %p69
    %p71 = scmp.ne.s32.totalorder %s60, %s61
    %p72 = scmp.eq.s32.totalorder %s14, 0
    %p73 = por %p71, %p72
    %p74 = scmp.ne.s32.totalorder %s60, %s61
    %p75 = scmp.eq.s32.totalorder %s15, 3
    %p76 = por %p74, %p75
    %p78 = scmp.ne.s32.totalorder %s61, %s77
    %p79 = scmp.eq.s32.totalorder %s15, 0
    %p80 = por %p78, %p79
    %s81 = ssub.s32 %s17, %s24
    %p82 = scmp.eq.s32.totalorder %s81, 0
    %s84 = sadd.s32 %s83, 1
    %s85 = scalar_select %p82, %s83, %s84
    %p88 = pneg %p82
    %p89 = scmp.eq.s32.totalorder %s9, 3
    %p90 = por %p88, %p89
    %p91 = scmp.ne.s32.totalorder %s83, %s86
    %p92 = scmp.eq.s32.totalorder %s9, 0
    %p93 = por %p91, %p92
    %p94 = scmp.ne.s32.totalorder %s83, %s86
    %p95 = scmp.eq.s32.totalorder %s14, 3
    %p96 = por %p94, %p95
    %p97 = scmp.ne.s32.totalorder %s86, %s87
    %p98 = scmp.eq.s32.totalorder %s14, 0
    %p99 = por %p97, %p98
    %p100 = scmp.ne.s32.totalorder %s86, %s87
    %p101 = scmp.eq.s32.totalorder %s15, 3
    %p102 = por %p100, %p101
    %p104 = scmp.ne.s32.totalorder %s87, %s103
    %p105 = scmp.eq.s32.totalorder %s15, 0
    %p106 = por %p104, %p105
    %s107 = ssub.s32 %s16, %s28
    %s108 = ssub.s32 %s17, %s24
    %s109 = sor.u32 %s107, %s108
    %p110 = scmp.eq.s32.totalorder %s109, 0
    %s112 = sadd.s32 %s111, 1
    %s113 = scalar_select %p110, %s111, %s112
    %p116 = pneg %p110
    %p117 = scmp.eq.s32.totalorder %s9, 3
    %p118 = por %p116, %p117
    %p119 = scmp.ne.s32.totalorder %s111, %s114
    %p120 = scmp.eq.s32.totalorder %s9, 0
    %p121 = por %p119, %p120
    %p122 = scmp.ne.s32.totalorder %s111, %s114
    %p123 = scmp.eq.s32.totalorder %s14, 3
    %p124 = por %p122, %p123
    %p125 = scmp.ne.s32.totalorder %s114, %s115
    %p126 = scmp.eq.s32.totalorder %s14, 0
    %p127 = por %p125, %p126
    %p128 = scmp.ne.s32.totalorder %s114, %s115
    %p129 = scmp.eq.s32.totalorder %s15, 3
    %p130 = por %p128, %p129
    %p132 = scmp.ne.s32.totalorder %s115, %s131
    %p133 = scmp.eq.s32.totalorder %s15, 0
    %p134 = por %p132, %p133
    %p135 = scmp.le.s32.totalorder 1, %s9
    %p136 = scmp.lt.s32.totalorder %s9, 5
    %p137 = pnand %p135, %p136
    %p138 = pneg %p137
    // Predicated region
    $region9: #{cnn_custom_4_pretrain_forward.5} parent=5 // pred_check
      _
    $region10: #{cnn_custom_4_pretrain_forward.5} parent=5 // pred_check_branch
      %140 = sbr.rel (%p137) target = $region12
    $region11: #{cnn_custom_4_pretrain_forward.5} parent=5 // pred_region
      %s141 = ssub.s32 %s9, 1
      // Predicated region
      $region13: #{cnn_custom_4_pretrain_forward.5} parent=11 // pred_check
        %p142 = pneg %p73
      $region14: #{cnn_custom_4_pretrain_forward.5} parent=11 // pred_check_branch
        %144 = sbr.rel (%p142) target = $region16
      $region15: #{cnn_custom_4_pretrain_forward.5} parent=11 // pred_region
        %p145 = scmp.lt.s32.totalorder %s19, 0
        %s146 = scalar_select %p145, %s19, 0
        %s147 = smul.addr %s146, 4
        %s148 = scalar_lea.vmem %s1, %s147
      $region16: #{cnn_custom_4_pretrain_forward.5} parent=11 // pred_fallthru
        _
      // Predicated region
      $region17: #{cnn_custom_4_pretrain_forward.5} parent=11 // pred_check
        %p149 = pneg %p99
      $region18: #{cnn_custom_4_pretrain_forward.5} parent=11 // pred_check_branch
        %151 = sbr.rel (%p149) target = $region20
      $region19: #{cnn_custom_4_pretrain_forward.5} parent=11 // pred_region
        %p152 = scmp.lt.s32.totalorder %s19, 0
        %s153 = scalar_select %p152, %s19, 0
        %s154 = scalar_lea.vmem %s2, %s153
      $region20: #{cnn_custom_4_pretrain_forward.5} parent=11 // pred_fallthru
        _
    $region12: #{cnn_custom_4_pretrain_forward.5} parent=5 // pred_fallthru
      _
    %p155 = scmp.lt.s32.totalorder %s9, 4
    // Predicated region
    $region21: #{cnn_custom_4_pretrain_forward.5} parent=5 // pred_check
      %p156 = pneg %p155
    $region22: #{cnn_custom_4_pretrain_forward.5} parent=5 // pred_check_branch
      %158 = sbr.rel (%p156) target = $region24
    $region23: #{cnn_custom_4_pretrain_forward.5} parent=5 // pred_region
      // Predicated region
      $region25: #{cnn_custom_4_pretrain_forward.5} parent=23 // pred_check
        %p159 = pneg %p41
      $region26: #{cnn_custom_4_pretrain_forward.5} parent=23 // pred_check_branch
        %161 = sbr.rel (%p159) target = $region28
      $region27: #{cnn_custom_4_pretrain_forward.5} parent=23 // pred_region
        %p162 = scmp.lt.s32.totalorder %s16, 3
        %s163 = scalar_select %p162, %s16, 3
        %s164 = smul.addr %s163, 48
        %s165 = smul.addr %s164, 4
        %s166 = scalar_lea.vmem %s0, %s165
      $region28: #{cnn_custom_4_pretrain_forward.5} parent=23 // pred_fallthru
        _
    $region24: #{cnn_custom_4_pretrain_forward.5} parent=5 // pred_fallthru
      _
    %p167 = scmp.le.s32.totalorder 1, %s9
    %p168 = scmp.lt.s32.totalorder %s9, 5
    %p169 = pnand %p167, %p168
    %p170 = pneg %p169
    // Predicated region
    $region29: #{cnn_custom_4_pretrain_forward.5} parent=5 // pred_check
      _
    $region30: #{cnn_custom_4_pretrain_forward.5} parent=5 // pred_check_branch
      %172 = sbr.rel (%p169) target = $region32
    $region31: #{cnn_custom_4_pretrain_forward.5} parent=5 // pred_region
      %s173 = ssub.s32 %s9, 1
      %p174 = scmp.lt.s32.totalorder %s18, 3
      %s175 = scalar_select %p174, %s18, 3
      %s176 = smul.addr %s175, 48
      %s177 = smul.addr %s176, 4
      %s178 = scalar_lea.vmem %s0, %s177
      %p179 = pneg %p47
      %p180 = pneg %p44
      %p181 = scmp.lt.s32.totalorder %s19, 0
      %s182 = scalar_select %p181, %s19, 0
      %s183 = smul.addr %s182, 4
      %s184 = scalar_lea.vmem %s1, %s183
      %p185 = pneg %p73
      %p186 = pneg %p70
      %p187 = scmp.lt.s32.totalorder %s19, 0
      %s188 = scalar_select %p187, %s19, 0
      %s189 = scalar_lea.vmem %s2, %s188
      %p190 = pneg %p99
      %p191 = pneg %p96
      %p192 = pneg %p127
      %p193 = pneg %p124
      %p194 = scmp.lt.s32.totalorder %s18, 3
      %s195 = scalar_select %p194, %s18, 3
      %p196 = scmp.lt.s32.totalorder %s19, 0
      %s197 = scalar_select %p196, %s19, 0
      %s198 = smul.addr %s195, 32
      %s199 = sadd.s32 %s197, %s198
      %s200 = smul.addr %s199, 4
      %s201 = scalar_lea.vmem %s3, %s200
      %p202 = scmp.lt.s32.totalorder %s18, 3
      %s203 = scalar_select %p202, %s18, 3
      %s204 = smul.addr %s203, 48
      %s205 = smul.addr %s204, 4
      %s206 = scalar_lea.vmem %s0, %s205
      %p207 = scmp.lt.s32.totalorder %s19, 0
      %s208 = scalar_select %p207, %s19, 0
      %s209 = smul.addr %s208, 4
      %s210 = scalar_lea.vmem %s1, %s209
      %p211 = scmp.lt.s32.totalorder %s19, 0
      %s212 = scalar_select %p211, %s19, 0
      %s213 = scalar_lea.vmem %s2, %s212
      %p214 = scmp.lt.s32.totalorder %s18, 3
      %s215 = scalar_select %p214, %s18, 3
      %p216 = scmp.lt.s32.totalorder %s19, 0
      %s217 = scalar_select %p216, %s19, 0
      %s218 = smul.addr %s215, 32
      %s219 = sadd.s32 %s217, %s218
      %s220 = smul.addr %s219, 4
      %s221 = scalar_lea.vmem %s3, %s220
      %v222 = vld [vmem:[%s206] sm:$0xf]
      %v223 = vld [vmem:[%s206 + $0x4] sm:$0xf]
      %v224 = vld [vmem:[%s206 + $0x8] sm:$0xf]
      %v225 = vld [vmem:[%s206 + $0xc] sm:$0xf]
      %v226 = vld [vmem:[%s206 + $0x10] sm:$0xf]
      %v227 = vld [vmem:[%s206 + $0x14] sm:$0xf]
      %v228 = vld [vmem:[%s206 + $0x18] sm:$0xf]
      %v229 = vld [vmem:[%s206 + $0x1c] sm:$0xf]
      %v230 = vld [vmem:[%s206 + $0x20] sm:$0xf]
      %v231 = vld [vmem:[%s206 + $0x24] sm:$0xf]
      %v232 = vld [vmem:[%s206 + $0x28] sm:$0xf]
      %v233 = vld [vmem:[%s206 + $0x2c] sm:$0xf]
      %v234 = vld [vmem:[%s206 + $0x30] sm:$0xf]
      %v235 = vld [vmem:[%s206 + $0x34] sm:$0xf]
      %v236 = vld [vmem:[%s206 + $0x38] sm:$0xf]
      %v237 = vld [vmem:[%s206 + $0x3c] sm:$0xf]
      %v238 = vld [vmem:[%s206 + $0x40] sm:$0xf]
      %v239 = vld [vmem:[%s206 + $0x44] sm:$0xf]
      %v240 = vld [vmem:[%s206 + $0x48] sm:$0xf]
      %v241 = vld [vmem:[%s206 + $0x4c] sm:$0xf]
      %v242 = vld [vmem:[%s206 + $0x50] sm:$0xf]
      %v243 = vld [vmem:[%s206 + $0x54] sm:$0xf]
      %v244 = vld [vmem:[%s206 + $0x58] sm:$0xf]
      %v245 = vld [vmem:[%s206 + $0x5c] sm:$0xf]
      %v246 = vld [vmem:[%s206 + $0x60] sm:$0xf]
      %v247 = vld [vmem:[%s206 + $0x64] sm:$0xf]
      %v248 = vld [vmem:[%s206 + $0x68] sm:$0xf]
      %v249 = vld [vmem:[%s206 + $0x6c] sm:$0xf]
      %v250 = vld [vmem:[%s206 + $0x70] sm:$0xf]
      %v251 = vld [vmem:[%s206 + $0x74] sm:$0xf]
      %v252 = vld [vmem:[%s206 + $0x78] sm:$0xf]
      %v253 = vld [vmem:[%s206 + $0x7c] sm:$0xf]
      %v254 = vld [vmem:[%s210] sm:$0xf]
      %v255 = vld [vmem:[%s210 + $0x4] sm:$0xf]
      %v256 = vld [vmem:[%s210 + $0x8] sm:$0xf]
      %v257 = vld [vmem:[%s210 + $0xc] sm:$0xf]
      %v258 = vld [vmem:[%s210 + $0x10] sm:$0xf]
      %v259 = vld [vmem:[%s210 + $0x14] sm:$0xf]
      %v260 = vld [vmem:[%s210 + $0x18] sm:$0xf]
      %v261 = vld [vmem:[%s210 + $0x1c] sm:$0xf]
      %v262 = vld [vmem:[%s210 + $0x20] sm:$0xf]
      %v263 = vld [vmem:[%s210 + $0x24] sm:$0xf]
      %v264 = vld [vmem:[%s210 + $0x28] sm:$0xf]
      %v265 = vld [vmem:[%s210 + $0x2c] sm:$0xf]
      %v266 = vld [vmem:[%s210 + $0x30] sm:$0xf]
      %v267 = vld [vmem:[%s210 + $0x34] sm:$0xf]
      %v268 = vld [vmem:[%s210 + $0x38] sm:$0xf]
      %v269 = vld [vmem:[%s210 + $0x3c] sm:$0xf]
      %v302 = vunpack.c.l.b16 %v222
      %v303 = vunpack.c.l.b16 %v223
      %v304 = vunpack.c.l.b16 %v224
      %v305 = vunpack.c.l.b16 %v225
      %v306 = vunpack.c.l.b16 %v226
      %v307 = vunpack.c.l.b16 %v227
      %v308 = vunpack.c.l.b16 %v228
      %v309 = vunpack.c.l.b16 %v229
      %v310 = vunpack.c.l.b16 %v230
      %v311 = vunpack.c.l.b16 %v231
      %v312 = vunpack.c.l.b16 %v232
      %v313 = vunpack.c.l.b16 %v233
      %v314 = vunpack.c.l.b16 %v234
      %v315 = vunpack.c.l.b16 %v235
      %v316 = vunpack.c.l.b16 %v236
      %v317 = vunpack.c.l.b16 %v237
      %v318 = vunpack.c.l.b16 %v238
      %v319 = vunpack.c.l.b16 %v239
      %v320 = vunpack.c.l.b16 %v240
      %v321 = vunpack.c.l.b16 %v241
      %v322 = vunpack.c.l.b16 %v242
      %v323 = vunpack.c.l.b16 %v243
      %v324 = vunpack.c.l.b16 %v244
      %v325 = vunpack.c.l.b16 %v245
      %v326 = vunpack.c.l.b16 %v246
      %v327 = vunpack.c.l.b16 %v247
      %v328 = vunpack.c.l.b16 %v248
      %v329 = vunpack.c.l.b16 %v249
      %v330 = vunpack.c.l.b16 %v250
      %v331 = vunpack.c.l.b16 %v251
      %v332 = vunpack.c.l.b16 %v252
      %v333 = vunpack.c.l.b16 %v253
      %v334 = vpack.c.b16 %v303, %v302
      %v335 = vpack.c.b16 %v305, %v304
      %v336 = vpack.c.b16 %v307, %v306
      %v337 = vpack.c.b16 %v309, %v308
      %v338 = vpack.c.b16 %v311, %v310
      %v339 = vpack.c.b16 %v313, %v312
      %v340 = vpack.c.b16 %v315, %v314
      %v341 = vpack.c.b16 %v317, %v316
      %v342 = vpack.c.b16 %v319, %v318
      %v343 = vpack.c.b16 %v321, %v320
      %v344 = vpack.c.b16 %v323, %v322
      %v345 = vpack.c.b16 %v325, %v324
      %v346 = vpack.c.b16 %v327, %v326
      %v347 = vpack.c.b16 %v329, %v328
      %v348 = vpack.c.b16 %v331, %v330
      %v349 = vpack.c.b16 %v333, %v332
      %v382 = vunpack.c.l.b16 %v254
      %v383 = vunpack.c.l.b16 %v255
      %v384 = vunpack.c.l.b16 %v256
      %v385 = vunpack.c.l.b16 %v257
      %v386 = vunpack.c.l.b16 %v258
      %v387 = vunpack.c.l.b16 %v259
      %v388 = vunpack.c.l.b16 %v260
      %v389 = vunpack.c.l.b16 %v261
      %v390 = vunpack.c.l.b16 %v262
      %v391 = vunpack.c.l.b16 %v263
      %v392 = vunpack.c.l.b16 %v264
      %v393 = vunpack.c.l.b16 %v265
      %v394 = vunpack.c.l.b16 %v266
      %v395 = vunpack.c.l.b16 %v267
      %v396 = vunpack.c.l.b16 %v268
      %v397 = vunpack.c.l.b16 %v269
      %v398 = vpack.c.b16 %v383, %v382
      %v399 = vpack.c.b16 %v385, %v384
      %v400 = vpack.c.b16 %v387, %v386
      %v401 = vpack.c.b16 %v389, %v388
      %v402 = vpack.c.b16 %v391, %v390
      %v403 = vpack.c.b16 %v393, %v392
      %v404 = vpack.c.b16 %v395, %v394
      %v405 = vpack.c.b16 %v397, %v396
      %414 = vmatpush.bf16.msra.mxu0 %v405
      %415 = vmatpush.bf16.msra.mxu0 %v404
      %416 = vmatpush.bf16.msra.mxu0 %v403
      %417 = vmatpush.bf16.msra.mxu0 %v402
      %418 = vmatpush.bf16.msra.mxu0 %v401
      %419 = vmatpush.bf16.msra.mxu0 %v400
      %420 = vmatpush.bf16.msra.mxu0 %v399
      %421 = vmatpush.bf16.msra.mxu0 %v398
      %422 = vmatmul.bf16.gmra.mxu0 %v334
      %v423 = vpop.f32.mrf.mxu0
      %v424 = vadd.f32 0.0, %v423
      %v425 = vpop.f32.mrf.mxu0
      %v426 = vadd.f32 0.0, %v425
      %427 = vmatmul.bf16.gmra.mxu0 %v335
      %v428 = vpop.f32.mrf.mxu0
      %v429 = vadd.f32 0.0, %v428
      %v430 = vpop.f32.mrf.mxu0
      %v431 = vadd.f32 0.0, %v430
      %432 = vmatmul.bf16.gmra.mxu0 %v336
      %v433 = vpop.f32.mrf.mxu0
      %v434 = vadd.f32 0.0, %v433
      %v435 = vpop.f32.mrf.mxu0
      %v436 = vadd.f32 0.0, %v435
      %437 = vmatmul.bf16.gmra.mxu0 %v337
      %v438 = vpop.f32.mrf.mxu0
      %v439 = vadd.f32 0.0, %v438
      %v440 = vpop.f32.mrf.mxu0
      %v441 = vadd.f32 0.0, %v440
      %442 = vmatmul.bf16.gmra.mxu0 %v338
      %v443 = vpop.f32.mrf.mxu0
      %v444 = vadd.f32 0.0, %v443
      %v445 = vpop.f32.mrf.mxu0
      %v446 = vadd.f32 0.0, %v445
      %447 = vmatmul.bf16.gmra.mxu0 %v339
      %v448 = vpop.f32.mrf.mxu0
      %v449 = vadd.f32 0.0, %v448
      %v450 = vpop.f32.mrf.mxu0
      %v451 = vadd.f32 0.0, %v450
      %452 = vmatmul.bf16.gmra.mxu0 %v340
      %v453 = vpop.f32.mrf.mxu0
      %v454 = vadd.f32 0.0, %v453
      %v455 = vpop.f32.mrf.mxu0
      %v456 = vadd.f32 0.0, %v455
      %457 = vmatmul.bf16.gmra.mxu0 %v341
      %v458 = vpop.f32.mrf.mxu0
      %v459 = vadd.f32 0.0, %v458
      %v460 = vpop.f32.mrf.mxu0
      %v461 = vadd.f32 0.0, %v460
      %462 = vmatmul.bf16.gmra.mxu0 %v342
      %v463 = vpop.f32.mrf.mxu0
      %v464 = vadd.f32 0.0, %v463
      %v465 = vpop.f32.mrf.mxu0
      %v466 = vadd.f32 0.0, %v465
      %467 = vmatmul.bf16.gmra.mxu0 %v343
      %v468 = vpop.f32.mrf.mxu0
      %v469 = vadd.f32 0.0, %v468
      %v470 = vpop.f32.mrf.mxu0
      %v471 = vadd.f32 0.0, %v470
      %472 = vmatmul.bf16.gmra.mxu0 %v344
      %v473 = vpop.f32.mrf.mxu0
      %v474 = vadd.f32 0.0, %v473
      %v475 = vpop.f32.mrf.mxu0
      %v476 = vadd.f32 0.0, %v475
      %477 = vmatmul.bf16.gmra.mxu0 %v345
      %v478 = vpop.f32.mrf.mxu0
      %v479 = vadd.f32 0.0, %v478
      %v480 = vpop.f32.mrf.mxu0
      %v481 = vadd.f32 0.0, %v480
      %482 = vmatmul.bf16.gmra.mxu0 %v346
      %v483 = vpop.f32.mrf.mxu0
      %v484 = vadd.f32 0.0, %v483
      %v485 = vpop.f32.mrf.mxu0
      %v486 = vadd.f32 0.0, %v485
      %487 = vmatmul.bf16.gmra.mxu0 %v347
      %v488 = vpop.f32.mrf.mxu0
      %v489 = vadd.f32 0.0, %v488
      %v490 = vpop.f32.mrf.mxu0
      %v491 = vadd.f32 0.0, %v490
      %492 = vmatmul.bf16.gmra.mxu0 %v348
      %v493 = vpop.f32.mrf.mxu0
      %v494 = vadd.f32 0.0, %v493
      %v495 = vpop.f32.mrf.mxu0
      %v496 = vadd.f32 0.0, %v495
      %497 = vmatmul.bf16.gmra.mxu0 %v349
      %v498 = vpop.f32.mrf.mxu0
      %v499 = vadd.f32 0.0, %v498
      %v500 = vpop.f32.mrf.mxu0
      %v501 = vadd.f32 0.0, %v500
      %502 = vdwg.mxu0
      %503 = vst [vmem:[#allocation2] sm:$0xff] %v424
      %504 = vst [vmem:[#allocation2 + $0x8] sm:$0xff] %v426
      %505 = vst [vmem:[#allocation2 + $0x10] sm:$0xff] %v429
      %506 = vst [vmem:[#allocation2 + $0x18] sm:$0xff] %v431
      %507 = vst [vmem:[#allocation2 + $0x20] sm:$0xff] %v434
      %508 = vst [vmem:[#allocation2 + $0x28] sm:$0xff] %v436
      %509 = vst [vmem:[#allocation2 + $0x30] sm:$0xff] %v439
      %510 = vst [vmem:[#allocation2 + $0x38] sm:$0xff] %v441
      %511 = vst [vmem:[#allocation2 + $0x40] sm:$0xff] %v444
      %512 = vst [vmem:[#allocation2 + $0x48] sm:$0xff] %v446
      %513 = vst [vmem:[#allocation2 + $0x50] sm:$0xff] %v449
      %514 = vst [vmem:[#allocation2 + $0x58] sm:$0xff] %v451
      %515 = vst [vmem:[#allocation2 + $0x60] sm:$0xff] %v454
      %516 = vst [vmem:[#allocation2 + $0x68] sm:$0xff] %v456
      %517 = vst [vmem:[#allocation2 + $0x70] sm:$0xff] %v459
      %518 = vst [vmem:[#allocation2 + $0x78] sm:$0xff] %v461
      %519 = vst [vmem:[#allocation2 + $0x80] sm:$0xff] %v464
      %520 = vst [vmem:[#allocation2 + $0x88] sm:$0xff] %v466
      %521 = vst [vmem:[#allocation2 + $0x90] sm:$0xff] %v469
      %522 = vst [vmem:[#allocation2 + $0x98] sm:$0xff] %v471
      %523 = vst [vmem:[#allocation2 + $0xa0] sm:$0xff] %v474
      %524 = vst [vmem:[#allocation2 + $0xa8] sm:$0xff] %v476
      %525 = vst [vmem:[#allocation2 + $0xb0] sm:$0xff] %v479
      %526 = vst [vmem:[#allocation2 + $0xb8] sm:$0xff] %v481
      %527 = vst [vmem:[#allocation2 + $0xc0] sm:$0xff] %v484
      %528 = vst [vmem:[#allocation2 + $0xc8] sm:$0xff] %v486
      %529 = vst [vmem:[#allocation2 + $0xd0] sm:$0xff] %v489
      %530 = vst [vmem:[#allocation2 + $0xd8] sm:$0xff] %v491
      %531 = vst [vmem:[#allocation2 + $0xe0] sm:$0xff] %v494
      %532 = vst [vmem:[#allocation2 + $0xe8] sm:$0xff] %v496
      %533 = vst [vmem:[#allocation2 + $0xf0] sm:$0xff] %v499
      %534 = vst [vmem:[#allocation2 + $0xf8] sm:$0xff] %v501
      %v535 = vld [vmem:[%s206 + $0x8] sm:$0xf]
      %v536 = vld [vmem:[%s206 + $0xc] sm:$0xf]
      %v537 = vld [vmem:[%s206 + $0x10] sm:$0xf]
      %v538 = vld [vmem:[%s206 + $0x14] sm:$0xf]
      %v539 = vld [vmem:[%s206 + $0x18] sm:$0xf]
      %v540 = vld [vmem:[%s206 + $0x1c] sm:$0xf]
      %v541 = vld [vmem:[%s206 + $0x20] sm:$0xf]
      %v542 = vld [vmem:[%s206 + $0x24] sm:$0xf]
      %v543 = vld [vmem:[%s206 + $0x28] sm:$0xf]
      %v544 = vld [vmem:[%s206 + $0x2c] sm:$0xf]
      %v545 = vld [vmem:[%s206 + $0x30] sm:$0xf]
      %v546 = vld [vmem:[%s206 + $0x34] sm:$0xf]
      %v547 = vld [vmem:[%s206 + $0x38] sm:$0xf]
      %v548 = vld [vmem:[%s206 + $0x3c] sm:$0xf]
      %v549 = vld [vmem:[%s206 + $0x40] sm:$0xf]
      %v550 = vld [vmem:[%s206 + $0x44] sm:$0xf]
      %v551 = vld [vmem:[%s206 + $0x48] sm:$0xf]
      %v552 = vld [vmem:[%s206 + $0x4c] sm:$0xf]
      %v553 = vld [vmem:[%s206 + $0x50] sm:$0xf]
      %v554 = vld [vmem:[%s206 + $0x54] sm:$0xf]
      %v555 = vld [vmem:[%s206 + $0x58] sm:$0xf]
      %v556 = vld [vmem:[%s206 + $0x5c] sm:$0xf]
      %v557 = vld [vmem:[%s206 + $0x60] sm:$0xf]
      %v558 = vld [vmem:[%s206 + $0x64] sm:$0xf]
      %v559 = vld [vmem:[%s206 + $0x68] sm:$0xf]
      %v560 = vld [vmem:[%s206 + $0x6c] sm:$0xf]
      %v561 = vld [vmem:[%s206 + $0x70] sm:$0xf]
      %v562 = vld [vmem:[%s206 + $0x74] sm:$0xf]
      %v563 = vld [vmem:[%s206 + $0x78] sm:$0xf]
      %v564 = vld [vmem:[%s206 + $0x7c] sm:$0xf]
      %v565 = vld [vmem:[%s206 + $0x80] sm:$0xf]
      %v566 = vld [vmem:[%s206 + $0x84] sm:$0xf]
      %s567 = scalar_lea.vmem %s210, 64
      %v568 = vld [vmem:[%s567] sm:$0xf]
      %v569 = vld [vmem:[%s567 + $0x4] sm:$0xf]
      %v570 = vld [vmem:[%s567 + $0x8] sm:$0xf]
      %v571 = vld [vmem:[%s567 + $0xc] sm:$0xf]
      %v572 = vld [vmem:[%s567 + $0x10] sm:$0xf]
      %v573 = vld [vmem:[%s567 + $0x14] sm:$0xf]
      %v574 = vld [vmem:[%s567 + $0x18] sm:$0xf]
      %v575 = vld [vmem:[%s567 + $0x1c] sm:$0xf]
      %v576 = vld [vmem:[%s567 + $0x20] sm:$0xf]
      %v577 = vld [vmem:[%s567 + $0x24] sm:$0xf]
      %v578 = vld [vmem:[%s567 + $0x28] sm:$0xf]
      %v579 = vld [vmem:[%s567 + $0x2c] sm:$0xf]
      %v580 = vld [vmem:[%s567 + $0x30] sm:$0xf]
      %v581 = vld [vmem:[%s567 + $0x34] sm:$0xf]
      %v582 = vld [vmem:[%s567 + $0x38] sm:$0xf]
      %v583 = vld [vmem:[%s567 + $0x3c] sm:$0xf]
      %v616 = vunpack.c.l.b16 %v535
      %v617 = vunpack.c.l.b16 %v536
      %v618 = vunpack.c.l.b16 %v537
      %v619 = vunpack.c.l.b16 %v538
      %v620 = vunpack.c.l.b16 %v539
      %v621 = vunpack.c.l.b16 %v540
      %v622 = vunpack.c.l.b16 %v541
      %v623 = vunpack.c.l.b16 %v542
      %v624 = vunpack.c.l.b16 %v543
      %v625 = vunpack.c.l.b16 %v544
      %v626 = vunpack.c.l.b16 %v545
      %v627 = vunpack.c.l.b16 %v546
      %v628 = vunpack.c.l.b16 %v547
      %v629 = vunpack.c.l.b16 %v548
      %v630 = vunpack.c.l.b16 %v549
      %v631 = vunpack.c.l.b16 %v550
      %v632 = vunpack.c.l.b16 %v551
      %v633 = vunpack.c.l.b16 %v552
      %v634 = vunpack.c.l.b16 %v553
      %v635 = vunpack.c.l.b16 %v554
      %v636 = vunpack.c.l.b16 %v555
      %v637 = vunpack.c.l.b16 %v556
      %v638 = vunpack.c.l.b16 %v557
      %v639 = vunpack.c.l.b16 %v558
      %v640 = vunpack.c.l.b16 %v559
      %v641 = vunpack.c.l.b16 %v560
      %v642 = vunpack.c.l.b16 %v561
      %v643 = vunpack.c.l.b16 %v562
      %v644 = vunpack.c.l.b16 %v563
      %v645 = vunpack.c.l.b16 %v564
      %v646 = vunpack.c.l.b16 %v565
      %v647 = vunpack.c.l.b16 %v566
      %v648 = vpack.c.b16 %v617, %v616
      %v649 = vpack.c.b16 %v619, %v618
      %v650 = vpack.c.b16 %v621, %v620
      %v651 = vpack.c.b16 %v623, %v622
      %v652 = vpack.c.b16 %v625, %v624
      %v653 = vpack.c.b16 %v627, %v626
      %v654 = vpack.c.b16 %v629, %v628
      %v655 = vpack.c.b16 %v631, %v630
      %v656 = vpack.c.b16 %v633, %v632
      %v657 = vpack.c.b16 %v635, %v634
      %v658 = vpack.c.b16 %v637, %v636
      %v659 = vpack.c.b16 %v639, %v638
      %v660 = vpack.c.b16 %v641, %v640
      %v661 = vpack.c.b16 %v643, %v642
      %v662 = vpack.c.b16 %v645, %v644
      %v663 = vpack.c.b16 %v647, %v646
      %v696 = vunpack.c.l.b16 %v568
      %v697 = vunpack.c.l.b16 %v569
      %v698 = vunpack.c.l.b16 %v570
      %v699 = vunpack.c.l.b16 %v571
      %v700 = vunpack.c.l.b16 %v572
      %v701 = vunpack.c.l.b16 %v573
      %v702 = vunpack.c.l.b16 %v574
      %v703 = vunpack.c.l.b16 %v575
      %v704 = vunpack.c.l.b16 %v576
      %v705 = vunpack.c.l.b16 %v577
      %v706 = vunpack.c.l.b16 %v578
      %v707 = vunpack.c.l.b16 %v579
      %v708 = vunpack.c.l.b16 %v580
      %v709 = vunpack.c.l.b16 %v581
      %v710 = vunpack.c.l.b16 %v582
      %v711 = vunpack.c.l.b16 %v583
      %v712 = vpack.c.b16 %v697, %v696
      %v713 = vpack.c.b16 %v699, %v698
      %v714 = vpack.c.b16 %v701, %v700
      %v715 = vpack.c.b16 %v703, %v702
      %v716 = vpack.c.b16 %v705, %v704
      %v717 = vpack.c.b16 %v707, %v706
      %v718 = vpack.c.b16 %v709, %v708
      %v719 = vpack.c.b16 %v711, %v710
      %728 = vmatpush.bf16.msra.mxu0 %v719
      %729 = vmatpush.bf16.msra.mxu0 %v718
      %730 = vmatpush.bf16.msra.mxu0 %v717
      %731 = vmatpush.bf16.msra.mxu0 %v716
      %732 = vmatpush.bf16.msra.mxu0 %v715
      %733 = vmatpush.bf16.msra.mxu0 %v714
      %734 = vmatpush.bf16.msra.mxu0 %v713
      %735 = vmatpush.bf16.msra.mxu0 %v712
      %736 = vmatmul.bf16.gmra.mxu0 %v648
      %v737 = vpop.f32.mrf.mxu0
      %v738 = vadd.f32 0.0, %v737
      %v739 = vpop.f32.mrf.mxu0
      %v740 = vadd.f32 0.0, %v739
      %741 = vmatmul.bf16.gmra.mxu0 %v649
      %v742 = vpop.f32.mrf.mxu0
      %v743 = vadd.f32 0.0, %v742
      %v744 = vpop.f32.mrf.mxu0
      %v745 = vadd.f32 0.0, %v744
      %746 = vmatmul.bf16.gmra.mxu0 %v650
      %v747 = vpop.f32.mrf.mxu0
      %v748 = vadd.f32 0.0, %v747
      %v749 = vpop.f32.mrf.mxu0
      %v750 = vadd.f32 0.0, %v749
      %751 = vmatmul.bf16.gmra.mxu0 %v651
      %v752 = vpop.f32.mrf.mxu0
      %v753 = vadd.f32 0.0, %v752
      %v754 = vpop.f32.mrf.mxu0
      %v755 = vadd.f32 0.0, %v754
      %756 = vmatmul.bf16.gmra.mxu0 %v652
      %v757 = vpop.f32.mrf.mxu0
      %v758 = vadd.f32 0.0, %v757
      %v759 = vpop.f32.mrf.mxu0
      %v760 = vadd.f32 0.0, %v759
      %761 = vmatmul.bf16.gmra.mxu0 %v653
      %v762 = vpop.f32.mrf.mxu0
      %v763 = vadd.f32 0.0, %v762
      %v764 = vpop.f32.mrf.mxu0
      %v765 = vadd.f32 0.0, %v764
      %766 = vmatmul.bf16.gmra.mxu0 %v654
      %v767 = vpop.f32.mrf.mxu0
      %v768 = vadd.f32 0.0, %v767
      %v769 = vpop.f32.mrf.mxu0
      %v770 = vadd.f32 0.0, %v769
      %771 = vmatmul.bf16.gmra.mxu0 %v655
      %v772 = vpop.f32.mrf.mxu0
      %v773 = vadd.f32 0.0, %v772
      %v774 = vpop.f32.mrf.mxu0
      %v775 = vadd.f32 0.0, %v774
      %776 = vmatmul.bf16.gmra.mxu0 %v656
      %v777 = vpop.f32.mrf.mxu0
      %v778 = vadd.f32 0.0, %v777
      %v779 = vpop.f32.mrf.mxu0
      %v780 = vadd.f32 0.0, %v779
      %781 = vmatmul.bf16.gmra.mxu0 %v657
      %v782 = vpop.f32.mrf.mxu0
      %v783 = vadd.f32 0.0, %v782
      %v784 = vpop.f32.mrf.mxu0
      %v785 = vadd.f32 0.0, %v784
      %786 = vmatmul.bf16.gmra.mxu0 %v658
      %v787 = vpop.f32.mrf.mxu0
      %v788 = vadd.f32 0.0, %v787
      %v789 = vpop.f32.mrf.mxu0
      %v790 = vadd.f32 0.0, %v789
      %791 = vmatmul.bf16.gmra.mxu0 %v659
      %v792 = vpop.f32.mrf.mxu0
      %v793 = vadd.f32 0.0, %v792
      %v794 = vpop.f32.mrf.mxu0
      %v795 = vadd.f32 0.0, %v794
      %796 = vmatmul.bf16.gmra.mxu0 %v660
      %v797 = vpop.f32.mrf.mxu0
      %v798 = vadd.f32 0.0, %v797
      %v799 = vpop.f32.mrf.mxu0
      %v800 = vadd.f32 0.0, %v799
      %801 = vmatmul.bf16.gmra.mxu0 %v661
      %v802 = vpop.f32.mrf.mxu0
      %v803 = vadd.f32 0.0, %v802
      %v804 = vpop.f32.mrf.mxu0
      %v805 = vadd.f32 0.0, %v804
      %806 = vmatmul.bf16.gmra.mxu0 %v662
      %v807 = vpop.f32.mrf.mxu0
      %v808 = vadd.f32 0.0, %v807
      %v809 = vpop.f32.mrf.mxu0
      %v810 = vadd.f32 0.0, %v809
      %811 = vmatmul.bf16.gmra.mxu0 %v663
      %v812 = vpop.f32.mrf.mxu0
      %v813 = vadd.f32 0.0, %v812
      %v814 = vpop.f32.mrf.mxu0
      %v815 = vadd.f32 0.0, %v814
      %816 = vdwg.mxu0
      %v817 = vld [vmem:[#allocation2] sm:$0xff]
      %v818 = vld [vmem:[#allocation2 + $0x8] sm:$0xff]
      %v819 = vld [vmem:[#allocation2 + $0x10] sm:$0xff]
      %v820 = vld [vmem:[#allocation2 + $0x18] sm:$0xff]
      %v821 = vld [vmem:[#allocation2 + $0x20] sm:$0xff]
      %v822 = vld [vmem:[#allocation2 + $0x28] sm:$0xff]
      %v823 = vld [vmem:[#allocation2 + $0x30] sm:$0xff]
      %v824 = vld [vmem:[#allocation2 + $0x38] sm:$0xff]
      %v825 = vld [vmem:[#allocation2 + $0x40] sm:$0xff]
      %v826 = vld [vmem:[#allocation2 + $0x48] sm:$0xff]
      %v827 = vld [vmem:[#allocation2 + $0x50] sm:$0xff]
      %v828 = vld [vmem:[#allocation2 + $0x58] sm:$0xff]
      %v829 = vld [vmem:[#allocation2 + $0x60] sm:$0xff]
      %v830 = vld [vmem:[#allocation2 + $0x68] sm:$0xff]
      %v831 = vld [vmem:[#allocation2 + $0x70] sm:$0xff]
      %v832 = vld [vmem:[#allocation2 + $0x78] sm:$0xff]
      %v833 = vld [vmem:[#allocation2 + $0x80] sm:$0xff]
      %v834 = vld [vmem:[#allocation2 + $0x88] sm:$0xff]
      %v835 = vld [vmem:[#allocation2 + $0x90] sm:$0xff]
      %v836 = vld [vmem:[#allocation2 + $0x98] sm:$0xff]
      %v837 = vld [vmem:[#allocation2 + $0xa0] sm:$0xff]
      %v838 = vld [vmem:[#allocation2 + $0xa8] sm:$0xff]
      %v839 = vld [vmem:[#allocation2 + $0xb0] sm:$0xff]
      %v840 = vld [vmem:[#allocation2 + $0xb8] sm:$0xff]
      %v841 = vld [vmem:[#allocation2 + $0xc0] sm:$0xff]
      %v842 = vld [vmem:[#allocation2 + $0xc8] sm:$0xff]
      %v843 = vld [vmem:[#allocation2 + $0xd0] sm:$0xff]
      %v844 = vld [vmem:[#allocation2 + $0xd8] sm:$0xff]
      %v845 = vld [vmem:[#allocation2 + $0xe0] sm:$0xff]
      %v846 = vld [vmem:[#allocation2 + $0xe8] sm:$0xff]
      %v847 = vld [vmem:[#allocation2 + $0xf0] sm:$0xff]
      %v848 = vld [vmem:[#allocation2 + $0xf8] sm:$0xff]
      %v849 = vadd.f32 %v817, %v738
      %v850 = vadd.f32 %v818, %v740
      %v851 = vadd.f32 %v819, %v743
      %v852 = vadd.f32 %v820, %v745
      %v853 = vadd.f32 %v821, %v748
      %v854 = vadd.f32 %v822, %v750
      %v855 = vadd.f32 %v823, %v753
      %v856 = vadd.f32 %v824, %v755
      %v857 = vadd.f32 %v825, %v758
      %v858 = vadd.f32 %v826, %v760
      %v859 = vadd.f32 %v827, %v763
      %v860 = vadd.f32 %v828, %v765
      %v861 = vadd.f32 %v829, %v768
      %v862 = vadd.f32 %v830, %v770
      %v863 = vadd.f32 %v831, %v773
      %v864 = vadd.f32 %v832, %v775
      %v865 = vadd.f32 %v833, %v778
      %v866 = vadd.f32 %v834, %v780
      %v867 = vadd.f32 %v835, %v783
      %v868 = vadd.f32 %v836, %v785
      %v869 = vadd.f32 %v837, %v788
      %v870 = vadd.f32 %v838, %v790
      %v871 = vadd.f32 %v839, %v793
      %v872 = vadd.f32 %v840, %v795
      %v873 = vadd.f32 %v841, %v798
      %v874 = vadd.f32 %v842, %v800
      %v875 = vadd.f32 %v843, %v803
      %v876 = vadd.f32 %v844, %v805
      %v877 = vadd.f32 %v845, %v808
      %v878 = vadd.f32 %v846, %v810
      %v879 = vadd.f32 %v847, %v813
      %v880 = vadd.f32 %v848, %v815
      %881 = vst [vmem:[#allocation2] sm:$0xff] %v849
      %882 = vst [vmem:[#allocation2 + $0x8] sm:$0xff] %v850
      %883 = vst [vmem:[#allocation2 + $0x10] sm:$0xff] %v851
      %884 = vst [vmem:[#allocation2 + $0x18] sm:$0xff] %v852
      %885 = vst [vmem:[#allocation2 + $0x20] sm:$0xff] %v853
      %886 = vst [vmem:[#allocation2 + $0x28] sm:$0xff] %v854
      %887 = vst [vmem:[#allocation2 + $0x30] sm:$0xff] %v855
      %888 = vst [vmem:[#allocation2 + $0x38] sm:$0xff] %v856
      %889 = vst [vmem:[#allocation2 + $0x40] sm:$0xff] %v857
      %890 = vst [vmem:[#allocation2 + $0x48] sm:$0xff] %v858
      %891 = vst [vmem:[#allocation2 + $0x50] sm:$0xff] %v859
      %892 = vst [vmem:[#allocation2 + $0x58] sm:$0xff] %v860
      %893 = vst [vmem:[#allocation2 + $0x60] sm:$0xff] %v861
      %894 = vst [vmem:[#allocation2 + $0x68] sm:$0xff] %v862
      %895 = vst [vmem:[#allocation2 + $0x70] sm:$0xff] %v863
      %896 = vst [vmem:[#allocation2 + $0x78] sm:$0xff] %v864
      %897 = vst [vmem:[#allocation2 + $0x80] sm:$0xff] %v865
      %898 = vst [vmem:[#allocation2 + $0x88] sm:$0xff] %v866
      %899 = vst [vmem:[#allocation2 + $0x90] sm:$0xff] %v867
      %900 = vst [vmem:[#allocation2 + $0x98] sm:$0xff] %v868
      %901 = vst [vmem:[#allocation2 + $0xa0] sm:$0xff] %v869
      %902 = vst [vmem:[#allocation2 + $0xa8] sm:$0xff] %v870
      %903 = vst [vmem:[#allocation2 + $0xb0] sm:$0xff] %v871
      %904 = vst [vmem:[#allocation2 + $0xb8] sm:$0xff] %v872
      %905 = vst [vmem:[#allocation2 + $0xc0] sm:$0xff] %v873
      %906 = vst [vmem:[#allocation2 + $0xc8] sm:$0xff] %v874
      %907 = vst [vmem:[#allocation2 + $0xd0] sm:$0xff] %v875
      %908 = vst [vmem:[#allocation2 + $0xd8] sm:$0xff] %v876
      %909 = vst [vmem:[#allocation2 + $0xe0] sm:$0xff] %v877
      %910 = vst [vmem:[#allocation2 + $0xe8] sm:$0xff] %v878
      %911 = vst [vmem:[#allocation2 + $0xf0] sm:$0xff] %v879
      %912 = vst [vmem:[#allocation2 + $0xf8] sm:$0xff] %v880
      %v913 = vld [vmem:[%s206 + $0x10] sm:$0xf]
      %v914 = vld [vmem:[%s206 + $0x14] sm:$0xf]
      %v915 = vld [vmem:[%s206 + $0x18] sm:$0xf]
      %v916 = vld [vmem:[%s206 + $0x1c] sm:$0xf]
      %v917 = vld [vmem:[%s206 + $0x20] sm:$0xf]
      %v918 = vld [vmem:[%s206 + $0x24] sm:$0xf]
      %v919 = vld [vmem:[%s206 + $0x28] sm:$0xf]
      %v920 = vld [vmem:[%s206 + $0x2c] sm:$0xf]
      %v921 = vld [vmem:[%s206 + $0x30] sm:$0xf]
      %v922 = vld [vmem:[%s206 + $0x34] sm:$0xf]
      %v923 = vld [vmem:[%s206 + $0x38] sm:$0xf]
      %v924 = vld [vmem:[%s206 + $0x3c] sm:$0xf]
      %v925 = vld [vmem:[%s206 + $0x40] sm:$0xf]
      %v926 = vld [vmem:[%s206 + $0x44] sm:$0xf]
      %v927 = vld [vmem:[%s206 + $0x48] sm:$0xf]
      %v928 = vld [vmem:[%s206 + $0x4c] sm:$0xf]
      %v929 = vld [vmem:[%s206 + $0x50] sm:$0xf]
      %v930 = vld [vmem:[%s206 + $0x54] sm:$0xf]
      %v931 = vld [vmem:[%s206 + $0x58] sm:$0xf]
      %v932 = vld [vmem:[%s206 + $0x5c] sm:$0xf]
      %v933 = vld [vmem:[%s206 + $0x60] sm:$0xf]
      %v934 = vld [vmem:[%s206 + $0x64] sm:$0xf]
      %v935 = vld [vmem:[%s206 + $0x68] sm:$0xf]
      %v936 = vld [vmem:[%s206 + $0x6c] sm:$0xf]
      %v937 = vld [vmem:[%s206 + $0x70] sm:$0xf]
      %v938 = vld [vmem:[%s206 + $0x74] sm:$0xf]
      %v939 = vld [vmem:[%s206 + $0x78] sm:$0xf]
      %v940 = vld [vmem:[%s206 + $0x7c] sm:$0xf]
      %v941 = vld [vmem:[%s206 + $0x80] sm:$0xf]
      %v942 = vld [vmem:[%s206 + $0x84] sm:$0xf]
      %v943 = vld [vmem:[%s206 + $0x88] sm:$0xf]
      %v944 = vld [vmem:[%s206 + $0x8c] sm:$0xf]
      %s945 = scalar_lea.vmem %s210, 128
      %v946 = vld [vmem:[%s945] sm:$0xf]
      %v947 = vld [vmem:[%s945 + $0x4] sm:$0xf]
      %v948 = vld [vmem:[%s945 + $0x8] sm:$0xf]
      %v949 = vld [vmem:[%s945 + $0xc] sm:$0xf]
      %v950 = vld [vmem:[%s945 + $0x10] sm:$0xf]
      %v951 = vld [vmem:[%s945 + $0x14] sm:$0xf]
      %v952 = vld [vmem:[%s945 + $0x18] sm:$0xf]
      %v953 = vld [vmem:[%s945 + $0x1c] sm:$0xf]
      %v954 = vld [vmem:[%s945 + $0x20] sm:$0xf]
      %v955 = vld [vmem:[%s945 + $0x24] sm:$0xf]
      %v956 = vld [vmem:[%s945 + $0x28] sm:$0xf]
      %v957 = vld [vmem:[%s945 + $0x2c] sm:$0xf]
      %v958 = vld [vmem:[%s945 + $0x30] sm:$0xf]
      %v959 = vld [vmem:[%s945 + $0x34] sm:$0xf]
      %v960 = vld [vmem:[%s945 + $0x38] sm:$0xf]
      %v961 = vld [vmem:[%s945 + $0x3c] sm:$0xf]
      %v994 = vunpack.c.l.b16 %v913
      %v995 = vunpack.c.l.b16 %v914
      %v996 = vunpack.c.l.b16 %v915
      %v997 = vunpack.c.l.b16 %v916
      %v998 = vunpack.c.l.b16 %v917
      %v999 = vunpack.c.l.b16 %v918
      %v1000 = vunpack.c.l.b16 %v919
      %v1001 = vunpack.c.l.b16 %v920
      %v1002 = vunpack.c.l.b16 %v921
      %v1003 = vunpack.c.l.b16 %v922
      %v1004 = vunpack.c.l.b16 %v923
      %v1005 = vunpack.c.l.b16 %v924
      %v1006 = vunpack.c.l.b16 %v925
      %v1007 = vunpack.c.l.b16 %v926
      %v1008 = vunpack.c.l.b16 %v927
      %v1009 = vunpack.c.l.b16 %v928
      %v1010 = vunpack.c.l.b16 %v929
      %v1011 = vunpack.c.l.b16 %v930
      %v1012 = vunpack.c.l.b16 %v931
      %v1013 = vunpack.c.l.b16 %v932
      %v1014 = vunpack.c.l.b16 %v933
      %v1015 = vunpack.c.l.b16 %v934
      %v1016 = vunpack.c.l.b16 %v935
      %v1017 = vunpack.c.l.b16 %v936
      %v1018 = vunpack.c.l.b16 %v937
      %v1019 = vunpack.c.l.b16 %v938
      %v1020 = vunpack.c.l.b16 %v939
      %v1021 = vunpack.c.l.b16 %v940
      %v1022 = vunpack.c.l.b16 %v941
      %v1023 = vunpack.c.l.b16 %v942
      %v1024 = vunpack.c.l.b16 %v943
      %v1025 = vunpack.c.l.b16 %v944
      %v1026 = vpack.c.b16 %v995, %v994
      %v1027 = vpack.c.b16 %v997, %v996
      %v1028 = vpack.c.b16 %v999, %v998
      %v1029 = vpack.c.b16 %v1001, %v1000
      %v1030 = vpack.c.b16 %v1003, %v1002
      %v1031 = vpack.c.b16 %v1005, %v1004
      %v1032 = vpack.c.b16 %v1007, %v1006
      %v1033 = vpack.c.b16 %v1009, %v1008
      %v1034 = vpack.c.b16 %v1011, %v1010
      %v1035 = vpack.c.b16 %v1013, %v1012
      %v1036 = vpack.c.b16 %v1015, %v1014
      %v1037 = vpack.c.b16 %v1017, %v1016
      %v1038 = vpack.c.b16 %v1019, %v1018
      %v1039 = vpack.c.b16 %v1021, %v1020
      %v1040 = vpack.c.b16 %v1023, %v1022
      %v1041 = vpack.c.b16 %v1025, %v1024
      %v1074 = vunpack.c.l.b16 %v946
      %v1075 = vunpack.c.l.b16 %v947
      %v1076 = vunpack.c.l.b16 %v948
      %v1077 = vunpack.c.l.b16 %v949
      %v1078 = vunpack.c.l.b16 %v950
      %v1079 = vunpack.c.l.b16 %v951
      %v1080 = vunpack.c.l.b16 %v952
      %v1081 = vunpack.c.l.b16 %v953
      %v1082 = vunpack.c.l.b16 %v954
      %v1083 = vunpack.c.l.b16 %v955
      %v1084 = vunpack.c.l.b16 %v956
      %v1085 = vunpack.c.l.b16 %v957
      %v1086 = vunpack.c.l.b16 %v958
      %v1087 = vunpack.c.l.b16 %v959
      %v1088 = vunpack.c.l.b16 %v960
      %v1089 = vunpack.c.l.b16 %v961
      %v1090 = vpack.c.b16 %v1075, %v1074
      %v1091 = vpack.c.b16 %v1077, %v1076
      %v1092 = vpack.c.b16 %v1079, %v1078
      %v1093 = vpack.c.b16 %v1081, %v1080
      %v1094 = vpack.c.b16 %v1083, %v1082
      %v1095 = vpack.c.b16 %v1085, %v1084
      %v1096 = vpack.c.b16 %v1087, %v1086
      %v1097 = vpack.c.b16 %v1089, %v1088
      %1106 = vmatpush.bf16.msra.mxu0 %v1097
      %1107 = vmatpush.bf16.msra.mxu0 %v1096
      %1108 = vmatpush.bf16.msra.mxu0 %v1095
      %1109 = vmatpush.bf16.msra.mxu0 %v1094
      %1110 = vmatpush.bf16.msra.mxu0 %v1093
      %1111 = vmatpush.bf16.msra.mxu0 %v1092
      %1112 = vmatpush.bf16.msra.mxu0 %v1091
      %1113 = vmatpush.bf16.msra.mxu0 %v1090
      %1114 = vmatmul.bf16.gmra.mxu0 %v1026
      %v1115 = vpop.f32.mrf.mxu0
      %v1116 = vadd.f32 0.0, %v1115
      %v1117 = vpop.f32.mrf.mxu0
      %v1118 = vadd.f32 0.0, %v1117
      %1119 = vmatmul.bf16.gmra.mxu0 %v1027
      %v1120 = vpop.f32.mrf.mxu0
      %v1121 = vadd.f32 0.0, %v1120
      %v1122 = vpop.f32.mrf.mxu0
      %v1123 = vadd.f32 0.0, %v1122
      %1124 = vmatmul.bf16.gmra.mxu0 %v1028
      %v1125 = vpop.f32.mrf.mxu0
      %v1126 = vadd.f32 0.0, %v1125
      %v1127 = vpop.f32.mrf.mxu0
      %v1128 = vadd.f32 0.0, %v1127
      %1129 = vmatmul.bf16.gmra.mxu0 %v1029
      %v1130 = vpop.f32.mrf.mxu0
      %v1131 = vadd.f32 0.0, %v1130
      %v1132 = vpop.f32.mrf.mxu0
      %v1133 = vadd.f32 0.0, %v1132
      %1134 = vmatmul.bf16.gmra.mxu0 %v1030
      %v1135 = vpop.f32.mrf.mxu0
      %v1136 = vadd.f32 0.0, %v1135
      %v1137 = vpop.f32.mrf.mxu0
      %v1138 = vadd.f32 0.0, %v1137
      %1139 = vmatmul.bf16.gmra.mxu0 %v1031
      %v1140 = vpop.f32.mrf.mxu0
      %v1141 = vadd.f32 0.0, %v1140
      %v1142 = vpop.f32.mrf.mxu0
      %v1143 = vadd.f32 0.0, %v1142
      %1144 = vmatmul.bf16.gmra.mxu0 %v1032
      %v1145 = vpop.f32.mrf.mxu0
      %v1146 = vadd.f32 0.0, %v1145
      %v1147 = vpop.f32.mrf.mxu0
      %v1148 = vadd.f32 0.0, %v1147
      %1149 = vmatmul.bf16.gmra.mxu0 %v1033
      %v1150 = vpop.f32.mrf.mxu0
      %v1151 = vadd.f32 0.0, %v1150
      %v1152 = vpop.f32.mrf.mxu0
      %v1153 = vadd.f32 0.0, %v1152
      %1154 = vmatmul.bf16.gmra.mxu0 %v1034
      %v1155 = vpop.f32.mrf.mxu0
      %v1156 = vadd.f32 0.0, %v1155
      %v1157 = vpop.f32.mrf.mxu0
      %v1158 = vadd.f32 0.0, %v1157
      %1159 = vmatmul.bf16.gmra.mxu0 %v1035
      %v1160 = vpop.f32.mrf.mxu0
      %v1161 = vadd.f32 0.0, %v1160
      %v1162 = vpop.f32.mrf.mxu0
      %v1163 = vadd.f32 0.0, %v1162
      %1164 = vmatmul.bf16.gmra.mxu0 %v1036
      %v1165 = vpop.f32.mrf.mxu0
      %v1166 = vadd.f32 0.0, %v1165
      %v1167 = vpop.f32.mrf.mxu0
      %v1168 = vadd.f32 0.0, %v1167
      %1169 = vmatmul.bf16.gmra.mxu0 %v1037
      %v1170 = vpop.f32.mrf.mxu0
      %v1171 = vadd.f32 0.0, %v1170
      %v1172 = vpop.f32.mrf.mxu0
      %v1173 = vadd.f32 0.0, %v1172
      %1174 = vmatmul.bf16.gmra.mxu0 %v1038
      %v1175 = vpop.f32.mrf.mxu0
      %v1176 = vadd.f32 0.0, %v1175
      %v1177 = vpop.f32.mrf.mxu0
      %v1178 = vadd.f32 0.0, %v1177
      %1179 = vmatmul.bf16.gmra.mxu0 %v1039
      %v1180 = vpop.f32.mrf.mxu0
      %v1181 = vadd.f32 0.0, %v1180
      %v1182 = vpop.f32.mrf.mxu0
      %v1183 = vadd.f32 0.0, %v1182
      %1184 = vmatmul.bf16.gmra.mxu0 %v1040
      %v1185 = vpop.f32.mrf.mxu0
      %v1186 = vadd.f32 0.0, %v1185
      %v1187 = vpop.f32.mrf.mxu0
      %v1188 = vadd.f32 0.0, %v1187
      %1189 = vmatmul.bf16.gmra.mxu0 %v1041
      %v1190 = vpop.f32.mrf.mxu0
      %v1191 = vadd.f32 0.0, %v1190
      %v1192 = vpop.f32.mrf.mxu0
      %v1193 = vadd.f32 0.0, %v1192
      %1194 = vdwg.mxu0
      %v1195 = vld [vmem:[#allocation2] sm:$0xff]
      %v1196 = vld [vmem:[#allocation2 + $0x8] sm:$0xff]
      %v1197 = vld [vmem:[#allocation2 + $0x10] sm:$0xff]
      %v1198 = vld [vmem:[#allocation2 + $0x18] sm:$0xff]
      %v1199 = vld [vmem:[#allocation2 + $0x20] sm:$0xff]
      %v1200 = vld [vmem:[#allocation2 + $0x28] sm:$0xff]
      %v1201 = vld [vmem:[#allocation2 + $0x30] sm:$0xff]
      %v1202 = vld [vmem:[#allocation2 + $0x38] sm:$0xff]
      %v1203 = vld [vmem:[#allocation2 + $0x40] sm:$0xff]
      %v1204 = vld [vmem:[#allocation2 + $0x48] sm:$0xff]
      %v1205 = vld [vmem:[#allocation2 + $0x50] sm:$0xff]
      %v1206 = vld [vmem:[#allocation2 + $0x58] sm:$0xff]
      %v1207 = vld [vmem:[#allocation2 + $0x60] sm:$0xff]
      %v1208 = vld [vmem:[#allocation2 + $0x68] sm:$0xff]
      %v1209 = vld [vmem:[#allocation2 + $0x70] sm:$0xff]
      %v1210 = vld [vmem:[#allocation2 + $0x78] sm:$0xff]
      %v1211 = vld [vmem:[#allocation2 + $0x80] sm:$0xff]
      %v1212 = vld [vmem:[#allocation2 + $0x88] sm:$0xff]
      %v1213 = vld [vmem:[#allocation2 + $0x90] sm:$0xff]
      %v1214 = vld [vmem:[#allocation2 + $0x98] sm:$0xff]
      %v1215 = vld [vmem:[#allocation2 + $0xa0] sm:$0xff]
      %v1216 = vld [vmem:[#allocation2 + $0xa8] sm:$0xff]
      %v1217 = vld [vmem:[#allocation2 + $0xb0] sm:$0xff]
      %v1218 = vld [vmem:[#allocation2 + $0xb8] sm:$0xff]
      %v1219 = vld [vmem:[#allocation2 + $0xc0] sm:$0xff]
      %v1220 = vld [vmem:[#allocation2 + $0xc8] sm:$0xff]
      %v1221 = vld [vmem:[#allocation2 + $0xd0] sm:$0xff]
      %v1222 = vld [vmem:[#allocation2 + $0xd8] sm:$0xff]
      %v1223 = vld [vmem:[#allocation2 + $0xe0] sm:$0xff]
      %v1224 = vld [vmem:[#allocation2 + $0xe8] sm:$0xff]
      %v1225 = vld [vmem:[#allocation2 + $0xf0] sm:$0xff]
      %v1226 = vld [vmem:[#allocation2 + $0xf8] sm:$0xff]
      %v1227 = vadd.f32 %v1195, %v1116
      %v1228 = vadd.f32 %v1196, %v1118
      %v1229 = vadd.f32 %v1197, %v1121
      %v1230 = vadd.f32 %v1198, %v1123
      %v1231 = vadd.f32 %v1199, %v1126
      %v1232 = vadd.f32 %v1200, %v1128
      %v1233 = vadd.f32 %v1201, %v1131
      %v1234 = vadd.f32 %v1202, %v1133
      %v1235 = vadd.f32 %v1203, %v1136
      %v1236 = vadd.f32 %v1204, %v1138
      %v1237 = vadd.f32 %v1205, %v1141
      %v1238 = vadd.f32 %v1206, %v1143
      %v1239 = vadd.f32 %v1207, %v1146
      %v1240 = vadd.f32 %v1208, %v1148
      %v1241 = vadd.f32 %v1209, %v1151
      %v1242 = vadd.f32 %v1210, %v1153
      %v1243 = vadd.f32 %v1211, %v1156
      %v1244 = vadd.f32 %v1212, %v1158
      %v1245 = vadd.f32 %v1213, %v1161
      %v1246 = vadd.f32 %v1214, %v1163
      %v1247 = vadd.f32 %v1215, %v1166
      %v1248 = vadd.f32 %v1216, %v1168
      %v1249 = vadd.f32 %v1217, %v1171
      %v1250 = vadd.f32 %v1218, %v1173
      %v1251 = vadd.f32 %v1219, %v1176
      %v1252 = vadd.f32 %v1220, %v1178
      %v1253 = vadd.f32 %v1221, %v1181
      %v1254 = vadd.f32 %v1222, %v1183
      %v1255 = vadd.f32 %v1223, %v1186
      %v1256 = vadd.f32 %v1224, %v1188
      %v1257 = vadd.f32 %v1225, %v1191
      %v1258 = vadd.f32 %v1226, %v1193
      %1259 = vst [vmem:[#allocation2] sm:$0xff] %v1227
      %1260 = vst [vmem:[#allocation2 + $0x8] sm:$0xff] %v1228
      %1261 = vst [vmem:[#allocation2 + $0x10] sm:$0xff] %v1229
      %1262 = vst [vmem:[#allocation2 + $0x18] sm:$0xff] %v1230
      %1263 = vst [vmem:[#allocation2 + $0x20] sm:$0xff] %v1231
      %1264 = vst [vmem:[#allocation2 + $0x28] sm:$0xff] %v1232
      %1265 = vst [vmem:[#allocation2 + $0x30] sm:$0xff] %v1233
      %1266 = vst [vmem:[#allocation2 + $0x38] sm:$0xff] %v1234
      %1267 = vst [vmem:[#allocation2 + $0x40] sm:$0xff] %v1235
      %1268 = vst [vmem:[#allocation2 + $0x48] sm:$0xff] %v1236
      %1269 = vst [vmem:[#allocation2 + $0x50] sm:$0xff] %v1237
      %1270 = vst [vmem:[#allocation2 + $0x58] sm:$0xff] %v1238
      %1271 = vst [vmem:[#allocation2 + $0x60] sm:$0xff] %v1239
      %1272 = vst [vmem:[#allocation2 + $0x68] sm:$0xff] %v1240
      %1273 = vst [vmem:[#allocation2 + $0x70] sm:$0xff] %v1241
      %1274 = vst [vmem:[#allocation2 + $0x78] sm:$0xff] %v1242
      %1275 = vst [vmem:[#allocation2 + $0x80] sm:$0xff] %v1243
      %1276 = vst [vmem:[#allocation2 + $0x88] sm:$0xff] %v1244
      %1277 = vst [vmem:[#allocation2 + $0x90] sm:$0xff] %v1245
      %1278 = vst [vmem:[#allocation2 + $0x98] sm:$0xff] %v1246
      %1279 = vst [vmem:[#allocation2 + $0xa0] sm:$0xff] %v1247
      %1280 = vst [vmem:[#allocation2 + $0xa8] sm:$0xff] %v1248
      %1281 = vst [vmem:[#allocation2 + $0xb0] sm:$0xff] %v1249
      %1282 = vst [vmem:[#allocation2 + $0xb8] sm:$0xff] %v1250
      %1283 = vst [vmem:[#allocation2 + $0xc0] sm:$0xff] %v1251
      %1284 = vst [vmem:[#allocation2 + $0xc8] sm:$0xff] %v1252
      %1285 = vst [vmem:[#allocation2 + $0xd0] sm:$0xff] %v1253
      %1286 = vst [vmem:[#allocation2 + $0xd8] sm:$0xff] %v1254
      %1287 = vst [vmem:[#allocation2 + $0xe0] sm:$0xff] %v1255
      %1288 = vst [vmem:[#allocation2 + $0xe8] sm:$0xff] %v1256
      %1289 = vst [vmem:[#allocation2 + $0xf0] sm:$0xff] %v1257
      %1290 = vst [vmem:[#allocation2 + $0xf8] sm:$0xff] %v1258
      %v1291 = vld [vmem:[%s206 + $0x18] sm:$0xf]
      %v1292 = vld [vmem:[%s206 + $0x1c] sm:$0xf]
      %v1293 = vld [vmem:[%s206 + $0x20] sm:$0xf]
      %v1294 = vld [vmem:[%s206 + $0x24] sm:$0xf]
      %v1295 = vld [vmem:[%s206 + $0x28] sm:$0xf]
      %v1296 = vld [vmem:[%s206 + $0x2c] sm:$0xf]
      %v1297 = vld [vmem:[%s206 + $0x30] sm:$0xf]
      %v1298 = vld [vmem:[%s206 + $0x34] sm:$0xf]
      %v1299 = vld [vmem:[%s206 + $0x38] sm:$0xf]
      %v1300 = vld [vmem:[%s206 + $0x3c] sm:$0xf]
      %v1301 = vld [vmem:[%s206 + $0x40] sm:$0xf]
      %v1302 = vld [vmem:[%s206 + $0x44] sm:$0xf]
      %v1303 = vld [vmem:[%s206 + $0x48] sm:$0xf]
      %v1304 = vld [vmem:[%s206 + $0x4c] sm:$0xf]
      %v1305 = vld [vmem:[%s206 + $0x50] sm:$0xf]
      %v1306 = vld [vmem:[%s206 + $0x54] sm:$0xf]
      %v1307 = vld [vmem:[%s206 + $0x58] sm:$0xf]
      %v1308 = vld [vmem:[%s206 + $0x5c] sm:$0xf]
      %v1309 = vld [vmem:[%s206 + $0x60] sm:$0xf]
      %v1310 = vld [vmem:[%s206 + $0x64] sm:$0xf]
      %v1311 = vld [vmem:[%s206 + $0x68] sm:$0xf]
      %v1312 = vld [vmem:[%s206 + $0x6c] sm:$0xf]
      %v1313 = vld [vmem:[%s206 + $0x70] sm:$0xf]
      %v1314 = vld [vmem:[%s206 + $0x74] sm:$0xf]
      %v1315 = vld [vmem:[%s206 + $0x78] sm:$0xf]
      %v1316 = vld [vmem:[%s206 + $0x7c] sm:$0xf]
      %v1317 = vld [vmem:[%s206 + $0x80] sm:$0xf]
      %v1318 = vld [vmem:[%s206 + $0x84] sm:$0xf]
      %v1319 = vld [vmem:[%s206 + $0x88] sm:$0xf]
      %v1320 = vld [vmem:[%s206 + $0x8c] sm:$0xf]
      %v1321 = vld [vmem:[%s206 + $0x90] sm:$0xf]
      %v1322 = vld [vmem:[%s206 + $0x94] sm:$0xf]
      %s1323 = scalar_lea.vmem %s210, 192
      %v1324 = vld [vmem:[%s1323] sm:$0xf]
      %v1325 = vld [vmem:[%s1323 + $0x4] sm:$0xf]
      %v1326 = vld [vmem:[%s1323 + $0x8] sm:$0xf]
      %v1327 = vld [vmem:[%s1323 + $0xc] sm:$0xf]
      %v1328 = vld [vmem:[%s1323 + $0x10] sm:$0xf]
      %v1329 = vld [vmem:[%s1323 + $0x14] sm:$0xf]
      %v1330 = vld [vmem:[%s1323 + $0x18] sm:$0xf]
      %v1331 = vld [vmem:[%s1323 + $0x1c] sm:$0xf]
      %v1332 = vld [vmem:[%s1323 + $0x20] sm:$0xf]
      %v1333 = vld [vmem:[%s1323 + $0x24] sm:$0xf]
      %v1334 = vld [vmem:[%s1323 + $0x28] sm:$0xf]
      %v1335 = vld [vmem:[%s1323 + $0x2c] sm:$0xf]
      %v1336 = vld [vmem:[%s1323 + $0x30] sm:$0xf]
      %v1337 = vld [vmem:[%s1323 + $0x34] sm:$0xf]
      %v1338 = vld [vmem:[%s1323 + $0x38] sm:$0xf]
      %v1339 = vld [vmem:[%s1323 + $0x3c] sm:$0xf]
      %v1372 = vunpack.c.l.b16 %v1291
      %v1373 = vunpack.c.l.b16 %v1292
      %v1374 = vunpack.c.l.b16 %v1293
      %v1375 = vunpack.c.l.b16 %v1294
      %v1376 = vunpack.c.l.b16 %v1295
      %v1377 = vunpack.c.l.b16 %v1296
      %v1378 = vunpack.c.l.b16 %v1297
      %v1379 = vunpack.c.l.b16 %v1298
      %v1380 = vunpack.c.l.b16 %v1299
      %v1381 = vunpack.c.l.b16 %v1300
      %v1382 = vunpack.c.l.b16 %v1301
      %v1383 = vunpack.c.l.b16 %v1302
      %v1384 = vunpack.c.l.b16 %v1303
      %v1385 = vunpack.c.l.b16 %v1304
      %v1386 = vunpack.c.l.b16 %v1305
      %v1387 = vunpack.c.l.b16 %v1306
      %v1388 = vunpack.c.l.b16 %v1307
      %v1389 = vunpack.c.l.b16 %v1308
      %v1390 = vunpack.c.l.b16 %v1309
      %v1391 = vunpack.c.l.b16 %v1310
      %v1392 = vunpack.c.l.b16 %v1311
      %v1393 = vunpack.c.l.b16 %v1312
      %v1394 = vunpack.c.l.b16 %v1313
      %v1395 = vunpack.c.l.b16 %v1314
      %v1396 = vunpack.c.l.b16 %v1315
      %v1397 = vunpack.c.l.b16 %v1316
      %v1398 = vunpack.c.l.b16 %v1317
      %v1399 = vunpack.c.l.b16 %v1318
      %v1400 = vunpack.c.l.b16 %v1319
      %v1401 = vunpack.c.l.b16 %v1320
      %v1402 = vunpack.c.l.b16 %v1321
      %v1403 = vunpack.c.l.b16 %v1322
      %v1404 = vpack.c.b16 %v1373, %v1372
      %v1405 = vpack.c.b16 %v1375, %v1374
      %v1406 = vpack.c.b16 %v1377, %v1376
      %v1407 = vpack.c.b16 %v1379, %v1378
      %v1408 = vpack.c.b16 %v1381, %v1380
      %v1409 = vpack.c.b16 %v1383, %v1382
      %v1410 = vpack.c.b16 %v1385, %v1384
      %v1411 = vpack.c.b16 %v1387, %v1386
      %v1412 = vpack.c.b16 %v1389, %v1388
      %v1413 = vpack.c.b16 %v1391, %v1390
      %v1414 = vpack.c.b16 %v1393, %v1392
      %v1415 = vpack.c.b16 %v1395, %v1394
      %v1416 = vpack.c.b16 %v1397, %v1396
      %v1417 = vpack.c.b16 %v1399, %v1398
      %v1418 = vpack.c.b16 %v1401, %v1400
      %v1419 = vpack.c.b16 %v1403, %v1402
      %v1452 = vunpack.c.l.b16 %v1324
      %v1453 = vunpack.c.l.b16 %v1325
      %v1454 = vunpack.c.l.b16 %v1326
      %v1455 = vunpack.c.l.b16 %v1327
      %v1456 = vunpack.c.l.b16 %v1328
      %v1457 = vunpack.c.l.b16 %v1329
      %v1458 = vunpack.c.l.b16 %v1330
      %v1459 = vunpack.c.l.b16 %v1331
      %v1460 = vunpack.c.l.b16 %v1332
      %v1461 = vunpack.c.l.b16 %v1333
      %v1462 = vunpack.c.l.b16 %v1334
      %v1463 = vunpack.c.l.b16 %v1335
      %v1464 = vunpack.c.l.b16 %v1336
      %v1465 = vunpack.c.l.b16 %v1337
      %v1466 = vunpack.c.l.b16 %v1338
      %v1467 = vunpack.c.l.b16 %v1339
      %v1468 = vpack.c.b16 %v1453, %v1452
      %v1469 = vpack.c.b16 %v1455, %v1454
      %v1470 = vpack.c.b16 %v1457, %v1456
      %v1471 = vpack.c.b16 %v1459, %v1458
      %v1472 = vpack.c.b16 %v1461, %v1460
      %v1473 = vpack.c.b16 %v1463, %v1462
      %v1474 = vpack.c.b16 %v1465, %v1464
      %v1475 = vpack.c.b16 %v1467, %v1466
      %1484 = vmatpush.bf16.msra.mxu0 %v1475
      %1485 = vmatpush.bf16.msra.mxu0 %v1474
      %1486 = vmatpush.bf16.msra.mxu0 %v1473
      %1487 = vmatpush.bf16.msra.mxu0 %v1472
      %1488 = vmatpush.bf16.msra.mxu0 %v1471
      %1489 = vmatpush.bf16.msra.mxu0 %v1470
      %1490 = vmatpush.bf16.msra.mxu0 %v1469
      %1491 = vmatpush.bf16.msra.mxu0 %v1468
      %1492 = vmatmul.bf16.gmra.mxu0 %v1404
      %v1493 = vpop.f32.mrf.mxu0
      %v1494 = vadd.f32 0.0, %v1493
      %v1495 = vpop.f32.mrf.mxu0
      %v1496 = vadd.f32 0.0, %v1495
      %1497 = vmatmul.bf16.gmra.mxu0 %v1405
      %v1498 = vpop.f32.mrf.mxu0
      %v1499 = vadd.f32 0.0, %v1498
      %v1500 = vpop.f32.mrf.mxu0
      %v1501 = vadd.f32 0.0, %v1500
      %1502 = vmatmul.bf16.gmra.mxu0 %v1406
      %v1503 = vpop.f32.mrf.mxu0
      %v1504 = vadd.f32 0.0, %v1503
      %v1505 = vpop.f32.mrf.mxu0
      %v1506 = vadd.f32 0.0, %v1505
      %1507 = vmatmul.bf16.gmra.mxu0 %v1407
      %v1508 = vpop.f32.mrf.mxu0
      %v1509 = vadd.f32 0.0, %v1508
      %v1510 = vpop.f32.mrf.mxu0
      %v1511 = vadd.f32 0.0, %v1510
      %1512 = vmatmul.bf16.gmra.mxu0 %v1408
      %v1513 = vpop.f32.mrf.mxu0
      %v1514 = vadd.f32 0.0, %v1513
      %v1515 = vpop.f32.mrf.mxu0
      %v1516 = vadd.f32 0.0, %v1515
      %1517 = vmatmul.bf16.gmra.mxu0 %v1409
      %v1518 = vpop.f32.mrf.mxu0
      %v1519 = vadd.f32 0.0, %v1518
      %v1520 = vpop.f32.mrf.mxu0
      %v1521 = vadd.f32 0.0, %v1520
      %1522 = vmatmul.bf16.gmra.mxu0 %v1410
      %v1523 = vpop.f32.mrf.mxu0
      %v1524 = vadd.f32 0.0, %v1523
      %v1525 = vpop.f32.mrf.mxu0
      %v1526 = vadd.f32 0.0, %v1525
      %1527 = vmatmul.bf16.gmra.mxu0 %v1411
      %v1528 = vpop.f32.mrf.mxu0
      %v1529 = vadd.f32 0.0, %v1528
      %v1530 = vpop.f32.mrf.mxu0
      %v1531 = vadd.f32 0.0, %v1530
      %1532 = vmatmul.bf16.gmra.mxu0 %v1412
      %v1533 = vpop.f32.mrf.mxu0
      %v1534 = vadd.f32 0.0, %v1533
      %v1535 = vpop.f32.mrf.mxu0
      %v1536 = vadd.f32 0.0, %v1535
      %1537 = vmatmul.bf16.gmra.mxu0 %v1413
      %v1538 = vpop.f32.mrf.mxu0
      %v1539 = vadd.f32 0.0, %v1538
      %v1540 = vpop.f32.mrf.mxu0
      %v1541 = vadd.f32 0.0, %v1540
      %1542 = vmatmul.bf16.gmra.mxu0 %v1414
      %v1543 = vpop.f32.mrf.mxu0
      %v1544 = vadd.f32 0.0, %v1543
      %v1545 = vpop.f32.mrf.mxu0
      %v1546 = vadd.f32 0.0, %v1545
      %1547 = vmatmul.bf16.gmra.mxu0 %v1415
      %v1548 = vpop.f32.mrf.mxu0
      %v1549 = vadd.f32 0.0, %v1548
      %v1550 = vpop.f32.mrf.mxu0
      %v1551 = vadd.f32 0.0, %v1550
      %1552 = vmatmul.bf16.gmra.mxu0 %v1416
      %v1553 = vpop.f32.mrf.mxu0
      %v1554 = vadd.f32 0.0, %v1553
      %v1555 = vpop.f32.mrf.mxu0
      %v1556 = vadd.f32 0.0, %v1555
      %1557 = vmatmul.bf16.gmra.mxu0 %v1417
      %v1558 = vpop.f32.mrf.mxu0
      %v1559 = vadd.f32 0.0, %v1558
      %v1560 = vpop.f32.mrf.mxu0
      %v1561 = vadd.f32 0.0, %v1560
      %1562 = vmatmul.bf16.gmra.mxu0 %v1418
      %v1563 = vpop.f32.mrf.mxu0
      %v1564 = vadd.f32 0.0, %v1563
      %v1565 = vpop.f32.mrf.mxu0
      %v1566 = vadd.f32 0.0, %v1565
      %1567 = vmatmul.bf16.gmra.mxu0 %v1419
      %v1568 = vpop.f32.mrf.mxu0
      %v1569 = vadd.f32 0.0, %v1568
      %v1570 = vpop.f32.mrf.mxu0
      %v1571 = vadd.f32 0.0, %v1570
      %1572 = vdwg.mxu0
      %v1573 = vld [vmem:[#allocation2] sm:$0xff]
      %v1574 = vld [vmem:[#allocation2 + $0x8] sm:$0xff]
      %v1575 = vld [vmem:[#allocation2 + $0x10] sm:$0xff]
      %v1576 = vld [vmem:[#allocation2 + $0x18] sm:$0xff]
      %v1577 = vld [vmem:[#allocation2 + $0x20] sm:$0xff]
      %v1578 = vld [vmem:[#allocation2 + $0x28] sm:$0xff]
      %v1579 = vld [vmem:[#allocation2 + $0x30] sm:$0xff]
      %v1580 = vld [vmem:[#allocation2 + $0x38] sm:$0xff]
      %v1581 = vld [vmem:[#allocation2 + $0x40] sm:$0xff]
      %v1582 = vld [vmem:[#allocation2 + $0x48] sm:$0xff]
      %v1583 = vld [vmem:[#allocation2 + $0x50] sm:$0xff]
      %v1584 = vld [vmem:[#allocation2 + $0x58] sm:$0xff]
      %v1585 = vld [vmem:[#allocation2 + $0x60] sm:$0xff]
      %v1586 = vld [vmem:[#allocation2 + $0x68] sm:$0xff]
      %v1587 = vld [vmem:[#allocation2 + $0x70] sm:$0xff]
      %v1588 = vld [vmem:[#allocation2 + $0x78] sm:$0xff]
      %v1589 = vld [vmem:[#allocation2 + $0x80] sm:$0xff]
      %v1590 = vld [vmem:[#allocation2 + $0x88] sm:$0xff]
      %v1591 = vld [vmem:[#allocation2 + $0x90] sm:$0xff]
      %v1592 = vld [vmem:[#allocation2 + $0x98] sm:$0xff]
      %v1593 = vld [vmem:[#allocation2 + $0xa0] sm:$0xff]
      %v1594 = vld [vmem:[#allocation2 + $0xa8] sm:$0xff]
      %v1595 = vld [vmem:[#allocation2 + $0xb0] sm:$0xff]
      %v1596 = vld [vmem:[#allocation2 + $0xb8] sm:$0xff]
      %v1597 = vld [vmem:[#allocation2 + $0xc0] sm:$0xff]
      %v1598 = vld [vmem:[#allocation2 + $0xc8] sm:$0xff]
      %v1599 = vld [vmem:[#allocation2 + $0xd0] sm:$0xff]
      %v1600 = vld [vmem:[#allocation2 + $0xd8] sm:$0xff]
      %v1601 = vld [vmem:[#allocation2 + $0xe0] sm:$0xff]
      %v1602 = vld [vmem:[#allocation2 + $0xe8] sm:$0xff]
      %v1603 = vld [vmem:[#allocation2 + $0xf0] sm:$0xff]
      %v1604 = vld [vmem:[#allocation2 + $0xf8] sm:$0xff]
      %v1605 = vadd.f32 %v1573, %v1494
      %v1606 = vadd.f32 %v1574, %v1496
      %v1607 = vadd.f32 %v1575, %v1499
      %v1608 = vadd.f32 %v1576, %v1501
      %v1609 = vadd.f32 %v1577, %v1504
      %v1610 = vadd.f32 %v1578, %v1506
      %v1611 = vadd.f32 %v1579, %v1509
      %v1612 = vadd.f32 %v1580, %v1511
      %v1613 = vadd.f32 %v1581, %v1514
      %v1614 = vadd.f32 %v1582, %v1516
      %v1615 = vadd.f32 %v1583, %v1519
      %v1616 = vadd.f32 %v1584, %v1521
      %v1617 = vadd.f32 %v1585, %v1524
      %v1618 = vadd.f32 %v1586, %v1526
      %v1619 = vadd.f32 %v1587, %v1529
      %v1620 = vadd.f32 %v1588, %v1531
      %v1621 = vadd.f32 %v1589, %v1534
      %v1622 = vadd.f32 %v1590, %v1536
      %v1623 = vadd.f32 %v1591, %v1539
      %v1624 = vadd.f32 %v1592, %v1541
      %v1625 = vadd.f32 %v1593, %v1544
      %v1626 = vadd.f32 %v1594, %v1546
      %v1627 = vadd.f32 %v1595, %v1549
      %v1628 = vadd.f32 %v1596, %v1551
      %v1629 = vadd.f32 %v1597, %v1554
      %v1630 = vadd.f32 %v1598, %v1556
      %v1631 = vadd.f32 %v1599, %v1559
      %v1632 = vadd.f32 %v1600, %v1561
      %v1633 = vadd.f32 %v1601, %v1564
      %v1634 = vadd.f32 %v1602, %v1566
      %v1635 = vadd.f32 %v1603, %v1569
      %v1636 = vadd.f32 %v1604, %v1571
      %1637 = vst [vmem:[#allocation2] sm:$0xff] %v1605
      %1638 = vst [vmem:[#allocation2 + $0x8] sm:$0xff] %v1606
      %1639 = vst [vmem:[#allocation2 + $0x10] sm:$0xff] %v1607
      %1640 = vst [vmem:[#allocation2 + $0x18] sm:$0xff] %v1608
      %1641 = vst [vmem:[#allocation2 + $0x20] sm:$0xff] %v1609
      %1642 = vst [vmem:[#allocation2 + $0x28] sm:$0xff] %v1610
      %1643 = vst [vmem:[#allocation2 + $0x30] sm:$0xff] %v1611
      %1644 = vst [vmem:[#allocation2 + $0x38] sm:$0xff] %v1612
      %1645 = vst [vmem:[#allocation2 + $0x40] sm:$0xff] %v1613
      %1646 = vst [vmem:[#allocation2 + $0x48] sm:$0xff] %v1614
      %1647 = vst [vmem:[#allocation2 + $0x50] sm:$0xff] %v1615
      %1648 = vst [vmem:[#allocation2 + $0x58] sm:$0xff] %v1616
      %1649 = vst [vmem:[#allocation2 + $0x60] sm:$0xff] %v1617
      %1650 = vst [vmem:[#allocation2 + $0x68] sm:$0xff] %v1618
      %1651 = vst [vmem:[#allocation2 + $0x70] sm:$0xff] %v1619
      %1652 = vst [vmem:[#allocation2 + $0x78] sm:$0xff] %v1620
      %1653 = vst [vmem:[#allocation2 + $0x80] sm:$0xff] %v1621
      %1654 = vst [vmem:[#allocation2 + $0x88] sm:$0xff] %v1622
      %1655 = vst [vmem:[#allocation2 + $0x90] sm:$0xff] %v1623
      %1656 = vst [vmem:[#allocation2 + $0x98] sm:$0xff] %v1624
      %1657 = vst [vmem:[#allocation2 + $0xa0] sm:$0xff] %v1625
      %1658 = vst [vmem:[#allocation2 + $0xa8] sm:$0xff] %v1626
      %1659 = vst [vmem:[#allocation2 + $0xb0] sm:$0xff] %v1627
      %1660 = vst [vmem:[#allocation2 + $0xb8] sm:$0xff] %v1628
      %1661 = vst [vmem:[#allocation2 + $0xc0] sm:$0xff] %v1629
      %1662 = vst [vmem:[#allocation2 + $0xc8] sm:$0xff] %v1630
      %1663 = vst [vmem:[#allocation2 + $0xd0] sm:$0xff] %v1631
      %1664 = vst [vmem:[#allocation2 + $0xd8] sm:$0xff] %v1632
      %1665 = vst [vmem:[#allocation2 + $0xe0] sm:$0xff] %v1633
      %1666 = vst [vmem:[#allocation2 + $0xe8] sm:$0xff] %v1634
      %1667 = vst [vmem:[#allocation2 + $0xf0] sm:$0xff] %v1635
      %1668 = vst [vmem:[#allocation2 + $0xf8] sm:$0xff] %v1636
      %v1669 = vld [vmem:[%s206 + $0x20] sm:$0xf]
      %v1670 = vld [vmem:[%s206 + $0x24] sm:$0xf]
      %v1671 = vld [vmem:[%s206 + $0x28] sm:$0xf]
      %v1672 = vld [vmem:[%s206 + $0x2c] sm:$0xf]
      %v1673 = vld [vmem:[%s206 + $0x30] sm:$0xf]
      %v1674 = vld [vmem:[%s206 + $0x34] sm:$0xf]
      %v1675 = vld [vmem:[%s206 + $0x38] sm:$0xf]
      %v1676 = vld [vmem:[%s206 + $0x3c] sm:$0xf]
      %v1677 = vld [vmem:[%s206 + $0x40] sm:$0xf]
      %v1678 = vld [vmem:[%s206 + $0x44] sm:$0xf]
      %v1679 = vld [vmem:[%s206 + $0x48] sm:$0xf]
      %v1680 = vld [vmem:[%s206 + $0x4c] sm:$0xf]
      %v1681 = vld [vmem:[%s206 + $0x50] sm:$0xf]
      %v1682 = vld [vmem:[%s206 + $0x54] sm:$0xf]
      %v1683 = vld [vmem:[%s206 + $0x58] sm:$0xf]
      %v1684 = vld [vmem:[%s206 + $0x5c] sm:$0xf]
      %v1685 = vld [vmem:[%s206 + $0x60] sm:$0xf]
      %v1686 = vld [vmem:[%s206 + $0x64] sm:$0xf]
      %v1687 = vld [vmem:[%s206 + $0x68] sm:$0xf]
      %v1688 = vld [vmem:[%s206 + $0x6c] sm:$0xf]
      %v1689 = vld [vmem:[%s206 + $0x70] sm:$0xf]
      %v1690 = vld [vmem:[%s206 + $0x74] sm:$0xf]
      %v1691 = vld [vmem:[%s206 + $0x78] sm:$0xf]
      %v1692 = vld [vmem:[%s206 + $0x7c] sm:$0xf]
      %v1693 = vld [vmem:[%s206 + $0x80] sm:$0xf]
      %v1694 = vld [vmem:[%s206 + $0x84] sm:$0xf]
      %v1695 = vld [vmem:[%s206 + $0x88] sm:$0xf]
      %v1696 = vld [vmem:[%s206 + $0x8c] sm:$0xf]
      %v1697 = vld [vmem:[%s206 + $0x90] sm:$0xf]
      %v1698 = vld [vmem:[%s206 + $0x94] sm:$0xf]
      %v1699 = vld [vmem:[%s206 + $0x98] sm:$0xf]
      %v1700 = vld [vmem:[%s206 + $0x9c] sm:$0xf]
      %s1701 = scalar_lea.vmem %s210, 256
      %v1702 = vld [vmem:[%s1701] sm:$0xf]
      %v1703 = vld [vmem:[%s1701 + $0x4] sm:$0xf]
      %v1704 = vld [vmem:[%s1701 + $0x8] sm:$0xf]
      %v1705 = vld [vmem:[%s1701 + $0xc] sm:$0xf]
      %v1706 = vld [vmem:[%s1701 + $0x10] sm:$0xf]
      %v1707 = vld [vmem:[%s1701 + $0x14] sm:$0xf]
      %v1708 = vld [vmem:[%s1701 + $0x18] sm:$0xf]
      %v1709 = vld [vmem:[%s1701 + $0x1c] sm:$0xf]
      %v1710 = vld [vmem:[%s1701 + $0x20] sm:$0xf]
      %v1711 = vld [vmem:[%s1701 + $0x24] sm:$0xf]
      %v1712 = vld [vmem:[%s1701 + $0x28] sm:$0xf]
      %v1713 = vld [vmem:[%s1701 + $0x2c] sm:$0xf]
      %v1714 = vld [vmem:[%s1701 + $0x30] sm:$0xf]
      %v1715 = vld [vmem:[%s1701 + $0x34] sm:$0xf]
      %v1716 = vld [vmem:[%s1701 + $0x38] sm:$0xf]
      %v1717 = vld [vmem:[%s1701 + $0x3c] sm:$0xf]
      %v1750 = vunpack.c.l.b16 %v1669
      %v1751 = vunpack.c.l.b16 %v1670
      %v1752 = vunpack.c.l.b16 %v1671
      %v1753 = vunpack.c.l.b16 %v1672
      %v1754 = vunpack.c.l.b16 %v1673
      %v1755 = vunpack.c.l.b16 %v1674
      %v1756 = vunpack.c.l.b16 %v1675
      %v1757 = vunpack.c.l.b16 %v1676
      %v1758 = vunpack.c.l.b16 %v1677
      %v1759 = vunpack.c.l.b16 %v1678
      %v1760 = vunpack.c.l.b16 %v1679
      %v1761 = vunpack.c.l.b16 %v1680
      %v1762 = vunpack.c.l.b16 %v1681
      %v1763 = vunpack.c.l.b16 %v1682
      %v1764 = vunpack.c.l.b16 %v1683
      %v1765 = vunpack.c.l.b16 %v1684
      %v1766 = vunpack.c.l.b16 %v1685
      %v1767 = vunpack.c.l.b16 %v1686
      %v1768 = vunpack.c.l.b16 %v1687
      %v1769 = vunpack.c.l.b16 %v1688
      %v1770 = vunpack.c.l.b16 %v1689
      %v1771 = vunpack.c.l.b16 %v1690
      %v1772 = vunpack.c.l.b16 %v1691
      %v1773 = vunpack.c.l.b16 %v1692
      %v1774 = vunpack.c.l.b16 %v1693
      %v1775 = vunpack.c.l.b16 %v1694
      %v1776 = vunpack.c.l.b16 %v1695
      %v1777 = vunpack.c.l.b16 %v1696
      %v1778 = vunpack.c.l.b16 %v1697
      %v1779 = vunpack.c.l.b16 %v1698
      %v1780 = vunpack.c.l.b16 %v1699
      %v1781 = vunpack.c.l.b16 %v1700
      %v1782 = vpack.c.b16 %v1751, %v1750
      %v1783 = vpack.c.b16 %v1753, %v1752
      %v1784 = vpack.c.b16 %v1755, %v1754
      %v1785 = vpack.c.b16 %v1757, %v1756
      %v1786 = vpack.c.b16 %v1759, %v1758
      %v1787 = vpack.c.b16 %v1761, %v1760
      %v1788 = vpack.c.b16 %v1763, %v1762
      %v1789 = vpack.c.b16 %v1765, %v1764
      %v1790 = vpack.c.b16 %v1767, %v1766
      %v1791 = vpack.c.b16 %v1769, %v1768
      %v1792 = vpack.c.b16 %v1771, %v1770
      %v1793 = vpack.c.b16 %v1773, %v1772
      %v1794 = vpack.c.b16 %v1775, %v1774
      %v1795 = vpack.c.b16 %v1777, %v1776
      %v1796 = vpack.c.b16 %v1779, %v1778
      %v1797 = vpack.c.b16 %v1781, %v1780
      %v1830 = vunpack.c.l.b16 %v1702
      %v1831 = vunpack.c.l.b16 %v1703
      %v1832 = vunpack.c.l.b16 %v1704
      %v1833 = vunpack.c.l.b16 %v1705
      %v1834 = vunpack.c.l.b16 %v1706
      %v1835 = vunpack.c.l.b16 %v1707
      %v1836 = vunpack.c.l.b16 %v1708
      %v1837 = vunpack.c.l.b16 %v1709
      %v1838 = vunpack.c.l.b16 %v1710
      %v1839 = vunpack.c.l.b16 %v1711
      %v1840 = vunpack.c.l.b16 %v1712
      %v1841 = vunpack.c.l.b16 %v1713
      %v1842 = vunpack.c.l.b16 %v1714
      %v1843 = vunpack.c.l.b16 %v1715
      %v1844 = vunpack.c.l.b16 %v1716
      %v1845 = vunpack.c.l.b16 %v1717
      %v1846 = vpack.c.b16 %v1831, %v1830
      %v1847 = vpack.c.b16 %v1833, %v1832
      %v1848 = vpack.c.b16 %v1835, %v1834
      %v1849 = vpack.c.b16 %v1837, %v1836
      %v1850 = vpack.c.b16 %v1839, %v1838
      %v1851 = vpack.c.b16 %v1841, %v1840
      %v1852 = vpack.c.b16 %v1843, %v1842
      %v1853 = vpack.c.b16 %v1845, %v1844
      %1862 = vmatpush.bf16.msra.mxu0 %v1853
      %1863 = vmatpush.bf16.msra.mxu0 %v1852
      %1864 = vmatpush.bf16.msra.mxu0 %v1851
      %1865 = vmatpush.bf16.msra.mxu0 %v1850
      %1866 = vmatpush.bf16.msra.mxu0 %v1849
      %1867 = vmatpush.bf16.msra.mxu0 %v1848
      %1868 = vmatpush.bf16.msra.mxu0 %v1847
      %1869 = vmatpush.bf16.msra.mxu0 %v1846
      %1870 = vmatmul.bf16.gmra.mxu0 %v1782
      %v1871 = vpop.f32.mrf.mxu0
      %v1872 = vadd.f32 0.0, %v1871
      %v1873 = vpop.f32.mrf.mxu0
      %v1874 = vadd.f32 0.0, %v1873
      %1875 = vmatmul.bf16.gmra.mxu0 %v1783
      %v1876 = vpop.f32.mrf.mxu0
      %v1877 = vadd.f32 0.0, %v1876
      %v1878 = vpop.f32.mrf.mxu0
      %v1879 = vadd.f32 0.0, %v1878
      %1880 = vmatmul.bf16.gmra.mxu0 %v1784
      %v1881 = vpop.f32.mrf.mxu0
      %v1882 = vadd.f32 0.0, %v1881
      %v1883 = vpop.f32.mrf.mxu0
      %v1884 = vadd.f32 0.0, %v1883
      %1885 = vmatmul.bf16.gmra.mxu0 %v1785
      %v1886 = vpop.f32.mrf.mxu0
      %v1887 = vadd.f32 0.0, %v1886
      %v1888 = vpop.f32.mrf.mxu0
      %v1889 = vadd.f32 0.0, %v1888
      %1890 = vmatmul.bf16.gmra.mxu0 %v1786
      %v1891 = vpop.f32.mrf.mxu0
      %v1892 = vadd.f32 0.0, %v1891
      %v1893 = vpop.f32.mrf.mxu0
      %v1894 = vadd.f32 0.0, %v1893
      %1895 = vmatmul.bf16.gmra.mxu0 %v1787
      %v1896 = vpop.f32.mrf.mxu0
      %v1897 = vadd.f32 0.0, %v1896
      %v1898 = vpop.f32.mrf.mxu0
      %v1899 = vadd.f32 0.0, %v1898
      %1900 = vmatmul.bf16.gmra.mxu0 %v1788
      %v1901 = vpop.f32.mrf.mxu0
      %v1902 = vadd.f32 0.0, %v1901
      %v1903 = vpop.f32.mrf.mxu0
      %v1904 = vadd.f32 0.0, %v1903
      %1905 = vmatmul.bf16.gmra.mxu0 %v1789
      %v1906 = vpop.f32.mrf.mxu0
      %v1907 = vadd.f32 0.0, %v1906
      %v1908 = vpop.f32.mrf.mxu0
      %v1909 = vadd.f32 0.0, %v1908
      %1910 = vmatmul.bf16.gmra.mxu0 %v1790
      %v1911 = vpop.f32.mrf.mxu0
      %v1912 = vadd.f32 0.0, %v1911
      %v1913 = vpop.f32.mrf.mxu0
      %v1914 = vadd.f32 0.0, %v1913
      %1915 = vmatmul.bf16.gmra.mxu0 %v1791
      %v1916 = vpop.f32.mrf.mxu0
      %v1917 = vadd.f32 0.0, %v1916
      %v1918 = vpop.f32.mrf.mxu0
      %v1919 = vadd.f32 0.0, %v1918
      %1920 = vmatmul.bf16.gmra.mxu0 %v1792
      %v1921 = vpop.f32.mrf.mxu0
      %v1922 = vadd.f32 0.0, %v1921
      %v1923 = vpop.f32.mrf.mxu0
      %v1924 = vadd.f32 0.0, %v1923
      %1925 = vmatmul.bf16.gmra.mxu0 %v1793
      %v1926 = vpop.f32.mrf.mxu0
      %v1927 = vadd.f32 0.0, %v1926
      %v1928 = vpop.f32.mrf.mxu0
      %v1929 = vadd.f32 0.0, %v1928
      %1930 = vmatmul.bf16.gmra.mxu0 %v1794
      %v1931 = vpop.f32.mrf.mxu0
      %v1932 = vadd.f32 0.0, %v1931
      %v1933 = vpop.f32.mrf.mxu0
      %v1934 = vadd.f32 0.0, %v1933
      %1935 = vmatmul.bf16.gmra.mxu0 %v1795
      %v1936 = vpop.f32.mrf.mxu0
      %v1937 = vadd.f32 0.0, %v1936
      %v1938 = vpop.f32.mrf.mxu0
      %v1939 = vadd.f32 0.0, %v1938
      %1940 = vmatmul.bf16.gmra.mxu0 %v1796
      %v1941 = vpop.f32.mrf.mxu0
      %v1942 = vadd.f32 0.0, %v1941
      %v1943 = vpop.f32.mrf.mxu0
      %v1944 = vadd.f32 0.0, %v1943
      %1945 = vmatmul.bf16.gmra.mxu0 %v1797
      %v1946 = vpop.f32.mrf.mxu0
      %v1947 = vadd.f32 0.0, %v1946
      %v1948 = vpop.f32.mrf.mxu0
      %v1949 = vadd.f32 0.0, %v1948
      %1950 = vdwg.mxu0
      %v1951 = vld [vmem:[#allocation2] sm:$0xff]
      %v1952 = vld [vmem:[#allocation2 + $0x8] sm:$0xff]
      %v1953 = vld [vmem:[#allocation2 + $0x10] sm:$0xff]
      %v1954 = vld [vmem:[#allocation2 + $0x18] sm:$0xff]
      %v1955 = vld [vmem:[#allocation2 + $0x20] sm:$0xff]
      %v1956 = vld [vmem:[#allocation2 + $0x28] sm:$0xff]
      %v1957 = vld [vmem:[#allocation2 + $0x30] sm:$0xff]
      %v1958 = vld [vmem:[#allocation2 + $0x38] sm:$0xff]
      %v1959 = vld [vmem:[#allocation2 + $0x40] sm:$0xff]
      %v1960 = vld [vmem:[#allocation2 + $0x48] sm:$0xff]
      %v1961 = vld [vmem:[#allocation2 + $0x50] sm:$0xff]
      %v1962 = vld [vmem:[#allocation2 + $0x58] sm:$0xff]
      %v1963 = vld [vmem:[#allocation2 + $0x60] sm:$0xff]
      %v1964 = vld [vmem:[#allocation2 + $0x68] sm:$0xff]
      %v1965 = vld [vmem:[#allocation2 + $0x70] sm:$0xff]
      %v1966 = vld [vmem:[#allocation2 + $0x78] sm:$0xff]
      %v1967 = vld [vmem:[#allocation2 + $0x80] sm:$0xff]
      %v1968 = vld [vmem:[#allocation2 + $0x88] sm:$0xff]
      %v1969 = vld [vmem:[#allocation2 + $0x90] sm:$0xff]
      %v1970 = vld [vmem:[#allocation2 + $0x98] sm:$0xff]
      %v1971 = vld [vmem:[#allocation2 + $0xa0] sm:$0xff]
      %v1972 = vld [vmem:[#allocation2 + $0xa8] sm:$0xff]
      %v1973 = vld [vmem:[#allocation2 + $0xb0] sm:$0xff]
      %v1974 = vld [vmem:[#allocation2 + $0xb8] sm:$0xff]
      %v1975 = vld [vmem:[#allocation2 + $0xc0] sm:$0xff]
      %v1976 = vld [vmem:[#allocation2 + $0xc8] sm:$0xff]
      %v1977 = vld [vmem:[#allocation2 + $0xd0] sm:$0xff]
      %v1978 = vld [vmem:[#allocation2 + $0xd8] sm:$0xff]
      %v1979 = vld [vmem:[#allocation2 + $0xe0] sm:$0xff]
      %v1980 = vld [vmem:[#allocation2 + $0xe8] sm:$0xff]
      %v1981 = vld [vmem:[#allocation2 + $0xf0] sm:$0xff]
      %v1982 = vld [vmem:[#allocation2 + $0xf8] sm:$0xff]
      %v1983 = vadd.f32 %v1951, %v1872
      %v1984 = vadd.f32 %v1952, %v1874
      %v1985 = vadd.f32 %v1953, %v1877
      %v1986 = vadd.f32 %v1954, %v1879
      %v1987 = vadd.f32 %v1955, %v1882
      %v1988 = vadd.f32 %v1956, %v1884
      %v1989 = vadd.f32 %v1957, %v1887
      %v1990 = vadd.f32 %v1958, %v1889
      %v1991 = vadd.f32 %v1959, %v1892
      %v1992 = vadd.f32 %v1960, %v1894
      %v1993 = vadd.f32 %v1961, %v1897
      %v1994 = vadd.f32 %v1962, %v1899
      %v1995 = vadd.f32 %v1963, %v1902
      %v1996 = vadd.f32 %v1964, %v1904
      %v1997 = vadd.f32 %v1965, %v1907
      %v1998 = vadd.f32 %v1966, %v1909
      %v1999 = vadd.f32 %v1967, %v1912
      %v2000 = vadd.f32 %v1968, %v1914
      %v2001 = vadd.f32 %v1969, %v1917
      %v2002 = vadd.f32 %v1970, %v1919
      %v2003 = vadd.f32 %v1971, %v1922
      %v2004 = vadd.f32 %v1972, %v1924
      %v2005 = vadd.f32 %v1973, %v1927
      %v2006 = vadd.f32 %v1974, %v1929
      %v2007 = vadd.f32 %v1975, %v1932
      %v2008 = vadd.f32 %v1976, %v1934
      %v2009 = vadd.f32 %v1977, %v1937
      %v2010 = vadd.f32 %v1978, %v1939
      %v2011 = vadd.f32 %v1979, %v1942
      %v2012 = vadd.f32 %v1980, %v1944
      %v2013 = vadd.f32 %v1981, %v1947
      %v2014 = vadd.f32 %v1982, %v1949
      %2015 = vst [vmem:[#allocation2] sm:$0xff] %v1983
      %2016 = vst [vmem:[#allocation2 + $0x8] sm:$0xff] %v1984
      %2017 = vst [vmem:[#allocation2 + $0x10] sm:$0xff] %v1985
      %2018 = vst [vmem:[#allocation2 + $0x18] sm:$0xff] %v1986
      %2019 = vst [vmem:[#allocation2 + $0x20] sm:$0xff] %v1987
      %2020 = vst [vmem:[#allocation2 + $0x28] sm:$0xff] %v1988
      %2021 = vst [vmem:[#allocation2 + $0x30] sm:$0xff] %v1989
      %2022 = vst [vmem:[#allocation2 + $0x38] sm:$0xff] %v1990
      %2023 = vst [vmem:[#allocation2 + $0x40] sm:$0xff] %v1991
      %2024 = vst [vmem:[#allocation2 + $0x48] sm:$0xff] %v1992
      %2025 = vst [vmem:[#allocation2 + $0x50] sm:$0xff] %v1993
      %2026 = vst [vmem:[#allocation2 + $0x58] sm:$0xff] %v1994
      %2027 = vst [vmem:[#allocation2 + $0x60] sm:$0xff] %v1995
      %2028 = vst [vmem:[#allocation2 + $0x68] sm:$0xff] %v1996
      %2029 = vst [vmem:[#allocation2 + $0x70] sm:$0xff] %v1997
      %2030 = vst [vmem:[#allocation2 + $0x78] sm:$0xff] %v1998
      %2031 = vst [vmem:[#allocation2 + $0x80] sm:$0xff] %v1999
      %2032 = vst [vmem:[#allocation2 + $0x88] sm:$0xff] %v2000
      %2033 = vst [vmem:[#allocation2 + $0x90] sm:$0xff] %v2001
      %2034 = vst [vmem:[#allocation2 + $0x98] sm:$0xff] %v2002
      %2035 = vst [vmem:[#allocation2 + $0xa0] sm:$0xff] %v2003
      %2036 = vst [vmem:[#allocation2 + $0xa8] sm:$0xff] %v2004
      %2037 = vst [vmem:[#allocation2 + $0xb0] sm:$0xff] %v2005
      %2038 = vst [vmem:[#allocation2 + $0xb8] sm:$0xff] %v2006
      %2039 = vst [vmem:[#allocation2 + $0xc0] sm:$0xff] %v2007
      %2040 = vst [vmem:[#allocation2 + $0xc8] sm:$0xff] %v2008
      %2041 = vst [vmem:[#allocation2 + $0xd0] sm:$0xff] %v2009
      %2042 = vst [vmem:[#allocation2 + $0xd8] sm:$0xff] %v2010
      %2043 = vst [vmem:[#allocation2 + $0xe0] sm:$0xff] %v2011
      %2044 = vst [vmem:[#allocation2 + $0xe8] sm:$0xff] %v2012
      %2045 = vst [vmem:[#allocation2 + $0xf0] sm:$0xff] %v2013
      %2046 = vst [vmem:[#allocation2 + $0xf8] sm:$0xff] %v2014
      %v2047 = vld [vmem:[%s206 + $0x28] sm:$0xf]
      %v2048 = vld [vmem:[%s206 + $0x2c] sm:$0xf]
      %v2049 = vld [vmem:[%s206 + $0x30] sm:$0xf]
      %v2050 = vld [vmem:[%s206 + $0x34] sm:$0xf]
      %v2051 = vld [vmem:[%s206 + $0x38] sm:$0xf]
      %v2052 = vld [vmem:[%s206 + $0x3c] sm:$0xf]
      %v2053 = vld [vmem:[%s206 + $0x40] sm:$0xf]
      %v2054 = vld [vmem:[%s206 + $0x44] sm:$0xf]
      %v2055 = vld [vmem:[%s206 + $0x48] sm:$0xf]
      %v2056 = vld [vmem:[%s206 + $0x4c] sm:$0xf]
      %v2057 = vld [vmem:[%s206 + $0x50] sm:$0xf]
      %v2058 = vld [vmem:[%s206 + $0x54] sm:$0xf]
      %v2059 = vld [vmem:[%s206 + $0x58] sm:$0xf]
      %v2060 = vld [vmem:[%s206 + $0x5c] sm:$0xf]
      %v2061 = vld [vmem:[%s206 + $0x60] sm:$0xf]
      %v2062 = vld [vmem:[%s206 + $0x64] sm:$0xf]
      %v2063 = vld [vmem:[%s206 + $0x68] sm:$0xf]
      %v2064 = vld [vmem:[%s206 + $0x6c] sm:$0xf]
      %v2065 = vld [vmem:[%s206 + $0x70] sm:$0xf]
      %v2066 = vld [vmem:[%s206 + $0x74] sm:$0xf]
      %v2067 = vld [vmem:[%s206 + $0x78] sm:$0xf]
      %v2068 = vld [vmem:[%s206 + $0x7c] sm:$0xf]
      %v2069 = vld [vmem:[%s206 + $0x80] sm:$0xf]
      %v2070 = vld [vmem:[%s206 + $0x84] sm:$0xf]
      %v2071 = vld [vmem:[%s206 + $0x88] sm:$0xf]
      %v2072 = vld [vmem:[%s206 + $0x8c] sm:$0xf]
      %v2073 = vld [vmem:[%s206 + $0x90] sm:$0xf]
      %v2074 = vld [vmem:[%s206 + $0x94] sm:$0xf]
      %v2075 = vld [vmem:[%s206 + $0x98] sm:$0xf]
      %v2076 = vld [vmem:[%s206 + $0x9c] sm:$0xf]
      %v2077 = vld [vmem:[%s206 + $0xa0] sm:$0xf]
      %v2078 = vld [vmem:[%s206 + $0xa4] sm:$0xf]
      %s2079 = scalar_lea.vmem %s210, 320
      %v2080 = vld [vmem:[%s2079] sm:$0xf]
      %v2081 = vld [vmem:[%s2079 + $0x4] sm:$0xf]
      %v2082 = vld [vmem:[%s2079 + $0x8] sm:$0xf]
      %v2083 = vld [vmem:[%s2079 + $0xc] sm:$0xf]
      %v2084 = vld [vmem:[%s2079 + $0x10] sm:$0xf]
      %v2085 = vld [vmem:[%s2079 + $0x14] sm:$0xf]
      %v2086 = vld [vmem:[%s2079 + $0x18] sm:$0xf]
      %v2087 = vld [vmem:[%s2079 + $0x1c] sm:$0xf]
      %v2088 = vld [vmem:[%s2079 + $0x20] sm:$0xf]
      %v2089 = vld [vmem:[%s2079 + $0x24] sm:$0xf]
      %v2090 = vld [vmem:[%s2079 + $0x28] sm:$0xf]
      %v2091 = vld [vmem:[%s2079 + $0x2c] sm:$0xf]
      %v2092 = vld [vmem:[%s2079 + $0x30] sm:$0xf]
      %v2093 = vld [vmem:[%s2079 + $0x34] sm:$0xf]
      %v2094 = vld [vmem:[%s2079 + $0x38] sm:$0xf]
      %v2095 = vld [vmem:[%s2079 + $0x3c] sm:$0xf]
      %v2128 = vunpack.c.l.b16 %v2047
      %v2129 = vunpack.c.l.b16 %v2048
      %v2130 = vunpack.c.l.b16 %v2049
      %v2131 = vunpack.c.l.b16 %v2050
      %v2132 = vunpack.c.l.b16 %v2051
      %v2133 = vunpack.c.l.b16 %v2052
      %v2134 = vunpack.c.l.b16 %v2053
      %v2135 = vunpack.c.l.b16 %v2054
      %v2136 = vunpack.c.l.b16 %v2055
      %v2137 = vunpack.c.l.b16 %v2056
      %v2138 = vunpack.c.l.b16 %v2057
      %v2139 = vunpack.c.l.b16 %v2058
      %v2140 = vunpack.c.l.b16 %v2059
      %v2141 = vunpack.c.l.b16 %v2060
      %v2142 = vunpack.c.l.b16 %v2061
      %v2143 = vunpack.c.l.b16 %v2062
      %v2144 = vunpack.c.l.b16 %v2063
      %v2145 = vunpack.c.l.b16 %v2064
      %v2146 = vunpack.c.l.b16 %v2065
      %v2147 = vunpack.c.l.b16 %v2066
      %v2148 = vunpack.c.l.b16 %v2067
      %v2149 = vunpack.c.l.b16 %v2068
      %v2150 = vunpack.c.l.b16 %v2069
      %v2151 = vunpack.c.l.b16 %v2070
      %v2152 = vunpack.c.l.b16 %v2071
      %v2153 = vunpack.c.l.b16 %v2072
      %v2154 = vunpack.c.l.b16 %v2073
      %v2155 = vunpack.c.l.b16 %v2074
      %v2156 = vunpack.c.l.b16 %v2075
      %v2157 = vunpack.c.l.b16 %v2076
      %v2158 = vunpack.c.l.b16 %v2077
      %v2159 = vunpack.c.l.b16 %v2078
      %v2160 = vpack.c.b16 %v2129, %v2128
      %v2161 = vpack.c.b16 %v2131, %v2130
      %v2162 = vpack.c.b16 %v2133, %v2132
      %v2163 = vpack.c.b16 %v2135, %v2134
      %v2164 = vpack.c.b16 %v2137, %v2136
      %v2165 = vpack.c.b16 %v2139, %v2138
      %v2166 = vpack.c.b16 %v2141, %v2140
      %v2167 = vpack.c.b16 %v2143, %v2142
      %v2168 = vpack.c.b16 %v2145, %v2144
      %v2169 = vpack.c.b16 %v2147, %v2146
      %v2170 = vpack.c.b16 %v2149, %v2148
      %v2171 = vpack.c.b16 %v2151, %v2150
      %v2172 = vpack.c.b16 %v2153, %v2152
      %v2173 = vpack.c.b16 %v2155, %v2154
      %v2174 = vpack.c.b16 %v2157, %v2156
      %v2175 = vpack.c.b16 %v2159, %v2158
      %v2208 = vunpack.c.l.b16 %v2080
      %v2209 = vunpack.c.l.b16 %v2081
      %v2210 = vunpack.c.l.b16 %v2082
      %v2211 = vunpack.c.l.b16 %v2083
      %v2212 = vunpack.c.l.b16 %v2084
      %v2213 = vunpack.c.l.b16 %v2085
      %v2214 = vunpack.c.l.b16 %v2086
      %v2215 = vunpack.c.l.b16 %v2087
      %v2216 = vunpack.c.l.b16 %v2088
      %v2217 = vunpack.c.l.b16 %v2089
      %v2218 = vunpack.c.l.b16 %v2090
      %v2219 = vunpack.c.l.b16 %v2091
      %v2220 = vunpack.c.l.b16 %v2092
      %v2221 = vunpack.c.l.b16 %v2093
      %v2222 = vunpack.c.l.b16 %v2094
      %v2223 = vunpack.c.l.b16 %v2095
      %v2224 = vpack.c.b16 %v2209, %v2208
      %v2225 = vpack.c.b16 %v2211, %v2210
      %v2226 = vpack.c.b16 %v2213, %v2212
      %v2227 = vpack.c.b16 %v2215, %v2214
      %v2228 = vpack.c.b16 %v2217, %v2216
      %v2229 = vpack.c.b16 %v2219, %v2218
      %v2230 = vpack.c.b16 %v2221, %v2220
      %v2231 = vpack.c.b16 %v2223, %v2222
      %2240 = vmatpush.bf16.msra.mxu0 %v2231
      %2241 = vmatpush.bf16.msra.mxu0 %v2230
      %2242 = vmatpush.bf16.msra.mxu0 %v2229
      %2243 = vmatpush.bf16.msra.mxu0 %v2228
      %2244 = vmatpush.bf16.msra.mxu0 %v2227
      %2245 = vmatpush.bf16.msra.mxu0 %v2226
      %2246 = vmatpush.bf16.msra.mxu0 %v2225
      %2247 = vmatpush.bf16.msra.mxu0 %v2224
      %2248 = vmatmul.bf16.gmra.mxu0 %v2160
      %v2249 = vpop.f32.mrf.mxu0
      %v2250 = vadd.f32 0.0, %v2249
      %v2251 = vpop.f32.mrf.mxu0
      %v2252 = vadd.f32 0.0, %v2251
      %2253 = vmatmul.bf16.gmra.mxu0 %v2161
      %v2254 = vpop.f32.mrf.mxu0
      %v2255 = vadd.f32 0.0, %v2254
      %v2256 = vpop.f32.mrf.mxu0
      %v2257 = vadd.f32 0.0, %v2256
      %2258 = vmatmul.bf16.gmra.mxu0 %v2162
      %v2259 = vpop.f32.mrf.mxu0
      %v2260 = vadd.f32 0.0, %v2259
      %v2261 = vpop.f32.mrf.mxu0
      %v2262 = vadd.f32 0.0, %v2261
      %2263 = vmatmul.bf16.gmra.mxu0 %v2163
      %v2264 = vpop.f32.mrf.mxu0
      %v2265 = vadd.f32 0.0, %v2264
      %v2266 = vpop.f32.mrf.mxu0
      %v2267 = vadd.f32 0.0, %v2266
      %2268 = vmatmul.bf16.gmra.mxu0 %v2164
      %v2269 = vpop.f32.mrf.mxu0
      %v2270 = vadd.f32 0.0, %v2269
      %v2271 = vpop.f32.mrf.mxu0
      %v2272 = vadd.f32 0.0, %v2271
      %2273 = vmatmul.bf16.gmra.mxu0 %v2165
      %v2274 = vpop.f32.mrf.mxu0
      %v2275 = vadd.f32 0.0, %v2274
      %v2276 = vpop.f32.mrf.mxu0
      %v2277 = vadd.f32 0.0, %v2276
      %2278 = vmatmul.bf16.gmra.mxu0 %v2166
      %v2279 = vpop.f32.mrf.mxu0
      %v2280 = vadd.f32 0.0, %v2279
      %v2281 = vpop.f32.mrf.mxu0
      %v2282 = vadd.f32 0.0, %v2281
      %2283 = vmatmul.bf16.gmra.mxu0 %v2167
      %v2284 = vpop.f32.mrf.mxu0
      %v2285 = vadd.f32 0.0, %v2284
      %v2286 = vpop.f32.mrf.mxu0
      %v2287 = vadd.f32 0.0, %v2286
      %2288 = vmatmul.bf16.gmra.mxu0 %v2168
      %v2289 = vpop.f32.mrf.mxu0
      %v2290 = vadd.f32 0.0, %v2289
      %v2291 = vpop.f32.mrf.mxu0
      %v2292 = vadd.f32 0.0, %v2291
      %2293 = vmatmul.bf16.gmra.mxu0 %v2169
      %v2294 = vpop.f32.mrf.mxu0
      %v2295 = vadd.f32 0.0, %v2294
      %v2296 = vpop.f32.mrf.mxu0
      %v2297 = vadd.f32 0.0, %v2296
      %2298 = vmatmul.bf16.gmra.mxu0 %v2170
      %v2299 = vpop.f32.mrf.mxu0
      %v2300 = vadd.f32 0.0, %v2299
      %v2301 = vpop.f32.mrf.mxu0
      %v2302 = vadd.f32 0.0, %v2301
      %2303 = vmatmul.bf16.gmra.mxu0 %v2171
      %v2304 = vpop.f32.mrf.mxu0
      %v2305 = vadd.f32 0.0, %v2304
      %v2306 = vpop.f32.mrf.mxu0
      %v2307 = vadd.f32 0.0, %v2306
      %2308 = vmatmul.bf16.gmra.mxu0 %v2172
      %v2309 = vpop.f32.mrf.mxu0
      %v2310 = vadd.f32 0.0, %v2309
      %v2311 = vpop.f32.mrf.mxu0
      %v2312 = vadd.f32 0.0, %v2311
      %2313 = vmatmul.bf16.gmra.mxu0 %v2173
      %v2314 = vpop.f32.mrf.mxu0
      %v2315 = vadd.f32 0.0, %v2314
      %v2316 = vpop.f32.mrf.mxu0
      %v2317 = vadd.f32 0.0, %v2316
      %2318 = vmatmul.bf16.gmra.mxu0 %v2174
      %v2319 = vpop.f32.mrf.mxu0
      %v2320 = vadd.f32 0.0, %v2319
      %v2321 = vpop.f32.mrf.mxu0
      %v2322 = vadd.f32 0.0, %v2321
      %2323 = vmatmul.bf16.gmra.mxu0 %v2175
      %v2324 = vpop.f32.mrf.mxu0
      %v2325 = vadd.f32 0.0, %v2324
      %v2326 = vpop.f32.mrf.mxu0
      %v2327 = vadd.f32 0.0, %v2326
      %2328 = vdwg.mxu0
      %v2329 = vld [vmem:[#allocation2] sm:$0xff]
      %v2330 = vld [vmem:[#allocation2 + $0x8] sm:$0xff]
      %v2331 = vld [vmem:[#allocation2 + $0x10] sm:$0xff]
      %v2332 = vld [vmem:[#allocation2 + $0x18] sm:$0xff]
      %v2333 = vld [vmem:[#allocation2 + $0x20] sm:$0xff]
      %v2334 = vld [vmem:[#allocation2 + $0x28] sm:$0xff]
      %v2335 = vld [vmem:[#allocation2 + $0x30] sm:$0xff]
      %v2336 = vld [vmem:[#allocation2 + $0x38] sm:$0xff]
      %v2337 = vld [vmem:[#allocation2 + $0x40] sm:$0xff]
      %v2338 = vld [vmem:[#allocation2 + $0x48] sm:$0xff]
      %v2339 = vld [vmem:[#allocation2 + $0x50] sm:$0xff]
      %v2340 = vld [vmem:[#allocation2 + $0x58] sm:$0xff]
      %v2341 = vld [vmem:[#allocation2 + $0x60] sm:$0xff]
      %v2342 = vld [vmem:[#allocation2 + $0x68] sm:$0xff]
      %v2343 = vld [vmem:[#allocation2 + $0x70] sm:$0xff]
      %v2344 = vld [vmem:[#allocation2 + $0x78] sm:$0xff]
      %v2345 = vld [vmem:[#allocation2 + $0x80] sm:$0xff]
      %v2346 = vld [vmem:[#allocation2 + $0x88] sm:$0xff]
      %v2347 = vld [vmem:[#allocation2 + $0x90] sm:$0xff]
      %v2348 = vld [vmem:[#allocation2 + $0x98] sm:$0xff]
      %v2349 = vld [vmem:[#allocation2 + $0xa0] sm:$0xff]
      %v2350 = vld [vmem:[#allocation2 + $0xa8] sm:$0xff]
      %v2351 = vld [vmem:[#allocation2 + $0xb0] sm:$0xff]
      %v2352 = vld [vmem:[#allocation2 + $0xb8] sm:$0xff]
      %v2353 = vld [vmem:[#allocation2 + $0xc0] sm:$0xff]
      %v2354 = vld [vmem:[#allocation2 + $0xc8] sm:$0xff]
      %v2355 = vld [vmem:[#allocation2 + $0xd0] sm:$0xff]
      %v2356 = vld [vmem:[#allocation2 + $0xd8] sm:$0xff]
      %v2357 = vld [vmem:[#allocation2 + $0xe0] sm:$0xff]
      %v2358 = vld [vmem:[#allocation2 + $0xe8] sm:$0xff]
      %v2359 = vld [vmem:[#allocation2 + $0xf0] sm:$0xff]
      %v2360 = vld [vmem:[#allocation2 + $0xf8] sm:$0xff]
      %v2361 = vadd.f32 %v2329, %v2250
      %v2362 = vadd.f32 %v2330, %v2252
      %v2363 = vadd.f32 %v2331, %v2255
      %v2364 = vadd.f32 %v2332, %v2257
      %v2365 = vadd.f32 %v2333, %v2260
      %v2366 = vadd.f32 %v2334, %v2262
      %v2367 = vadd.f32 %v2335, %v2265
      %v2368 = vadd.f32 %v2336, %v2267
      %v2369 = vadd.f32 %v2337, %v2270
      %v2370 = vadd.f32 %v2338, %v2272
      %v2371 = vadd.f32 %v2339, %v2275
      %v2372 = vadd.f32 %v2340, %v2277
      %v2373 = vadd.f32 %v2341, %v2280
      %v2374 = vadd.f32 %v2342, %v2282
      %v2375 = vadd.f32 %v2343, %v2285
      %v2376 = vadd.f32 %v2344, %v2287
      %v2377 = vadd.f32 %v2345, %v2290
      %v2378 = vadd.f32 %v2346, %v2292
      %v2379 = vadd.f32 %v2347, %v2295
      %v2380 = vadd.f32 %v2348, %v2297
      %v2381 = vadd.f32 %v2349, %v2300
      %v2382 = vadd.f32 %v2350, %v2302
      %v2383 = vadd.f32 %v2351, %v2305
      %v2384 = vadd.f32 %v2352, %v2307
      %v2385 = vadd.f32 %v2353, %v2310
      %v2386 = vadd.f32 %v2354, %v2312
      %v2387 = vadd.f32 %v2355, %v2315
      %v2388 = vadd.f32 %v2356, %v2317
      %v2389 = vadd.f32 %v2357, %v2320
      %v2390 = vadd.f32 %v2358, %v2322
      %v2391 = vadd.f32 %v2359, %v2325
      %v2392 = vadd.f32 %v2360, %v2327
      %2393 = vst [vmem:[#allocation2] sm:$0xff] %v2361
      %2394 = vst [vmem:[#allocation2 + $0x8] sm:$0xff] %v2362
      %2395 = vst [vmem:[#allocation2 + $0x10] sm:$0xff] %v2363
      %2396 = vst [vmem:[#allocation2 + $0x18] sm:$0xff] %v2364
      %2397 = vst [vmem:[#allocation2 + $0x20] sm:$0xff] %v2365
      %2398 = vst [vmem:[#allocation2 + $0x28] sm:$0xff] %v2366
      %2399 = vst [vmem:[#allocation2 + $0x30] sm:$0xff] %v2367
      %2400 = vst [vmem:[#allocation2 + $0x38] sm:$0xff] %v2368
      %2401 = vst [vmem:[#allocation2 + $0x40] sm:$0xff] %v2369
      %2402 = vst [vmem:[#allocation2 + $0x48] sm:$0xff] %v2370
      %2403 = vst [vmem:[#allocation2 + $0x50] sm:$0xff] %v2371
      %2404 = vst [vmem:[#allocation2 + $0x58] sm:$0xff] %v2372
      %2405 = vst [vmem:[#allocation2 + $0x60] sm:$0xff] %v2373
      %2406 = vst [vmem:[#allocation2 + $0x68] sm:$0xff] %v2374
      %2407 = vst [vmem:[#allocation2 + $0x70] sm:$0xff] %v2375
      %2408 = vst [vmem:[#allocation2 + $0x78] sm:$0xff] %v2376
      %2409 = vst [vmem:[#allocation2 + $0x80] sm:$0xff] %v2377
      %2410 = vst [vmem:[#allocation2 + $0x88] sm:$0xff] %v2378
      %2411 = vst [vmem:[#allocation2 + $0x90] sm:$0xff] %v2379
      %2412 = vst [vmem:[#allocation2 + $0x98] sm:$0xff] %v2380
      %2413 = vst [vmem:[#allocation2 + $0xa0] sm:$0xff] %v2381
      %2414 = vst [vmem:[#allocation2 + $0xa8] sm:$0xff] %v2382
      %2415 = vst [vmem:[#allocation2 + $0xb0] sm:$0xff] %v2383
      %2416 = vst [vmem:[#allocation2 + $0xb8] sm:$0xff] %v2384
      %2417 = vst [vmem:[#allocation2 + $0xc0] sm:$0xff] %v2385
      %2418 = vst [vmem:[#allocation2 + $0xc8] sm:$0xff] %v2386
      %2419 = vst [vmem:[#allocation2 + $0xd0] sm:$0xff] %v2387
      %2420 = vst [vmem:[#allocation2 + $0xd8] sm:$0xff] %v2388
      %2421 = vst [vmem:[#allocation2 + $0xe0] sm:$0xff] %v2389
      %2422 = vst [vmem:[#allocation2 + $0xe8] sm:$0xff] %v2390
      %2423 = vst [vmem:[#allocation2 + $0xf0] sm:$0xff] %v2391
      %2424 = vst [vmem:[#allocation2 + $0xf8] sm:$0xff] %v2392
      %v2425 = vld [vmem:[%s206 + $0x30] sm:$0xf]
      %v2426 = vld [vmem:[%s206 + $0x34] sm:$0xf]
      %v2427 = vld [vmem:[%s206 + $0x38] sm:$0xf]
      %v2428 = vld [vmem:[%s206 + $0x3c] sm:$0xf]
      %v2429 = vld [vmem:[%s206 + $0x40] sm:$0xf]
      %v2430 = vld [vmem:[%s206 + $0x44] sm:$0xf]
      %v2431 = vld [vmem:[%s206 + $0x48] sm:$0xf]
      %v2432 = vld [vmem:[%s206 + $0x4c] sm:$0xf]
      %v2433 = vld [vmem:[%s206 + $0x50] sm:$0xf]
      %v2434 = vld [vmem:[%s206 + $0x54] sm:$0xf]
      %v2435 = vld [vmem:[%s206 + $0x58] sm:$0xf]
      %v2436 = vld [vmem:[%s206 + $0x5c] sm:$0xf]
      %v2437 = vld [vmem:[%s206 + $0x60] sm:$0xf]
      %v2438 = vld [vmem:[%s206 + $0x64] sm:$0xf]
      %v2439 = vld [vmem:[%s206 + $0x68] sm:$0xf]
      %v2440 = vld [vmem:[%s206 + $0x6c] sm:$0xf]
      %v2441 = vld [vmem:[%s206 + $0x70] sm:$0xf]
      %v2442 = vld [vmem:[%s206 + $0x74] sm:$0xf]
      %v2443 = vld [vmem:[%s206 + $0x78] sm:$0xf]
      %v2444 = vld [vmem:[%s206 + $0x7c] sm:$0xf]
      %v2445 = vld [vmem:[%s206 + $0x80] sm:$0xf]
      %v2446 = vld [vmem:[%s206 + $0x84] sm:$0xf]
      %v2447 = vld [vmem:[%s206 + $0x88] sm:$0xf]
      %v2448 = vld [vmem:[%s206 + $0x8c] sm:$0xf]
      %v2449 = vld [vmem:[%s206 + $0x90] sm:$0xf]
      %v2450 = vld [vmem:[%s206 + $0x94] sm:$0xf]
      %v2451 = vld [vmem:[%s206 + $0x98] sm:$0xf]
      %v2452 = vld [vmem:[%s206 + $0x9c] sm:$0xf]
      %v2453 = vld [vmem:[%s206 + $0xa0] sm:$0xf]
      %v2454 = vld [vmem:[%s206 + $0xa4] sm:$0xf]
      %v2455 = vld [vmem:[%s206 + $0xa8] sm:$0xf]
      %v2456 = vld [vmem:[%s206 + $0xac] sm:$0xf]
      %s2457 = scalar_lea.vmem %s210, 384
      %v2458 = vld [vmem:[%s2457] sm:$0xf]
      %v2459 = vld [vmem:[%s2457 + $0x4] sm:$0xf]
      %v2460 = vld [vmem:[%s2457 + $0x8] sm:$0xf]
      %v2461 = vld [vmem:[%s2457 + $0xc] sm:$0xf]
      %v2462 = vld [vmem:[%s2457 + $0x10] sm:$0xf]
      %v2463 = vld [vmem:[%s2457 + $0x14] sm:$0xf]
      %v2464 = vld [vmem:[%s2457 + $0x18] sm:$0xf]
      %v2465 = vld [vmem:[%s2457 + $0x1c] sm:$0xf]
      %v2466 = vld [vmem:[%s2457 + $0x20] sm:$0xf]
      %v2467 = vld [vmem:[%s2457 + $0x24] sm:$0xf]
      %v2468 = vld [vmem:[%s2457 + $0x28] sm:$0xf]
      %v2469 = vld [vmem:[%s2457 + $0x2c] sm:$0xf]
      %v2470 = vld [vmem:[%s2457 + $0x30] sm:$0xf]
      %v2471 = vld [vmem:[%s2457 + $0x34] sm:$0xf]
      %v2472 = vld [vmem:[%s2457 + $0x38] sm:$0xf]
      %v2473 = vld [vmem:[%s2457 + $0x3c] sm:$0xf]
      %v2506 = vunpack.c.l.b16 %v2425
      %v2507 = vunpack.c.l.b16 %v2426
      %v2508 = vunpack.c.l.b16 %v2427
      %v2509 = vunpack.c.l.b16 %v2428
      %v2510 = vunpack.c.l.b16 %v2429
      %v2511 = vunpack.c.l.b16 %v2430
      %v2512 = vunpack.c.l.b16 %v2431
      %v2513 = vunpack.c.l.b16 %v2432
      %v2514 = vunpack.c.l.b16 %v2433
      %v2515 = vunpack.c.l.b16 %v2434
      %v2516 = vunpack.c.l.b16 %v2435
      %v2517 = vunpack.c.l.b16 %v2436
      %v2518 = vunpack.c.l.b16 %v2437
      %v2519 = vunpack.c.l.b16 %v2438
      %v2520 = vunpack.c.l.b16 %v2439
      %v2521 = vunpack.c.l.b16 %v2440
      %v2522 = vunpack.c.l.b16 %v2441
      %v2523 = vunpack.c.l.b16 %v2442
      %v2524 = vunpack.c.l.b16 %v2443
      %v2525 = vunpack.c.l.b16 %v2444
      %v2526 = vunpack.c.l.b16 %v2445
      %v2527 = vunpack.c.l.b16 %v2446
      %v2528 = vunpack.c.l.b16 %v2447
      %v2529 = vunpack.c.l.b16 %v2448
      %v2530 = vunpack.c.l.b16 %v2449
      %v2531 = vunpack.c.l.b16 %v2450
      %v2532 = vunpack.c.l.b16 %v2451
      %v2533 = vunpack.c.l.b16 %v2452
      %v2534 = vunpack.c.l.b16 %v2453
      %v2535 = vunpack.c.l.b16 %v2454
      %v2536 = vunpack.c.l.b16 %v2455
      %v2537 = vunpack.c.l.b16 %v2456
      %v2538 = vpack.c.b16 %v2507, %v2506
      %v2539 = vpack.c.b16 %v2509, %v2508
      %v2540 = vpack.c.b16 %v2511, %v2510
      %v2541 = vpack.c.b16 %v2513, %v2512
      %v2542 = vpack.c.b16 %v2515, %v2514
      %v2543 = vpack.c.b16 %v2517, %v2516
      %v2544 = vpack.c.b16 %v2519, %v2518
      %v2545 = vpack.c.b16 %v2521, %v2520
      %v2546 = vpack.c.b16 %v2523, %v2522
      %v2547 = vpack.c.b16 %v2525, %v2524
      %v2548 = vpack.c.b16 %v2527, %v2526
      %v2549 = vpack.c.b16 %v2529, %v2528
      %v2550 = vpack.c.b16 %v2531, %v2530
      %v2551 = vpack.c.b16 %v2533, %v2532
      %v2552 = vpack.c.b16 %v2535, %v2534
      %v2553 = vpack.c.b16 %v2537, %v2536
      %v2586 = vunpack.c.l.b16 %v2458
      %v2587 = vunpack.c.l.b16 %v2459
      %v2588 = vunpack.c.l.b16 %v2460
      %v2589 = vunpack.c.l.b16 %v2461
      %v2590 = vunpack.c.l.b16 %v2462
      %v2591 = vunpack.c.l.b16 %v2463
      %v2592 = vunpack.c.l.b16 %v2464
      %v2593 = vunpack.c.l.b16 %v2465
      %v2594 = vunpack.c.l.b16 %v2466
      %v2595 = vunpack.c.l.b16 %v2467
      %v2596 = vunpack.c.l.b16 %v2468
      %v2597 = vunpack.c.l.b16 %v2469
      %v2598 = vunpack.c.l.b16 %v2470
      %v2599 = vunpack.c.l.b16 %v2471
      %v2600 = vunpack.c.l.b16 %v2472
      %v2601 = vunpack.c.l.b16 %v2473
      %v2602 = vpack.c.b16 %v2587, %v2586
      %v2603 = vpack.c.b16 %v2589, %v2588
      %v2604 = vpack.c.b16 %v2591, %v2590
      %v2605 = vpack.c.b16 %v2593, %v2592
      %v2606 = vpack.c.b16 %v2595, %v2594
      %v2607 = vpack.c.b16 %v2597, %v2596
      %v2608 = vpack.c.b16 %v2599, %v2598
      %v2609 = vpack.c.b16 %v2601, %v2600
      %2618 = vmatpush.bf16.msra.mxu0 %v2609
      %2619 = vmatpush.bf16.msra.mxu0 %v2608
      %2620 = vmatpush.bf16.msra.mxu0 %v2607
      %2621 = vmatpush.bf16.msra.mxu0 %v2606
      %2622 = vmatpush.bf16.msra.mxu0 %v2605
      %2623 = vmatpush.bf16.msra.mxu0 %v2604
      %2624 = vmatpush.bf16.msra.mxu0 %v2603
      %2625 = vmatpush.bf16.msra.mxu0 %v2602
      %2626 = vmatmul.bf16.gmra.mxu0 %v2538
      %v2627 = vpop.f32.mrf.mxu0
      %v2628 = vadd.f32 0.0, %v2627
      %v2629 = vpop.f32.mrf.mxu0
      %v2630 = vadd.f32 0.0, %v2629
      %2631 = vmatmul.bf16.gmra.mxu0 %v2539
      %v2632 = vpop.f32.mrf.mxu0
      %v2633 = vadd.f32 0.0, %v2632
      %v2634 = vpop.f32.mrf.mxu0
      %v2635 = vadd.f32 0.0, %v2634
      %2636 = vmatmul.bf16.gmra.mxu0 %v2540
      %v2637 = vpop.f32.mrf.mxu0
      %v2638 = vadd.f32 0.0, %v2637
      %v2639 = vpop.f32.mrf.mxu0
      %v2640 = vadd.f32 0.0, %v2639
      %2641 = vmatmul.bf16.gmra.mxu0 %v2541
      %v2642 = vpop.f32.mrf.mxu0
      %v2643 = vadd.f32 0.0, %v2642
      %v2644 = vpop.f32.mrf.mxu0
      %v2645 = vadd.f32 0.0, %v2644
      %2646 = vmatmul.bf16.gmra.mxu0 %v2542
      %v2647 = vpop.f32.mrf.mxu0
      %v2648 = vadd.f32 0.0, %v2647
      %v2649 = vpop.f32.mrf.mxu0
      %v2650 = vadd.f32 0.0, %v2649
      %2651 = vmatmul.bf16.gmra.mxu0 %v2543
      %v2652 = vpop.f32.mrf.mxu0
      %v2653 = vadd.f32 0.0, %v2652
      %v2654 = vpop.f32.mrf.mxu0
      %v2655 = vadd.f32 0.0, %v2654
      %2656 = vmatmul.bf16.gmra.mxu0 %v2544
      %v2657 = vpop.f32.mrf.mxu0
      %v2658 = vadd.f32 0.0, %v2657
      %v2659 = vpop.f32.mrf.mxu0
      %v2660 = vadd.f32 0.0, %v2659
      %2661 = vmatmul.bf16.gmra.mxu0 %v2545
      %v2662 = vpop.f32.mrf.mxu0
      %v2663 = vadd.f32 0.0, %v2662
      %v2664 = vpop.f32.mrf.mxu0
      %v2665 = vadd.f32 0.0, %v2664
      %2666 = vmatmul.bf16.gmra.mxu0 %v2546
      %v2667 = vpop.f32.mrf.mxu0
      %v2668 = vadd.f32 0.0, %v2667
      %v2669 = vpop.f32.mrf.mxu0
      %v2670 = vadd.f32 0.0, %v2669
      %2671 = vmatmul.bf16.gmra.mxu0 %v2547
      %v2672 = vpop.f32.mrf.mxu0
      %v2673 = vadd.f32 0.0, %v2672
      %v2674 = vpop.f32.mrf.mxu0
      %v2675 = vadd.f32 0.0, %v2674
      %2676 = vmatmul.bf16.gmra.mxu0 %v2548
      %v2677 = vpop.f32.mrf.mxu0
      %v2678 = vadd.f32 0.0, %v2677
      %v2679 = vpop.f32.mrf.mxu0
      %v2680 = vadd.f32 0.0, %v2679
      %2681 = vmatmul.bf16.gmra.mxu0 %v2549
      %v2682 = vpop.f32.mrf.mxu0
      %v2683 = vadd.f32 0.0, %v2682
      %v2684 = vpop.f32.mrf.mxu0
      %v2685 = vadd.f32 0.0, %v2684
      %2686 = vmatmul.bf16.gmra.mxu0 %v2550
      %v2687 = vpop.f32.mrf.mxu0
      %v2688 = vadd.f32 0.0, %v2687
      %v2689 = vpop.f32.mrf.mxu0
      %v2690 = vadd.f32 0.0, %v2689
      %2691 = vmatmul.bf16.gmra.mxu0 %v2551
      %v2692 = vpop.f32.mrf.mxu0
      %v2693 = vadd.f32 0.0, %v2692
      %v2694 = vpop.f32.mrf.mxu0
      %v2695 = vadd.f32 0.0, %v2694
      %2696 = vmatmul.bf16.gmra.mxu0 %v2552
      %v2697 = vpop.f32.mrf.mxu0
      %v2698 = vadd.f32 0.0, %v2697
      %v2699 = vpop.f32.mrf.mxu0
      %v2700 = vadd.f32 0.0, %v2699
      %2701 = vmatmul.bf16.gmra.mxu0 %v2553
      %v2702 = vpop.f32.mrf.mxu0
      %v2703 = vadd.f32 0.0, %v2702
      %v2704 = vpop.f32.mrf.mxu0
      %v2705 = vadd.f32 0.0, %v2704
      %2706 = vdwg.mxu0
      %v2707 = vld [vmem:[#allocation2] sm:$0xff]
      %v2708 = vld [vmem:[#allocation2 + $0x8] sm:$0xff]
      %v2709 = vld [vmem:[#allocation2 + $0x10] sm:$0xff]
      %v2710 = vld [vmem:[#allocation2 + $0x18] sm:$0xff]
      %v2711 = vld [vmem:[#allocation2 + $0x20] sm:$0xff]
      %v2712 = vld [vmem:[#allocation2 + $0x28] sm:$0xff]
      %v2713 = vld [vmem:[#allocation2 + $0x30] sm:$0xff]
      %v2714 = vld [vmem:[#allocation2 + $0x38] sm:$0xff]
      %v2715 = vld [vmem:[#allocation2 + $0x40] sm:$0xff]
      %v2716 = vld [vmem:[#allocation2 + $0x48] sm:$0xff]
      %v2717 = vld [vmem:[#allocation2 + $0x50] sm:$0xff]
      %v2718 = vld [vmem:[#allocation2 + $0x58] sm:$0xff]
      %v2719 = vld [vmem:[#allocation2 + $0x60] sm:$0xff]
      %v2720 = vld [vmem:[#allocation2 + $0x68] sm:$0xff]
      %v2721 = vld [vmem:[#allocation2 + $0x70] sm:$0xff]
      %v2722 = vld [vmem:[#allocation2 + $0x78] sm:$0xff]
      %v2723 = vld [vmem:[#allocation2 + $0x80] sm:$0xff]
      %v2724 = vld [vmem:[#allocation2 + $0x88] sm:$0xff]
      %v2725 = vld [vmem:[#allocation2 + $0x90] sm:$0xff]
      %v2726 = vld [vmem:[#allocation2 + $0x98] sm:$0xff]
      %v2727 = vld [vmem:[#allocation2 + $0xa0] sm:$0xff]
      %v2728 = vld [vmem:[#allocation2 + $0xa8] sm:$0xff]
      %v2729 = vld [vmem:[#allocation2 + $0xb0] sm:$0xff]
      %v2730 = vld [vmem:[#allocation2 + $0xb8] sm:$0xff]
      %v2731 = vld [vmem:[#allocation2 + $0xc0] sm:$0xff]
      %v2732 = vld [vmem:[#allocation2 + $0xc8] sm:$0xff]
      %v2733 = vld [vmem:[#allocation2 + $0xd0] sm:$0xff]
      %v2734 = vld [vmem:[#allocation2 + $0xd8] sm:$0xff]
      %v2735 = vld [vmem:[#allocation2 + $0xe0] sm:$0xff]
      %v2736 = vld [vmem:[#allocation2 + $0xe8] sm:$0xff]
      %v2737 = vld [vmem:[#allocation2 + $0xf0] sm:$0xff]
      %v2738 = vld [vmem:[#allocation2 + $0xf8] sm:$0xff]
      %v2739 = vadd.f32 %v2707, %v2628
      %v2740 = vadd.f32 %v2708, %v2630
      %v2741 = vadd.f32 %v2709, %v2633
      %v2742 = vadd.f32 %v2710, %v2635
      %v2743 = vadd.f32 %v2711, %v2638
      %v2744 = vadd.f32 %v2712, %v2640
      %v2745 = vadd.f32 %v2713, %v2643
      %v2746 = vadd.f32 %v2714, %v2645
      %v2747 = vadd.f32 %v2715, %v2648
      %v2748 = vadd.f32 %v2716, %v2650
      %v2749 = vadd.f32 %v2717, %v2653
      %v2750 = vadd.f32 %v2718, %v2655
      %v2751 = vadd.f32 %v2719, %v2658
      %v2752 = vadd.f32 %v2720, %v2660
      %v2753 = vadd.f32 %v2721, %v2663
      %v2754 = vadd.f32 %v2722, %v2665
      %v2755 = vadd.f32 %v2723, %v2668
      %v2756 = vadd.f32 %v2724, %v2670
      %v2757 = vadd.f32 %v2725, %v2673
      %v2758 = vadd.f32 %v2726, %v2675
      %v2759 = vadd.f32 %v2727, %v2678
      %v2760 = vadd.f32 %v2728, %v2680
      %v2761 = vadd.f32 %v2729, %v2683
      %v2762 = vadd.f32 %v2730, %v2685
      %v2763 = vadd.f32 %v2731, %v2688
      %v2764 = vadd.f32 %v2732, %v2690
      %v2765 = vadd.f32 %v2733, %v2693
      %v2766 = vadd.f32 %v2734, %v2695
      %v2767 = vadd.f32 %v2735, %v2698
      %v2768 = vadd.f32 %v2736, %v2700
      %v2769 = vadd.f32 %v2737, %v2703
      %v2770 = vadd.f32 %v2738, %v2705
      %2771 = vst [vmem:[#allocation2] sm:$0xff] %v2739
      %2772 = vst [vmem:[#allocation2 + $0x8] sm:$0xff] %v2740
      %2773 = vst [vmem:[#allocation2 + $0x10] sm:$0xff] %v2741
      %2774 = vst [vmem:[#allocation2 + $0x18] sm:$0xff] %v2742
      %2775 = vst [vmem:[#allocation2 + $0x20] sm:$0xff] %v2743
      %2776 = vst [vmem:[#allocation2 + $0x28] sm:$0xff] %v2744
      %2777 = vst [vmem:[#allocation2 + $0x30] sm:$0xff] %v2745
      %2778 = vst [vmem:[#allocation2 + $0x38] sm:$0xff] %v2746
      %2779 = vst [vmem:[#allocation2 + $0x40] sm:$0xff] %v2747
      %2780 = vst [vmem:[#allocation2 + $0x48] sm:$0xff] %v2748
      %2781 = vst [vmem:[#allocation2 + $0x50] sm:$0xff] %v2749
      %2782 = vst [vmem:[#allocation2 + $0x58] sm:$0xff] %v2750
      %2783 = vst [vmem:[#allocation2 + $0x60] sm:$0xff] %v2751
      %2784 = vst [vmem:[#allocation2 + $0x68] sm:$0xff] %v2752
      %2785 = vst [vmem:[#allocation2 + $0x70] sm:$0xff] %v2753
      %2786 = vst [vmem:[#allocation2 + $0x78] sm:$0xff] %v2754
      %2787 = vst [vmem:[#allocation2 + $0x80] sm:$0xff] %v2755
      %2788 = vst [vmem:[#allocation2 + $0x88] sm:$0xff] %v2756
      %2789 = vst [vmem:[#allocation2 + $0x90] sm:$0xff] %v2757
      %2790 = vst [vmem:[#allocation2 + $0x98] sm:$0xff] %v2758
      %2791 = vst [vmem:[#allocation2 + $0xa0] sm:$0xff] %v2759
      %2792 = vst [vmem:[#allocation2 + $0xa8] sm:$0xff] %v2760
      %2793 = vst [vmem:[#allocation2 + $0xb0] sm:$0xff] %v2761
      %2794 = vst [vmem:[#allocation2 + $0xb8] sm:$0xff] %v2762
      %2795 = vst [vmem:[#allocation2 + $0xc0] sm:$0xff] %v2763
      %2796 = vst [vmem:[#allocation2 + $0xc8] sm:$0xff] %v2764
      %2797 = vst [vmem:[#allocation2 + $0xd0] sm:$0xff] %v2765
      %2798 = vst [vmem:[#allocation2 + $0xd8] sm:$0xff] %v2766
      %2799 = vst [vmem:[#allocation2 + $0xe0] sm:$0xff] %v2767
      %2800 = vst [vmem:[#allocation2 + $0xe8] sm:$0xff] %v2768
      %2801 = vst [vmem:[#allocation2 + $0xf0] sm:$0xff] %v2769
      %2802 = vst [vmem:[#allocation2 + $0xf8] sm:$0xff] %v2770
      %v2803 = vld [vmem:[%s206 + $0x38] sm:$0xf]
      %v2804 = vld [vmem:[%s206 + $0x3c] sm:$0xf]
      %v2805 = vld [vmem:[%s206 + $0x40] sm:$0xf]
      %v2806 = vld [vmem:[%s206 + $0x44] sm:$0xf]
      %v2807 = vld [vmem:[%s206 + $0x48] sm:$0xf]
      %v2808 = vld [vmem:[%s206 + $0x4c] sm:$0xf]
      %v2809 = vld [vmem:[%s206 + $0x50] sm:$0xf]
      %v2810 = vld [vmem:[%s206 + $0x54] sm:$0xf]
      %v2811 = vld [vmem:[%s206 + $0x58] sm:$0xf]
      %v2812 = vld [vmem:[%s206 + $0x5c] sm:$0xf]
      %v2813 = vld [vmem:[%s206 + $0x60] sm:$0xf]
      %v2814 = vld [vmem:[%s206 + $0x64] sm:$0xf]
      %v2815 = vld [vmem:[%s206 + $0x68] sm:$0xf]
      %v2816 = vld [vmem:[%s206 + $0x6c] sm:$0xf]
      %v2817 = vld [vmem:[%s206 + $0x70] sm:$0xf]
      %v2818 = vld [vmem:[%s206 + $0x74] sm:$0xf]
      %v2819 = vld [vmem:[%s206 + $0x78] sm:$0xf]
      %v2820 = vld [vmem:[%s206 + $0x7c] sm:$0xf]
      %v2821 = vld [vmem:[%s206 + $0x80] sm:$0xf]
      %v2822 = vld [vmem:[%s206 + $0x84] sm:$0xf]
      %v2823 = vld [vmem:[%s206 + $0x88] sm:$0xf]
      %v2824 = vld [vmem:[%s206 + $0x8c] sm:$0xf]
      %v2825 = vld [vmem:[%s206 + $0x90] sm:$0xf]
      %v2826 = vld [vmem:[%s206 + $0x94] sm:$0xf]
      %v2827 = vld [vmem:[%s206 + $0x98] sm:$0xf]
      %v2828 = vld [vmem:[%s206 + $0x9c] sm:$0xf]
      %v2829 = vld [vmem:[%s206 + $0xa0] sm:$0xf]
      %v2830 = vld [vmem:[%s206 + $0xa4] sm:$0xf]
      %v2831 = vld [vmem:[%s206 + $0xa8] sm:$0xf]
      %v2832 = vld [vmem:[%s206 + $0xac] sm:$0xf]
      %v2833 = vld [vmem:[%s206 + $0xb0] sm:$0xf]
      %v2834 = vld [vmem:[%s206 + $0xb4] sm:$0xf]
      %s2835 = scalar_lea.vmem %s210, 448
      %v2836 = vld [vmem:[%s2835] sm:$0xf]
      %v2837 = vld [vmem:[%s2835 + $0x4] sm:$0xf]
      %v2838 = vld [vmem:[%s2835 + $0x8] sm:$0xf]
      %v2839 = vld [vmem:[%s2835 + $0xc] sm:$0xf]
      %v2840 = vld [vmem:[%s2835 + $0x10] sm:$0xf]
      %v2841 = vld [vmem:[%s2835 + $0x14] sm:$0xf]
      %v2842 = vld [vmem:[%s2835 + $0x18] sm:$0xf]
      %v2843 = vld [vmem:[%s2835 + $0x1c] sm:$0xf]
      %v2844 = vld [vmem:[%s2835 + $0x20] sm:$0xf]
      %v2845 = vld [vmem:[%s2835 + $0x24] sm:$0xf]
      %v2846 = vld [vmem:[%s2835 + $0x28] sm:$0xf]
      %v2847 = vld [vmem:[%s2835 + $0x2c] sm:$0xf]
      %v2848 = vld [vmem:[%s2835 + $0x30] sm:$0xf]
      %v2849 = vld [vmem:[%s2835 + $0x34] sm:$0xf]
      %v2850 = vld [vmem:[%s2835 + $0x38] sm:$0xf]
      %v2851 = vld [vmem:[%s2835 + $0x3c] sm:$0xf]
      %v2884 = vunpack.c.l.b16 %v2803
      %v2885 = vunpack.c.l.b16 %v2804
      %v2886 = vunpack.c.l.b16 %v2805
      %v2887 = vunpack.c.l.b16 %v2806
      %v2888 = vunpack.c.l.b16 %v2807
      %v2889 = vunpack.c.l.b16 %v2808
      %v2890 = vunpack.c.l.b16 %v2809
      %v2891 = vunpack.c.l.b16 %v2810
      %v2892 = vunpack.c.l.b16 %v2811
      %v2893 = vunpack.c.l.b16 %v2812
      %v2894 = vunpack.c.l.b16 %v2813
      %v2895 = vunpack.c.l.b16 %v2814
      %v2896 = vunpack.c.l.b16 %v2815
      %v2897 = vunpack.c.l.b16 %v2816
      %v2898 = vunpack.c.l.b16 %v2817
      %v2899 = vunpack.c.l.b16 %v2818
      %v2900 = vunpack.c.l.b16 %v2819
      %v2901 = vunpack.c.l.b16 %v2820
      %v2902 = vunpack.c.l.b16 %v2821
      %v2903 = vunpack.c.l.b16 %v2822
      %v2904 = vunpack.c.l.b16 %v2823
      %v2905 = vunpack.c.l.b16 %v2824
      %v2906 = vunpack.c.l.b16 %v2825
      %v2907 = vunpack.c.l.b16 %v2826
      %v2908 = vunpack.c.l.b16 %v2827
      %v2909 = vunpack.c.l.b16 %v2828
      %v2910 = vunpack.c.l.b16 %v2829
      %v2911 = vunpack.c.l.b16 %v2830
      %v2912 = vunpack.c.l.b16 %v2831
      %v2913 = vunpack.c.l.b16 %v2832
      %v2914 = vunpack.c.l.b16 %v2833
      %v2915 = vunpack.c.l.b16 %v2834
      %v2916 = vpack.c.b16 %v2885, %v2884
      %v2917 = vpack.c.b16 %v2887, %v2886
      %v2918 = vpack.c.b16 %v2889, %v2888
      %v2919 = vpack.c.b16 %v2891, %v2890
      %v2920 = vpack.c.b16 %v2893, %v2892
      %v2921 = vpack.c.b16 %v2895, %v2894
      %v2922 = vpack.c.b16 %v2897, %v2896
      %v2923 = vpack.c.b16 %v2899, %v2898
      %v2924 = vpack.c.b16 %v2901, %v2900
      %v2925 = vpack.c.b16 %v2903, %v2902
      %v2926 = vpack.c.b16 %v2905, %v2904
      %v2927 = vpack.c.b16 %v2907, %v2906
      %v2928 = vpack.c.b16 %v2909, %v2908
      %v2929 = vpack.c.b16 %v2911, %v2910
      %v2930 = vpack.c.b16 %v2913, %v2912
      %v2931 = vpack.c.b16 %v2915, %v2914
      %v2964 = vunpack.c.l.b16 %v2836
      %v2965 = vunpack.c.l.b16 %v2837
      %v2966 = vunpack.c.l.b16 %v2838
      %v2967 = vunpack.c.l.b16 %v2839
      %v2968 = vunpack.c.l.b16 %v2840
      %v2969 = vunpack.c.l.b16 %v2841
      %v2970 = vunpack.c.l.b16 %v2842
      %v2971 = vunpack.c.l.b16 %v2843
      %v2972 = vunpack.c.l.b16 %v2844
      %v2973 = vunpack.c.l.b16 %v2845
      %v2974 = vunpack.c.l.b16 %v2846
      %v2975 = vunpack.c.l.b16 %v2847
      %v2976 = vunpack.c.l.b16 %v2848
      %v2977 = vunpack.c.l.b16 %v2849
      %v2978 = vunpack.c.l.b16 %v2850
      %v2979 = vunpack.c.l.b16 %v2851
      %v2980 = vpack.c.b16 %v2965, %v2964
      %v2981 = vpack.c.b16 %v2967, %v2966
      %v2982 = vpack.c.b16 %v2969, %v2968
      %v2983 = vpack.c.b16 %v2971, %v2970
      %v2984 = vpack.c.b16 %v2973, %v2972
      %v2985 = vpack.c.b16 %v2975, %v2974
      %v2986 = vpack.c.b16 %v2977, %v2976
      %v2987 = vpack.c.b16 %v2979, %v2978
      %2996 = vmatpush.bf16.msra.mxu0 %v2987
      %2997 = vmatpush.bf16.msra.mxu0 %v2986
      %2998 = vmatpush.bf16.msra.mxu0 %v2985
      %2999 = vmatpush.bf16.msra.mxu0 %v2984
      %3000 = vmatpush.bf16.msra.mxu0 %v2983
      %3001 = vmatpush.bf16.msra.mxu0 %v2982
      %3002 = vmatpush.bf16.msra.mxu0 %v2981
      %3003 = vmatpush.bf16.msra.mxu0 %v2980
      %3004 = vmatmul.bf16.gmra.mxu0 %v2916
      %v3005 = vpop.f32.mrf.mxu0
      %v3006 = vadd.f32 0.0, %v3005
      %v3007 = vpop.f32.mrf.mxu0
      %v3008 = vadd.f32 0.0, %v3007
      %3009 = vmatmul.bf16.gmra.mxu0 %v2917
      %v3010 = vpop.f32.mrf.mxu0
      %v3011 = vadd.f32 0.0, %v3010
      %v3012 = vpop.f32.mrf.mxu0
      %v3013 = vadd.f32 0.0, %v3012
      %3014 = vmatmul.bf16.gmra.mxu0 %v2918
      %v3015 = vpop.f32.mrf.mxu0
      %v3016 = vadd.f32 0.0, %v3015
      %v3017 = vpop.f32.mrf.mxu0
      %v3018 = vadd.f32 0.0, %v3017
      %3019 = vmatmul.bf16.gmra.mxu0 %v2919
      %v3020 = vpop.f32.mrf.mxu0
      %v3021 = vadd.f32 0.0, %v3020
      %v3022 = vpop.f32.mrf.mxu0
      %v3023 = vadd.f32 0.0, %v3022
      %3024 = vmatmul.bf16.gmra.mxu0 %v2920
      %v3025 = vpop.f32.mrf.mxu0
      %v3026 = vadd.f32 0.0, %v3025
      %v3027 = vpop.f32.mrf.mxu0
      %v3028 = vadd.f32 0.0, %v3027
      %3029 = vmatmul.bf16.gmra.mxu0 %v2921
      %v3030 = vpop.f32.mrf.mxu0
      %v3031 = vadd.f32 0.0, %v3030
      %v3032 = vpop.f32.mrf.mxu0
      %v3033 = vadd.f32 0.0, %v3032
      %3034 = vmatmul.bf16.gmra.mxu0 %v2922
      %v3035 = vpop.f32.mrf.mxu0
      %v3036 = vadd.f32 0.0, %v3035
      %v3037 = vpop.f32.mrf.mxu0
      %v3038 = vadd.f32 0.0, %v3037
      %3039 = vmatmul.bf16.gmra.mxu0 %v2923
      %v3040 = vpop.f32.mrf.mxu0
      %v3041 = vadd.f32 0.0, %v3040
      %v3042 = vpop.f32.mrf.mxu0
      %v3043 = vadd.f32 0.0, %v3042
      %3044 = vmatmul.bf16.gmra.mxu0 %v2924
      %v3045 = vpop.f32.mrf.mxu0
      %v3046 = vadd.f32 0.0, %v3045
      %v3047 = vpop.f32.mrf.mxu0
      %v3048 = vadd.f32 0.0, %v3047
      %3049 = vmatmul.bf16.gmra.mxu0 %v2925
      %v3050 = vpop.f32.mrf.mxu0
      %v3051 = vadd.f32 0.0, %v3050
      %v3052 = vpop.f32.mrf.mxu0
      %v3053 = vadd.f32 0.0, %v3052
      %3054 = vmatmul.bf16.gmra.mxu0 %v2926
      %v3055 = vpop.f32.mrf.mxu0
      %v3056 = vadd.f32 0.0, %v3055
      %v3057 = vpop.f32.mrf.mxu0
      %v3058 = vadd.f32 0.0, %v3057
      %3059 = vmatmul.bf16.gmra.mxu0 %v2927
      %v3060 = vpop.f32.mrf.mxu0
      %v3061 = vadd.f32 0.0, %v3060
      %v3062 = vpop.f32.mrf.mxu0
      %v3063 = vadd.f32 0.0, %v3062
      %3064 = vmatmul.bf16.gmra.mxu0 %v2928
      %v3065 = vpop.f32.mrf.mxu0
      %v3066 = vadd.f32 0.0, %v3065
      %v3067 = vpop.f32.mrf.mxu0
      %v3068 = vadd.f32 0.0, %v3067
      %3069 = vmatmul.bf16.gmra.mxu0 %v2929
      %v3070 = vpop.f32.mrf.mxu0
      %v3071 = vadd.f32 0.0, %v3070
      %v3072 = vpop.f32.mrf.mxu0
      %v3073 = vadd.f32 0.0, %v3072
      %3074 = vmatmul.bf16.gmra.mxu0 %v2930
      %v3075 = vpop.f32.mrf.mxu0
      %v3076 = vadd.f32 0.0, %v3075
      %v3077 = vpop.f32.mrf.mxu0
      %v3078 = vadd.f32 0.0, %v3077
      %3079 = vmatmul.bf16.gmra.mxu0 %v2931
      %v3080 = vpop.f32.mrf.mxu0
      %v3081 = vadd.f32 0.0, %v3080
      %v3082 = vpop.f32.mrf.mxu0
      %v3083 = vadd.f32 0.0, %v3082
      %3084 = vdwg.mxu0
      %v3085 = vld [vmem:[#allocation2] sm:$0xff]
      %v3086 = vld [vmem:[#allocation2 + $0x8] sm:$0xff]
      %v3087 = vld [vmem:[#allocation2 + $0x10] sm:$0xff]
      %v3088 = vld [vmem:[#allocation2 + $0x18] sm:$0xff]
      %v3089 = vld [vmem:[#allocation2 + $0x20] sm:$0xff]
      %v3090 = vld [vmem:[#allocation2 + $0x28] sm:$0xff]
      %v3091 = vld [vmem:[#allocation2 + $0x30] sm:$0xff]
      %v3092 = vld [vmem:[#allocation2 + $0x38] sm:$0xff]
      %v3093 = vld [vmem:[#allocation2 + $0x40] sm:$0xff]
      %v3094 = vld [vmem:[#allocation2 + $0x48] sm:$0xff]
      %v3095 = vld [vmem:[#allocation2 + $0x50] sm:$0xff]
      %v3096 = vld [vmem:[#allocation2 + $0x58] sm:$0xff]
      %v3097 = vld [vmem:[#allocation2 + $0x60] sm:$0xff]
      %v3098 = vld [vmem:[#allocation2 + $0x68] sm:$0xff]
      %v3099 = vld [vmem:[#allocation2 + $0x70] sm:$0xff]
      %v3100 = vld [vmem:[#allocation2 + $0x78] sm:$0xff]
      %v3101 = vld [vmem:[#allocation2 + $0x80] sm:$0xff]
      %v3102 = vld [vmem:[#allocation2 + $0x88] sm:$0xff]
      %v3103 = vld [vmem:[#allocation2 + $0x90] sm:$0xff]
      %v3104 = vld [vmem:[#allocation2 + $0x98] sm:$0xff]
      %v3105 = vld [vmem:[#allocation2 + $0xa0] sm:$0xff]
      %v3106 = vld [vmem:[#allocation2 + $0xa8] sm:$0xff]
      %v3107 = vld [vmem:[#allocation2 + $0xb0] sm:$0xff]
      %v3108 = vld [vmem:[#allocation2 + $0xb8] sm:$0xff]
      %v3109 = vld [vmem:[#allocation2 + $0xc0] sm:$0xff]
      %v3110 = vld [vmem:[#allocation2 + $0xc8] sm:$0xff]
      %v3111 = vld [vmem:[#allocation2 + $0xd0] sm:$0xff]
      %v3112 = vld [vmem:[#allocation2 + $0xd8] sm:$0xff]
      %v3113 = vld [vmem:[#allocation2 + $0xe0] sm:$0xff]
      %v3114 = vld [vmem:[#allocation2 + $0xe8] sm:$0xff]
      %v3115 = vld [vmem:[#allocation2 + $0xf0] sm:$0xff]
      %v3116 = vld [vmem:[#allocation2 + $0xf8] sm:$0xff]
      %v3117 = vadd.f32 %v3085, %v3006
      %v3118 = vadd.f32 %v3086, %v3008
      %v3119 = vadd.f32 %v3087, %v3011
      %v3120 = vadd.f32 %v3088, %v3013
      %v3121 = vadd.f32 %v3089, %v3016
      %v3122 = vadd.f32 %v3090, %v3018
      %v3123 = vadd.f32 %v3091, %v3021
      %v3124 = vadd.f32 %v3092, %v3023
      %v3125 = vadd.f32 %v3093, %v3026
      %v3126 = vadd.f32 %v3094, %v3028
      %v3127 = vadd.f32 %v3095, %v3031
      %v3128 = vadd.f32 %v3096, %v3033
      %v3129 = vadd.f32 %v3097, %v3036
      %v3130 = vadd.f32 %v3098, %v3038
      %v3131 = vadd.f32 %v3099, %v3041
      %v3132 = vadd.f32 %v3100, %v3043
      %v3133 = vadd.f32 %v3101, %v3046
      %v3134 = vadd.f32 %v3102, %v3048
      %v3135 = vadd.f32 %v3103, %v3051
      %v3136 = vadd.f32 %v3104, %v3053
      %v3137 = vadd.f32 %v3105, %v3056
      %v3138 = vadd.f32 %v3106, %v3058
      %v3139 = vadd.f32 %v3107, %v3061
      %v3140 = vadd.f32 %v3108, %v3063
      %v3141 = vadd.f32 %v3109, %v3066
      %v3142 = vadd.f32 %v3110, %v3068
      %v3143 = vadd.f32 %v3111, %v3071
      %v3144 = vadd.f32 %v3112, %v3073
      %v3145 = vadd.f32 %v3113, %v3076
      %v3146 = vadd.f32 %v3114, %v3078
      %v3147 = vadd.f32 %v3115, %v3081
      %v3148 = vadd.f32 %v3116, %v3083
      %3149 = vst [vmem:[#allocation2] sm:$0xff] %v3117
      %3150 = vst [vmem:[#allocation2 + $0x8] sm:$0xff] %v3118
      %3151 = vst [vmem:[#allocation2 + $0x10] sm:$0xff] %v3119
      %3152 = vst [vmem:[#allocation2 + $0x18] sm:$0xff] %v3120
      %3153 = vst [vmem:[#allocation2 + $0x20] sm:$0xff] %v3121
      %3154 = vst [vmem:[#allocation2 + $0x28] sm:$0xff] %v3122
      %3155 = vst [vmem:[#allocation2 + $0x30] sm:$0xff] %v3123
      %3156 = vst [vmem:[#allocation2 + $0x38] sm:$0xff] %v3124
      %3157 = vst [vmem:[#allocation2 + $0x40] sm:$0xff] %v3125
      %3158 = vst [vmem:[#allocation2 + $0x48] sm:$0xff] %v3126
      %3159 = vst [vmem:[#allocation2 + $0x50] sm:$0xff] %v3127
      %3160 = vst [vmem:[#allocation2 + $0x58] sm:$0xff] %v3128
      %3161 = vst [vmem:[#allocation2 + $0x60] sm:$0xff] %v3129
      %3162 = vst [vmem:[#allocation2 + $0x68] sm:$0xff] %v3130
      %3163 = vst [vmem:[#allocation2 + $0x70] sm:$0xff] %v3131
      %3164 = vst [vmem:[#allocation2 + $0x78] sm:$0xff] %v3132
      %3165 = vst [vmem:[#allocation2 + $0x80] sm:$0xff] %v3133
      %3166 = vst [vmem:[#allocation2 + $0x88] sm:$0xff] %v3134
      %3167 = vst [vmem:[#allocation2 + $0x90] sm:$0xff] %v3135
      %3168 = vst [vmem:[#allocation2 + $0x98] sm:$0xff] %v3136
      %3169 = vst [vmem:[#allocation2 + $0xa0] sm:$0xff] %v3137
      %3170 = vst [vmem:[#allocation2 + $0xa8] sm:$0xff] %v3138
      %3171 = vst [vmem:[#allocation2 + $0xb0] sm:$0xff] %v3139
      %3172 = vst [vmem:[#allocation2 + $0xb8] sm:$0xff] %v3140
      %3173 = vst [vmem:[#allocation2 + $0xc0] sm:$0xff] %v3141
      %3174 = vst [vmem:[#allocation2 + $0xc8] sm:$0xff] %v3142
      %3175 = vst [vmem:[#allocation2 + $0xd0] sm:$0xff] %v3143
      %3176 = vst [vmem:[#allocation2 + $0xd8] sm:$0xff] %v3144
      %3177 = vst [vmem:[#allocation2 + $0xe0] sm:$0xff] %v3145
      %3178 = vst [vmem:[#allocation2 + $0xe8] sm:$0xff] %v3146
      %3179 = vst [vmem:[#allocation2 + $0xf0] sm:$0xff] %v3147
      %3180 = vst [vmem:[#allocation2 + $0xf8] sm:$0xff] %v3148
      %v3181 = vld [vmem:[%s206 + $0x40] sm:$0xf]
      %v3182 = vld [vmem:[%s206 + $0x44] sm:$0xf]
      %v3183 = vld [vmem:[%s206 + $0x48] sm:$0xf]
      %v3184 = vld [vmem:[%s206 + $0x4c] sm:$0xf]
      %v3185 = vld [vmem:[%s206 + $0x50] sm:$0xf]
      %v3186 = vld [vmem:[%s206 + $0x54] sm:$0xf]
      %v3187 = vld [vmem:[%s206 + $0x58] sm:$0xf]
      %v3188 = vld [vmem:[%s206 + $0x5c] sm:$0xf]
      %v3189 = vld [vmem:[%s206 + $0x60] sm:$0xf]
      %v3190 = vld [vmem:[%s206 + $0x64] sm:$0xf]
      %v3191 = vld [vmem:[%s206 + $0x68] sm:$0xf]
      %v3192 = vld [vmem:[%s206 + $0x6c] sm:$0xf]
      %v3193 = vld [vmem:[%s206 + $0x70] sm:$0xf]
      %v3194 = vld [vmem:[%s206 + $0x74] sm:$0xf]
      %v3195 = vld [vmem:[%s206 + $0x78] sm:$0xf]
      %v3196 = vld [vmem:[%s206 + $0x7c] sm:$0xf]
      %v3197 = vld [vmem:[%s206 + $0x80] sm:$0xf]
      %v3198 = vld [vmem:[%s206 + $0x84] sm:$0xf]
      %v3199 = vld [vmem:[%s206 + $0x88] sm:$0xf]
      %v3200 = vld [vmem:[%s206 + $0x8c] sm:$0xf]
      %v3201 = vld [vmem:[%s206 + $0x90] sm:$0xf]
      %v3202 = vld [vmem:[%s206 + $0x94] sm:$0xf]
      %v3203 = vld [vmem:[%s206 + $0x98] sm:$0xf]
      %v3204 = vld [vmem:[%s206 + $0x9c] sm:$0xf]
      %v3205 = vld [vmem:[%s206 + $0xa0] sm:$0xf]
      %v3206 = vld [vmem:[%s206 + $0xa4] sm:$0xf]
      %v3207 = vld [vmem:[%s206 + $0xa8] sm:$0xf]
      %v3208 = vld [vmem:[%s206 + $0xac] sm:$0xf]
      %v3209 = vld [vmem:[%s206 + $0xb0] sm:$0xf]
      %v3210 = vld [vmem:[%s206 + $0xb4] sm:$0xf]
      %v3211 = vld [vmem:[%s206 + $0xb8] sm:$0xf]
      %v3212 = vld [vmem:[%s206 + $0xbc] sm:$0xf]
      %s3213 = scalar_lea.vmem %s210, 512
      %v3214 = vld [vmem:[%s3213] sm:$0xf]
      %v3215 = vld [vmem:[%s3213 + $0x4] sm:$0xf]
      %v3216 = vld [vmem:[%s3213 + $0x8] sm:$0xf]
      %v3217 = vld [vmem:[%s3213 + $0xc] sm:$0xf]
      %v3218 = vld [vmem:[%s3213 + $0x10] sm:$0xf]
      %v3219 = vld [vmem:[%s3213 + $0x14] sm:$0xf]
      %v3220 = vld [vmem:[%s3213 + $0x18] sm:$0xf]
      %v3221 = vld [vmem:[%s3213 + $0x1c] sm:$0xf]
      %v3222 = vld [vmem:[%s3213 + $0x20] sm:$0xf]
      %v3223 = vld [vmem:[%s3213 + $0x24] sm:$0xf]
      %v3224 = vld [vmem:[%s3213 + $0x28] sm:$0xf]
      %v3225 = vld [vmem:[%s3213 + $0x2c] sm:$0xf]
      %v3226 = vld [vmem:[%s3213 + $0x30] sm:$0xf]
      %v3227 = vld [vmem:[%s3213 + $0x34] sm:$0xf]
      %v3228 = vld [vmem:[%s3213 + $0x38] sm:$0xf]
      %v3229 = vld [vmem:[%s3213 + $0x3c] sm:$0xf]
      %v3262 = vunpack.c.l.b16 %v3181
      %v3263 = vunpack.c.l.b16 %v3182
      %v3264 = vunpack.c.l.b16 %v3183
      %v3265 = vunpack.c.l.b16 %v3184
      %v3266 = vunpack.c.l.b16 %v3185
      %v3267 = vunpack.c.l.b16 %v3186
      %v3268 = vunpack.c.l.b16 %v3187
      %v3269 = vunpack.c.l.b16 %v3188
      %v3270 = vunpack.c.l.b16 %v3189
      %v3271 = vunpack.c.l.b16 %v3190
      %v3272 = vunpack.c.l.b16 %v3191
      %v3273 = vunpack.c.l.b16 %v3192
      %v3274 = vunpack.c.l.b16 %v3193
      %v3275 = vunpack.c.l.b16 %v3194
      %v3276 = vunpack.c.l.b16 %v3195
      %v3277 = vunpack.c.l.b16 %v3196
      %v3278 = vunpack.c.l.b16 %v3197
      %v3279 = vunpack.c.l.b16 %v3198
      %v3280 = vunpack.c.l.b16 %v3199
      %v3281 = vunpack.c.l.b16 %v3200
      %v3282 = vunpack.c.l.b16 %v3201
      %v3283 = vunpack.c.l.b16 %v3202
      %v3284 = vunpack.c.l.b16 %v3203
      %v3285 = vunpack.c.l.b16 %v3204
      %v3286 = vunpack.c.l.b16 %v3205
      %v3287 = vunpack.c.l.b16 %v3206
      %v3288 = vunpack.c.l.b16 %v3207
      %v3289 = vunpack.c.l.b16 %v3208
      %v3290 = vunpack.c.l.b16 %v3209
      %v3291 = vunpack.c.l.b16 %v3210
      %v3292 = vunpack.c.l.b16 %v3211
      %v3293 = vunpack.c.l.b16 %v3212
      %v3294 = vpack.c.b16 %v3263, %v3262
      %v3295 = vpack.c.b16 %v3265, %v3264
      %v3296 = vpack.c.b16 %v3267, %v3266
      %v3297 = vpack.c.b16 %v3269, %v3268
      %v3298 = vpack.c.b16 %v3271, %v3270
      %v3299 = vpack.c.b16 %v3273, %v3272
      %v3300 = vpack.c.b16 %v3275, %v3274
      %v3301 = vpack.c.b16 %v3277, %v3276
      %v3302 = vpack.c.b16 %v3279, %v3278
      %v3303 = vpack.c.b16 %v3281, %v3280
      %v3304 = vpack.c.b16 %v3283, %v3282
      %v3305 = vpack.c.b16 %v3285, %v3284
      %v3306 = vpack.c.b16 %v3287, %v3286
      %v3307 = vpack.c.b16 %v3289, %v3288
      %v3308 = vpack.c.b16 %v3291, %v3290
      %v3309 = vpack.c.b16 %v3293, %v3292
      %v3342 = vunpack.c.l.b16 %v3214
      %v3343 = vunpack.c.l.b16 %v3215
      %v3344 = vunpack.c.l.b16 %v3216
      %v3345 = vunpack.c.l.b16 %v3217
      %v3346 = vunpack.c.l.b16 %v3218
      %v3347 = vunpack.c.l.b16 %v3219
      %v3348 = vunpack.c.l.b16 %v3220
      %v3349 = vunpack.c.l.b16 %v3221
      %v3350 = vunpack.c.l.b16 %v3222
      %v3351 = vunpack.c.l.b16 %v3223
      %v3352 = vunpack.c.l.b16 %v3224
      %v3353 = vunpack.c.l.b16 %v3225
      %v3354 = vunpack.c.l.b16 %v3226
      %v3355 = vunpack.c.l.b16 %v3227
      %v3356 = vunpack.c.l.b16 %v3228
      %v3357 = vunpack.c.l.b16 %v3229
      %v3358 = vpack.c.b16 %v3343, %v3342
      %v3359 = vpack.c.b16 %v3345, %v3344
      %v3360 = vpack.c.b16 %v3347, %v3346
      %v3361 = vpack.c.b16 %v3349, %v3348
      %v3362 = vpack.c.b16 %v3351, %v3350
      %v3363 = vpack.c.b16 %v3353, %v3352
      %v3364 = vpack.c.b16 %v3355, %v3354
      %v3365 = vpack.c.b16 %v3357, %v3356
      %3374 = vmatpush.bf16.msra.mxu0 %v3365
      %3375 = vmatpush.bf16.msra.mxu0 %v3364
      %3376 = vmatpush.bf16.msra.mxu0 %v3363
      %3377 = vmatpush.bf16.msra.mxu0 %v3362
      %3378 = vmatpush.bf16.msra.mxu0 %v3361
      %3379 = vmatpush.bf16.msra.mxu0 %v3360
      %3380 = vmatpush.bf16.msra.mxu0 %v3359
      %3381 = vmatpush.bf16.msra.mxu0 %v3358
      %3382 = vmatmul.bf16.gmra.mxu0 %v3294
      %v3383 = vpop.f32.mrf.mxu0
      %v3384 = vadd.f32 0.0, %v3383
      %v3385 = vpop.f32.mrf.mxu0
      %v3386 = vadd.f32 0.0, %v3385
      %3387 = vmatmul.bf16.gmra.mxu0 %v3295
      %v3388 = vpop.f32.mrf.mxu0
      %v3389 = vadd.f32 0.0, %v3388
      %v3390 = vpop.f32.mrf.mxu0
      %v3391 = vadd.f32 0.0, %v3390
      %3392 = vmatmul.bf16.gmra.mxu0 %v3296
      %v3393 = vpop.f32.mrf.mxu0
      %v3394 = vadd.f32 0.0, %v3393
      %v3395 = vpop.f32.mrf.mxu0
      %v3396 = vadd.f32 0.0, %v3395
      %3397 = vmatmul.bf16.gmra.mxu0 %v3297
      %v3398 = vpop.f32.mrf.mxu0
      %v3399 = vadd.f32 0.0, %v3398
      %v3400 = vpop.f32.mrf.mxu0
      %v3401 = vadd.f32 0.0, %v3400
      %3402 = vmatmul.bf16.gmra.mxu0 %v3298
      %v3403 = vpop.f32.mrf.mxu0
      %v3404 = vadd.f32 0.0, %v3403
      %v3405 = vpop.f32.mrf.mxu0
      %v3406 = vadd.f32 0.0, %v3405
      %3407 = vmatmul.bf16.gmra.mxu0 %v3299
      %v3408 = vpop.f32.mrf.mxu0
      %v3409 = vadd.f32 0.0, %v3408
      %v3410 = vpop.f32.mrf.mxu0
      %v3411 = vadd.f32 0.0, %v3410
      %3412 = vmatmul.bf16.gmra.mxu0 %v3300
      %v3413 = vpop.f32.mrf.mxu0
      %v3414 = vadd.f32 0.0, %v3413
      %v3415 = vpop.f32.mrf.mxu0
      %v3416 = vadd.f32 0.0, %v3415
      %3417 = vmatmul.bf16.gmra.mxu0 %v3301
      %v3418 = vpop.f32.mrf.mxu0
      %v3419 = vadd.f32 0.0, %v3418
      %v3420 = vpop.f32.mrf.mxu0
      %v3421 = vadd.f32 0.0, %v3420
      %3422 = vmatmul.bf16.gmra.mxu0 %v3302
      %v3423 = vpop.f32.mrf.mxu0
      %v3424 = vadd.f32 0.0, %v3423
      %v3425 = vpop.f32.mrf.mxu0
      %v3426 = vadd.f32 0.0, %v3425
      %3427 = vmatmul.bf16.gmra.mxu0 %v3303
      %v3428 = vpop.f32.mrf.mxu0
      %v3429 = vadd.f32 0.0, %v3428
      %v3430 = vpop.f32.mrf.mxu0
      %v3431 = vadd.f32 0.0, %v3430
      %3432 = vmatmul.bf16.gmra.mxu0 %v3304
      %v3433 = vpop.f32.mrf.mxu0
      %v3434 = vadd.f32 0.0, %v3433
      %v3435 = vpop.f32.mrf.mxu0
      %v3436 = vadd.f32 0.0, %v3435
      %3437 = vmatmul.bf16.gmra.mxu0 %v3305
      %v3438 = vpop.f32.mrf.mxu0
      %v3439 = vadd.f32 0.0, %v3438
      %v3440 = vpop.f32.mrf.mxu0
      %v3441 = vadd.f32 0.0, %v3440
      %3442 = vmatmul.bf16.gmra.mxu0 %v3306
      %v3443 = vpop.f32.mrf.mxu0
      %v3444 = vadd.f32 0.0, %v3443
      %v3445 = vpop.f32.mrf.mxu0
      %v3446 = vadd.f32 0.0, %v3445
      %3447 = vmatmul.bf16.gmra.mxu0 %v3307
      %v3448 = vpop.f32.mrf.mxu0
      %v3449 = vadd.f32 0.0, %v3448
      %v3450 = vpop.f32.mrf.mxu0
      %v3451 = vadd.f32 0.0, %v3450
      %3452 = vmatmul.bf16.gmra.mxu0 %v3308
      %v3453 = vpop.f32.mrf.mxu0
      %v3454 = vadd.f32 0.0, %v3453
      %v3455 = vpop.f32.mrf.mxu0
      %v3456 = vadd.f32 0.0, %v3455
      %3457 = vmatmul.bf16.gmra.mxu0 %v3309
      %v3458 = vpop.f32.mrf.mxu0
      %v3459 = vadd.f32 0.0, %v3458
      %v3460 = vpop.f32.mrf.mxu0
      %v3461 = vadd.f32 0.0, %v3460
      %3462 = vdwg.mxu0
      %v3463 = vld [vmem:[#allocation2] sm:$0xff]
      %v3464 = vld [vmem:[#allocation2 + $0x8] sm:$0xff]
      %v3465 = vld [vmem:[#allocation2 + $0x10] sm:$0xff]
      %v3466 = vld [vmem:[#allocation2 + $0x18] sm:$0xff]
      %v3467 = vld [vmem:[#allocation2 + $0x20] sm:$0xff]
      %v3468 = vld [vmem:[#allocation2 + $0x28] sm:$0xff]
      %v3469 = vld [vmem:[#allocation2 + $0x30] sm:$0xff]
      %v3470 = vld [vmem:[#allocation2 + $0x38] sm:$0xff]
      %v3471 = vld [vmem:[#allocation2 + $0x40] sm:$0xff]
      %v3472 = vld [vmem:[#allocation2 + $0x48] sm:$0xff]
      %v3473 = vld [vmem:[#allocation2 + $0x50] sm:$0xff]
      %v3474 = vld [vmem:[#allocation2 + $0x58] sm:$0xff]
      %v3475 = vld [vmem:[#allocation2 + $0x60] sm:$0xff]
      %v3476 = vld [vmem:[#allocation2 + $0x68] sm:$0xff]
      %v3477 = vld [vmem:[#allocation2 + $0x70] sm:$0xff]
      %v3478 = vld [vmem:[#allocation2 + $0x78] sm:$0xff]
      %v3479 = vld [vmem:[#allocation2 + $0x80] sm:$0xff]
      %v3480 = vld [vmem:[#allocation2 + $0x88] sm:$0xff]
      %v3481 = vld [vmem:[#allocation2 + $0x90] sm:$0xff]
      %v3482 = vld [vmem:[#allocation2 + $0x98] sm:$0xff]
      %v3483 = vld [vmem:[#allocation2 + $0xa0] sm:$0xff]
      %v3484 = vld [vmem:[#allocation2 + $0xa8] sm:$0xff]
      %v3485 = vld [vmem:[#allocation2 + $0xb0] sm:$0xff]
      %v3486 = vld [vmem:[#allocation2 + $0xb8] sm:$0xff]
      %v3487 = vld [vmem:[#allocation2 + $0xc0] sm:$0xff]
      %v3488 = vld [vmem:[#allocation2 + $0xc8] sm:$0xff]
      %v3489 = vld [vmem:[#allocation2 + $0xd0] sm:$0xff]
      %v3490 = vld [vmem:[#allocation2 + $0xd8] sm:$0xff]
      %v3491 = vld [vmem:[#allocation2 + $0xe0] sm:$0xff]
      %v3492 = vld [vmem:[#allocation2 + $0xe8] sm:$0xff]
      %v3493 = vld [vmem:[#allocation2 + $0xf0] sm:$0xff]
      %v3494 = vld [vmem:[#allocation2 + $0xf8] sm:$0xff]
      %v3495 = vadd.f32 %v3463, %v3384
      %v3496 = vadd.f32 %v3464, %v3386
      %v3497 = vadd.f32 %v3465, %v3389
      %v3498 = vadd.f32 %v3466, %v3391
      %v3499 = vadd.f32 %v3467, %v3394
      %v3500 = vadd.f32 %v3468, %v3396
      %v3501 = vadd.f32 %v3469, %v3399
      %v3502 = vadd.f32 %v3470, %v3401
      %v3503 = vadd.f32 %v3471, %v3404
      %v3504 = vadd.f32 %v3472, %v3406
      %v3505 = vadd.f32 %v3473, %v3409
      %v3506 = vadd.f32 %v3474, %v3411
      %v3507 = vadd.f32 %v3475, %v3414
      %v3508 = vadd.f32 %v3476, %v3416
      %v3509 = vadd.f32 %v3477, %v3419
      %v3510 = vadd.f32 %v3478, %v3421
      %v3511 = vadd.f32 %v3479, %v3424
      %v3512 = vadd.f32 %v3480, %v3426
      %v3513 = vadd.f32 %v3481, %v3429
      %v3514 = vadd.f32 %v3482, %v3431
      %v3515 = vadd.f32 %v3483, %v3434
      %v3516 = vadd.f32 %v3484, %v3436
      %v3517 = vadd.f32 %v3485, %v3439
      %v3518 = vadd.f32 %v3486, %v3441
      %v3519 = vadd.f32 %v3487, %v3444
      %v3520 = vadd.f32 %v3488, %v3446
      %v3521 = vadd.f32 %v3489, %v3449
      %v3522 = vadd.f32 %v3490, %v3451
      %v3523 = vadd.f32 %v3491, %v3454
      %v3524 = vadd.f32 %v3492, %v3456
      %v3525 = vadd.f32 %v3493, %v3459
      %v3526 = vadd.f32 %v3494, %v3461
      %3527 = vst [vmem:[#allocation2] sm:$0xff] %v3495
      %3528 = vst [vmem:[#allocation2 + $0x8] sm:$0xff] %v3496
      %3529 = vst [vmem:[#allocation2 + $0x10] sm:$0xff] %v3497
      %3530 = vst [vmem:[#allocation2 + $0x18] sm:$0xff] %v3498
      %3531 = vst [vmem:[#allocation2 + $0x20] sm:$0xff] %v3499
      %3532 = vst [vmem:[#allocation2 + $0x28] sm:$0xff] %v3500
      %3533 = vst [vmem:[#allocation2 + $0x30] sm:$0xff] %v3501
      %3534 = vst [vmem:[#allocation2 + $0x38] sm:$0xff] %v3502
      %3535 = vst [vmem:[#allocation2 + $0x40] sm:$0xff] %v3503
      %3536 = vst [vmem:[#allocation2 + $0x48] sm:$0xff] %v3504
      %3537 = vst [vmem:[#allocation2 + $0x50] sm:$0xff] %v3505
      %3538 = vst [vmem:[#allocation2 + $0x58] sm:$0xff] %v3506
      %3539 = vst [vmem:[#allocation2 + $0x60] sm:$0xff] %v3507
      %3540 = vst [vmem:[#allocation2 + $0x68] sm:$0xff] %v3508
      %3541 = vst [vmem:[#allocation2 + $0x70] sm:$0xff] %v3509
      %3542 = vst [vmem:[#allocation2 + $0x78] sm:$0xff] %v3510
      %3543 = vst [vmem:[#allocation2 + $0x80] sm:$0xff] %v3511
      %3544 = vst [vmem:[#allocation2 + $0x88] sm:$0xff] %v3512
      %3545 = vst [vmem:[#allocation2 + $0x90] sm:$0xff] %v3513
      %3546 = vst [vmem:[#allocation2 + $0x98] sm:$0xff] %v3514
      %3547 = vst [vmem:[#allocation2 + $0xa0] sm:$0xff] %v3515
      %3548 = vst [vmem:[#allocation2 + $0xa8] sm:$0xff] %v3516
      %3549 = vst [vmem:[#allocation2 + $0xb0] sm:$0xff] %v3517
      %3550 = vst [vmem:[#allocation2 + $0xb8] sm:$0xff] %v3518
      %3551 = vst [vmem:[#allocation2 + $0xc0] sm:$0xff] %v3519
      %3552 = vst [vmem:[#allocation2 + $0xc8] sm:$0xff] %v3520
      %3553 = vst [vmem:[#allocation2 + $0xd0] sm:$0xff] %v3521
      %3554 = vst [vmem:[#allocation2 + $0xd8] sm:$0xff] %v3522
      %3555 = vst [vmem:[#allocation2 + $0xe0] sm:$0xff] %v3523
      %3556 = vst [vmem:[#allocation2 + $0xe8] sm:$0xff] %v3524
      %3557 = vst [vmem:[#allocation2 + $0xf0] sm:$0xff] %v3525
      %3558 = vst [vmem:[#allocation2 + $0xf8] sm:$0xff] %v3526
      %v3559 = vld [vmem:[#allocation2] sm:$0xff]
      %v3560 = vld [vmem:[#allocation2 + $0x8] sm:$0xff]
      %v3561 = vld [vmem:[#allocation2 + $0x10] sm:$0xff]
      %v3562 = vld [vmem:[#allocation2 + $0x18] sm:$0xff]
      %v3563 = vld [vmem:[#allocation2 + $0x20] sm:$0xff]
      %v3564 = vld [vmem:[#allocation2 + $0x28] sm:$0xff]
      %v3565 = vld [vmem:[#allocation2 + $0x30] sm:$0xff]
      %v3566 = vld [vmem:[#allocation2 + $0x38] sm:$0xff]
      %v3567 = vld [vmem:[#allocation2 + $0x40] sm:$0xff]
      %v3568 = vld [vmem:[#allocation2 + $0x48] sm:$0xff]
      %v3569 = vld [vmem:[#allocation2 + $0x50] sm:$0xff]
      %v3570 = vld [vmem:[#allocation2 + $0x58] sm:$0xff]
      %v3571 = vld [vmem:[#allocation2 + $0x60] sm:$0xff]
      %v3572 = vld [vmem:[#allocation2 + $0x68] sm:$0xff]
      %v3573 = vld [vmem:[#allocation2 + $0x70] sm:$0xff]
      %v3574 = vld [vmem:[#allocation2 + $0x78] sm:$0xff]
      %v3575 = vld [vmem:[#allocation2 + $0x80] sm:$0xff]
      %v3576 = vld [vmem:[#allocation2 + $0x88] sm:$0xff]
      %v3577 = vld [vmem:[#allocation2 + $0x90] sm:$0xff]
      %v3578 = vld [vmem:[#allocation2 + $0x98] sm:$0xff]
      %v3579 = vld [vmem:[#allocation2 + $0xa0] sm:$0xff]
      %v3580 = vld [vmem:[#allocation2 + $0xa8] sm:$0xff]
      %v3581 = vld [vmem:[#allocation2 + $0xb0] sm:$0xff]
      %v3582 = vld [vmem:[#allocation2 + $0xb8] sm:$0xff]
      %v3583 = vld [vmem:[#allocation2 + $0xc0] sm:$0xff]
      %v3584 = vld [vmem:[#allocation2 + $0xc8] sm:$0xff]
      %v3585 = vld [vmem:[#allocation2 + $0xd0] sm:$0xff]
      %v3586 = vld [vmem:[#allocation2 + $0xd8] sm:$0xff]
      %v3587 = vld [vmem:[#allocation2 + $0xe0] sm:$0xff]
      %v3588 = vld [vmem:[#allocation2 + $0xe8] sm:$0xff]
      %v3589 = vld [vmem:[#allocation2 + $0xf0] sm:$0xff]
      %v3590 = vld [vmem:[#allocation2 + $0xf8] sm:$0xff]
      %v3591 = vld [vmem:[%s213] sm:$0x1]
      %v3593 = vperm.slane %v3591, 0
      %v3595 = vadd.f32 %v3559, %v3593
      %v3596 = vadd.f32 %v3560, %v3593
      %v3597 = vadd.f32 %v3561, %v3593
      %v3598 = vadd.f32 %v3562, %v3593
      %v3599 = vadd.f32 %v3563, %v3593
      %v3600 = vadd.f32 %v3564, %v3593
      %v3601 = vadd.f32 %v3565, %v3593
      %v3602 = vadd.f32 %v3566, %v3593
      %v3603 = vadd.f32 %v3567, %v3593
      %v3604 = vadd.f32 %v3568, %v3593
      %v3605 = vadd.f32 %v3569, %v3593
      %v3606 = vadd.f32 %v3570, %v3593
      %v3607 = vadd.f32 %v3571, %v3593
      %v3608 = vadd.f32 %v3572, %v3593
      %v3609 = vadd.f32 %v3573, %v3593
      %v3610 = vadd.f32 %v3574, %v3593
      %v3611 = vadd.f32 %v3575, %v3593
      %v3612 = vadd.f32 %v3576, %v3593
      %v3613 = vadd.f32 %v3577, %v3593
      %v3614 = vadd.f32 %v3578, %v3593
      %v3615 = vadd.f32 %v3579, %v3593
      %v3616 = vadd.f32 %v3580, %v3593
      %v3617 = vadd.f32 %v3581, %v3593
      %v3618 = vadd.f32 %v3582, %v3593
      %v3619 = vadd.f32 %v3583, %v3593
      %v3620 = vadd.f32 %v3584, %v3593
      %v3621 = vadd.f32 %v3585, %v3593
      %v3622 = vadd.f32 %v3586, %v3593
      %v3623 = vadd.f32 %v3587, %v3593
      %v3624 = vadd.f32 %v3588, %v3593
      %v3625 = vadd.f32 %v3589, %v3593
      %v3626 = vadd.f32 %v3590, %v3593
      %v3627 = vmax.f32 %v3595, 0.0
      %v3628 = vmax.f32 %v3596, 0.0
      %v3629 = vmax.f32 %v3597, 0.0
      %v3630 = vmax.f32 %v3598, 0.0
      %v3631 = vmax.f32 %v3599, 0.0
      %v3632 = vmax.f32 %v3600, 0.0
      %v3633 = vmax.f32 %v3601, 0.0
      %v3634 = vmax.f32 %v3602, 0.0
      %v3635 = vmax.f32 %v3603, 0.0
      %v3636 = vmax.f32 %v3604, 0.0
      %v3637 = vmax.f32 %v3605, 0.0
      %v3638 = vmax.f32 %v3606, 0.0
      %v3639 = vmax.f32 %v3607, 0.0
      %v3640 = vmax.f32 %v3608, 0.0
      %v3641 = vmax.f32 %v3609, 0.0
      %v3642 = vmax.f32 %v3610, 0.0
      %v3643 = vmax.f32 %v3611, 0.0
      %v3644 = vmax.f32 %v3612, 0.0
      %v3645 = vmax.f32 %v3613, 0.0
      %v3646 = vmax.f32 %v3614, 0.0
      %v3647 = vmax.f32 %v3615, 0.0
      %v3648 = vmax.f32 %v3616, 0.0
      %v3649 = vmax.f32 %v3617, 0.0
      %v3650 = vmax.f32 %v3618, 0.0
      %v3651 = vmax.f32 %v3619, 0.0
      %v3652 = vmax.f32 %v3620, 0.0
      %v3653 = vmax.f32 %v3621, 0.0
      %v3654 = vmax.f32 %v3622, 0.0
      %v3655 = vmax.f32 %v3623, 0.0
      %v3656 = vmax.f32 %v3624, 0.0
      %v3657 = vmax.f32 %v3625, 0.0
      %v3658 = vmax.f32 %v3626, 0.0
      %v3659 = vpack.c.bf16 %v3627, %v3627
      %v3660 = vpack.c.bf16 %v3628, %v3628
      %v3661 = vpack.c.bf16 %v3629, %v3629
      %v3662 = vpack.c.bf16 %v3630, %v3630
      %v3663 = vpack.c.bf16 %v3631, %v3631
      %v3664 = vpack.c.bf16 %v3632, %v3632
      %v3665 = vpack.c.bf16 %v3633, %v3633
      %v3666 = vpack.c.bf16 %v3634, %v3634
      %v3667 = vpack.c.bf16 %v3635, %v3635
      %v3668 = vpack.c.bf16 %v3636, %v3636
      %v3669 = vpack.c.bf16 %v3637, %v3637
      %v3670 = vpack.c.bf16 %v3638, %v3638
      %v3671 = vpack.c.bf16 %v3639, %v3639
      %v3672 = vpack.c.bf16 %v3640, %v3640
      %v3673 = vpack.c.bf16 %v3641, %v3641
      %v3674 = vpack.c.bf16 %v3642, %v3642
      %v3675 = vpack.c.bf16 %v3643, %v3643
      %v3676 = vpack.c.bf16 %v3644, %v3644
      %v3677 = vpack.c.bf16 %v3645, %v3645
      %v3678 = vpack.c.bf16 %v3646, %v3646
      %v3679 = vpack.c.bf16 %v3647, %v3647
      %v3680 = vpack.c.bf16 %v3648, %v3648
      %v3681 = vpack.c.bf16 %v3649, %v3649
      %v3682 = vpack.c.bf16 %v3650, %v3650
      %v3683 = vpack.c.bf16 %v3651, %v3651
      %v3684 = vpack.c.bf16 %v3652, %v3652
      %v3685 = vpack.c.bf16 %v3653, %v3653
      %v3686 = vpack.c.bf16 %v3654, %v3654
      %v3687 = vpack.c.bf16 %v3655, %v3655
      %v3688 = vpack.c.bf16 %v3656, %v3656
      %v3689 = vpack.c.bf16 %v3657, %v3657
      %v3690 = vpack.c.bf16 %v3658, %v3658
      %3691 = vst [vmem:[%s221] sm:$0xf] %v3659
      %3692 = vst [vmem:[%s221 + $0x4] sm:$0xf] %v3660
      %3693 = vst [vmem:[%s221 + $0x8] sm:$0xf] %v3661
      %3694 = vst [vmem:[%s221 + $0xc] sm:$0xf] %v3662
      %3695 = vst [vmem:[%s221 + $0x10] sm:$0xf] %v3663
      %3696 = vst [vmem:[%s221 + $0x14] sm:$0xf] %v3664
      %3697 = vst [vmem:[%s221 + $0x18] sm:$0xf] %v3665
      %3698 = vst [vmem:[%s221 + $0x1c] sm:$0xf] %v3666
      %3699 = vst [vmem:[%s221 + $0x20] sm:$0xf] %v3667
      %3700 = vst [vmem:[%s221 + $0x24] sm:$0xf] %v3668
      %3701 = vst [vmem:[%s221 + $0x28] sm:$0xf] %v3669
      %3702 = vst [vmem:[%s221 + $0x2c] sm:$0xf] %v3670
      %3703 = vst [vmem:[%s221 + $0x30] sm:$0xf] %v3671
      %3704 = vst [vmem:[%s221 + $0x34] sm:$0xf] %v3672
      %3705 = vst [vmem:[%s221 + $0x38] sm:$0xf] %v3673
      %3706 = vst [vmem:[%s221 + $0x3c] sm:$0xf] %v3674
      %3707 = vst [vmem:[%s221 + $0x40] sm:$0xf] %v3675
      %3708 = vst [vmem:[%s221 + $0x44] sm:$0xf] %v3676
      %3709 = vst [vmem:[%s221 + $0x48] sm:$0xf] %v3677
      %3710 = vst [vmem:[%s221 + $0x4c] sm:$0xf] %v3678
      %3711 = vst [vmem:[%s221 + $0x50] sm:$0xf] %v3679
      %3712 = vst [vmem:[%s221 + $0x54] sm:$0xf] %v3680
      %3713 = vst [vmem:[%s221 + $0x58] sm:$0xf] %v3681
      %3714 = vst [vmem:[%s221 + $0x5c] sm:$0xf] %v3682
      %3715 = vst [vmem:[%s221 + $0x60] sm:$0xf] %v3683
      %3716 = vst [vmem:[%s221 + $0x64] sm:$0xf] %v3684
      %3717 = vst [vmem:[%s221 + $0x68] sm:$0xf] %v3685
      %3718 = vst [vmem:[%s221 + $0x6c] sm:$0xf] %v3686
      %3719 = vst [vmem:[%s221 + $0x70] sm:$0xf] %v3687
      %3720 = vst [vmem:[%s221 + $0x74] sm:$0xf] %v3688
      %3721 = vst [vmem:[%s221 + $0x78] sm:$0xf] %v3689
      %3722 = vst [vmem:[%s221 + $0x7c] sm:$0xf] %v3690
      %p3723 = scmp.lt.s32.totalorder %s18, 3
      %s3724 = scalar_select %p3723, %s18, 3
      %p3725 = scmp.lt.s32.totalorder %s19, 0
      %s3726 = scalar_select %p3725, %s19, 0
      %s3727 = smul.addr %s3724, 32
      %s3728 = sadd.s32 %s3726, %s3727
      %s3729 = smul.addr %s3728, 4
      %s3730 = scalar_lea.vmem %s3, %s3729
      // Predicated region
      $region33: #{cnn_custom_4_pretrain_forward.5} parent=31 // pred_check
        %p3731 = pneg %p124
      $region34: #{cnn_custom_4_pretrain_forward.5} parent=31 // pred_check_branch
        %3733 = sbr.rel (%p3731) target = $region36
      $region35: #{cnn_custom_4_pretrain_forward.5} parent=31 // pred_region
        _
      $region36: #{cnn_custom_4_pretrain_forward.5} parent=31 // pred_fallthru
        _
    $region32: #{cnn_custom_4_pretrain_forward.5} parent=5 // pred_fallthru
      _
    %p3734 = scmp.le.s32.totalorder 2, %s9
    // Predicated region
    $region37: #{cnn_custom_4_pretrain_forward.5} parent=5 // pred_check
      %p3735 = pneg %p3734
    $region38: #{cnn_custom_4_pretrain_forward.5} parent=5 // pred_check_branch
      %3737 = sbr.rel (%p3735) target = $region40
    $region39: #{cnn_custom_4_pretrain_forward.5} parent=5 // pred_region
      %s3738 = ssub.s32 %s9, 2
      // Predicated region
      $region41: #{cnn_custom_4_pretrain_forward.5} parent=39 // pred_check
        %p3739 = pneg %p130
      $region42: #{cnn_custom_4_pretrain_forward.5} parent=39 // pred_check_branch
        %3741 = sbr.rel (%p3739) target = $region44
      $region43: #{cnn_custom_4_pretrain_forward.5} parent=39 // pred_region
        %p3742 = scmp.lt.s32.totalorder %s20, 3
        %s3743 = scalar_select %p3742, %s20, 3
        %p3744 = scmp.lt.s32.totalorder %s21, 0
        %s3745 = scalar_select %p3744, %s21, 0
        %s3746 = smul.addr %s3743, 32
        %s3747 = sadd.s32 %s3745, %s3746
        %s3748 = smul.addr %s3747, 4
        %s3749 = scalar_lea.vmem %s3, %s3748
      $region44: #{cnn_custom_4_pretrain_forward.5} parent=39 // pred_fallthru
        _
    $region40: #{cnn_custom_4_pretrain_forward.5} parent=5 // pred_fallthru
      _
  $region6: #{cnn_custom_4_pretrain_forward.5} parent=0 // loop_footer
    %s13 = sadd.s32 1, %s9
  $region7: #{cnn_custom_4_pretrain_forward.5} parent=0 // loop_footer_branch
    %8 = sbr.rel target = $region3
  $region8: #{cnn_custom_4_pretrain_forward.5} parent=0 // loop_exit
    _

// kernel: cnn_custom_4_pretrain_forward.4
$region0: #{cnn_custom_4_pretrain_forward.4}
  #allocation0 [shape = 'u32[]', space=smem, size = 0x4, offset = 0x4, fixed_abs, tag = 'smem constant byte address 0x4 - core index']
  #allocation1 [shape = 'u32[72,128]{1,0:T(1,128)}', space=vmem, size = 0x9000, scoped, tag = 'internal scratch']
  #allocation2 [shape = 'f32[256,128]{1,0:T(8,128)}', space=vmem, size = 0x20000, scoped, tag = 'scratch operand']
  %s0 = inlined_call_operand.vmem [shape: bf16[4,384,8], index: 0, kind: input, shape index: {}]
  %s1 = inlined_call_operand.vmem [shape: bf16[9,8,128], index: 1, kind: input, shape index: {}]
  %s2 = inlined_call_operand.vmem [shape: f32[1,128], index: 2, kind: input, shape index: {}]
  %s3 = inlined_call_operand.vmem [shape: bf16[4,256,128], index: 3, kind: output, shape index: {}]
  %s4 = sld [smem:[#allocation0]]
  $region45: #{cnn_custom_4_pretrain_forward.4} parent=0
    _
  %s6 = ssub.s32 1, %s4
  %s7 = scalar_select 0, %s6, %s4
  loop: start=0, step=1, limit=6
  $region2: #{cnn_custom_4_pretrain_forward.4} parent=0 // loop_pre_header
    _
  $region3: #{cnn_custom_4_pretrain_forward.4} parent=0 // loop_header
    %s9 = sphi 0, %s13
    %p10 = scmp.ge.s32.totalorder %s9, 6
    %s16 = sphi 0, %s28
    %s17 = sphi 0, %s24
    %s18 = sphi 0, %s16
    %s19 = sphi 0, %s17
    %s20 = sphi 0, %s18
    %s21 = sphi 0, %s19
    %s31 = sphi 0, %s33
    %s34 = sphi 0, %s31
    %s35 = sphi 0, %s34
    %s51 = sphi 0, %s35
    %s57 = sphi 0, %s59
    %s60 = sphi 0, %s57
    %s61 = sphi 0, %s60
    %s77 = sphi 0, %s61
    %s83 = sphi 0, %s85
    %s86 = sphi 0, %s83
    %s87 = sphi 0, %s86
    %s103 = sphi 0, %s87
    %s111 = sphi 0, %s113
    %s114 = sphi 0, %s111
    %s115 = sphi 0, %s114
    %s131 = sphi 0, %s115
  $region4: #{cnn_custom_4_pretrain_forward.4} parent=0 // loop_header_branch
    %12 = sbr.rel (%p10) target = $region8
  $region5: #{cnn_custom_4_pretrain_forward.4} parent=0 // loop_body
    %s14 = ssub.s32 %s9, 1
    %s15 = ssub.s32 %s9, 2
    %s22 = sadd.s32 1, %s17
    %p23 = scmp.ge.s32.totalorder %s22, 1
    %s24 = scalar_select %p23, 0, %s22
    %s25 = sadd.s32 1, %s16
    %s26 = scalar_select %p23, %s25, %s16
    %p27 = scmp.ge.s32.totalorder %s26, 4
    %s28 = scalar_select %p27, 0, %s26
    %s29 = ssub.s32 %s16, %s28
    %p30 = scmp.eq.s32.totalorder %s29, 0
    %s32 = sadd.s32 %s31, 1
    %s33 = scalar_select %p30, %s31, %s32
    %p36 = pneg %p30
    %p37 = scmp.eq.s32.totalorder %s9, 3
    %p38 = por %p36, %p37
    %p39 = scmp.ne.s32.totalorder %s31, %s34
    %p40 = scmp.eq.s32.totalorder %s9, 0
    %p41 = por %p39, %p40
    %p42 = scmp.ne.s32.totalorder %s31, %s34
    %p43 = scmp.eq.s32.totalorder %s14, 3
    %p44 = por %p42, %p43
    %p45 = scmp.ne.s32.totalorder %s34, %s35
    %p46 = scmp.eq.s32.totalorder %s14, 0
    %p47 = por %p45, %p46
    %p48 = scmp.ne.s32.totalorder %s34, %s35
    %p49 = scmp.eq.s32.totalorder %s15, 3
    %p50 = por %p48, %p49
    %p52 = scmp.ne.s32.totalorder %s35, %s51
    %p53 = scmp.eq.s32.totalorder %s15, 0
    %p54 = por %p52, %p53
    %s55 = ssub.s32 %s17, %s24
    %p56 = scmp.eq.s32.totalorder %s55, 0
    %s58 = sadd.s32 %s57, 1
    %s59 = scalar_select %p56, %s57, %s58
    %p62 = pneg %p56
    %p63 = scmp.eq.s32.totalorder %s9, 3
    %p64 = por %p62, %p63
    %p65 = scmp.ne.s32.totalorder %s57, %s60
    %p66 = scmp.eq.s32.totalorder %s9, 0
    %p67 = por %p65, %p66
    %p68 = scmp.ne.s32.totalorder %s57, %s60
    %p69 = scmp.eq.s32.totalorder %s14, 3
    %p70 = por %p68, %p69
    %p71 = scmp.ne.s32.totalorder %s60, %s61
    %p72 = scmp.eq.s32.totalorder %s14, 0
    %p73 = por %p71, %p72
    %p74 = scmp.ne.s32.totalorder %s60, %s61
    %p75 = scmp.eq.s32.totalorder %s15, 3
    %p76 = por %p74, %p75
    %p78 = scmp.ne.s32.totalorder %s61, %s77
    %p79 = scmp.eq.s32.totalorder %s15, 0
    %p80 = por %p78, %p79
    %s81 = ssub.s32 %s17, %s24
    %p82 = scmp.eq.s32.totalorder %s81, 0
    %s84 = sadd.s32 %s83, 1
    %s85 = scalar_select %p82, %s83, %s84
    %p88 = pneg %p82
    %p89 = scmp.eq.s32.totalorder %s9, 3
    %p90 = por %p88, %p89
    %p91 = scmp.ne.s32.totalorder %s83, %s86
    %p92 = scmp.eq.s32.totalorder %s9, 0
    %p93 = por %p91, %p92
    %p94 = scmp.ne.s32.totalorder %s83, %s86
    %p95 = scmp.eq.s32.totalorder %s14, 3
    %p96 = por %p94, %p95
    %p97 = scmp.ne.s32.totalorder %s86, %s87
    %p98 = scmp.eq.s32.totalorder %s14, 0
    %p99 = por %p97, %p98
    %p100 = scmp.ne.s32.totalorder %s86, %s87
    %p101 = scmp.eq.s32.totalorder %s15, 3
    %p102 = por %p100, %p101
    %p104 = scmp.ne.s32.totalorder %s87, %s103
    %p105 = scmp.eq.s32.totalorder %s15, 0
    %p106 = por %p104, %p105
    %s107 = ssub.s32 %s16, %s28
    %s108 = ssub.s32 %s17, %s24
    %s109 = sor.u32 %s107, %s108
    %p110 = scmp.eq.s32.totalorder %s109, 0
    %s112 = sadd.s32 %s111, 1
    %s113 = scalar_select %p110, %s111, %s112
    %p116 = pneg %p110
    %p117 = scmp.eq.s32.totalorder %s9, 3
    %p118 = por %p116, %p117
    %p119 = scmp.ne.s32.totalorder %s111, %s114
    %p120 = scmp.eq.s32.totalorder %s9, 0
    %p121 = por %p119, %p120
    %p122 = scmp.ne.s32.totalorder %s111, %s114
    %p123 = scmp.eq.s32.totalorder %s14, 3
    %p124 = por %p122, %p123
    %p125 = scmp.ne.s32.totalorder %s114, %s115
    %p126 = scmp.eq.s32.totalorder %s14, 0
    %p127 = por %p125, %p126
    %p128 = scmp.ne.s32.totalorder %s114, %s115
    %p129 = scmp.eq.s32.totalorder %s15, 3
    %p130 = por %p128, %p129
    %p132 = scmp.ne.s32.totalorder %s115, %s131
    %p133 = scmp.eq.s32.totalorder %s15, 0
    %p134 = por %p132, %p133
    %p135 = scmp.le.s32.totalorder 1, %s9
    %p136 = scmp.lt.s32.totalorder %s9, 5
    %p137 = pnand %p135, %p136
    %p138 = pneg %p137
    // Predicated region
    $region9: #{cnn_custom_4_pretrain_forward.4} parent=5 // pred_check
      _
    $region10: #{cnn_custom_4_pretrain_forward.4} parent=5 // pred_check_branch
      %140 = sbr.rel (%p137) target = $region12
    $region11: #{cnn_custom_4_pretrain_forward.4} parent=5 // pred_region
      %s141 = ssub.s32 %s9, 1
      // Predicated region
      $region13: #{cnn_custom_4_pretrain_forward.4} parent=11 // pred_check
        %p142 = pneg %p73
      $region14: #{cnn_custom_4_pretrain_forward.4} parent=11 // pred_check_branch
        %144 = sbr.rel (%p142) target = $region16
      $region15: #{cnn_custom_4_pretrain_forward.4} parent=11 // pred_region
        %p145 = scmp.lt.s32.totalorder %s19, 0
        %s146 = scalar_select %p145, %s19, 0
        %s147 = smul.addr %s146, 4
        %s148 = scalar_lea.vmem %s1, %s147
      $region16: #{cnn_custom_4_pretrain_forward.4} parent=11 // pred_fallthru
        _
      // Predicated region
      $region17: #{cnn_custom_4_pretrain_forward.4} parent=11 // pred_check
        %p149 = pneg %p99
      $region18: #{cnn_custom_4_pretrain_forward.4} parent=11 // pred_check_branch
        %151 = sbr.rel (%p149) target = $region20
      $region19: #{cnn_custom_4_pretrain_forward.4} parent=11 // pred_region
        %p152 = scmp.lt.s32.totalorder %s19, 0
        %s153 = scalar_select %p152, %s19, 0
        %s154 = scalar_lea.vmem %s2, %s153
      $region20: #{cnn_custom_4_pretrain_forward.4} parent=11 // pred_fallthru
        _
    $region12: #{cnn_custom_4_pretrain_forward.4} parent=5 // pred_fallthru
      _
    %p155 = scmp.lt.s32.totalorder %s9, 4
    // Predicated region
    $region21: #{cnn_custom_4_pretrain_forward.4} parent=5 // pred_check
      %p156 = pneg %p155
    $region22: #{cnn_custom_4_pretrain_forward.4} parent=5 // pred_check_branch
      %158 = sbr.rel (%p156) target = $region24
    $region23: #{cnn_custom_4_pretrain_forward.4} parent=5 // pred_region
      // Predicated region
      $region25: #{cnn_custom_4_pretrain_forward.4} parent=23 // pred_check
        %p159 = pneg %p41
      $region26: #{cnn_custom_4_pretrain_forward.4} parent=23 // pred_check_branch
        %161 = sbr.rel (%p159) target = $region28
      $region27: #{cnn_custom_4_pretrain_forward.4} parent=23 // pred_region
        %p162 = scmp.lt.s32.totalorder %s16, 3
        %s163 = scalar_select %p162, %s16, 3
        %s164 = smul.addr %s163, 48
        %s165 = smul.addr %s164, 4
        %s166 = scalar_lea.vmem %s0, %s165
      $region28: #{cnn_custom_4_pretrain_forward.4} parent=23 // pred_fallthru
        _
    $region24: #{cnn_custom_4_pretrain_forward.4} parent=5 // pred_fallthru
      _
    %p167 = scmp.le.s32.totalorder 1, %s9
    %p168 = scmp.lt.s32.totalorder %s9, 5
    %p169 = pnand %p167, %p168
    %p170 = pneg %p169
    // Predicated region
    $region29: #{cnn_custom_4_pretrain_forward.4} parent=5 // pred_check
      _
    $region30: #{cnn_custom_4_pretrain_forward.4} parent=5 // pred_check_branch
      %172 = sbr.rel (%p169) target = $region32
    $region31: #{cnn_custom_4_pretrain_forward.4} parent=5 // pred_region
      %s173 = ssub.s32 %s9, 1
      %p174 = scmp.lt.s32.totalorder %s18, 3
      %s175 = scalar_select %p174, %s18, 3
      %s176 = smul.addr %s175, 48
      %s177 = smul.addr %s176, 4
      %s178 = scalar_lea.vmem %s0, %s177
      %p179 = pneg %p47
      %p180 = pneg %p44
      %p181 = scmp.lt.s32.totalorder %s19, 0
      %s182 = scalar_select %p181, %s19, 0
      %s183 = smul.addr %s182, 4
      %s184 = scalar_lea.vmem %s1, %s183
      %p185 = pneg %p73
      %p186 = pneg %p70
      %p187 = scmp.lt.s32.totalorder %s19, 0
      %s188 = scalar_select %p187, %s19, 0
      %s189 = scalar_lea.vmem %s2, %s188
      %p190 = pneg %p99
      %p191 = pneg %p96
      %p192 = pneg %p127
      %p193 = pneg %p124
      %p194 = scmp.lt.s32.totalorder %s18, 3
      %s195 = scalar_select %p194, %s18, 3
      %p196 = scmp.lt.s32.totalorder %s19, 0
      %s197 = scalar_select %p196, %s19, 0
      %s198 = smul.addr %s195, 32
      %s199 = sadd.s32 %s197, %s198
      %s200 = smul.addr %s199, 4
      %s201 = scalar_lea.vmem %s3, %s200
      %p202 = scmp.lt.s32.totalorder %s18, 3
      %s203 = scalar_select %p202, %s18, 3
      %s204 = smul.addr %s203, 48
      %s205 = smul.addr %s204, 4
      %s206 = scalar_lea.vmem %s0, %s205
      %p207 = scmp.lt.s32.totalorder %s19, 0
      %s208 = scalar_select %p207, %s19, 0
      %s209 = smul.addr %s208, 4
      %s210 = scalar_lea.vmem %s1, %s209
      %p211 = scmp.lt.s32.totalorder %s19, 0
      %s212 = scalar_select %p211, %s19, 0
      %s213 = scalar_lea.vmem %s2, %s212
      %p214 = scmp.lt.s32.totalorder %s18, 3
      %s215 = scalar_select %p214, %s18, 3
      %p216 = scmp.lt.s32.totalorder %s19, 0
      %s217 = scalar_select %p216, %s19, 0
      %s218 = smul.addr %s215, 32
      %s219 = sadd.s32 %s217, %s218
      %s220 = smul.addr %s219, 4
      %s221 = scalar_lea.vmem %s3, %s220
      %v223 = vld [vmem:[%s206] sm:$0xf]
      %v224 = vld [vmem:[%s206 + $0x4] sm:$0xf]
      %v225 = vld [vmem:[%s206 + $0x8] sm:$0xf]
      %v226 = vld [vmem:[%s206 + $0xc] sm:$0xf]
      %v227 = vld [vmem:[%s206 + $0x10] sm:$0xf]
      %v228 = vld [vmem:[%s206 + $0x14] sm:$0xf]
      %v229 = vld [vmem:[%s206 + $0x18] sm:$0xf]
      %v230 = vld [vmem:[%s206 + $0x1c] sm:$0xf]
      %v231 = vld [vmem:[%s206 + $0x20] sm:$0xf]
      %v232 = vld [vmem:[%s206 + $0x24] sm:$0xf]
      %v233 = vld [vmem:[%s206 + $0x28] sm:$0xf]
      %v234 = vld [vmem:[%s206 + $0x2c] sm:$0xf]
      %v235 = vld [vmem:[%s206 + $0x30] sm:$0xf]
      %v236 = vld [vmem:[%s206 + $0x34] sm:$0xf]
      %v237 = vld [vmem:[%s206 + $0x38] sm:$0xf]
      %v238 = vld [vmem:[%s206 + $0x3c] sm:$0xf]
      %v239 = vld [vmem:[%s206 + $0x40] sm:$0xf]
      %v240 = vld [vmem:[%s206 + $0x44] sm:$0xf]
      %v241 = vld [vmem:[%s206 + $0x48] sm:$0xf]
      %v242 = vld [vmem:[%s206 + $0x4c] sm:$0xf]
      %v243 = vld [vmem:[%s206 + $0x50] sm:$0xf]
      %v244 = vld [vmem:[%s206 + $0x54] sm:$0xf]
      %v245 = vld [vmem:[%s206 + $0x58] sm:$0xf]
      %v246 = vld [vmem:[%s206 + $0x5c] sm:$0xf]
      %v247 = vld [vmem:[%s206 + $0x60] sm:$0xf]
      %v248 = vld [vmem:[%s206 + $0x64] sm:$0xf]
      %v249 = vld [vmem:[%s206 + $0x68] sm:$0xf]
      %v250 = vld [vmem:[%s206 + $0x6c] sm:$0xf]
      %v251 = vld [vmem:[%s206 + $0x70] sm:$0xf]
      %v252 = vld [vmem:[%s206 + $0x74] sm:$0xf]
      %v253 = vld [vmem:[%s206 + $0x78] sm:$0xf]
      %v254 = vld [vmem:[%s206 + $0x7c] sm:$0xf]
      %v255 = vld [vmem:[%s210] sm:$0xf]
      %v288 = vunpack.c.l.b16 %v223
      %v289 = vunpack.c.l.b16 %v224
      %v290 = vunpack.c.l.b16 %v225
      %v291 = vunpack.c.l.b16 %v226
      %v292 = vunpack.c.l.b16 %v227
      %v293 = vunpack.c.l.b16 %v228
      %v294 = vunpack.c.l.b16 %v229
      %v295 = vunpack.c.l.b16 %v230
      %v296 = vunpack.c.l.b16 %v231
      %v297 = vunpack.c.l.b16 %v232
      %v298 = vunpack.c.l.b16 %v233
      %v299 = vunpack.c.l.b16 %v234
      %v300 = vunpack.c.l.b16 %v235
      %v301 = vunpack.c.l.b16 %v236
      %v302 = vunpack.c.l.b16 %v237
      %v303 = vunpack.c.l.b16 %v238
      %v304 = vunpack.c.l.b16 %v239
      %v305 = vunpack.c.l.b16 %v240
      %v306 = vunpack.c.l.b16 %v241
      %v307 = vunpack.c.l.b16 %v242
      %v308 = vunpack.c.l.b16 %v243
      %v309 = vunpack.c.l.b16 %v244
      %v310 = vunpack.c.l.b16 %v245
      %v311 = vunpack.c.l.b16 %v246
      %v312 = vunpack.c.l.b16 %v247
      %v313 = vunpack.c.l.b16 %v248
      %v314 = vunpack.c.l.b16 %v249
      %v315 = vunpack.c.l.b16 %v250
      %v316 = vunpack.c.l.b16 %v251
      %v317 = vunpack.c.l.b16 %v252
      %v318 = vunpack.c.l.b16 %v253
      %v319 = vunpack.c.l.b16 %v254
      %v320 = vpack.c.b16 %v289, %v288
      %v321 = vpack.c.b16 %v291, %v290
      %v322 = vpack.c.b16 %v293, %v292
      %v323 = vpack.c.b16 %v295, %v294
      %v324 = vpack.c.b16 %v297, %v296
      %v325 = vpack.c.b16 %v299, %v298
      %v326 = vpack.c.b16 %v301, %v300
      %v327 = vpack.c.b16 %v303, %v302
      %v328 = vpack.c.b16 %v305, %v304
      %v329 = vpack.c.b16 %v307, %v306
      %v330 = vpack.c.b16 %v309, %v308
      %v331 = vpack.c.b16 %v311, %v310
      %v332 = vpack.c.b16 %v313, %v312
      %v333 = vpack.c.b16 %v315, %v314
      %v334 = vpack.c.b16 %v317, %v316
      %v335 = vpack.c.b16 %v319, %v318
      %vm336 = vcmask 64512
      %v338 = vsel %vm336, %v320, 0
      %v341 = vsel %vm336, %v321, 0
      %v344 = vsel %vm336, %v322, 0
      %v347 = vsel %vm336, %v323, 0
      %v350 = vsel %vm336, %v324, 0
      %v353 = vsel %vm336, %v325, 0
      %v356 = vsel %vm336, %v326, 0
      %v359 = vsel %vm336, %v327, 0
      %v362 = vsel %vm336, %v328, 0
      %v365 = vsel %vm336, %v329, 0
      %v368 = vsel %vm336, %v330, 0
      %v371 = vsel %vm336, %v331, 0
      %v374 = vsel %vm336, %v332, 0
      %v377 = vsel %vm336, %v333, 0
      %v380 = vsel %vm336, %v334, 0
      %v383 = vsel %vm336, %v335, 0
      %vm385 = vcmask 1043456
      %v387 = vsel %vm385, %v255, 0
      %389 = vmatpush.bf16.msra.mxu0 0
      %390 = vmatpush.bf16.msra.mxu0 0
      %391 = vmatpush.bf16.msra.mxu0 0
      %392 = vmatpush.bf16.msra.mxu0 0
      %393 = vmatpush.bf16.msra.mxu0 0
      %394 = vmatpush.bf16.msra.mxu0 0
      %395 = vmatpush.bf16.msra.mxu0 0
      %396 = vmatpush.bf16.msra.mxu0 %v387
      %397 = vmatmul.bf16.gmra.mxu0 %v338
      %v398 = vpop.f32.mrf.mxu0
      %v399 = vadd.f32 0.0, %v398
      %v400 = vpop.f32.mrf.mxu0
      %v401 = vadd.f32 0.0, %v400
      %402 = vmatmul.bf16.gmra.mxu0 %v341
      %v403 = vpop.f32.mrf.mxu0
      %v404 = vadd.f32 0.0, %v403
      %v405 = vpop.f32.mrf.mxu0
      %v406 = vadd.f32 0.0, %v405
      %407 = vmatmul.bf16.gmra.mxu0 %v344
      %v408 = vpop.f32.mrf.mxu0
      %v409 = vadd.f32 0.0, %v408
      %v410 = vpop.f32.mrf.mxu0
      %v411 = vadd.f32 0.0, %v410
      %412 = vmatmul.bf16.gmra.mxu0 %v347
      %v413 = vpop.f32.mrf.mxu0
      %v414 = vadd.f32 0.0, %v413
      %v415 = vpop.f32.mrf.mxu0
      %v416 = vadd.f32 0.0, %v415
      %417 = vmatmul.bf16.gmra.mxu0 %v350
      %v418 = vpop.f32.mrf.mxu0
      %v419 = vadd.f32 0.0, %v418
      %v420 = vpop.f32.mrf.mxu0
      %v421 = vadd.f32 0.0, %v420
      %422 = vmatmul.bf16.gmra.mxu0 %v353
      %v423 = vpop.f32.mrf.mxu0
      %v424 = vadd.f32 0.0, %v423
      %v425 = vpop.f32.mrf.mxu0
      %v426 = vadd.f32 0.0, %v425
      %427 = vmatmul.bf16.gmra.mxu0 %v356
      %v428 = vpop.f32.mrf.mxu0
      %v429 = vadd.f32 0.0, %v428
      %v430 = vpop.f32.mrf.mxu0
      %v431 = vadd.f32 0.0, %v430
      %432 = vmatmul.bf16.gmra.mxu0 %v359
      %v433 = vpop.f32.mrf.mxu0
      %v434 = vadd.f32 0.0, %v433
      %v435 = vpop.f32.mrf.mxu0
      %v436 = vadd.f32 0.0, %v435
      %437 = vmatmul.bf16.gmra.mxu0 %v362
      %v438 = vpop.f32.mrf.mxu0
      %v439 = vadd.f32 0.0, %v438
      %v440 = vpop.f32.mrf.mxu0
      %v441 = vadd.f32 0.0, %v440
      %442 = vmatmul.bf16.gmra.mxu0 %v365
      %v443 = vpop.f32.mrf.mxu0
      %v444 = vadd.f32 0.0, %v443
      %v445 = vpop.f32.mrf.mxu0
      %v446 = vadd.f32 0.0, %v445
      %447 = vmatmul.bf16.gmra.mxu0 %v368
      %v448 = vpop.f32.mrf.mxu0
      %v449 = vadd.f32 0.0, %v448
      %v450 = vpop.f32.mrf.mxu0
      %v451 = vadd.f32 0.0, %v450
      %452 = vmatmul.bf16.gmra.mxu0 %v371
      %v453 = vpop.f32.mrf.mxu0
      %v454 = vadd.f32 0.0, %v453
      %v455 = vpop.f32.mrf.mxu0
      %v456 = vadd.f32 0.0, %v455
      %457 = vmatmul.bf16.gmra.mxu0 %v374
      %v458 = vpop.f32.mrf.mxu0
      %v459 = vadd.f32 0.0, %v458
      %v460 = vpop.f32.mrf.mxu0
      %v461 = vadd.f32 0.0, %v460
      %462 = vmatmul.bf16.gmra.mxu0 %v377
      %v463 = vpop.f32.mrf.mxu0
      %v464 = vadd.f32 0.0, %v463
      %v465 = vpop.f32.mrf.mxu0
      %v466 = vadd.f32 0.0, %v465
      %467 = vmatmul.bf16.gmra.mxu0 %v380
      %v468 = vpop.f32.mrf.mxu0
      %v469 = vadd.f32 0.0, %v468
      %v470 = vpop.f32.mrf.mxu0
      %v471 = vadd.f32 0.0, %v470
      %472 = vmatmul.bf16.gmra.mxu0 %v383
      %v473 = vpop.f32.mrf.mxu0
      %v474 = vadd.f32 0.0, %v473
      %v475 = vpop.f32.mrf.mxu0
      %v476 = vadd.f32 0.0, %v475
      %477 = vdwg.mxu0
      %478 = vst [vmem:[#allocation2] sm:$0xff] %v399
      %479 = vst [vmem:[#allocation2 + $0x8] sm:$0xff] %v401
      %480 = vst [vmem:[#allocation2 + $0x10] sm:$0xff] %v404
      %481 = vst [vmem:[#allocation2 + $0x18] sm:$0xff] %v406
      %482 = vst [vmem:[#allocation2 + $0x20] sm:$0xff] %v409
      %483 = vst [vmem:[#allocation2 + $0x28] sm:$0xff] %v411
      %484 = vst [vmem:[#allocation2 + $0x30] sm:$0xff] %v414
      %485 = vst [vmem:[#allocation2 + $0x38] sm:$0xff] %v416
      %486 = vst [vmem:[#allocation2 + $0x40] sm:$0xff] %v419
      %487 = vst [vmem:[#allocation2 + $0x48] sm:$0xff] %v421
      %488 = vst [vmem:[#allocation2 + $0x50] sm:$0xff] %v424
      %489 = vst [vmem:[#allocation2 + $0x58] sm:$0xff] %v426
      %490 = vst [vmem:[#allocation2 + $0x60] sm:$0xff] %v429
      %491 = vst [vmem:[#allocation2 + $0x68] sm:$0xff] %v431
      %492 = vst [vmem:[#allocation2 + $0x70] sm:$0xff] %v434
      %493 = vst [vmem:[#allocation2 + $0x78] sm:$0xff] %v436
      %494 = vst [vmem:[#allocation2 + $0x80] sm:$0xff] %v439
      %495 = vst [vmem:[#allocation2 + $0x88] sm:$0xff] %v441
      %496 = vst [vmem:[#allocation2 + $0x90] sm:$0xff] %v444
      %497 = vst [vmem:[#allocation2 + $0x98] sm:$0xff] %v446
      %498 = vst [vmem:[#allocation2 + $0xa0] sm:$0xff] %v449
      %499 = vst [vmem:[#allocation2 + $0xa8] sm:$0xff] %v451
      %500 = vst [vmem:[#allocation2 + $0xb0] sm:$0xff] %v454
      %501 = vst [vmem:[#allocation2 + $0xb8] sm:$0xff] %v456
      %502 = vst [vmem:[#allocation2 + $0xc0] sm:$0xff] %v459
      %503 = vst [vmem:[#allocation2 + $0xc8] sm:$0xff] %v461
      %504 = vst [vmem:[#allocation2 + $0xd0] sm:$0xff] %v464
      %505 = vst [vmem:[#allocation2 + $0xd8] sm:$0xff] %v466
      %506 = vst [vmem:[#allocation2 + $0xe0] sm:$0xff] %v469
      %507 = vst [vmem:[#allocation2 + $0xe8] sm:$0xff] %v471
      %508 = vst [vmem:[#allocation2 + $0xf0] sm:$0xff] %v474
      %509 = vst [vmem:[#allocation2 + $0xf8] sm:$0xff] %v476
      %v510 = vld [vmem:[%s206 + $0x8] sm:$0xf]
      %v511 = vld [vmem:[%s206 + $0xc] sm:$0xf]
      %v512 = vld [vmem:[%s206 + $0x10] sm:$0xf]
      %v513 = vld [vmem:[%s206 + $0x14] sm:$0xf]
      %v514 = vld [vmem:[%s206 + $0x18] sm:$0xf]
      %v515 = vld [vmem:[%s206 + $0x1c] sm:$0xf]
      %v516 = vld [vmem:[%s206 + $0x20] sm:$0xf]
      %v517 = vld [vmem:[%s206 + $0x24] sm:$0xf]
      %v518 = vld [vmem:[%s206 + $0x28] sm:$0xf]
      %v519 = vld [vmem:[%s206 + $0x2c] sm:$0xf]
      %v520 = vld [vmem:[%s206 + $0x30] sm:$0xf]
      %v521 = vld [vmem:[%s206 + $0x34] sm:$0xf]
      %v522 = vld [vmem:[%s206 + $0x38] sm:$0xf]
      %v523 = vld [vmem:[%s206 + $0x3c] sm:$0xf]
      %v524 = vld [vmem:[%s206 + $0x40] sm:$0xf]
      %v525 = vld [vmem:[%s206 + $0x44] sm:$0xf]
      %v526 = vld [vmem:[%s206 + $0x48] sm:$0xf]
      %v527 = vld [vmem:[%s206 + $0x4c] sm:$0xf]
      %v528 = vld [vmem:[%s206 + $0x50] sm:$0xf]
      %v529 = vld [vmem:[%s206 + $0x54] sm:$0xf]
      %v530 = vld [vmem:[%s206 + $0x58] sm:$0xf]
      %v531 = vld [vmem:[%s206 + $0x5c] sm:$0xf]
      %v532 = vld [vmem:[%s206 + $0x60] sm:$0xf]
      %v533 = vld [vmem:[%s206 + $0x64] sm:$0xf]
      %v534 = vld [vmem:[%s206 + $0x68] sm:$0xf]
      %v535 = vld [vmem:[%s206 + $0x6c] sm:$0xf]
      %v536 = vld [vmem:[%s206 + $0x70] sm:$0xf]
      %v537 = vld [vmem:[%s206 + $0x74] sm:$0xf]
      %v538 = vld [vmem:[%s206 + $0x78] sm:$0xf]
      %v539 = vld [vmem:[%s206 + $0x7c] sm:$0xf]
      %v540 = vld [vmem:[%s206 + $0x80] sm:$0xf]
      %v541 = vld [vmem:[%s206 + $0x84] sm:$0xf]
      %s542 = scalar_lea.vmem %s210, 4
      %v543 = vld [vmem:[%s542] sm:$0xf]
      %v576 = vunpack.c.l.b16 %v510
      %v577 = vunpack.c.l.b16 %v511
      %v578 = vunpack.c.l.b16 %v512
      %v579 = vunpack.c.l.b16 %v513
      %v580 = vunpack.c.l.b16 %v514
      %v581 = vunpack.c.l.b16 %v515
      %v582 = vunpack.c.l.b16 %v516
      %v583 = vunpack.c.l.b16 %v517
      %v584 = vunpack.c.l.b16 %v518
      %v585 = vunpack.c.l.b16 %v519
      %v586 = vunpack.c.l.b16 %v520
      %v587 = vunpack.c.l.b16 %v521
      %v588 = vunpack.c.l.b16 %v522
      %v589 = vunpack.c.l.b16 %v523
      %v590 = vunpack.c.l.b16 %v524
      %v591 = vunpack.c.l.b16 %v525
      %v592 = vunpack.c.l.b16 %v526
      %v593 = vunpack.c.l.b16 %v527
      %v594 = vunpack.c.l.b16 %v528
      %v595 = vunpack.c.l.b16 %v529
      %v596 = vunpack.c.l.b16 %v530
      %v597 = vunpack.c.l.b16 %v531
      %v598 = vunpack.c.l.b16 %v532
      %v599 = vunpack.c.l.b16 %v533
      %v600 = vunpack.c.l.b16 %v534
      %v601 = vunpack.c.l.b16 %v535
      %v602 = vunpack.c.l.b16 %v536
      %v603 = vunpack.c.l.b16 %v537
      %v604 = vunpack.c.l.b16 %v538
      %v605 = vunpack.c.l.b16 %v539
      %v606 = vunpack.c.l.b16 %v540
      %v607 = vunpack.c.l.b16 %v541
      %v608 = vpack.c.b16 %v577, %v576
      %v609 = vpack.c.b16 %v579, %v578
      %v610 = vpack.c.b16 %v581, %v580
      %v611 = vpack.c.b16 %v583, %v582
      %v612 = vpack.c.b16 %v585, %v584
      %v613 = vpack.c.b16 %v587, %v586
      %v614 = vpack.c.b16 %v589, %v588
      %v615 = vpack.c.b16 %v591, %v590
      %v616 = vpack.c.b16 %v593, %v592
      %v617 = vpack.c.b16 %v595, %v594
      %v618 = vpack.c.b16 %v597, %v596
      %v619 = vpack.c.b16 %v599, %v598
      %v620 = vpack.c.b16 %v601, %v600
      %v621 = vpack.c.b16 %v603, %v602
      %v622 = vpack.c.b16 %v605, %v604
      %v623 = vpack.c.b16 %v607, %v606
      %v625 = vsel %vm336, %v608, 0
      %v628 = vsel %vm336, %v609, 0
      %v631 = vsel %vm336, %v610, 0
      %v634 = vsel %vm336, %v611, 0
      %v637 = vsel %vm336, %v612, 0
      %v640 = vsel %vm336, %v613, 0
      %v643 = vsel %vm336, %v614, 0
      %v646 = vsel %vm336, %v615, 0
      %v649 = vsel %vm336, %v616, 0
      %v652 = vsel %vm336, %v617, 0
      %v655 = vsel %vm336, %v618, 0
      %v658 = vsel %vm336, %v619, 0
      %v661 = vsel %vm336, %v620, 0
      %v664 = vsel %vm336, %v621, 0
      %v667 = vsel %vm336, %v622, 0
      %v670 = vsel %vm336, %v623, 0
      %v673 = vsel %vm385, %v543, 0
      %675 = vmatpush.bf16.msra.mxu0 0
      %676 = vmatpush.bf16.msra.mxu0 0
      %677 = vmatpush.bf16.msra.mxu0 0
      %678 = vmatpush.bf16.msra.mxu0 0
      %679 = vmatpush.bf16.msra.mxu0 0
      %680 = vmatpush.bf16.msra.mxu0 0
      %681 = vmatpush.bf16.msra.mxu0 0
      %682 = vmatpush.bf16.msra.mxu0 %v673
      %683 = vmatmul.bf16.gmra.mxu0 %v625
      %v684 = vpop.f32.mrf.mxu0
      %v685 = vadd.f32 0.0, %v684
      %v686 = vpop.f32.mrf.mxu0
      %v687 = vadd.f32 0.0, %v686
      %688 = vmatmul.bf16.gmra.mxu0 %v628
      %v689 = vpop.f32.mrf.mxu0
      %v690 = vadd.f32 0.0, %v689
      %v691 = vpop.f32.mrf.mxu0
      %v692 = vadd.f32 0.0, %v691
      %693 = vmatmul.bf16.gmra.mxu0 %v631
      %v694 = vpop.f32.mrf.mxu0
      %v695 = vadd.f32 0.0, %v694
      %v696 = vpop.f32.mrf.mxu0
      %v697 = vadd.f32 0.0, %v696
      %698 = vmatmul.bf16.gmra.mxu0 %v634
      %v699 = vpop.f32.mrf.mxu0
      %v700 = vadd.f32 0.0, %v699
      %v701 = vpop.f32.mrf.mxu0
      %v702 = vadd.f32 0.0, %v701
      %703 = vmatmul.bf16.gmra.mxu0 %v637
      %v704 = vpop.f32.mrf.mxu0
      %v705 = vadd.f32 0.0, %v704
      %v706 = vpop.f32.mrf.mxu0
      %v707 = vadd.f32 0.0, %v706
      %708 = vmatmul.bf16.gmra.mxu0 %v640
      %v709 = vpop.f32.mrf.mxu0
      %v710 = vadd.f32 0.0, %v709
      %v711 = vpop.f32.mrf.mxu0
      %v712 = vadd.f32 0.0, %v711
      %713 = vmatmul.bf16.gmra.mxu0 %v643
      %v714 = vpop.f32.mrf.mxu0
      %v715 = vadd.f32 0.0, %v714
      %v716 = vpop.f32.mrf.mxu0
      %v717 = vadd.f32 0.0, %v716
      %718 = vmatmul.bf16.gmra.mxu0 %v646
      %v719 = vpop.f32.mrf.mxu0
      %v720 = vadd.f32 0.0, %v719
      %v721 = vpop.f32.mrf.mxu0
      %v722 = vadd.f32 0.0, %v721
      %723 = vmatmul.bf16.gmra.mxu0 %v649
      %v724 = vpop.f32.mrf.mxu0
      %v725 = vadd.f32 0.0, %v724
      %v726 = vpop.f32.mrf.mxu0
      %v727 = vadd.f32 0.0, %v726
      %728 = vmatmul.bf16.gmra.mxu0 %v652
      %v729 = vpop.f32.mrf.mxu0
      %v730 = vadd.f32 0.0, %v729
      %v731 = vpop.f32.mrf.mxu0
      %v732 = vadd.f32 0.0, %v731
      %733 = vmatmul.bf16.gmra.mxu0 %v655
      %v734 = vpop.f32.mrf.mxu0
      %v735 = vadd.f32 0.0, %v734
      %v736 = vpop.f32.mrf.mxu0
      %v737 = vadd.f32 0.0, %v736
      %738 = vmatmul.bf16.gmra.mxu0 %v658
      %v739 = vpop.f32.mrf.mxu0
      %v740 = vadd.f32 0.0, %v739
      %v741 = vpop.f32.mrf.mxu0
      %v742 = vadd.f32 0.0, %v741
      %743 = vmatmul.bf16.gmra.mxu0 %v661
      %v744 = vpop.f32.mrf.mxu0
      %v745 = vadd.f32 0.0, %v744
      %v746 = vpop.f32.mrf.mxu0
      %v747 = vadd.f32 0.0, %v746
      %748 = vmatmul.bf16.gmra.mxu0 %v664
      %v749 = vpop.f32.mrf.mxu0
      %v750 = vadd.f32 0.0, %v749
      %v751 = vpop.f32.mrf.mxu0
      %v752 = vadd.f32 0.0, %v751
      %753 = vmatmul.bf16.gmra.mxu0 %v667
      %v754 = vpop.f32.mrf.mxu0
      %v755 = vadd.f32 0.0, %v754
      %v756 = vpop.f32.mrf.mxu0
      %v757 = vadd.f32 0.0, %v756
      %758 = vmatmul.bf16.gmra.mxu0 %v670
      %v759 = vpop.f32.mrf.mxu0
      %v760 = vadd.f32 0.0, %v759
      %v761 = vpop.f32.mrf.mxu0
      %v762 = vadd.f32 0.0, %v761
      %763 = vdwg.mxu0
      %v764 = vld [vmem:[#allocation2] sm:$0xff]
      %v765 = vld [vmem:[#allocation2 + $0x8] sm:$0xff]
      %v766 = vld [vmem:[#allocation2 + $0x10] sm:$0xff]
      %v767 = vld [vmem:[#allocation2 + $0x18] sm:$0xff]
      %v768 = vld [vmem:[#allocation2 + $0x20] sm:$0xff]
      %v769 = vld [vmem:[#allocation2 + $0x28] sm:$0xff]
      %v770 = vld [vmem:[#allocation2 + $0x30] sm:$0xff]
      %v771 = vld [vmem:[#allocation2 + $0x38] sm:$0xff]
      %v772 = vld [vmem:[#allocation2 + $0x40] sm:$0xff]
      %v773 = vld [vmem:[#allocation2 + $0x48] sm:$0xff]
      %v774 = vld [vmem:[#allocation2 + $0x50] sm:$0xff]
      %v775 = vld [vmem:[#allocation2 + $0x58] sm:$0xff]
      %v776 = vld [vmem:[#allocation2 + $0x60] sm:$0xff]
      %v777 = vld [vmem:[#allocation2 + $0x68] sm:$0xff]
      %v778 = vld [vmem:[#allocation2 + $0x70] sm:$0xff]
      %v779 = vld [vmem:[#allocation2 + $0x78] sm:$0xff]
      %v780 = vld [vmem:[#allocation2 + $0x80] sm:$0xff]
      %v781 = vld [vmem:[#allocation2 + $0x88] sm:$0xff]
      %v782 = vld [vmem:[#allocation2 + $0x90] sm:$0xff]
      %v783 = vld [vmem:[#allocation2 + $0x98] sm:$0xff]
      %v784 = vld [vmem:[#allocation2 + $0xa0] sm:$0xff]
      %v785 = vld [vmem:[#allocation2 + $0xa8] sm:$0xff]
      %v786 = vld [vmem:[#allocation2 + $0xb0] sm:$0xff]
      %v787 = vld [vmem:[#allocation2 + $0xb8] sm:$0xff]
      %v788 = vld [vmem:[#allocation2 + $0xc0] sm:$0xff]
      %v789 = vld [vmem:[#allocation2 + $0xc8] sm:$0xff]
      %v790 = vld [vmem:[#allocation2 + $0xd0] sm:$0xff]
      %v791 = vld [vmem:[#allocation2 + $0xd8] sm:$0xff]
      %v792 = vld [vmem:[#allocation2 + $0xe0] sm:$0xff]
      %v793 = vld [vmem:[#allocation2 + $0xe8] sm:$0xff]
      %v794 = vld [vmem:[#allocation2 + $0xf0] sm:$0xff]
      %v795 = vld [vmem:[#allocation2 + $0xf8] sm:$0xff]
      %v796 = vadd.f32 %v764, %v685
      %v797 = vadd.f32 %v765, %v687
      %v798 = vadd.f32 %v766, %v690
      %v799 = vadd.f32 %v767, %v692
      %v800 = vadd.f32 %v768, %v695
      %v801 = vadd.f32 %v769, %v697
      %v802 = vadd.f32 %v770, %v700
      %v803 = vadd.f32 %v771, %v702
      %v804 = vadd.f32 %v772, %v705
      %v805 = vadd.f32 %v773, %v707
      %v806 = vadd.f32 %v774, %v710
      %v807 = vadd.f32 %v775, %v712
      %v808 = vadd.f32 %v776, %v715
      %v809 = vadd.f32 %v777, %v717
      %v810 = vadd.f32 %v778, %v720
      %v811 = vadd.f32 %v779, %v722
      %v812 = vadd.f32 %v780, %v725
      %v813 = vadd.f32 %v781, %v727
      %v814 = vadd.f32 %v782, %v730
      %v815 = vadd.f32 %v783, %v732
      %v816 = vadd.f32 %v784, %v735
      %v817 = vadd.f32 %v785, %v737
      %v818 = vadd.f32 %v786, %v740
      %v819 = vadd.f32 %v787, %v742
      %v820 = vadd.f32 %v788, %v745
      %v821 = vadd.f32 %v789, %v747
      %v822 = vadd.f32 %v790, %v750
      %v823 = vadd.f32 %v791, %v752
      %v824 = vadd.f32 %v792, %v755
      %v825 = vadd.f32 %v793, %v757
      %v826 = vadd.f32 %v794, %v760
      %v827 = vadd.f32 %v795, %v762
      %828 = vst [vmem:[#allocation2] sm:$0xff] %v796
      %829 = vst [vmem:[#allocation2 + $0x8] sm:$0xff] %v797
      %830 = vst [vmem:[#allocation2 + $0x10] sm:$0xff] %v798
      %831 = vst [vmem:[#allocation2 + $0x18] sm:$0xff] %v799
      %832 = vst [vmem:[#allocation2 + $0x20] sm:$0xff] %v800
      %833 = vst [vmem:[#allocation2 + $0x28] sm:$0xff] %v801
      %834 = vst [vmem:[#allocation2 + $0x30] sm:$0xff] %v802
      %835 = vst [vmem:[#allocation2 + $0x38] sm:$0xff] %v803
      %836 = vst [vmem:[#allocation2 + $0x40] sm:$0xff] %v804
      %837 = vst [vmem:[#allocation2 + $0x48] sm:$0xff] %v805
      %838 = vst [vmem:[#allocation2 + $0x50] sm:$0xff] %v806
      %839 = vst [vmem:[#allocation2 + $0x58] sm:$0xff] %v807
      %840 = vst [vmem:[#allocation2 + $0x60] sm:$0xff] %v808
      %841 = vst [vmem:[#allocation2 + $0x68] sm:$0xff] %v809
      %842 = vst [vmem:[#allocation2 + $0x70] sm:$0xff] %v810
      %843 = vst [vmem:[#allocation2 + $0x78] sm:$0xff] %v811
      %844 = vst [vmem:[#allocation2 + $0x80] sm:$0xff] %v812
      %845 = vst [vmem:[#allocation2 + $0x88] sm:$0xff] %v813
      %846 = vst [vmem:[#allocation2 + $0x90] sm:$0xff] %v814
      %847 = vst [vmem:[#allocation2 + $0x98] sm:$0xff] %v815
      %848 = vst [vmem:[#allocation2 + $0xa0] sm:$0xff] %v816
      %849 = vst [vmem:[#allocation2 + $0xa8] sm:$0xff] %v817
      %850 = vst [vmem:[#allocation2 + $0xb0] sm:$0xff] %v818
      %851 = vst [vmem:[#allocation2 + $0xb8] sm:$0xff] %v819
      %852 = vst [vmem:[#allocation2 + $0xc0] sm:$0xff] %v820
      %853 = vst [vmem:[#allocation2 + $0xc8] sm:$0xff] %v821
      %854 = vst [vmem:[#allocation2 + $0xd0] sm:$0xff] %v822
      %855 = vst [vmem:[#allocation2 + $0xd8] sm:$0xff] %v823
      %856 = vst [vmem:[#allocation2 + $0xe0] sm:$0xff] %v824
      %857 = vst [vmem:[#allocation2 + $0xe8] sm:$0xff] %v825
      %858 = vst [vmem:[#allocation2 + $0xf0] sm:$0xff] %v826
      %859 = vst [vmem:[#allocation2 + $0xf8] sm:$0xff] %v827
      %v860 = vld [vmem:[%s206 + $0x10] sm:$0xf]
      %v861 = vld [vmem:[%s206 + $0x14] sm:$0xf]
      %v862 = vld [vmem:[%s206 + $0x18] sm:$0xf]
      %v863 = vld [vmem:[%s206 + $0x1c] sm:$0xf]
      %v864 = vld [vmem:[%s206 + $0x20] sm:$0xf]
      %v865 = vld [vmem:[%s206 + $0x24] sm:$0xf]
      %v866 = vld [vmem:[%s206 + $0x28] sm:$0xf]
      %v867 = vld [vmem:[%s206 + $0x2c] sm:$0xf]
      %v868 = vld [vmem:[%s206 + $0x30] sm:$0xf]
      %v869 = vld [vmem:[%s206 + $0x34] sm:$0xf]
      %v870 = vld [vmem:[%s206 + $0x38] sm:$0xf]
      %v871 = vld [vmem:[%s206 + $0x3c] sm:$0xf]
      %v872 = vld [vmem:[%s206 + $0x40] sm:$0xf]
      %v873 = vld [vmem:[%s206 + $0x44] sm:$0xf]
      %v874 = vld [vmem:[%s206 + $0x48] sm:$0xf]
      %v875 = vld [vmem:[%s206 + $0x4c] sm:$0xf]
      %v876 = vld [vmem:[%s206 + $0x50] sm:$0xf]
      %v877 = vld [vmem:[%s206 + $0x54] sm:$0xf]
      %v878 = vld [vmem:[%s206 + $0x58] sm:$0xf]
      %v879 = vld [vmem:[%s206 + $0x5c] sm:$0xf]
      %v880 = vld [vmem:[%s206 + $0x60] sm:$0xf]
      %v881 = vld [vmem:[%s206 + $0x64] sm:$0xf]
      %v882 = vld [vmem:[%s206 + $0x68] sm:$0xf]
      %v883 = vld [vmem:[%s206 + $0x6c] sm:$0xf]
      %v884 = vld [vmem:[%s206 + $0x70] sm:$0xf]
      %v885 = vld [vmem:[%s206 + $0x74] sm:$0xf]
      %v886 = vld [vmem:[%s206 + $0x78] sm:$0xf]
      %v887 = vld [vmem:[%s206 + $0x7c] sm:$0xf]
      %v888 = vld [vmem:[%s206 + $0x80] sm:$0xf]
      %v889 = vld [vmem:[%s206 + $0x84] sm:$0xf]
      %v890 = vld [vmem:[%s206 + $0x88] sm:$0xf]
      %v891 = vld [vmem:[%s206 + $0x8c] sm:$0xf]
      %s892 = scalar_lea.vmem %s210, 8
      %v893 = vld [vmem:[%s892] sm:$0xf]
      %v926 = vunpack.c.l.b16 %v860
      %v927 = vunpack.c.l.b16 %v861
      %v928 = vunpack.c.l.b16 %v862
      %v929 = vunpack.c.l.b16 %v863
      %v930 = vunpack.c.l.b16 %v864
      %v931 = vunpack.c.l.b16 %v865
      %v932 = vunpack.c.l.b16 %v866
      %v933 = vunpack.c.l.b16 %v867
      %v934 = vunpack.c.l.b16 %v868
      %v935 = vunpack.c.l.b16 %v869
      %v936 = vunpack.c.l.b16 %v870
      %v937 = vunpack.c.l.b16 %v871
      %v938 = vunpack.c.l.b16 %v872
      %v939 = vunpack.c.l.b16 %v873
      %v940 = vunpack.c.l.b16 %v874
      %v941 = vunpack.c.l.b16 %v875
      %v942 = vunpack.c.l.b16 %v876
      %v943 = vunpack.c.l.b16 %v877
      %v944 = vunpack.c.l.b16 %v878
      %v945 = vunpack.c.l.b16 %v879
      %v946 = vunpack.c.l.b16 %v880
      %v947 = vunpack.c.l.b16 %v881
      %v948 = vunpack.c.l.b16 %v882
      %v949 = vunpack.c.l.b16 %v883
      %v950 = vunpack.c.l.b16 %v884
      %v951 = vunpack.c.l.b16 %v885
      %v952 = vunpack.c.l.b16 %v886
      %v953 = vunpack.c.l.b16 %v887
      %v954 = vunpack.c.l.b16 %v888
      %v955 = vunpack.c.l.b16 %v889
      %v956 = vunpack.c.l.b16 %v890
      %v957 = vunpack.c.l.b16 %v891
      %v958 = vpack.c.b16 %v927, %v926
      %v959 = vpack.c.b16 %v929, %v928
      %v960 = vpack.c.b16 %v931, %v930
      %v961 = vpack.c.b16 %v933, %v932
      %v962 = vpack.c.b16 %v935, %v934
      %v963 = vpack.c.b16 %v937, %v936
      %v964 = vpack.c.b16 %v939, %v938
      %v965 = vpack.c.b16 %v941, %v940
      %v966 = vpack.c.b16 %v943, %v942
      %v967 = vpack.c.b16 %v945, %v944
      %v968 = vpack.c.b16 %v947, %v946
      %v969 = vpack.c.b16 %v949, %v948
      %v970 = vpack.c.b16 %v951, %v950
      %v971 = vpack.c.b16 %v953, %v952
      %v972 = vpack.c.b16 %v955, %v954
      %v973 = vpack.c.b16 %v957, %v956
      %v975 = vsel %vm336, %v958, 0
      %v978 = vsel %vm336, %v959, 0
      %v981 = vsel %vm336, %v960, 0
      %v984 = vsel %vm336, %v961, 0
      %v987 = vsel %vm336, %v962, 0
      %v990 = vsel %vm336, %v963, 0
      %v993 = vsel %vm336, %v964, 0
      %v996 = vsel %vm336, %v965, 0
      %v999 = vsel %vm336, %v966, 0
      %v1002 = vsel %vm336, %v967, 0
      %v1005 = vsel %vm336, %v968, 0
      %v1008 = vsel %vm336, %v969, 0
      %v1011 = vsel %vm336, %v970, 0
      %v1014 = vsel %vm336, %v971, 0
      %v1017 = vsel %vm336, %v972, 0
      %v1020 = vsel %vm336, %v973, 0
      %v1023 = vsel %vm385, %v893, 0
      %1025 = vmatpush.bf16.msra.mxu0 0
      %1026 = vmatpush.bf16.msra.mxu0 0
      %1027 = vmatpush.bf16.msra.mxu0 0
      %1028 = vmatpush.bf16.msra.mxu0 0
      %1029 = vmatpush.bf16.msra.mxu0 0
      %1030 = vmatpush.bf16.msra.mxu0 0
      %1031 = vmatpush.bf16.msra.mxu0 0
      %1032 = vmatpush.bf16.msra.mxu0 %v1023
      %1033 = vmatmul.bf16.gmra.mxu0 %v975
      %v1034 = vpop.f32.mrf.mxu0
      %v1035 = vadd.f32 0.0, %v1034
      %v1036 = vpop.f32.mrf.mxu0
      %v1037 = vadd.f32 0.0, %v1036
      %1038 = vmatmul.bf16.gmra.mxu0 %v978
      %v1039 = vpop.f32.mrf.mxu0
      %v1040 = vadd.f32 0.0, %v1039
      %v1041 = vpop.f32.mrf.mxu0
      %v1042 = vadd.f32 0.0, %v1041
      %1043 = vmatmul.bf16.gmra.mxu0 %v981
      %v1044 = vpop.f32.mrf.mxu0
      %v1045 = vadd.f32 0.0, %v1044
      %v1046 = vpop.f32.mrf.mxu0
      %v1047 = vadd.f32 0.0, %v1046
      %1048 = vmatmul.bf16.gmra.mxu0 %v984
      %v1049 = vpop.f32.mrf.mxu0
      %v1050 = vadd.f32 0.0, %v1049
      %v1051 = vpop.f32.mrf.mxu0
      %v1052 = vadd.f32 0.0, %v1051
      %1053 = vmatmul.bf16.gmra.mxu0 %v987
      %v1054 = vpop.f32.mrf.mxu0
      %v1055 = vadd.f32 0.0, %v1054
      %v1056 = vpop.f32.mrf.mxu0
      %v1057 = vadd.f32 0.0, %v1056
      %1058 = vmatmul.bf16.gmra.mxu0 %v990
      %v1059 = vpop.f32.mrf.mxu0
      %v1060 = vadd.f32 0.0, %v1059
      %v1061 = vpop.f32.mrf.mxu0
      %v1062 = vadd.f32 0.0, %v1061
      %1063 = vmatmul.bf16.gmra.mxu0 %v993
      %v1064 = vpop.f32.mrf.mxu0
      %v1065 = vadd.f32 0.0, %v1064
      %v1066 = vpop.f32.mrf.mxu0
      %v1067 = vadd.f32 0.0, %v1066
      %1068 = vmatmul.bf16.gmra.mxu0 %v996
      %v1069 = vpop.f32.mrf.mxu0
      %v1070 = vadd.f32 0.0, %v1069
      %v1071 = vpop.f32.mrf.mxu0
      %v1072 = vadd.f32 0.0, %v1071
      %1073 = vmatmul.bf16.gmra.mxu0 %v999
      %v1074 = vpop.f32.mrf.mxu0
      %v1075 = vadd.f32 0.0, %v1074
      %v1076 = vpop.f32.mrf.mxu0
      %v1077 = vadd.f32 0.0, %v1076
      %1078 = vmatmul.bf16.gmra.mxu0 %v1002
      %v1079 = vpop.f32.mrf.mxu0
      %v1080 = vadd.f32 0.0, %v1079
      %v1081 = vpop.f32.mrf.mxu0
      %v1082 = vadd.f32 0.0, %v1081
      %1083 = vmatmul.bf16.gmra.mxu0 %v1005
      %v1084 = vpop.f32.mrf.mxu0
      %v1085 = vadd.f32 0.0, %v1084
      %v1086 = vpop.f32.mrf.mxu0
      %v1087 = vadd.f32 0.0, %v1086
      %1088 = vmatmul.bf16.gmra.mxu0 %v1008
      %v1089 = vpop.f32.mrf.mxu0
      %v1090 = vadd.f32 0.0, %v1089
      %v1091 = vpop.f32.mrf.mxu0
      %v1092 = vadd.f32 0.0, %v1091
      %1093 = vmatmul.bf16.gmra.mxu0 %v1011
      %v1094 = vpop.f32.mrf.mxu0
      %v1095 = vadd.f32 0.0, %v1094
      %v1096 = vpop.f32.mrf.mxu0
      %v1097 = vadd.f32 0.0, %v1096
      %1098 = vmatmul.bf16.gmra.mxu0 %v1014
      %v1099 = vpop.f32.mrf.mxu0
      %v1100 = vadd.f32 0.0, %v1099
      %v1101 = vpop.f32.mrf.mxu0
      %v1102 = vadd.f32 0.0, %v1101
      %1103 = vmatmul.bf16.gmra.mxu0 %v1017
      %v1104 = vpop.f32.mrf.mxu0
      %v1105 = vadd.f32 0.0, %v1104
      %v1106 = vpop.f32.mrf.mxu0
      %v1107 = vadd.f32 0.0, %v1106
      %1108 = vmatmul.bf16.gmra.mxu0 %v1020
      %v1109 = vpop.f32.mrf.mxu0
      %v1110 = vadd.f32 0.0, %v1109
      %v1111 = vpop.f32.mrf.mxu0
      %v1112 = vadd.f32 0.0, %v1111
      %1113 = vdwg.mxu0
      %v1114 = vld [vmem:[#allocation2] sm:$0xff]
      %v1115 = vld [vmem:[#allocation2 + $0x8] sm:$0xff]
      %v1116 = vld [vmem:[#allocation2 + $0x10] sm:$0xff]
      %v1117 = vld [vmem:[#allocation2 + $0x18] sm:$0xff]
      %v1118 = vld [vmem:[#allocation2 + $0x20] sm:$0xff]
      %v1119 = vld [vmem:[#allocation2 + $0x28] sm:$0xff]
      %v1120 = vld [vmem:[#allocation2 + $0x30] sm:$0xff]
      %v1121 = vld [vmem:[#allocation2 + $0x38] sm:$0xff]
      %v1122 = vld [vmem:[#allocation2 + $0x40] sm:$0xff]
      %v1123 = vld [vmem:[#allocation2 + $0x48] sm:$0xff]
      %v1124 = vld [vmem:[#allocation2 + $0x50] sm:$0xff]
      %v1125 = vld [vmem:[#allocation2 + $0x58] sm:$0xff]
      %v1126 = vld [vmem:[#allocation2 + $0x60] sm:$0xff]
      %v1127 = vld [vmem:[#allocation2 + $0x68] sm:$0xff]
      %v1128 = vld [vmem:[#allocation2 + $0x70] sm:$0xff]
      %v1129 = vld [vmem:[#allocation2 + $0x78] sm:$0xff]
      %v1130 = vld [vmem:[#allocation2 + $0x80] sm:$0xff]
      %v1131 = vld [vmem:[#allocation2 + $0x88] sm:$0xff]
      %v1132 = vld [vmem:[#allocation2 + $0x90] sm:$0xff]
      %v1133 = vld [vmem:[#allocation2 + $0x98] sm:$0xff]
      %v1134 = vld [vmem:[#allocation2 + $0xa0] sm:$0xff]
      %v1135 = vld [vmem:[#allocation2 + $0xa8] sm:$0xff]
      %v1136 = vld [vmem:[#allocation2 + $0xb0] sm:$0xff]
      %v1137 = vld [vmem:[#allocation2 + $0xb8] sm:$0xff]
      %v1138 = vld [vmem:[#allocation2 + $0xc0] sm:$0xff]
      %v1139 = vld [vmem:[#allocation2 + $0xc8] sm:$0xff]
      %v1140 = vld [vmem:[#allocation2 + $0xd0] sm:$0xff]
      %v1141 = vld [vmem:[#allocation2 + $0xd8] sm:$0xff]
      %v1142 = vld [vmem:[#allocation2 + $0xe0] sm:$0xff]
      %v1143 = vld [vmem:[#allocation2 + $0xe8] sm:$0xff]
      %v1144 = vld [vmem:[#allocation2 + $0xf0] sm:$0xff]
      %v1145 = vld [vmem:[#allocation2 + $0xf8] sm:$0xff]
      %v1146 = vadd.f32 %v1114, %v1035
      %v1147 = vadd.f32 %v1115, %v1037
      %v1148 = vadd.f32 %v1116, %v1040
      %v1149 = vadd.f32 %v1117, %v1042
      %v1150 = vadd.f32 %v1118, %v1045
      %v1151 = vadd.f32 %v1119, %v1047
      %v1152 = vadd.f32 %v1120, %v1050
      %v1153 = vadd.f32 %v1121, %v1052
      %v1154 = vadd.f32 %v1122, %v1055
      %v1155 = vadd.f32 %v1123, %v1057
      %v1156 = vadd.f32 %v1124, %v1060
      %v1157 = vadd.f32 %v1125, %v1062
      %v1158 = vadd.f32 %v1126, %v1065
      %v1159 = vadd.f32 %v1127, %v1067
      %v1160 = vadd.f32 %v1128, %v1070
      %v1161 = vadd.f32 %v1129, %v1072
      %v1162 = vadd.f32 %v1130, %v1075
      %v1163 = vadd.f32 %v1131, %v1077
      %v1164 = vadd.f32 %v1132, %v1080
      %v1165 = vadd.f32 %v1133, %v1082
      %v1166 = vadd.f32 %v1134, %v1085
      %v1167 = vadd.f32 %v1135, %v1087
      %v1168 = vadd.f32 %v1136, %v1090
      %v1169 = vadd.f32 %v1137, %v1092
      %v1170 = vadd.f32 %v1138, %v1095
      %v1171 = vadd.f32 %v1139, %v1097
      %v1172 = vadd.f32 %v1140, %v1100
      %v1173 = vadd.f32 %v1141, %v1102
      %v1174 = vadd.f32 %v1142, %v1105
      %v1175 = vadd.f32 %v1143, %v1107
      %v1176 = vadd.f32 %v1144, %v1110
      %v1177 = vadd.f32 %v1145, %v1112
      %1178 = vst [vmem:[#allocation2] sm:$0xff] %v1146
      %1179 = vst [vmem:[#allocation2 + $0x8] sm:$0xff] %v1147
      %1180 = vst [vmem:[#allocation2 + $0x10] sm:$0xff] %v1148
      %1181 = vst [vmem:[#allocation2 + $0x18] sm:$0xff] %v1149
      %1182 = vst [vmem:[#allocation2 + $0x20] sm:$0xff] %v1150
      %1183 = vst [vmem:[#allocation2 + $0x28] sm:$0xff] %v1151
      %1184 = vst [vmem:[#allocation2 + $0x30] sm:$0xff] %v1152
      %1185 = vst [vmem:[#allocation2 + $0x38] sm:$0xff] %v1153
      %1186 = vst [vmem:[#allocation2 + $0x40] sm:$0xff] %v1154
      %1187 = vst [vmem:[#allocation2 + $0x48] sm:$0xff] %v1155
      %1188 = vst [vmem:[#allocation2 + $0x50] sm:$0xff] %v1156
      %1189 = vst [vmem:[#allocation2 + $0x58] sm:$0xff] %v1157
      %1190 = vst [vmem:[#allocation2 + $0x60] sm:$0xff] %v1158
      %1191 = vst [vmem:[#allocation2 + $0x68] sm:$0xff] %v1159
      %1192 = vst [vmem:[#allocation2 + $0x70] sm:$0xff] %v1160
      %1193 = vst [vmem:[#allocation2 + $0x78] sm:$0xff] %v1161
      %1194 = vst [vmem:[#allocation2 + $0x80] sm:$0xff] %v1162
      %1195 = vst [vmem:[#allocation2 + $0x88] sm:$0xff] %v1163
      %1196 = vst [vmem:[#allocation2 + $0x90] sm:$0xff] %v1164
      %1197 = vst [vmem:[#allocation2 + $0x98] sm:$0xff] %v1165
      %1198 = vst [vmem:[#allocation2 + $0xa0] sm:$0xff] %v1166
      %1199 = vst [vmem:[#allocation2 + $0xa8] sm:$0xff] %v1167
      %1200 = vst [vmem:[#allocation2 + $0xb0] sm:$0xff] %v1168
      %1201 = vst [vmem:[#allocation2 + $0xb8] sm:$0xff] %v1169
      %1202 = vst [vmem:[#allocation2 + $0xc0] sm:$0xff] %v1170
      %1203 = vst [vmem:[#allocation2 + $0xc8] sm:$0xff] %v1171
      %1204 = vst [vmem:[#allocation2 + $0xd0] sm:$0xff] %v1172
      %1205 = vst [vmem:[#allocation2 + $0xd8] sm:$0xff] %v1173
      %1206 = vst [vmem:[#allocation2 + $0xe0] sm:$0xff] %v1174
      %1207 = vst [vmem:[#allocation2 + $0xe8] sm:$0xff] %v1175
      %1208 = vst [vmem:[#allocation2 + $0xf0] sm:$0xff] %v1176
      %1209 = vst [vmem:[#allocation2 + $0xf8] sm:$0xff] %v1177
      %v1210 = vld [vmem:[%s206 + $0x18] sm:$0xf]
      %v1211 = vld [vmem:[%s206 + $0x1c] sm:$0xf]
      %v1212 = vld [vmem:[%s206 + $0x20] sm:$0xf]
      %v1213 = vld [vmem:[%s206 + $0x24] sm:$0xf]
      %v1214 = vld [vmem:[%s206 + $0x28] sm:$0xf]
      %v1215 = vld [vmem:[%s206 + $0x2c] sm:$0xf]
      %v1216 = vld [vmem:[%s206 + $0x30] sm:$0xf]
      %v1217 = vld [vmem:[%s206 + $0x34] sm:$0xf]
      %v1218 = vld [vmem:[%s206 + $0x38] sm:$0xf]
      %v1219 = vld [vmem:[%s206 + $0x3c] sm:$0xf]
      %v1220 = vld [vmem:[%s206 + $0x40] sm:$0xf]
      %v1221 = vld [vmem:[%s206 + $0x44] sm:$0xf]
      %v1222 = vld [vmem:[%s206 + $0x48] sm:$0xf]
      %v1223 = vld [vmem:[%s206 + $0x4c] sm:$0xf]
      %v1224 = vld [vmem:[%s206 + $0x50] sm:$0xf]
      %v1225 = vld [vmem:[%s206 + $0x54] sm:$0xf]
      %v1226 = vld [vmem:[%s206 + $0x58] sm:$0xf]
      %v1227 = vld [vmem:[%s206 + $0x5c] sm:$0xf]
      %v1228 = vld [vmem:[%s206 + $0x60] sm:$0xf]
      %v1229 = vld [vmem:[%s206 + $0x64] sm:$0xf]
      %v1230 = vld [vmem:[%s206 + $0x68] sm:$0xf]
      %v1231 = vld [vmem:[%s206 + $0x6c] sm:$0xf]
      %v1232 = vld [vmem:[%s206 + $0x70] sm:$0xf]
      %v1233 = vld [vmem:[%s206 + $0x74] sm:$0xf]
      %v1234 = vld [vmem:[%s206 + $0x78] sm:$0xf]
      %v1235 = vld [vmem:[%s206 + $0x7c] sm:$0xf]
      %v1236 = vld [vmem:[%s206 + $0x80] sm:$0xf]
      %v1237 = vld [vmem:[%s206 + $0x84] sm:$0xf]
      %v1238 = vld [vmem:[%s206 + $0x88] sm:$0xf]
      %v1239 = vld [vmem:[%s206 + $0x8c] sm:$0xf]
      %v1240 = vld [vmem:[%s206 + $0x90] sm:$0xf]
      %v1241 = vld [vmem:[%s206 + $0x94] sm:$0xf]
      %s1242 = scalar_lea.vmem %s210, 12
      %v1243 = vld [vmem:[%s1242] sm:$0xf]
      %v1276 = vunpack.c.l.b16 %v1210
      %v1277 = vunpack.c.l.b16 %v1211
      %v1278 = vunpack.c.l.b16 %v1212
      %v1279 = vunpack.c.l.b16 %v1213
      %v1280 = vunpack.c.l.b16 %v1214
      %v1281 = vunpack.c.l.b16 %v1215
      %v1282 = vunpack.c.l.b16 %v1216
      %v1283 = vunpack.c.l.b16 %v1217
      %v1284 = vunpack.c.l.b16 %v1218
      %v1285 = vunpack.c.l.b16 %v1219
      %v1286 = vunpack.c.l.b16 %v1220
      %v1287 = vunpack.c.l.b16 %v1221
      %v1288 = vunpack.c.l.b16 %v1222
      %v1289 = vunpack.c.l.b16 %v1223
      %v1290 = vunpack.c.l.b16 %v1224
      %v1291 = vunpack.c.l.b16 %v1225
      %v1292 = vunpack.c.l.b16 %v1226
      %v1293 = vunpack.c.l.b16 %v1227
      %v1294 = vunpack.c.l.b16 %v1228
      %v1295 = vunpack.c.l.b16 %v1229
      %v1296 = vunpack.c.l.b16 %v1230
      %v1297 = vunpack.c.l.b16 %v1231
      %v1298 = vunpack.c.l.b16 %v1232
      %v1299 = vunpack.c.l.b16 %v1233
      %v1300 = vunpack.c.l.b16 %v1234
      %v1301 = vunpack.c.l.b16 %v1235
      %v1302 = vunpack.c.l.b16 %v1236
      %v1303 = vunpack.c.l.b16 %v1237
      %v1304 = vunpack.c.l.b16 %v1238
      %v1305 = vunpack.c.l.b16 %v1239
      %v1306 = vunpack.c.l.b16 %v1240
      %v1307 = vunpack.c.l.b16 %v1241
      %v1308 = vpack.c.b16 %v1277, %v1276
      %v1309 = vpack.c.b16 %v1279, %v1278
      %v1310 = vpack.c.b16 %v1281, %v1280
      %v1311 = vpack.c.b16 %v1283, %v1282
      %v1312 = vpack.c.b16 %v1285, %v1284
      %v1313 = vpack.c.b16 %v1287, %v1286
      %v1314 = vpack.c.b16 %v1289, %v1288
      %v1315 = vpack.c.b16 %v1291, %v1290
      %v1316 = vpack.c.b16 %v1293, %v1292
      %v1317 = vpack.c.b16 %v1295, %v1294
      %v1318 = vpack.c.b16 %v1297, %v1296
      %v1319 = vpack.c.b16 %v1299, %v1298
      %v1320 = vpack.c.b16 %v1301, %v1300
      %v1321 = vpack.c.b16 %v1303, %v1302
      %v1322 = vpack.c.b16 %v1305, %v1304
      %v1323 = vpack.c.b16 %v1307, %v1306
      %v1325 = vsel %vm336, %v1308, 0
      %v1328 = vsel %vm336, %v1309, 0
      %v1331 = vsel %vm336, %v1310, 0
      %v1334 = vsel %vm336, %v1311, 0
      %v1337 = vsel %vm336, %v1312, 0
      %v1340 = vsel %vm336, %v1313, 0
      %v1343 = vsel %vm336, %v1314, 0
      %v1346 = vsel %vm336, %v1315, 0
      %v1349 = vsel %vm336, %v1316, 0
      %v1352 = vsel %vm336, %v1317, 0
      %v1355 = vsel %vm336, %v1318, 0
      %v1358 = vsel %vm336, %v1319, 0
      %v1361 = vsel %vm336, %v1320, 0
      %v1364 = vsel %vm336, %v1321, 0
      %v1367 = vsel %vm336, %v1322, 0
      %v1370 = vsel %vm336, %v1323, 0
      %v1373 = vsel %vm385, %v1243, 0
      %1375 = vmatpush.bf16.msra.mxu0 0
      %1376 = vmatpush.bf16.msra.mxu0 0
      %1377 = vmatpush.bf16.msra.mxu0 0
      %1378 = vmatpush.bf16.msra.mxu0 0
      %1379 = vmatpush.bf16.msra.mxu0 0
      %1380 = vmatpush.bf16.msra.mxu0 0
      %1381 = vmatpush.bf16.msra.mxu0 0
      %1382 = vmatpush.bf16.msra.mxu0 %v1373
      %1383 = vmatmul.bf16.gmra.mxu0 %v1325
      %v1384 = vpop.f32.mrf.mxu0
      %v1385 = vadd.f32 0.0, %v1384
      %v1386 = vpop.f32.mrf.mxu0
      %v1387 = vadd.f32 0.0, %v1386
      %1388 = vmatmul.bf16.gmra.mxu0 %v1328
      %v1389 = vpop.f32.mrf.mxu0
      %v1390 = vadd.f32 0.0, %v1389
      %v1391 = vpop.f32.mrf.mxu0
      %v1392 = vadd.f32 0.0, %v1391
      %1393 = vmatmul.bf16.gmra.mxu0 %v1331
      %v1394 = vpop.f32.mrf.mxu0
      %v1395 = vadd.f32 0.0, %v1394
      %v1396 = vpop.f32.mrf.mxu0
      %v1397 = vadd.f32 0.0, %v1396
      %1398 = vmatmul.bf16.gmra.mxu0 %v1334
      %v1399 = vpop.f32.mrf.mxu0
      %v1400 = vadd.f32 0.0, %v1399
      %v1401 = vpop.f32.mrf.mxu0
      %v1402 = vadd.f32 0.0, %v1401
      %1403 = vmatmul.bf16.gmra.mxu0 %v1337
      %v1404 = vpop.f32.mrf.mxu0
      %v1405 = vadd.f32 0.0, %v1404
      %v1406 = vpop.f32.mrf.mxu0
      %v1407 = vadd.f32 0.0, %v1406
      %1408 = vmatmul.bf16.gmra.mxu0 %v1340
      %v1409 = vpop.f32.mrf.mxu0
      %v1410 = vadd.f32 0.0, %v1409
      %v1411 = vpop.f32.mrf.mxu0
      %v1412 = vadd.f32 0.0, %v1411
      %1413 = vmatmul.bf16.gmra.mxu0 %v1343
      %v1414 = vpop.f32.mrf.mxu0
      %v1415 = vadd.f32 0.0, %v1414
      %v1416 = vpop.f32.mrf.mxu0
      %v1417 = vadd.f32 0.0, %v1416
      %1418 = vmatmul.bf16.gmra.mxu0 %v1346
      %v1419 = vpop.f32.mrf.mxu0
      %v1420 = vadd.f32 0.0, %v1419
      %v1421 = vpop.f32.mrf.mxu0
      %v1422 = vadd.f32 0.0, %v1421
      %1423 = vmatmul.bf16.gmra.mxu0 %v1349
      %v1424 = vpop.f32.mrf.mxu0
      %v1425 = vadd.f32 0.0, %v1424
      %v1426 = vpop.f32.mrf.mxu0
      %v1427 = vadd.f32 0.0, %v1426
      %1428 = vmatmul.bf16.gmra.mxu0 %v1352
      %v1429 = vpop.f32.mrf.mxu0
      %v1430 = vadd.f32 0.0, %v1429
      %v1431 = vpop.f32.mrf.mxu0
      %v1432 = vadd.f32 0.0, %v1431
      %1433 = vmatmul.bf16.gmra.mxu0 %v1355
      %v1434 = vpop.f32.mrf.mxu0
      %v1435 = vadd.f32 0.0, %v1434
      %v1436 = vpop.f32.mrf.mxu0
      %v1437 = vadd.f32 0.0, %v1436
      %1438 = vmatmul.bf16.gmra.mxu0 %v1358
      %v1439 = vpop.f32.mrf.mxu0
      %v1440 = vadd.f32 0.0, %v1439
      %v1441 = vpop.f32.mrf.mxu0
      %v1442 = vadd.f32 0.0, %v1441
      %1443 = vmatmul.bf16.gmra.mxu0 %v1361
      %v1444 = vpop.f32.mrf.mxu0
      %v1445 = vadd.f32 0.0, %v1444
      %v1446 = vpop.f32.mrf.mxu0
      %v1447 = vadd.f32 0.0, %v1446
      %1448 = vmatmul.bf16.gmra.mxu0 %v1364
      %v1449 = vpop.f32.mrf.mxu0
      %v1450 = vadd.f32 0.0, %v1449
      %v1451 = vpop.f32.mrf.mxu0
      %v1452 = vadd.f32 0.0, %v1451
      %1453 = vmatmul.bf16.gmra.mxu0 %v1367
      %v1454 = vpop.f32.mrf.mxu0
      %v1455 = vadd.f32 0.0, %v1454
      %v1456 = vpop.f32.mrf.mxu0
      %v1457 = vadd.f32 0.0, %v1456
      %1458 = vmatmul.bf16.gmra.mxu0 %v1370
      %v1459 = vpop.f32.mrf.mxu0
      %v1460 = vadd.f32 0.0, %v1459
      %v1461 = vpop.f32.mrf.mxu0
      %v1462 = vadd.f32 0.0, %v1461
      %1463 = vdwg.mxu0
      %v1464 = vld [vmem:[#allocation2] sm:$0xff]
      %v1465 = vld [vmem:[#allocation2 + $0x8] sm:$0xff]
      %v1466 = vld [vmem:[#allocation2 + $0x10] sm:$0xff]
      %v1467 = vld [vmem:[#allocation2 + $0x18] sm:$0xff]
      %v1468 = vld [vmem:[#allocation2 + $0x20] sm:$0xff]
      %v1469 = vld [vmem:[#allocation2 + $0x28] sm:$0xff]
      %v1470 = vld [vmem:[#allocation2 + $0x30] sm:$0xff]
      %v1471 = vld [vmem:[#allocation2 + $0x38] sm:$0xff]
      %v1472 = vld [vmem:[#allocation2 + $0x40] sm:$0xff]
      %v1473 = vld [vmem:[#allocation2 + $0x48] sm:$0xff]
      %v1474 = vld [vmem:[#allocation2 + $0x50] sm:$0xff]
      %v1475 = vld [vmem:[#allocation2 + $0x58] sm:$0xff]
      %v1476 = vld [vmem:[#allocation2 + $0x60] sm:$0xff]
      %v1477 = vld [vmem:[#allocation2 + $0x68] sm:$0xff]
      %v1478 = vld [vmem:[#allocation2 + $0x70] sm:$0xff]
      %v1479 = vld [vmem:[#allocation2 + $0x78] sm:$0xff]
      %v1480 = vld [vmem:[#allocation2 + $0x80] sm:$0xff]
      %v1481 = vld [vmem:[#allocation2 + $0x88] sm:$0xff]
      %v1482 = vld [vmem:[#allocation2 + $0x90] sm:$0xff]
      %v1483 = vld [vmem:[#allocation2 + $0x98] sm:$0xff]
      %v1484 = vld [vmem:[#allocation2 + $0xa0] sm:$0xff]
      %v1485 = vld [vmem:[#allocation2 + $0xa8] sm:$0xff]
      %v1486 = vld [vmem:[#allocation2 + $0xb0] sm:$0xff]
      %v1487 = vld [vmem:[#allocation2 + $0xb8] sm:$0xff]
      %v1488 = vld [vmem:[#allocation2 + $0xc0] sm:$0xff]
      %v1489 = vld [vmem:[#allocation2 + $0xc8] sm:$0xff]
      %v1490 = vld [vmem:[#allocation2 + $0xd0] sm:$0xff]
      %v1491 = vld [vmem:[#allocation2 + $0xd8] sm:$0xff]
      %v1492 = vld [vmem:[#allocation2 + $0xe0] sm:$0xff]
      %v1493 = vld [vmem:[#allocation2 + $0xe8] sm:$0xff]
      %v1494 = vld [vmem:[#allocation2 + $0xf0] sm:$0xff]
      %v1495 = vld [vmem:[#allocation2 + $0xf8] sm:$0xff]
      %v1496 = vadd.f32 %v1464, %v1385
      %v1497 = vadd.f32 %v1465, %v1387
      %v1498 = vadd.f32 %v1466, %v1390
      %v1499 = vadd.f32 %v1467, %v1392
      %v1500 = vadd.f32 %v1468, %v1395
      %v1501 = vadd.f32 %v1469, %v1397
      %v1502 = vadd.f32 %v1470, %v1400
      %v1503 = vadd.f32 %v1471, %v1402
      %v1504 = vadd.f32 %v1472, %v1405
      %v1505 = vadd.f32 %v1473, %v1407
      %v1506 = vadd.f32 %v1474, %v1410
      %v1507 = vadd.f32 %v1475, %v1412
      %v1508 = vadd.f32 %v1476, %v1415
      %v1509 = vadd.f32 %v1477, %v1417
      %v1510 = vadd.f32 %v1478, %v1420
      %v1511 = vadd.f32 %v1479, %v1422
      %v1512 = vadd.f32 %v1480, %v1425
      %v1513 = vadd.f32 %v1481, %v1427
      %v1514 = vadd.f32 %v1482, %v1430
      %v1515 = vadd.f32 %v1483, %v1432
      %v1516 = vadd.f32 %v1484, %v1435
      %v1517 = vadd.f32 %v1485, %v1437
      %v1518 = vadd.f32 %v1486, %v1440
      %v1519 = vadd.f32 %v1487, %v1442
      %v1520 = vadd.f32 %v1488, %v1445
      %v1521 = vadd.f32 %v1489, %v1447
      %v1522 = vadd.f32 %v1490, %v1450
      %v1523 = vadd.f32 %v1491, %v1452
      %v1524 = vadd.f32 %v1492, %v1455
      %v1525 = vadd.f32 %v1493, %v1457
      %v1526 = vadd.f32 %v1494, %v1460
      %v1527 = vadd.f32 %v1495, %v1462
      %1528 = vst [vmem:[#allocation2] sm:$0xff] %v1496
      %1529 = vst [vmem:[#allocation2 + $0x8] sm:$0xff] %v1497
      %1530 = vst [vmem:[#allocation2 + $0x10] sm:$0xff] %v1498
      %1531 = vst [vmem:[#allocation2 + $0x18] sm:$0xff] %v1499
      %1532 = vst [vmem:[#allocation2 + $0x20] sm:$0xff] %v1500
      %1533 = vst [vmem:[#allocation2 + $0x28] sm:$0xff] %v1501
      %1534 = vst [vmem:[#allocation2 + $0x30] sm:$0xff] %v1502
      %1535 = vst [vmem:[#allocation2 + $0x38] sm:$0xff] %v1503
      %1536 = vst [vmem:[#allocation2 + $0x40] sm:$0xff] %v1504
      %1537 = vst [vmem:[#allocation2 + $0x48] sm:$0xff] %v1505
      %1538 = vst [vmem:[#allocation2 + $0x50] sm:$0xff] %v1506
      %1539 = vst [vmem:[#allocation2 + $0x58] sm:$0xff] %v1507
      %1540 = vst [vmem:[#allocation2 + $0x60] sm:$0xff] %v1508
      %1541 = vst [vmem:[#allocation2 + $0x68] sm:$0xff] %v1509
      %1542 = vst [vmem:[#allocation2 + $0x70] sm:$0xff] %v1510
      %1543 = vst [vmem:[#allocation2 + $0x78] sm:$0xff] %v1511
      %1544 = vst [vmem:[#allocation2 + $0x80] sm:$0xff] %v1512
      %1545 = vst [vmem:[#allocation2 + $0x88] sm:$0xff] %v1513
      %1546 = vst [vmem:[#allocation2 + $0x90] sm:$0xff] %v1514
      %1547 = vst [vmem:[#allocation2 + $0x98] sm:$0xff] %v1515
      %1548 = vst [vmem:[#allocation2 + $0xa0] sm:$0xff] %v1516
      %1549 = vst [vmem:[#allocation2 + $0xa8] sm:$0xff] %v1517
      %1550 = vst [vmem:[#allocation2 + $0xb0] sm:$0xff] %v1518
      %1551 = vst [vmem:[#allocation2 + $0xb8] sm:$0xff] %v1519
      %1552 = vst [vmem:[#allocation2 + $0xc0] sm:$0xff] %v1520
      %1553 = vst [vmem:[#allocation2 + $0xc8] sm:$0xff] %v1521
      %1554 = vst [vmem:[#allocation2 + $0xd0] sm:$0xff] %v1522
      %1555 = vst [vmem:[#allocation2 + $0xd8] sm:$0xff] %v1523
      %1556 = vst [vmem:[#allocation2 + $0xe0] sm:$0xff] %v1524
      %1557 = vst [vmem:[#allocation2 + $0xe8] sm:$0xff] %v1525
      %1558 = vst [vmem:[#allocation2 + $0xf0] sm:$0xff] %v1526
      %1559 = vst [vmem:[#allocation2 + $0xf8] sm:$0xff] %v1527
      %v1560 = vld [vmem:[%s206 + $0x20] sm:$0xf]
      %v1561 = vld [vmem:[%s206 + $0x24] sm:$0xf]
      %v1562 = vld [vmem:[%s206 + $0x28] sm:$0xf]
      %v1563 = vld [vmem:[%s206 + $0x2c] sm:$0xf]
      %v1564 = vld [vmem:[%s206 + $0x30] sm:$0xf]
      %v1565 = vld [vmem:[%s206 + $0x34] sm:$0xf]
      %v1566 = vld [vmem:[%s206 + $0x38] sm:$0xf]
      %v1567 = vld [vmem:[%s206 + $0x3c] sm:$0xf]
      %v1568 = vld [vmem:[%s206 + $0x40] sm:$0xf]
      %v1569 = vld [vmem:[%s206 + $0x44] sm:$0xf]
      %v1570 = vld [vmem:[%s206 + $0x48] sm:$0xf]
      %v1571 = vld [vmem:[%s206 + $0x4c] sm:$0xf]
      %v1572 = vld [vmem:[%s206 + $0x50] sm:$0xf]
      %v1573 = vld [vmem:[%s206 + $0x54] sm:$0xf]
      %v1574 = vld [vmem:[%s206 + $0x58] sm:$0xf]
      %v1575 = vld [vmem:[%s206 + $0x5c] sm:$0xf]
      %v1576 = vld [vmem:[%s206 + $0x60] sm:$0xf]
      %v1577 = vld [vmem:[%s206 + $0x64] sm:$0xf]
      %v1578 = vld [vmem:[%s206 + $0x68] sm:$0xf]
      %v1579 = vld [vmem:[%s206 + $0x6c] sm:$0xf]
      %v1580 = vld [vmem:[%s206 + $0x70] sm:$0xf]
      %v1581 = vld [vmem:[%s206 + $0x74] sm:$0xf]
      %v1582 = vld [vmem:[%s206 + $0x78] sm:$0xf]
      %v1583 = vld [vmem:[%s206 + $0x7c] sm:$0xf]
      %v1584 = vld [vmem:[%s206 + $0x80] sm:$0xf]
      %v1585 = vld [vmem:[%s206 + $0x84] sm:$0xf]
      %v1586 = vld [vmem:[%s206 + $0x88] sm:$0xf]
      %v1587 = vld [vmem:[%s206 + $0x8c] sm:$0xf]
      %v1588 = vld [vmem:[%s206 + $0x90] sm:$0xf]
      %v1589 = vld [vmem:[%s206 + $0x94] sm:$0xf]
      %v1590 = vld [vmem:[%s206 + $0x98] sm:$0xf]
      %v1591 = vld [vmem:[%s206 + $0x9c] sm:$0xf]
      %s1592 = scalar_lea.vmem %s210, 16
      %v1593 = vld [vmem:[%s1592] sm:$0xf]
      %v1626 = vunpack.c.l.b16 %v1560
      %v1627 = vunpack.c.l.b16 %v1561
      %v1628 = vunpack.c.l.b16 %v1562
      %v1629 = vunpack.c.l.b16 %v1563
      %v1630 = vunpack.c.l.b16 %v1564
      %v1631 = vunpack.c.l.b16 %v1565
      %v1632 = vunpack.c.l.b16 %v1566
      %v1633 = vunpack.c.l.b16 %v1567
      %v1634 = vunpack.c.l.b16 %v1568
      %v1635 = vunpack.c.l.b16 %v1569
      %v1636 = vunpack.c.l.b16 %v1570
      %v1637 = vunpack.c.l.b16 %v1571
      %v1638 = vunpack.c.l.b16 %v1572
      %v1639 = vunpack.c.l.b16 %v1573
      %v1640 = vunpack.c.l.b16 %v1574
      %v1641 = vunpack.c.l.b16 %v1575
      %v1642 = vunpack.c.l.b16 %v1576
      %v1643 = vunpack.c.l.b16 %v1577
      %v1644 = vunpack.c.l.b16 %v1578
      %v1645 = vunpack.c.l.b16 %v1579
      %v1646 = vunpack.c.l.b16 %v1580
      %v1647 = vunpack.c.l.b16 %v1581
      %v1648 = vunpack.c.l.b16 %v1582
      %v1649 = vunpack.c.l.b16 %v1583
      %v1650 = vunpack.c.l.b16 %v1584
      %v1651 = vunpack.c.l.b16 %v1585
      %v1652 = vunpack.c.l.b16 %v1586
      %v1653 = vunpack.c.l.b16 %v1587
      %v1654 = vunpack.c.l.b16 %v1588
      %v1655 = vunpack.c.l.b16 %v1589
      %v1656 = vunpack.c.l.b16 %v1590
      %v1657 = vunpack.c.l.b16 %v1591
      %v1658 = vpack.c.b16 %v1627, %v1626
      %v1659 = vpack.c.b16 %v1629, %v1628
      %v1660 = vpack.c.b16 %v1631, %v1630
      %v1661 = vpack.c.b16 %v1633, %v1632
      %v1662 = vpack.c.b16 %v1635, %v1634
      %v1663 = vpack.c.b16 %v1637, %v1636
      %v1664 = vpack.c.b16 %v1639, %v1638
      %v1665 = vpack.c.b16 %v1641, %v1640
      %v1666 = vpack.c.b16 %v1643, %v1642
      %v1667 = vpack.c.b16 %v1645, %v1644
      %v1668 = vpack.c.b16 %v1647, %v1646
      %v1669 = vpack.c.b16 %v1649, %v1648
      %v1670 = vpack.c.b16 %v1651, %v1650
      %v1671 = vpack.c.b16 %v1653, %v1652
      %v1672 = vpack.c.b16 %v1655, %v1654
      %v1673 = vpack.c.b16 %v1657, %v1656
      %v1675 = vsel %vm336, %v1658, 0
      %v1678 = vsel %vm336, %v1659, 0
      %v1681 = vsel %vm336, %v1660, 0
      %v1684 = vsel %vm336, %v1661, 0
      %v1687 = vsel %vm336, %v1662, 0
      %v1690 = vsel %vm336, %v1663, 0
      %v1693 = vsel %vm336, %v1664, 0
      %v1696 = vsel %vm336, %v1665, 0
      %v1699 = vsel %vm336, %v1666, 0
      %v1702 = vsel %vm336, %v1667, 0
      %v1705 = vsel %vm336, %v1668, 0
      %v1708 = vsel %vm336, %v1669, 0
      %v1711 = vsel %vm336, %v1670, 0
      %v1714 = vsel %vm336, %v1671, 0
      %v1717 = vsel %vm336, %v1672, 0
      %v1720 = vsel %vm336, %v1673, 0
      %v1723 = vsel %vm385, %v1593, 0
      %1725 = vmatpush.bf16.msra.mxu0 0
      %1726 = vmatpush.bf16.msra.mxu0 0
      %1727 = vmatpush.bf16.msra.mxu0 0
      %1728 = vmatpush.bf16.msra.mxu0 0
      %1729 = vmatpush.bf16.msra.mxu0 0
      %1730 = vmatpush.bf16.msra.mxu0 0
      %1731 = vmatpush.bf16.msra.mxu0 0
      %1732 = vmatpush.bf16.msra.mxu0 %v1723
      %1733 = vmatmul.bf16.gmra.mxu0 %v1675
      %v1734 = vpop.f32.mrf.mxu0
      %v1735 = vadd.f32 0.0, %v1734
      %v1736 = vpop.f32.mrf.mxu0
      %v1737 = vadd.f32 0.0, %v1736
      %1738 = vmatmul.bf16.gmra.mxu0 %v1678
      %v1739 = vpop.f32.mrf.mxu0
      %v1740 = vadd.f32 0.0, %v1739
      %v1741 = vpop.f32.mrf.mxu0
      %v1742 = vadd.f32 0.0, %v1741
      %1743 = vmatmul.bf16.gmra.mxu0 %v1681
      %v1744 = vpop.f32.mrf.mxu0
      %v1745 = vadd.f32 0.0, %v1744
      %v1746 = vpop.f32.mrf.mxu0
      %v1747 = vadd.f32 0.0, %v1746
      %1748 = vmatmul.bf16.gmra.mxu0 %v1684
      %v1749 = vpop.f32.mrf.mxu0
      %v1750 = vadd.f32 0.0, %v1749
      %v1751 = vpop.f32.mrf.mxu0
      %v1752 = vadd.f32 0.0, %v1751
      %1753 = vmatmul.bf16.gmra.mxu0 %v1687
      %v1754 = vpop.f32.mrf.mxu0
      %v1755 = vadd.f32 0.0, %v1754
      %v1756 = vpop.f32.mrf.mxu0
      %v1757 = vadd.f32 0.0, %v1756
      %1758 = vmatmul.bf16.gmra.mxu0 %v1690
      %v1759 = vpop.f32.mrf.mxu0
      %v1760 = vadd.f32 0.0, %v1759
      %v1761 = vpop.f32.mrf.mxu0
      %v1762 = vadd.f32 0.0, %v1761
      %1763 = vmatmul.bf16.gmra.mxu0 %v1693
      %v1764 = vpop.f32.mrf.mxu0
      %v1765 = vadd.f32 0.0, %v1764
      %v1766 = vpop.f32.mrf.mxu0
      %v1767 = vadd.f32 0.0, %v1766
      %1768 = vmatmul.bf16.gmra.mxu0 %v1696
      %v1769 = vpop.f32.mrf.mxu0
      %v1770 = vadd.f32 0.0, %v1769
      %v1771 = vpop.f32.mrf.mxu0
      %v1772 = vadd.f32 0.0, %v1771
      %1773 = vmatmul.bf16.gmra.mxu0 %v1699
      %v1774 = vpop.f32.mrf.mxu0
      %v1775 = vadd.f32 0.0, %v1774
      %v1776 = vpop.f32.mrf.mxu0
      %v1777 = vadd.f32 0.0, %v1776
      %1778 = vmatmul.bf16.gmra.mxu0 %v1702
      %v1779 = vpop.f32.mrf.mxu0
      %v1780 = vadd.f32 0.0, %v1779
      %v1781 = vpop.f32.mrf.mxu0
      %v1782 = vadd.f32 0.0, %v1781
      %1783 = vmatmul.bf16.gmra.mxu0 %v1705
      %v1784 = vpop.f32.mrf.mxu0
      %v1785 = vadd.f32 0.0, %v1784
      %v1786 = vpop.f32.mrf.mxu0
      %v1787 = vadd.f32 0.0, %v1786
      %1788 = vmatmul.bf16.gmra.mxu0 %v1708
      %v1789 = vpop.f32.mrf.mxu0
      %v1790 = vadd.f32 0.0, %v1789
      %v1791 = vpop.f32.mrf.mxu0
      %v1792 = vadd.f32 0.0, %v1791
      %1793 = vmatmul.bf16.gmra.mxu0 %v1711
      %v1794 = vpop.f32.mrf.mxu0
      %v1795 = vadd.f32 0.0, %v1794
      %v1796 = vpop.f32.mrf.mxu0
      %v1797 = vadd.f32 0.0, %v1796
      %1798 = vmatmul.bf16.gmra.mxu0 %v1714
      %v1799 = vpop.f32.mrf.mxu0
      %v1800 = vadd.f32 0.0, %v1799
      %v1801 = vpop.f32.mrf.mxu0
      %v1802 = vadd.f32 0.0, %v1801
      %1803 = vmatmul.bf16.gmra.mxu0 %v1717
      %v1804 = vpop.f32.mrf.mxu0
      %v1805 = vadd.f32 0.0, %v1804
      %v1806 = vpop.f32.mrf.mxu0
      %v1807 = vadd.f32 0.0, %v1806
      %1808 = vmatmul.bf16.gmra.mxu0 %v1720
      %v1809 = vpop.f32.mrf.mxu0
      %v1810 = vadd.f32 0.0, %v1809
      %v1811 = vpop.f32.mrf.mxu0
      %v1812 = vadd.f32 0.0, %v1811
      %1813 = vdwg.mxu0
      %v1814 = vld [vmem:[#allocation2] sm:$0xff]
      %v1815 = vld [vmem:[#allocation2 + $0x8] sm:$0xff]
      %v1816 = vld [vmem:[#allocation2 + $0x10] sm:$0xff]
      %v1817 = vld [vmem:[#allocation2 + $0x18] sm:$0xff]
      %v1818 = vld [vmem:[#allocation2 + $0x20] sm:$0xff]
      %v1819 = vld [vmem:[#allocation2 + $0x28] sm:$0xff]
      %v1820 = vld [vmem:[#allocation2 + $0x30] sm:$0xff]
      %v1821 = vld [vmem:[#allocation2 + $0x38] sm:$0xff]
      %v1822 = vld [vmem:[#allocation2 + $0x40] sm:$0xff]
      %v1823 = vld [vmem:[#allocation2 + $0x48] sm:$0xff]
      %v1824 = vld [vmem:[#allocation2 + $0x50] sm:$0xff]
      %v1825 = vld [vmem:[#allocation2 + $0x58] sm:$0xff]
      %v1826 = vld [vmem:[#allocation2 + $0x60] sm:$0xff]
      %v1827 = vld [vmem:[#allocation2 + $0x68] sm:$0xff]
      %v1828 = vld [vmem:[#allocation2 + $0x70] sm:$0xff]
      %v1829 = vld [vmem:[#allocation2 + $0x78] sm:$0xff]
      %v1830 = vld [vmem:[#allocation2 + $0x80] sm:$0xff]
      %v1831 = vld [vmem:[#allocation2 + $0x88] sm:$0xff]
      %v1832 = vld [vmem:[#allocation2 + $0x90] sm:$0xff]
      %v1833 = vld [vmem:[#allocation2 + $0x98] sm:$0xff]
      %v1834 = vld [vmem:[#allocation2 + $0xa0] sm:$0xff]
      %v1835 = vld [vmem:[#allocation2 + $0xa8] sm:$0xff]
      %v1836 = vld [vmem:[#allocation2 + $0xb0] sm:$0xff]
      %v1837 = vld [vmem:[#allocation2 + $0xb8] sm:$0xff]
      %v1838 = vld [vmem:[#allocation2 + $0xc0] sm:$0xff]
      %v1839 = vld [vmem:[#allocation2 + $0xc8] sm:$0xff]
      %v1840 = vld [vmem:[#allocation2 + $0xd0] sm:$0xff]
      %v1841 = vld [vmem:[#allocation2 + $0xd8] sm:$0xff]
      %v1842 = vld [vmem:[#allocation2 + $0xe0] sm:$0xff]
      %v1843 = vld [vmem:[#allocation2 + $0xe8] sm:$0xff]
      %v1844 = vld [vmem:[#allocation2 + $0xf0] sm:$0xff]
      %v1845 = vld [vmem:[#allocation2 + $0xf8] sm:$0xff]
      %v1846 = vadd.f32 %v1814, %v1735
      %v1847 = vadd.f32 %v1815, %v1737
      %v1848 = vadd.f32 %v1816, %v1740
      %v1849 = vadd.f32 %v1817, %v1742
      %v1850 = vadd.f32 %v1818, %v1745
      %v1851 = vadd.f32 %v1819, %v1747
      %v1852 = vadd.f32 %v1820, %v1750
      %v1853 = vadd.f32 %v1821, %v1752
      %v1854 = vadd.f32 %v1822, %v1755
      %v1855 = vadd.f32 %v1823, %v1757
      %v1856 = vadd.f32 %v1824, %v1760
      %v1857 = vadd.f32 %v1825, %v1762
      %v1858 = vadd.f32 %v1826, %v1765
      %v1859 = vadd.f32 %v1827, %v1767
      %v1860 = vadd.f32 %v1828, %v1770
      %v1861 = vadd.f32 %v1829, %v1772
      %v1862 = vadd.f32 %v1830, %v1775
      %v1863 = vadd.f32 %v1831, %v1777
      %v1864 = vadd.f32 %v1832, %v1780
      %v1865 = vadd.f32 %v1833, %v1782
      %v1866 = vadd.f32 %v1834, %v1785
      %v1867 = vadd.f32 %v1835, %v1787
      %v1868 = vadd.f32 %v1836, %v1790
      %v1869 = vadd.f32 %v1837, %v1792
      %v1870 = vadd.f32 %v1838, %v1795
      %v1871 = vadd.f32 %v1839, %v1797
      %v1872 = vadd.f32 %v1840, %v1800
      %v1873 = vadd.f32 %v1841, %v1802
      %v1874 = vadd.f32 %v1842, %v1805
      %v1875 = vadd.f32 %v1843, %v1807
      %v1876 = vadd.f32 %v1844, %v1810
      %v1877 = vadd.f32 %v1845, %v1812
      %1878 = vst [vmem:[#allocation2] sm:$0xff] %v1846
      %1879 = vst [vmem:[#allocation2 + $0x8] sm:$0xff] %v1847
      %1880 = vst [vmem:[#allocation2 + $0x10] sm:$0xff] %v1848
      %1881 = vst [vmem:[#allocation2 + $0x18] sm:$0xff] %v1849
      %1882 = vst [vmem:[#allocation2 + $0x20] sm:$0xff] %v1850
      %1883 = vst [vmem:[#allocation2 + $0x28] sm:$0xff] %v1851
      %1884 = vst [vmem:[#allocation2 + $0x30] sm:$0xff] %v1852
      %1885 = vst [vmem:[#allocation2 + $0x38] sm:$0xff] %v1853
      %1886 = vst [vmem:[#allocation2 + $0x40] sm:$0xff] %v1854
      %1887 = vst [vmem:[#allocation2 + $0x48] sm:$0xff] %v1855
      %1888 = vst [vmem:[#allocation2 + $0x50] sm:$0xff] %v1856
      %1889 = vst [vmem:[#allocation2 + $0x58] sm:$0xff] %v1857
      %1890 = vst [vmem:[#allocation2 + $0x60] sm:$0xff] %v1858
      %1891 = vst [vmem:[#allocation2 + $0x68] sm:$0xff] %v1859
      %1892 = vst [vmem:[#allocation2 + $0x70] sm:$0xff] %v1860
      %1893 = vst [vmem:[#allocation2 + $0x78] sm:$0xff] %v1861
      %1894 = vst [vmem:[#allocation2 + $0x80] sm:$0xff] %v1862
      %1895 = vst [vmem:[#allocation2 + $0x88] sm:$0xff] %v1863
      %1896 = vst [vmem:[#allocation2 + $0x90] sm:$0xff] %v1864
      %1897 = vst [vmem:[#allocation2 + $0x98] sm:$0xff] %v1865
      %1898 = vst [vmem:[#allocation2 + $0xa0] sm:$0xff] %v1866
      %1899 = vst [vmem:[#allocation2 + $0xa8] sm:$0xff] %v1867
      %1900 = vst [vmem:[#allocation2 + $0xb0] sm:$0xff] %v1868
      %1901 = vst [vmem:[#allocation2 + $0xb8] sm:$0xff] %v1869
      %1902 = vst [vmem:[#allocation2 + $0xc0] sm:$0xff] %v1870
      %1903 = vst [vmem:[#allocation2 + $0xc8] sm:$0xff] %v1871
      %1904 = vst [vmem:[#allocation2 + $0xd0] sm:$0xff] %v1872
      %1905 = vst [vmem:[#allocation2 + $0xd8] sm:$0xff] %v1873
      %1906 = vst [vmem:[#allocation2 + $0xe0] sm:$0xff] %v1874
      %1907 = vst [vmem:[#allocation2 + $0xe8] sm:$0xff] %v1875
      %1908 = vst [vmem:[#allocation2 + $0xf0] sm:$0xff] %v1876
      %1909 = vst [vmem:[#allocation2 + $0xf8] sm:$0xff] %v1877
      %v1910 = vld [vmem:[%s206 + $0x28] sm:$0xf]
      %v1911 = vld [vmem:[%s206 + $0x2c] sm:$0xf]
      %v1912 = vld [vmem:[%s206 + $0x30] sm:$0xf]
      %v1913 = vld [vmem:[%s206 + $0x34] sm:$0xf]
      %v1914 = vld [vmem:[%s206 + $0x38] sm:$0xf]
      %v1915 = vld [vmem:[%s206 + $0x3c] sm:$0xf]
      %v1916 = vld [vmem:[%s206 + $0x40] sm:$0xf]
      %v1917 = vld [vmem:[%s206 + $0x44] sm:$0xf]
      %v1918 = vld [vmem:[%s206 + $0x48] sm:$0xf]
      %v1919 = vld [vmem:[%s206 + $0x4c] sm:$0xf]
      %v1920 = vld [vmem:[%s206 + $0x50] sm:$0xf]
      %v1921 = vld [vmem:[%s206 + $0x54] sm:$0xf]
      %v1922 = vld [vmem:[%s206 + $0x58] sm:$0xf]
      %v1923 = vld [vmem:[%s206 + $0x5c] sm:$0xf]
      %v1924 = vld [vmem:[%s206 + $0x60] sm:$0xf]
      %v1925 = vld [vmem:[%s206 + $0x64] sm:$0xf]
      %v1926 = vld [vmem:[%s206 + $0x68] sm:$0xf]
      %v1927 = vld [vmem:[%s206 + $0x6c] sm:$0xf]
      %v1928 = vld [vmem:[%s206 + $0x70] sm:$0xf]
      %v1929 = vld [vmem:[%s206 + $0x74] sm:$0xf]
      %v1930 = vld [vmem:[%s206 + $0x78] sm:$0xf]
      %v1931 = vld [vmem:[%s206 + $0x7c] sm:$0xf]
      %v1932 = vld [vmem:[%s206 + $0x80] sm:$0xf]
      %v1933 = vld [vmem:[%s206 + $0x84] sm:$0xf]
      %v1934 = vld [vmem:[%s206 + $0x88] sm:$0xf]
      %v1935 = vld [vmem:[%s206 + $0x8c] sm:$0xf]
      %v1936 = vld [vmem:[%s206 + $0x90] sm:$0xf]
      %v1937 = vld [vmem:[%s206 + $0x94] sm:$0xf]
      %v1938 = vld [vmem:[%s206 + $0x98] sm:$0xf]
      %v1939 = vld [vmem:[%s206 + $0x9c] sm:$0xf]
      %v1940 = vld [vmem:[%s206 + $0xa0] sm:$0xf]
      %v1941 = vld [vmem:[%s206 + $0xa4] sm:$0xf]
      %s1942 = scalar_lea.vmem %s210, 20
      %v1943 = vld [vmem:[%s1942] sm:$0xf]
      %v1976 = vunpack.c.l.b16 %v1910
      %v1977 = vunpack.c.l.b16 %v1911
      %v1978 = vunpack.c.l.b16 %v1912
      %v1979 = vunpack.c.l.b16 %v1913
      %v1980 = vunpack.c.l.b16 %v1914
      %v1981 = vunpack.c.l.b16 %v1915
      %v1982 = vunpack.c.l.b16 %v1916
      %v1983 = vunpack.c.l.b16 %v1917
      %v1984 = vunpack.c.l.b16 %v1918
      %v1985 = vunpack.c.l.b16 %v1919
      %v1986 = vunpack.c.l.b16 %v1920
      %v1987 = vunpack.c.l.b16 %v1921
      %v1988 = vunpack.c.l.b16 %v1922
      %v1989 = vunpack.c.l.b16 %v1923
      %v1990 = vunpack.c.l.b16 %v1924
      %v1991 = vunpack.c.l.b16 %v1925
      %v1992 = vunpack.c.l.b16 %v1926
      %v1993 = vunpack.c.l.b16 %v1927
      %v1994 = vunpack.c.l.b16 %v1928
      %v1995 = vunpack.c.l.b16 %v1929
      %v1996 = vunpack.c.l.b16 %v1930
      %v1997 = vunpack.c.l.b16 %v1931
      %v1998 = vunpack.c.l.b16 %v1932
      %v1999 = vunpack.c.l.b16 %v1933
      %v2000 = vunpack.c.l.b16 %v1934
      %v2001 = vunpack.c.l.b16 %v1935
      %v2002 = vunpack.c.l.b16 %v1936
      %v2003 = vunpack.c.l.b16 %v1937
      %v2004 = vunpack.c.l.b16 %v1938
      %v2005 = vunpack.c.l.b16 %v1939
      %v2006 = vunpack.c.l.b16 %v1940
      %v2007 = vunpack.c.l.b16 %v1941
      %v2008 = vpack.c.b16 %v1977, %v1976
      %v2009 = vpack.c.b16 %v1979, %v1978
      %v2010 = vpack.c.b16 %v1981, %v1980
      %v2011 = vpack.c.b16 %v1983, %v1982
      %v2012 = vpack.c.b16 %v1985, %v1984
      %v2013 = vpack.c.b16 %v1987, %v1986
      %v2014 = vpack.c.b16 %v1989, %v1988
      %v2015 = vpack.c.b16 %v1991, %v1990
      %v2016 = vpack.c.b16 %v1993, %v1992
      %v2017 = vpack.c.b16 %v1995, %v1994
      %v2018 = vpack.c.b16 %v1997, %v1996
      %v2019 = vpack.c.b16 %v1999, %v1998
      %v2020 = vpack.c.b16 %v2001, %v2000
      %v2021 = vpack.c.b16 %v2003, %v2002
      %v2022 = vpack.c.b16 %v2005, %v2004
      %v2023 = vpack.c.b16 %v2007, %v2006
      %v2025 = vsel %vm336, %v2008, 0
      %v2028 = vsel %vm336, %v2009, 0
      %v2031 = vsel %vm336, %v2010, 0
      %v2034 = vsel %vm336, %v2011, 0
      %v2037 = vsel %vm336, %v2012, 0
      %v2040 = vsel %vm336, %v2013, 0
      %v2043 = vsel %vm336, %v2014, 0
      %v2046 = vsel %vm336, %v2015, 0
      %v2049 = vsel %vm336, %v2016, 0
      %v2052 = vsel %vm336, %v2017, 0
      %v2055 = vsel %vm336, %v2018, 0
      %v2058 = vsel %vm336, %v2019, 0
      %v2061 = vsel %vm336, %v2020, 0
      %v2064 = vsel %vm336, %v2021, 0
      %v2067 = vsel %vm336, %v2022, 0
      %v2070 = vsel %vm336, %v2023, 0
      %v2073 = vsel %vm385, %v1943, 0
      %2075 = vmatpush.bf16.msra.mxu0 0
      %2076 = vmatpush.bf16.msra.mxu0 0
      %2077 = vmatpush.bf16.msra.mxu0 0
      %2078 = vmatpush.bf16.msra.mxu0 0
      %2079 = vmatpush.bf16.msra.mxu0 0
      %2080 = vmatpush.bf16.msra.mxu0 0
      %2081 = vmatpush.bf16.msra.mxu0 0
      %2082 = vmatpush.bf16.msra.mxu0 %v2073
      %2083 = vmatmul.bf16.gmra.mxu0 %v2025
      %v2084 = vpop.f32.mrf.mxu0
      %v2085 = vadd.f32 0.0, %v2084
      %v2086 = vpop.f32.mrf.mxu0
      %v2087 = vadd.f32 0.0, %v2086
      %2088 = vmatmul.bf16.gmra.mxu0 %v2028
      %v2089 = vpop.f32.mrf.mxu0
      %v2090 = vadd.f32 0.0, %v2089
      %v2091 = vpop.f32.mrf.mxu0
      %v2092 = vadd.f32 0.0, %v2091
      %2093 = vmatmul.bf16.gmra.mxu0 %v2031
      %v2094 = vpop.f32.mrf.mxu0
      %v2095 = vadd.f32 0.0, %v2094
      %v2096 = vpop.f32.mrf.mxu0
      %v2097 = vadd.f32 0.0, %v2096
      %2098 = vmatmul.bf16.gmra.mxu0 %v2034
      %v2099 = vpop.f32.mrf.mxu0
      %v2100 = vadd.f32 0.0, %v2099
      %v2101 = vpop.f32.mrf.mxu0
      %v2102 = vadd.f32 0.0, %v2101
      %2103 = vmatmul.bf16.gmra.mxu0 %v2037
      %v2104 = vpop.f32.mrf.mxu0
      %v2105 = vadd.f32 0.0, %v2104
      %v2106 = vpop.f32.mrf.mxu0
      %v2107 = vadd.f32 0.0, %v2106
      %2108 = vmatmul.bf16.gmra.mxu0 %v2040
      %v2109 = vpop.f32.mrf.mxu0
      %v2110 = vadd.f32 0.0, %v2109
      %v2111 = vpop.f32.mrf.mxu0
      %v2112 = vadd.f32 0.0, %v2111
      %2113 = vmatmul.bf16.gmra.mxu0 %v2043
      %v2114 = vpop.f32.mrf.mxu0
      %v2115 = vadd.f32 0.0, %v2114
      %v2116 = vpop.f32.mrf.mxu0
      %v2117 = vadd.f32 0.0, %v2116
      %2118 = vmatmul.bf16.gmra.mxu0 %v2046
      %v2119 = vpop.f32.mrf.mxu0
      %v2120 = vadd.f32 0.0, %v2119
      %v2121 = vpop.f32.mrf.mxu0
      %v2122 = vadd.f32 0.0, %v2121
      %2123 = vmatmul.bf16.gmra.mxu0 %v2049
      %v2124 = vpop.f32.mrf.mxu0
      %v2125 = vadd.f32 0.0, %v2124
      %v2126 = vpop.f32.mrf.mxu0
      %v2127 = vadd.f32 0.0, %v2126
      %2128 = vmatmul.bf16.gmra.mxu0 %v2052
      %v2129 = vpop.f32.mrf.mxu0
      %v2130 = vadd.f32 0.0, %v2129
      %v2131 = vpop.f32.mrf.mxu0
      %v2132 = vadd.f32 0.0, %v2131
      %2133 = vmatmul.bf16.gmra.mxu0 %v2055
      %v2134 = vpop.f32.mrf.mxu0
      %v2135 = vadd.f32 0.0, %v2134
      %v2136 = vpop.f32.mrf.mxu0
      %v2137 = vadd.f32 0.0, %v2136
      %2138 = vmatmul.bf16.gmra.mxu0 %v2058
      %v2139 = vpop.f32.mrf.mxu0
      %v2140 = vadd.f32 0.0, %v2139
      %v2141 = vpop.f32.mrf.mxu0
      %v2142 = vadd.f32 0.0, %v2141
      %2143 = vmatmul.bf16.gmra.mxu0 %v2061
      %v2144 = vpop.f32.mrf.mxu0
      %v2145 = vadd.f32 0.0, %v2144
      %v2146 = vpop.f32.mrf.mxu0
      %v2147 = vadd.f32 0.0, %v2146
      %2148 = vmatmul.bf16.gmra.mxu0 %v2064
      %v2149 = vpop.f32.mrf.mxu0
      %v2150 = vadd.f32 0.0, %v2149
      %v2151 = vpop.f32.mrf.mxu0
      %v2152 = vadd.f32 0.0, %v2151
      %2153 = vmatmul.bf16.gmra.mxu0 %v2067
      %v2154 = vpop.f32.mrf.mxu0
      %v2155 = vadd.f32 0.0, %v2154
      %v2156 = vpop.f32.mrf.mxu0
      %v2157 = vadd.f32 0.0, %v2156
      %2158 = vmatmul.bf16.gmra.mxu0 %v2070
      %v2159 = vpop.f32.mrf.mxu0
      %v2160 = vadd.f32 0.0, %v2159
      %v2161 = vpop.f32.mrf.mxu0
      %v2162 = vadd.f32 0.0, %v2161
      %2163 = vdwg.mxu0
      %v2164 = vld [vmem:[#allocation2] sm:$0xff]
      %v2165 = vld [vmem:[#allocation2 + $0x8] sm:$0xff]
      %v2166 = vld [vmem:[#allocation2 + $0x10] sm:$0xff]
      %v2167 = vld [vmem:[#allocation2 + $0x18] sm:$0xff]
      %v2168 = vld [vmem:[#allocation2 + $0x20] sm:$0xff]
      %v2169 = vld [vmem:[#allocation2 + $0x28] sm:$0xff]
      %v2170 = vld [vmem:[#allocation2 + $0x30] sm:$0xff]
      %v2171 = vld [vmem:[#allocation2 + $0x38] sm:$0xff]
      %v2172 = vld [vmem:[#allocation2 + $0x40] sm:$0xff]
      %v2173 = vld [vmem:[#allocation2 + $0x48] sm:$0xff]
      %v2174 = vld [vmem:[#allocation2 + $0x50] sm:$0xff]
      %v2175 = vld [vmem:[#allocation2 + $0x58] sm:$0xff]
      %v2176 = vld [vmem:[#allocation2 + $0x60] sm:$0xff]
      %v2177 = vld [vmem:[#allocation2 + $0x68] sm:$0xff]
      %v2178 = vld [vmem:[#allocation2 + $0x70] sm:$0xff]
      %v2179 = vld [vmem:[#allocation2 + $0x78] sm:$0xff]
      %v2180 = vld [vmem:[#allocation2 + $0x80] sm:$0xff]
      %v2181 = vld [vmem:[#allocation2 + $0x88] sm:$0xff]
      %v2182 = vld [vmem:[#allocation2 + $0x90] sm:$0xff]
      %v2183 = vld [vmem:[#allocation2 + $0x98] sm:$0xff]
      %v2184 = vld [vmem:[#allocation2 + $0xa0] sm:$0xff]
      %v2185 = vld [vmem:[#allocation2 + $0xa8] sm:$0xff]
      %v2186 = vld [vmem:[#allocation2 + $0xb0] sm:$0xff]
      %v2187 = vld [vmem:[#allocation2 + $0xb8] sm:$0xff]
      %v2188 = vld [vmem:[#allocation2 + $0xc0] sm:$0xff]
      %v2189 = vld [vmem:[#allocation2 + $0xc8] sm:$0xff]
      %v2190 = vld [vmem:[#allocation2 + $0xd0] sm:$0xff]
      %v2191 = vld [vmem:[#allocation2 + $0xd8] sm:$0xff]
      %v2192 = vld [vmem:[#allocation2 + $0xe0] sm:$0xff]
      %v2193 = vld [vmem:[#allocation2 + $0xe8] sm:$0xff]
      %v2194 = vld [vmem:[#allocation2 + $0xf0] sm:$0xff]
      %v2195 = vld [vmem:[#allocation2 + $0xf8] sm:$0xff]
      %v2196 = vadd.f32 %v2164, %v2085
      %v2197 = vadd.f32 %v2165, %v2087
      %v2198 = vadd.f32 %v2166, %v2090
      %v2199 = vadd.f32 %v2167, %v2092
      %v2200 = vadd.f32 %v2168, %v2095
      %v2201 = vadd.f32 %v2169, %v2097
      %v2202 = vadd.f32 %v2170, %v2100
      %v2203 = vadd.f32 %v2171, %v2102
      %v2204 = vadd.f32 %v2172, %v2105
      %v2205 = vadd.f32 %v2173, %v2107
      %v2206 = vadd.f32 %v2174, %v2110
      %v2207 = vadd.f32 %v2175, %v2112
      %v2208 = vadd.f32 %v2176, %v2115
      %v2209 = vadd.f32 %v2177, %v2117
      %v2210 = vadd.f32 %v2178, %v2120
      %v2211 = vadd.f32 %v2179, %v2122
      %v2212 = vadd.f32 %v2180, %v2125
      %v2213 = vadd.f32 %v2181, %v2127
      %v2214 = vadd.f32 %v2182, %v2130
      %v2215 = vadd.f32 %v2183, %v2132
      %v2216 = vadd.f32 %v2184, %v2135
      %v2217 = vadd.f32 %v2185, %v2137
      %v2218 = vadd.f32 %v2186, %v2140
      %v2219 = vadd.f32 %v2187, %v2142
      %v2220 = vadd.f32 %v2188, %v2145
      %v2221 = vadd.f32 %v2189, %v2147
      %v2222 = vadd.f32 %v2190, %v2150
      %v2223 = vadd.f32 %v2191, %v2152
      %v2224 = vadd.f32 %v2192, %v2155
      %v2225 = vadd.f32 %v2193, %v2157
      %v2226 = vadd.f32 %v2194, %v2160
      %v2227 = vadd.f32 %v2195, %v2162
      %2228 = vst [vmem:[#allocation2] sm:$0xff] %v2196
      %2229 = vst [vmem:[#allocation2 + $0x8] sm:$0xff] %v2197
      %2230 = vst [vmem:[#allocation2 + $0x10] sm:$0xff] %v2198
      %2231 = vst [vmem:[#allocation2 + $0x18] sm:$0xff] %v2199
      %2232 = vst [vmem:[#allocation2 + $0x20] sm:$0xff] %v2200
      %2233 = vst [vmem:[#allocation2 + $0x28] sm:$0xff] %v2201
      %2234 = vst [vmem:[#allocation2 + $0x30] sm:$0xff] %v2202
      %2235 = vst [vmem:[#allocation2 + $0x38] sm:$0xff] %v2203
      %2236 = vst [vmem:[#allocation2 + $0x40] sm:$0xff] %v2204
      %2237 = vst [vmem:[#allocation2 + $0x48] sm:$0xff] %v2205
      %2238 = vst [vmem:[#allocation2 + $0x50] sm:$0xff] %v2206
      %2239 = vst [vmem:[#allocation2 + $0x58] sm:$0xff] %v2207
      %2240 = vst [vmem:[#allocation2 + $0x60] sm:$0xff] %v2208
      %2241 = vst [vmem:[#allocation2 + $0x68] sm:$0xff] %v2209
      %2242 = vst [vmem:[#allocation2 + $0x70] sm:$0xff] %v2210
      %2243 = vst [vmem:[#allocation2 + $0x78] sm:$0xff] %v2211
      %2244 = vst [vmem:[#allocation2 + $0x80] sm:$0xff] %v2212
      %2245 = vst [vmem:[#allocation2 + $0x88] sm:$0xff] %v2213
      %2246 = vst [vmem:[#allocation2 + $0x90] sm:$0xff] %v2214
      %2247 = vst [vmem:[#allocation2 + $0x98] sm:$0xff] %v2215
      %2248 = vst [vmem:[#allocation2 + $0xa0] sm:$0xff] %v2216
      %2249 = vst [vmem:[#allocation2 + $0xa8] sm:$0xff] %v2217
      %2250 = vst [vmem:[#allocation2 + $0xb0] sm:$0xff] %v2218
      %2251 = vst [vmem:[#allocation2 + $0xb8] sm:$0xff] %v2219
      %2252 = vst [vmem:[#allocation2 + $0xc0] sm:$0xff] %v2220
      %2253 = vst [vmem:[#allocation2 + $0xc8] sm:$0xff] %v2221
      %2254 = vst [vmem:[#allocation2 + $0xd0] sm:$0xff] %v2222
      %2255 = vst [vmem:[#allocation2 + $0xd8] sm:$0xff] %v2223
      %2256 = vst [vmem:[#allocation2 + $0xe0] sm:$0xff] %v2224
      %2257 = vst [vmem:[#allocation2 + $0xe8] sm:$0xff] %v2225
      %2258 = vst [vmem:[#allocation2 + $0xf0] sm:$0xff] %v2226
      %2259 = vst [vmem:[#allocation2 + $0xf8] sm:$0xff] %v2227
      %v2260 = vld [vmem:[%s206 + $0x30] sm:$0xf]
      %v2261 = vld [vmem:[%s206 + $0x34] sm:$0xf]
      %v2262 = vld [vmem:[%s206 + $0x38] sm:$0xf]
      %v2263 = vld [vmem:[%s206 + $0x3c] sm:$0xf]
      %v2264 = vld [vmem:[%s206 + $0x40] sm:$0xf]
      %v2265 = vld [vmem:[%s206 + $0x44] sm:$0xf]
      %v2266 = vld [vmem:[%s206 + $0x48] sm:$0xf]
      %v2267 = vld [vmem:[%s206 + $0x4c] sm:$0xf]
      %v2268 = vld [vmem:[%s206 + $0x50] sm:$0xf]
      %v2269 = vld [vmem:[%s206 + $0x54] sm:$0xf]
      %v2270 = vld [vmem:[%s206 + $0x58] sm:$0xf]
      %v2271 = vld [vmem:[%s206 + $0x5c] sm:$0xf]
      %v2272 = vld [vmem:[%s206 + $0x60] sm:$0xf]
      %v2273 = vld [vmem:[%s206 + $0x64] sm:$0xf]
      %v2274 = vld [vmem:[%s206 + $0x68] sm:$0xf]
      %v2275 = vld [vmem:[%s206 + $0x6c] sm:$0xf]
      %v2276 = vld [vmem:[%s206 + $0x70] sm:$0xf]
      %v2277 = vld [vmem:[%s206 + $0x74] sm:$0xf]
      %v2278 = vld [vmem:[%s206 + $0x78] sm:$0xf]
      %v2279 = vld [vmem:[%s206 + $0x7c] sm:$0xf]
      %v2280 = vld [vmem:[%s206 + $0x80] sm:$0xf]
      %v2281 = vld [vmem:[%s206 + $0x84] sm:$0xf]
      %v2282 = vld [vmem:[%s206 + $0x88] sm:$0xf]
      %v2283 = vld [vmem:[%s206 + $0x8c] sm:$0xf]
      %v2284 = vld [vmem:[%s206 + $0x90] sm:$0xf]
      %v2285 = vld [vmem:[%s206 + $0x94] sm:$0xf]
      %v2286 = vld [vmem:[%s206 + $0x98] sm:$0xf]
      %v2287 = vld [vmem:[%s206 + $0x9c] sm:$0xf]
      %v2288 = vld [vmem:[%s206 + $0xa0] sm:$0xf]
      %v2289 = vld [vmem:[%s206 + $0xa4] sm:$0xf]
      %v2290 = vld [vmem:[%s206 + $0xa8] sm:$0xf]
      %v2291 = vld [vmem:[%s206 + $0xac] sm:$0xf]
      %s2292 = scalar_lea.vmem %s210, 24
      %v2293 = vld [vmem:[%s2292] sm:$0xf]
      %v2326 = vunpack.c.l.b16 %v2260
      %v2327 = vunpack.c.l.b16 %v2261
      %v2328 = vunpack.c.l.b16 %v2262
      %v2329 = vunpack.c.l.b16 %v2263
      %v2330 = vunpack.c.l.b16 %v2264
      %v2331 = vunpack.c.l.b16 %v2265
      %v2332 = vunpack.c.l.b16 %v2266
      %v2333 = vunpack.c.l.b16 %v2267
      %v2334 = vunpack.c.l.b16 %v2268
      %v2335 = vunpack.c.l.b16 %v2269
      %v2336 = vunpack.c.l.b16 %v2270
      %v2337 = vunpack.c.l.b16 %v2271
      %v2338 = vunpack.c.l.b16 %v2272
      %v2339 = vunpack.c.l.b16 %v2273
      %v2340 = vunpack.c.l.b16 %v2274
      %v2341 = vunpack.c.l.b16 %v2275
      %v2342 = vunpack.c.l.b16 %v2276
      %v2343 = vunpack.c.l.b16 %v2277
      %v2344 = vunpack.c.l.b16 %v2278
      %v2345 = vunpack.c.l.b16 %v2279
      %v2346 = vunpack.c.l.b16 %v2280
      %v2347 = vunpack.c.l.b16 %v2281
      %v2348 = vunpack.c.l.b16 %v2282
      %v2349 = vunpack.c.l.b16 %v2283
      %v2350 = vunpack.c.l.b16 %v2284
      %v2351 = vunpack.c.l.b16 %v2285
      %v2352 = vunpack.c.l.b16 %v2286
      %v2353 = vunpack.c.l.b16 %v2287
      %v2354 = vunpack.c.l.b16 %v2288
      %v2355 = vunpack.c.l.b16 %v2289
      %v2356 = vunpack.c.l.b16 %v2290
      %v2357 = vunpack.c.l.b16 %v2291
      %v2358 = vpack.c.b16 %v2327, %v2326
      %v2359 = vpack.c.b16 %v2329, %v2328
      %v2360 = vpack.c.b16 %v2331, %v2330
      %v2361 = vpack.c.b16 %v2333, %v2332
      %v2362 = vpack.c.b16 %v2335, %v2334
      %v2363 = vpack.c.b16 %v2337, %v2336
      %v2364 = vpack.c.b16 %v2339, %v2338
      %v2365 = vpack.c.b16 %v2341, %v2340
      %v2366 = vpack.c.b16 %v2343, %v2342
      %v2367 = vpack.c.b16 %v2345, %v2344
      %v2368 = vpack.c.b16 %v2347, %v2346
      %v2369 = vpack.c.b16 %v2349, %v2348
      %v2370 = vpack.c.b16 %v2351, %v2350
      %v2371 = vpack.c.b16 %v2353, %v2352
      %v2372 = vpack.c.b16 %v2355, %v2354
      %v2373 = vpack.c.b16 %v2357, %v2356
      %v2375 = vsel %vm336, %v2358, 0
      %v2378 = vsel %vm336, %v2359, 0
      %v2381 = vsel %vm336, %v2360, 0
      %v2384 = vsel %vm336, %v2361, 0
      %v2387 = vsel %vm336, %v2362, 0
      %v2390 = vsel %vm336, %v2363, 0
      %v2393 = vsel %vm336, %v2364, 0
      %v2396 = vsel %vm336, %v2365, 0
      %v2399 = vsel %vm336, %v2366, 0
      %v2402 = vsel %vm336, %v2367, 0
      %v2405 = vsel %vm336, %v2368, 0
      %v2408 = vsel %vm336, %v2369, 0
      %v2411 = vsel %vm336, %v2370, 0
      %v2414 = vsel %vm336, %v2371, 0
      %v2417 = vsel %vm336, %v2372, 0
      %v2420 = vsel %vm336, %v2373, 0
      %v2423 = vsel %vm385, %v2293, 0
      %2425 = vmatpush.bf16.msra.mxu0 0
      %2426 = vmatpush.bf16.msra.mxu0 0
      %2427 = vmatpush.bf16.msra.mxu0 0
      %2428 = vmatpush.bf16.msra.mxu0 0
      %2429 = vmatpush.bf16.msra.mxu0 0
      %2430 = vmatpush.bf16.msra.mxu0 0
      %2431 = vmatpush.bf16.msra.mxu0 0
      %2432 = vmatpush.bf16.msra.mxu0 %v2423
      %2433 = vmatmul.bf16.gmra.mxu0 %v2375
      %v2434 = vpop.f32.mrf.mxu0
      %v2435 = vadd.f32 0.0, %v2434
      %v2436 = vpop.f32.mrf.mxu0
      %v2437 = vadd.f32 0.0, %v2436
      %2438 = vmatmul.bf16.gmra.mxu0 %v2378
      %v2439 = vpop.f32.mrf.mxu0
      %v2440 = vadd.f32 0.0, %v2439
      %v2441 = vpop.f32.mrf.mxu0
      %v2442 = vadd.f32 0.0, %v2441
      %2443 = vmatmul.bf16.gmra.mxu0 %v2381
      %v2444 = vpop.f32.mrf.mxu0
      %v2445 = vadd.f32 0.0, %v2444
      %v2446 = vpop.f32.mrf.mxu0
      %v2447 = vadd.f32 0.0, %v2446
      %2448 = vmatmul.bf16.gmra.mxu0 %v2384
      %v2449 = vpop.f32.mrf.mxu0
      %v2450 = vadd.f32 0.0, %v2449
      %v2451 = vpop.f32.mrf.mxu0
      %v2452 = vadd.f32 0.0, %v2451
      %2453 = vmatmul.bf16.gmra.mxu0 %v2387
      %v2454 = vpop.f32.mrf.mxu0
      %v2455 = vadd.f32 0.0, %v2454
      %v2456 = vpop.f32.mrf.mxu0
      %v2457 = vadd.f32 0.0, %v2456
      %2458 = vmatmul.bf16.gmra.mxu0 %v2390
      %v2459 = vpop.f32.mrf.mxu0
      %v2460 = vadd.f32 0.0, %v2459
      %v2461 = vpop.f32.mrf.mxu0
      %v2462 = vadd.f32 0.0, %v2461
      %2463 = vmatmul.bf16.gmra.mxu0 %v2393
      %v2464 = vpop.f32.mrf.mxu0
      %v2465 = vadd.f32 0.0, %v2464
      %v2466 = vpop.f32.mrf.mxu0
      %v2467 = vadd.f32 0.0, %v2466
      %2468 = vmatmul.bf16.gmra.mxu0 %v2396
      %v2469 = vpop.f32.mrf.mxu0
      %v2470 = vadd.f32 0.0, %v2469
      %v2471 = vpop.f32.mrf.mxu0
      %v2472 = vadd.f32 0.0, %v2471
      %2473 = vmatmul.bf16.gmra.mxu0 %v2399
      %v2474 = vpop.f32.mrf.mxu0
      %v2475 = vadd.f32 0.0, %v2474
      %v2476 = vpop.f32.mrf.mxu0
      %v2477 = vadd.f32 0.0, %v2476
      %2478 = vmatmul.bf16.gmra.mxu0 %v2402
      %v2479 = vpop.f32.mrf.mxu0
      %v2480 = vadd.f32 0.0, %v2479
      %v2481 = vpop.f32.mrf.mxu0
      %v2482 = vadd.f32 0.0, %v2481
      %2483 = vmatmul.bf16.gmra.mxu0 %v2405
      %v2484 = vpop.f32.mrf.mxu0
      %v2485 = vadd.f32 0.0, %v2484
      %v2486 = vpop.f32.mrf.mxu0
      %v2487 = vadd.f32 0.0, %v2486
      %2488 = vmatmul.bf16.gmra.mxu0 %v2408
      %v2489 = vpop.f32.mrf.mxu0
      %v2490 = vadd.f32 0.0, %v2489
      %v2491 = vpop.f32.mrf.mxu0
      %v2492 = vadd.f32 0.0, %v2491
      %2493 = vmatmul.bf16.gmra.mxu0 %v2411
      %v2494 = vpop.f32.mrf.mxu0
      %v2495 = vadd.f32 0.0, %v2494
      %v2496 = vpop.f32.mrf.mxu0
      %v2497 = vadd.f32 0.0, %v2496
      %2498 = vmatmul.bf16.gmra.mxu0 %v2414
      %v2499 = vpop.f32.mrf.mxu0
      %v2500 = vadd.f32 0.0, %v2499
      %v2501 = vpop.f32.mrf.mxu0
      %v2502 = vadd.f32 0.0, %v2501
      %2503 = vmatmul.bf16.gmra.mxu0 %v2417
      %v2504 = vpop.f32.mrf.mxu0
      %v2505 = vadd.f32 0.0, %v2504
      %v2506 = vpop.f32.mrf.mxu0
      %v2507 = vadd.f32 0.0, %v2506
      %2508 = vmatmul.bf16.gmra.mxu0 %v2420
      %v2509 = vpop.f32.mrf.mxu0
      %v2510 = vadd.f32 0.0, %v2509
      %v2511 = vpop.f32.mrf.mxu0
      %v2512 = vadd.f32 0.0, %v2511
      %2513 = vdwg.mxu0
      %v2514 = vld [vmem:[#allocation2] sm:$0xff]
      %v2515 = vld [vmem:[#allocation2 + $0x8] sm:$0xff]
      %v2516 = vld [vmem:[#allocation2 + $0x10] sm:$0xff]
      %v2517 = vld [vmem:[#allocation2 + $0x18] sm:$0xff]
      %v2518 = vld [vmem:[#allocation2 + $0x20] sm:$0xff]
      %v2519 = vld [vmem:[#allocation2 + $0x28] sm:$0xff]
      %v2520 = vld [vmem:[#allocation2 + $0x30] sm:$0xff]
      %v2521 = vld [vmem:[#allocation2 + $0x38] sm:$0xff]
      %v2522 = vld [vmem:[#allocation2 + $0x40] sm:$0xff]
      %v2523 = vld [vmem:[#allocation2 + $0x48] sm:$0xff]
      %v2524 = vld [vmem:[#allocation2 + $0x50] sm:$0xff]
      %v2525 = vld [vmem:[#allocation2 + $0x58] sm:$0xff]
      %v2526 = vld [vmem:[#allocation2 + $0x60] sm:$0xff]
      %v2527 = vld [vmem:[#allocation2 + $0x68] sm:$0xff]
      %v2528 = vld [vmem:[#allocation2 + $0x70] sm:$0xff]
      %v2529 = vld [vmem:[#allocation2 + $0x78] sm:$0xff]
      %v2530 = vld [vmem:[#allocation2 + $0x80] sm:$0xff]
      %v2531 = vld [vmem:[#allocation2 + $0x88] sm:$0xff]
      %v2532 = vld [vmem:[#allocation2 + $0x90] sm:$0xff]
      %v2533 = vld [vmem:[#allocation2 + $0x98] sm:$0xff]
      %v2534 = vld [vmem:[#allocation2 + $0xa0] sm:$0xff]
      %v2535 = vld [vmem:[#allocation2 + $0xa8] sm:$0xff]
      %v2536 = vld [vmem:[#allocation2 + $0xb0] sm:$0xff]
      %v2537 = vld [vmem:[#allocation2 + $0xb8] sm:$0xff]
      %v2538 = vld [vmem:[#allocation2 + $0xc0] sm:$0xff]
      %v2539 = vld [vmem:[#allocation2 + $0xc8] sm:$0xff]
      %v2540 = vld [vmem:[#allocation2 + $0xd0] sm:$0xff]
      %v2541 = vld [vmem:[#allocation2 + $0xd8] sm:$0xff]
      %v2542 = vld [vmem:[#allocation2 + $0xe0] sm:$0xff]
      %v2543 = vld [vmem:[#allocation2 + $0xe8] sm:$0xff]
      %v2544 = vld [vmem:[#allocation2 + $0xf0] sm:$0xff]
      %v2545 = vld [vmem:[#allocation2 + $0xf8] sm:$0xff]
      %v2546 = vadd.f32 %v2514, %v2435
      %v2547 = vadd.f32 %v2515, %v2437
      %v2548 = vadd.f32 %v2516, %v2440
      %v2549 = vadd.f32 %v2517, %v2442
      %v2550 = vadd.f32 %v2518, %v2445
      %v2551 = vadd.f32 %v2519, %v2447
      %v2552 = vadd.f32 %v2520, %v2450
      %v2553 = vadd.f32 %v2521, %v2452
      %v2554 = vadd.f32 %v2522, %v2455
      %v2555 = vadd.f32 %v2523, %v2457
      %v2556 = vadd.f32 %v2524, %v2460
      %v2557 = vadd.f32 %v2525, %v2462
      %v2558 = vadd.f32 %v2526, %v2465
      %v2559 = vadd.f32 %v2527, %v2467
      %v2560 = vadd.f32 %v2528, %v2470
      %v2561 = vadd.f32 %v2529, %v2472
      %v2562 = vadd.f32 %v2530, %v2475
      %v2563 = vadd.f32 %v2531, %v2477
      %v2564 = vadd.f32 %v2532, %v2480
      %v2565 = vadd.f32 %v2533, %v2482
      %v2566 = vadd.f32 %v2534, %v2485
      %v2567 = vadd.f32 %v2535, %v2487
      %v2568 = vadd.f32 %v2536, %v2490
      %v2569 = vadd.f32 %v2537, %v2492
      %v2570 = vadd.f32 %v2538, %v2495
      %v2571 = vadd.f32 %v2539, %v2497
      %v2572 = vadd.f32 %v2540, %v2500
      %v2573 = vadd.f32 %v2541, %v2502
      %v2574 = vadd.f32 %v2542, %v2505
      %v2575 = vadd.f32 %v2543, %v2507
      %v2576 = vadd.f32 %v2544, %v2510
      %v2577 = vadd.f32 %v2545, %v2512
      %2578 = vst [vmem:[#allocation2] sm:$0xff] %v2546
      %2579 = vst [vmem:[#allocation2 + $0x8] sm:$0xff] %v2547
      %2580 = vst [vmem:[#allocation2 + $0x10] sm:$0xff] %v2548
      %2581 = vst [vmem:[#allocation2 + $0x18] sm:$0xff] %v2549
      %2582 = vst [vmem:[#allocation2 + $0x20] sm:$0xff] %v2550
      %2583 = vst [vmem:[#allocation2 + $0x28] sm:$0xff] %v2551
      %2584 = vst [vmem:[#allocation2 + $0x30] sm:$0xff] %v2552
      %2585 = vst [vmem:[#allocation2 + $0x38] sm:$0xff] %v2553
      %2586 = vst [vmem:[#allocation2 + $0x40] sm:$0xff] %v2554
      %2587 = vst [vmem:[#allocation2 + $0x48] sm:$0xff] %v2555
      %2588 = vst [vmem:[#allocation2 + $0x50] sm:$0xff] %v2556
      %2589 = vst [vmem:[#allocation2 + $0x58] sm:$0xff] %v2557
      %2590 = vst [vmem:[#allocation2 + $0x60] sm:$0xff] %v2558
      %2591 = vst [vmem:[#allocation2 + $0x68] sm:$0xff] %v2559
      %2592 = vst [vmem:[#allocation2 + $0x70] sm:$0xff] %v2560
      %2593 = vst [vmem:[#allocation2 + $0x78] sm:$0xff] %v2561
      %2594 = vst [vmem:[#allocation2 + $0x80] sm:$0xff] %v2562
      %2595 = vst [vmem:[#allocation2 + $0x88] sm:$0xff] %v2563
      %2596 = vst [vmem:[#allocation2 + $0x90] sm:$0xff] %v2564
      %2597 = vst [vmem:[#allocation2 + $0x98] sm:$0xff] %v2565
      %2598 = vst [vmem:[#allocation2 + $0xa0] sm:$0xff] %v2566
      %2599 = vst [vmem:[#allocation2 + $0xa8] sm:$0xff] %v2567
      %2600 = vst [vmem:[#allocation2 + $0xb0] sm:$0xff] %v2568
      %2601 = vst [vmem:[#allocation2 + $0xb8] sm:$0xff] %v2569
      %2602 = vst [vmem:[#allocation2 + $0xc0] sm:$0xff] %v2570
      %2603 = vst [vmem:[#allocation2 + $0xc8] sm:$0xff] %v2571
      %2604 = vst [vmem:[#allocation2 + $0xd0] sm:$0xff] %v2572
      %2605 = vst [vmem:[#allocation2 + $0xd8] sm:$0xff] %v2573
      %2606 = vst [vmem:[#allocation2 + $0xe0] sm:$0xff] %v2574
      %2607 = vst [vmem:[#allocation2 + $0xe8] sm:$0xff] %v2575
      %2608 = vst [vmem:[#allocation2 + $0xf0] sm:$0xff] %v2576
      %2609 = vst [vmem:[#allocation2 + $0xf8] sm:$0xff] %v2577
      %v2610 = vld [vmem:[%s206 + $0x38] sm:$0xf]
      %v2611 = vld [vmem:[%s206 + $0x3c] sm:$0xf]
      %v2612 = vld [vmem:[%s206 + $0x40] sm:$0xf]
      %v2613 = vld [vmem:[%s206 + $0x44] sm:$0xf]
      %v2614 = vld [vmem:[%s206 + $0x48] sm:$0xf]
      %v2615 = vld [vmem:[%s206 + $0x4c] sm:$0xf]
      %v2616 = vld [vmem:[%s206 + $0x50] sm:$0xf]
      %v2617 = vld [vmem:[%s206 + $0x54] sm:$0xf]
      %v2618 = vld [vmem:[%s206 + $0x58] sm:$0xf]
      %v2619 = vld [vmem:[%s206 + $0x5c] sm:$0xf]
      %v2620 = vld [vmem:[%s206 + $0x60] sm:$0xf]
      %v2621 = vld [vmem:[%s206 + $0x64] sm:$0xf]
      %v2622 = vld [vmem:[%s206 + $0x68] sm:$0xf]
      %v2623 = vld [vmem:[%s206 + $0x6c] sm:$0xf]
      %v2624 = vld [vmem:[%s206 + $0x70] sm:$0xf]
      %v2625 = vld [vmem:[%s206 + $0x74] sm:$0xf]
      %v2626 = vld [vmem:[%s206 + $0x78] sm:$0xf]
      %v2627 = vld [vmem:[%s206 + $0x7c] sm:$0xf]
      %v2628 = vld [vmem:[%s206 + $0x80] sm:$0xf]
      %v2629 = vld [vmem:[%s206 + $0x84] sm:$0xf]
      %v2630 = vld [vmem:[%s206 + $0x88] sm:$0xf]
      %v2631 = vld [vmem:[%s206 + $0x8c] sm:$0xf]
      %v2632 = vld [vmem:[%s206 + $0x90] sm:$0xf]
      %v2633 = vld [vmem:[%s206 + $0x94] sm:$0xf]
      %v2634 = vld [vmem:[%s206 + $0x98] sm:$0xf]
      %v2635 = vld [vmem:[%s206 + $0x9c] sm:$0xf]
      %v2636 = vld [vmem:[%s206 + $0xa0] sm:$0xf]
      %v2637 = vld [vmem:[%s206 + $0xa4] sm:$0xf]
      %v2638 = vld [vmem:[%s206 + $0xa8] sm:$0xf]
      %v2639 = vld [vmem:[%s206 + $0xac] sm:$0xf]
      %v2640 = vld [vmem:[%s206 + $0xb0] sm:$0xf]
      %v2641 = vld [vmem:[%s206 + $0xb4] sm:$0xf]
      %s2642 = scalar_lea.vmem %s210, 28
      %v2643 = vld [vmem:[%s2642] sm:$0xf]
      %v2676 = vunpack.c.l.b16 %v2610
      %v2677 = vunpack.c.l.b16 %v2611
      %v2678 = vunpack.c.l.b16 %v2612
      %v2679 = vunpack.c.l.b16 %v2613
      %v2680 = vunpack.c.l.b16 %v2614
      %v2681 = vunpack.c.l.b16 %v2615
      %v2682 = vunpack.c.l.b16 %v2616
      %v2683 = vunpack.c.l.b16 %v2617
      %v2684 = vunpack.c.l.b16 %v2618
      %v2685 = vunpack.c.l.b16 %v2619
      %v2686 = vunpack.c.l.b16 %v2620
      %v2687 = vunpack.c.l.b16 %v2621
      %v2688 = vunpack.c.l.b16 %v2622
      %v2689 = vunpack.c.l.b16 %v2623
      %v2690 = vunpack.c.l.b16 %v2624
      %v2691 = vunpack.c.l.b16 %v2625
      %v2692 = vunpack.c.l.b16 %v2626
      %v2693 = vunpack.c.l.b16 %v2627
      %v2694 = vunpack.c.l.b16 %v2628
      %v2695 = vunpack.c.l.b16 %v2629
      %v2696 = vunpack.c.l.b16 %v2630
      %v2697 = vunpack.c.l.b16 %v2631
      %v2698 = vunpack.c.l.b16 %v2632
      %v2699 = vunpack.c.l.b16 %v2633
      %v2700 = vunpack.c.l.b16 %v2634
      %v2701 = vunpack.c.l.b16 %v2635
      %v2702 = vunpack.c.l.b16 %v2636
      %v2703 = vunpack.c.l.b16 %v2637
      %v2704 = vunpack.c.l.b16 %v2638
      %v2705 = vunpack.c.l.b16 %v2639
      %v2706 = vunpack.c.l.b16 %v2640
      %v2707 = vunpack.c.l.b16 %v2641
      %v2708 = vpack.c.b16 %v2677, %v2676
      %v2709 = vpack.c.b16 %v2679, %v2678
      %v2710 = vpack.c.b16 %v2681, %v2680
      %v2711 = vpack.c.b16 %v2683, %v2682
      %v2712 = vpack.c.b16 %v2685, %v2684
      %v2713 = vpack.c.b16 %v2687, %v2686
      %v2714 = vpack.c.b16 %v2689, %v2688
      %v2715 = vpack.c.b16 %v2691, %v2690
      %v2716 = vpack.c.b16 %v2693, %v2692
      %v2717 = vpack.c.b16 %v2695, %v2694
      %v2718 = vpack.c.b16 %v2697, %v2696
      %v2719 = vpack.c.b16 %v2699, %v2698
      %v2720 = vpack.c.b16 %v2701, %v2700
      %v2721 = vpack.c.b16 %v2703, %v2702
      %v2722 = vpack.c.b16 %v2705, %v2704
      %v2723 = vpack.c.b16 %v2707, %v2706
      %v2725 = vsel %vm336, %v2708, 0
      %v2728 = vsel %vm336, %v2709, 0
      %v2731 = vsel %vm336, %v2710, 0
      %v2734 = vsel %vm336, %v2711, 0
      %v2737 = vsel %vm336, %v2712, 0
      %v2740 = vsel %vm336, %v2713, 0
      %v2743 = vsel %vm336, %v2714, 0
      %v2746 = vsel %vm336, %v2715, 0
      %v2749 = vsel %vm336, %v2716, 0
      %v2752 = vsel %vm336, %v2717, 0
      %v2755 = vsel %vm336, %v2718, 0
      %v2758 = vsel %vm336, %v2719, 0
      %v2761 = vsel %vm336, %v2720, 0
      %v2764 = vsel %vm336, %v2721, 0
      %v2767 = vsel %vm336, %v2722, 0
      %v2770 = vsel %vm336, %v2723, 0
      %v2773 = vsel %vm385, %v2643, 0
      %2775 = vmatpush.bf16.msra.mxu0 0
      %2776 = vmatpush.bf16.msra.mxu0 0
      %2777 = vmatpush.bf16.msra.mxu0 0
      %2778 = vmatpush.bf16.msra.mxu0 0
      %2779 = vmatpush.bf16.msra.mxu0 0
      %2780 = vmatpush.bf16.msra.mxu0 0
      %2781 = vmatpush.bf16.msra.mxu0 0
      %2782 = vmatpush.bf16.msra.mxu0 %v2773
      %2783 = vmatmul.bf16.gmra.mxu0 %v2725
      %v2784 = vpop.f32.mrf.mxu0
      %v2785 = vadd.f32 0.0, %v2784
      %v2786 = vpop.f32.mrf.mxu0
      %v2787 = vadd.f32 0.0, %v2786
      %2788 = vmatmul.bf16.gmra.mxu0 %v2728
      %v2789 = vpop.f32.mrf.mxu0
      %v2790 = vadd.f32 0.0, %v2789
      %v2791 = vpop.f32.mrf.mxu0
      %v2792 = vadd.f32 0.0, %v2791
      %2793 = vmatmul.bf16.gmra.mxu0 %v2731
      %v2794 = vpop.f32.mrf.mxu0
      %v2795 = vadd.f32 0.0, %v2794
      %v2796 = vpop.f32.mrf.mxu0
      %v2797 = vadd.f32 0.0, %v2796
      %2798 = vmatmul.bf16.gmra.mxu0 %v2734
      %v2799 = vpop.f32.mrf.mxu0
      %v2800 = vadd.f32 0.0, %v2799
      %v2801 = vpop.f32.mrf.mxu0
      %v2802 = vadd.f32 0.0, %v2801
      %2803 = vmatmul.bf16.gmra.mxu0 %v2737
      %v2804 = vpop.f32.mrf.mxu0
      %v2805 = vadd.f32 0.0, %v2804
      %v2806 = vpop.f32.mrf.mxu0
      %v2807 = vadd.f32 0.0, %v2806
      %2808 = vmatmul.bf16.gmra.mxu0 %v2740
      %v2809 = vpop.f32.mrf.mxu0
      %v2810 = vadd.f32 0.0, %v2809
      %v2811 = vpop.f32.mrf.mxu0
      %v2812 = vadd.f32 0.0, %v2811
      %2813 = vmatmul.bf16.gmra.mxu0 %v2743
      %v2814 = vpop.f32.mrf.mxu0
      %v2815 = vadd.f32 0.0, %v2814
      %v2816 = vpop.f32.mrf.mxu0
      %v2817 = vadd.f32 0.0, %v2816
      %2818 = vmatmul.bf16.gmra.mxu0 %v2746
      %v2819 = vpop.f32.mrf.mxu0
      %v2820 = vadd.f32 0.0, %v2819
      %v2821 = vpop.f32.mrf.mxu0
      %v2822 = vadd.f32 0.0, %v2821
      %2823 = vmatmul.bf16.gmra.mxu0 %v2749
      %v2824 = vpop.f32.mrf.mxu0
      %v2825 = vadd.f32 0.0, %v2824
      %v2826 = vpop.f32.mrf.mxu0
      %v2827 = vadd.f32 0.0, %v2826
      %2828 = vmatmul.bf16.gmra.mxu0 %v2752
      %v2829 = vpop.f32.mrf.mxu0
      %v2830 = vadd.f32 0.0, %v2829
      %v2831 = vpop.f32.mrf.mxu0
      %v2832 = vadd.f32 0.0, %v2831
      %2833 = vmatmul.bf16.gmra.mxu0 %v2755
      %v2834 = vpop.f32.mrf.mxu0
      %v2835 = vadd.f32 0.0, %v2834
      %v2836 = vpop.f32.mrf.mxu0
      %v2837 = vadd.f32 0.0, %v2836
      %2838 = vmatmul.bf16.gmra.mxu0 %v2758
      %v2839 = vpop.f32.mrf.mxu0
      %v2840 = vadd.f32 0.0, %v2839
      %v2841 = vpop.f32.mrf.mxu0
      %v2842 = vadd.f32 0.0, %v2841
      %2843 = vmatmul.bf16.gmra.mxu0 %v2761
      %v2844 = vpop.f32.mrf.mxu0
      %v2845 = vadd.f32 0.0, %v2844
      %v2846 = vpop.f32.mrf.mxu0
      %v2847 = vadd.f32 0.0, %v2846
      %2848 = vmatmul.bf16.gmra.mxu0 %v2764
      %v2849 = vpop.f32.mrf.mxu0
      %v2850 = vadd.f32 0.0, %v2849
      %v2851 = vpop.f32.mrf.mxu0
      %v2852 = vadd.f32 0.0, %v2851
      %2853 = vmatmul.bf16.gmra.mxu0 %v2767
      %v2854 = vpop.f32.mrf.mxu0
      %v2855 = vadd.f32 0.0, %v2854
      %v2856 = vpop.f32.mrf.mxu0
      %v2857 = vadd.f32 0.0, %v2856
      %2858 = vmatmul.bf16.gmra.mxu0 %v2770
      %v2859 = vpop.f32.mrf.mxu0
      %v2860 = vadd.f32 0.0, %v2859
      %v2861 = vpop.f32.mrf.mxu0
      %v2862 = vadd.f32 0.0, %v2861
      %2863 = vdwg.mxu0
      %v2864 = vld [vmem:[#allocation2] sm:$0xff]
      %v2865 = vld [vmem:[#allocation2 + $0x8] sm:$0xff]
      %v2866 = vld [vmem:[#allocation2 + $0x10] sm:$0xff]
      %v2867 = vld [vmem:[#allocation2 + $0x18] sm:$0xff]
      %v2868 = vld [vmem:[#allocation2 + $0x20] sm:$0xff]
      %v2869 = vld [vmem:[#allocation2 + $0x28] sm:$0xff]
      %v2870 = vld [vmem:[#allocation2 + $0x30] sm:$0xff]
      %v2871 = vld [vmem:[#allocation2 + $0x38] sm:$0xff]
      %v2872 = vld [vmem:[#allocation2 + $0x40] sm:$0xff]
      %v2873 = vld [vmem:[#allocation2 + $0x48] sm:$0xff]
      %v2874 = vld [vmem:[#allocation2 + $0x50] sm:$0xff]
      %v2875 = vld [vmem:[#allocation2 + $0x58] sm:$0xff]
      %v2876 = vld [vmem:[#allocation2 + $0x60] sm:$0xff]
      %v2877 = vld [vmem:[#allocation2 + $0x68] sm:$0xff]
      %v2878 = vld [vmem:[#allocation2 + $0x70] sm:$0xff]
      %v2879 = vld [vmem:[#allocation2 + $0x78] sm:$0xff]
      %v2880 = vld [vmem:[#allocation2 + $0x80] sm:$0xff]
      %v2881 = vld [vmem:[#allocation2 + $0x88] sm:$0xff]
      %v2882 = vld [vmem:[#allocation2 + $0x90] sm:$0xff]
      %v2883 = vld [vmem:[#allocation2 + $0x98] sm:$0xff]
      %v2884 = vld [vmem:[#allocation2 + $0xa0] sm:$0xff]
      %v2885 = vld [vmem:[#allocation2 + $0xa8] sm:$0xff]
      %v2886 = vld [vmem:[#allocation2 + $0xb0] sm:$0xff]
      %v2887 = vld [vmem:[#allocation2 + $0xb8] sm:$0xff]
      %v2888 = vld [vmem:[#allocation2 + $0xc0] sm:$0xff]
      %v2889 = vld [vmem:[#allocation2 + $0xc8] sm:$0xff]
      %v2890 = vld [vmem:[#allocation2 + $0xd0] sm:$0xff]
      %v2891 = vld [vmem:[#allocation2 + $0xd8] sm:$0xff]
      %v2892 = vld [vmem:[#allocation2 + $0xe0] sm:$0xff]
      %v2893 = vld [vmem:[#allocation2 + $0xe8] sm:$0xff]
      %v2894 = vld [vmem:[#allocation2 + $0xf0] sm:$0xff]
      %v2895 = vld [vmem:[#allocation2 + $0xf8] sm:$0xff]
      %v2896 = vadd.f32 %v2864, %v2785
      %v2897 = vadd.f32 %v2865, %v2787
      %v2898 = vadd.f32 %v2866, %v2790
      %v2899 = vadd.f32 %v2867, %v2792
      %v2900 = vadd.f32 %v2868, %v2795
      %v2901 = vadd.f32 %v2869, %v2797
      %v2902 = vadd.f32 %v2870, %v2800
      %v2903 = vadd.f32 %v2871, %v2802
      %v2904 = vadd.f32 %v2872, %v2805
      %v2905 = vadd.f32 %v2873, %v2807
      %v2906 = vadd.f32 %v2874, %v2810
      %v2907 = vadd.f32 %v2875, %v2812
      %v2908 = vadd.f32 %v2876, %v2815
      %v2909 = vadd.f32 %v2877, %v2817
      %v2910 = vadd.f32 %v2878, %v2820
      %v2911 = vadd.f32 %v2879, %v2822
      %v2912 = vadd.f32 %v2880, %v2825
      %v2913 = vadd.f32 %v2881, %v2827
      %v2914 = vadd.f32 %v2882, %v2830
      %v2915 = vadd.f32 %v2883, %v2832
      %v2916 = vadd.f32 %v2884, %v2835
      %v2917 = vadd.f32 %v2885, %v2837
      %v2918 = vadd.f32 %v2886, %v2840
      %v2919 = vadd.f32 %v2887, %v2842
      %v2920 = vadd.f32 %v2888, %v2845
      %v2921 = vadd.f32 %v2889, %v2847
      %v2922 = vadd.f32 %v2890, %v2850
      %v2923 = vadd.f32 %v2891, %v2852
      %v2924 = vadd.f32 %v2892, %v2855
      %v2925 = vadd.f32 %v2893, %v2857
      %v2926 = vadd.f32 %v2894, %v2860
      %v2927 = vadd.f32 %v2895, %v2862
      %2928 = vst [vmem:[#allocation2] sm:$0xff] %v2896
      %2929 = vst [vmem:[#allocation2 + $0x8] sm:$0xff] %v2897
      %2930 = vst [vmem:[#allocation2 + $0x10] sm:$0xff] %v2898
      %2931 = vst [vmem:[#allocation2 + $0x18] sm:$0xff] %v2899
      %2932 = vst [vmem:[#allocation2 + $0x20] sm:$0xff] %v2900
      %2933 = vst [vmem:[#allocation2 + $0x28] sm:$0xff] %v2901
      %2934 = vst [vmem:[#allocation2 + $0x30] sm:$0xff] %v2902
      %2935 = vst [vmem:[#allocation2 + $0x38] sm:$0xff] %v2903
      %2936 = vst [vmem:[#allocation2 + $0x40] sm:$0xff] %v2904
      %2937 = vst [vmem:[#allocation2 + $0x48] sm:$0xff] %v2905
      %2938 = vst [vmem:[#allocation2 + $0x50] sm:$0xff] %v2906
      %2939 = vst [vmem:[#allocation2 + $0x58] sm:$0xff] %v2907
      %2940 = vst [vmem:[#allocation2 + $0x60] sm:$0xff] %v2908
      %2941 = vst [vmem:[#allocation2 + $0x68] sm:$0xff] %v2909
      %2942 = vst [vmem:[#allocation2 + $0x70] sm:$0xff] %v2910
      %2943 = vst [vmem:[#allocation2 + $0x78] sm:$0xff] %v2911
      %2944 = vst [vmem:[#allocation2 + $0x80] sm:$0xff] %v2912
      %2945 = vst [vmem:[#allocation2 + $0x88] sm:$0xff] %v2913
      %2946 = vst [vmem:[#allocation2 + $0x90] sm:$0xff] %v2914
      %2947 = vst [vmem:[#allocation2 + $0x98] sm:$0xff] %v2915
      %2948 = vst [vmem:[#allocation2 + $0xa0] sm:$0xff] %v2916
      %2949 = vst [vmem:[#allocation2 + $0xa8] sm:$0xff] %v2917
      %2950 = vst [vmem:[#allocation2 + $0xb0] sm:$0xff] %v2918
      %2951 = vst [vmem:[#allocation2 + $0xb8] sm:$0xff] %v2919
      %2952 = vst [vmem:[#allocation2 + $0xc0] sm:$0xff] %v2920
      %2953 = vst [vmem:[#allocation2 + $0xc8] sm:$0xff] %v2921
      %2954 = vst [vmem:[#allocation2 + $0xd0] sm:$0xff] %v2922
      %2955 = vst [vmem:[#allocation2 + $0xd8] sm:$0xff] %v2923
      %2956 = vst [vmem:[#allocation2 + $0xe0] sm:$0xff] %v2924
      %2957 = vst [vmem:[#allocation2 + $0xe8] sm:$0xff] %v2925
      %2958 = vst [vmem:[#allocation2 + $0xf0] sm:$0xff] %v2926
      %2959 = vst [vmem:[#allocation2 + $0xf8] sm:$0xff] %v2927
      %v2960 = vld [vmem:[%s206 + $0x40] sm:$0xf]
      %v2961 = vld [vmem:[%s206 + $0x44] sm:$0xf]
      %v2962 = vld [vmem:[%s206 + $0x48] sm:$0xf]
      %v2963 = vld [vmem:[%s206 + $0x4c] sm:$0xf]
      %v2964 = vld [vmem:[%s206 + $0x50] sm:$0xf]
      %v2965 = vld [vmem:[%s206 + $0x54] sm:$0xf]
      %v2966 = vld [vmem:[%s206 + $0x58] sm:$0xf]
      %v2967 = vld [vmem:[%s206 + $0x5c] sm:$0xf]
      %v2968 = vld [vmem:[%s206 + $0x60] sm:$0xf]
      %v2969 = vld [vmem:[%s206 + $0x64] sm:$0xf]
      %v2970 = vld [vmem:[%s206 + $0x68] sm:$0xf]
      %v2971 = vld [vmem:[%s206 + $0x6c] sm:$0xf]
      %v2972 = vld [vmem:[%s206 + $0x70] sm:$0xf]
      %v2973 = vld [vmem:[%s206 + $0x74] sm:$0xf]
      %v2974 = vld [vmem:[%s206 + $0x78] sm:$0xf]
      %v2975 = vld [vmem:[%s206 + $0x7c] sm:$0xf]
      %v2976 = vld [vmem:[%s206 + $0x80] sm:$0xf]
      %v2977 = vld [vmem:[%s206 + $0x84] sm:$0xf]
      %v2978 = vld [vmem:[%s206 + $0x88] sm:$0xf]
      %v2979 = vld [vmem:[%s206 + $0x8c] sm:$0xf]
      %v2980 = vld [vmem:[%s206 + $0x90] sm:$0xf]
      %v2981 = vld [vmem:[%s206 + $0x94] sm:$0xf]
      %v2982 = vld [vmem:[%s206 + $0x98] sm:$0xf]
      %v2983 = vld [vmem:[%s206 + $0x9c] sm:$0xf]
      %v2984 = vld [vmem:[%s206 + $0xa0] sm:$0xf]
      %v2985 = vld [vmem:[%s206 + $0xa4] sm:$0xf]
      %v2986 = vld [vmem:[%s206 + $0xa8] sm:$0xf]
      %v2987 = vld [vmem:[%s206 + $0xac] sm:$0xf]
      %v2988 = vld [vmem:[%s206 + $0xb0] sm:$0xf]
      %v2989 = vld [vmem:[%s206 + $0xb4] sm:$0xf]
      %v2990 = vld [vmem:[%s206 + $0xb8] sm:$0xf]
      %v2991 = vld [vmem:[%s206 + $0xbc] sm:$0xf]
      %s2992 = scalar_lea.vmem %s210, 32
      %v2993 = vld [vmem:[%s2992] sm:$0xf]
      %v3026 = vunpack.c.l.b16 %v2960
      %v3027 = vunpack.c.l.b16 %v2961
      %v3028 = vunpack.c.l.b16 %v2962
      %v3029 = vunpack.c.l.b16 %v2963
      %v3030 = vunpack.c.l.b16 %v2964
      %v3031 = vunpack.c.l.b16 %v2965
      %v3032 = vunpack.c.l.b16 %v2966
      %v3033 = vunpack.c.l.b16 %v2967
      %v3034 = vunpack.c.l.b16 %v2968
      %v3035 = vunpack.c.l.b16 %v2969
      %v3036 = vunpack.c.l.b16 %v2970
      %v3037 = vunpack.c.l.b16 %v2971
      %v3038 = vunpack.c.l.b16 %v2972
      %v3039 = vunpack.c.l.b16 %v2973
      %v3040 = vunpack.c.l.b16 %v2974
      %v3041 = vunpack.c.l.b16 %v2975
      %v3042 = vunpack.c.l.b16 %v2976
      %v3043 = vunpack.c.l.b16 %v2977
      %v3044 = vunpack.c.l.b16 %v2978
      %v3045 = vunpack.c.l.b16 %v2979
      %v3046 = vunpack.c.l.b16 %v2980
      %v3047 = vunpack.c.l.b16 %v2981
      %v3048 = vunpack.c.l.b16 %v2982
      %v3049 = vunpack.c.l.b16 %v2983
      %v3050 = vunpack.c.l.b16 %v2984
      %v3051 = vunpack.c.l.b16 %v2985
      %v3052 = vunpack.c.l.b16 %v2986
      %v3053 = vunpack.c.l.b16 %v2987
      %v3054 = vunpack.c.l.b16 %v2988
      %v3055 = vunpack.c.l.b16 %v2989
      %v3056 = vunpack.c.l.b16 %v2990
      %v3057 = vunpack.c.l.b16 %v2991
      %v3058 = vpack.c.b16 %v3027, %v3026
      %v3059 = vpack.c.b16 %v3029, %v3028
      %v3060 = vpack.c.b16 %v3031, %v3030
      %v3061 = vpack.c.b16 %v3033, %v3032
      %v3062 = vpack.c.b16 %v3035, %v3034
      %v3063 = vpack.c.b16 %v3037, %v3036
      %v3064 = vpack.c.b16 %v3039, %v3038
      %v3065 = vpack.c.b16 %v3041, %v3040
      %v3066 = vpack.c.b16 %v3043, %v3042
      %v3067 = vpack.c.b16 %v3045, %v3044
      %v3068 = vpack.c.b16 %v3047, %v3046
      %v3069 = vpack.c.b16 %v3049, %v3048
      %v3070 = vpack.c.b16 %v3051, %v3050
      %v3071 = vpack.c.b16 %v3053, %v3052
      %v3072 = vpack.c.b16 %v3055, %v3054
      %v3073 = vpack.c.b16 %v3057, %v3056
      %v3075 = vsel %vm336, %v3058, 0
      %v3078 = vsel %vm336, %v3059, 0
      %v3081 = vsel %vm336, %v3060, 0
      %v3084 = vsel %vm336, %v3061, 0
      %v3087 = vsel %vm336, %v3062, 0
      %v3090 = vsel %vm336, %v3063, 0
      %v3093 = vsel %vm336, %v3064, 0
      %v3096 = vsel %vm336, %v3065, 0
      %v3099 = vsel %vm336, %v3066, 0
      %v3102 = vsel %vm336, %v3067, 0
      %v3105 = vsel %vm336, %v3068, 0
      %v3108 = vsel %vm336, %v3069, 0
      %v3111 = vsel %vm336, %v3070, 0
      %v3114 = vsel %vm336, %v3071, 0
      %v3117 = vsel %vm336, %v3072, 0
      %v3120 = vsel %vm336, %v3073, 0
      %v3123 = vsel %vm385, %v2993, 0
      %3125 = vmatpush.bf16.msra.mxu0 0
      %3126 = vmatpush.bf16.msra.mxu0 0
      %3127 = vmatpush.bf16.msra.mxu0 0
      %3128 = vmatpush.bf16.msra.mxu0 0
      %3129 = vmatpush.bf16.msra.mxu0 0
      %3130 = vmatpush.bf16.msra.mxu0 0
      %3131 = vmatpush.bf16.msra.mxu0 0
      %3132 = vmatpush.bf16.msra.mxu0 %v3123
      %3133 = vmatmul.bf16.gmra.mxu0 %v3075
      %v3134 = vpop.f32.mrf.mxu0
      %v3135 = vadd.f32 0.0, %v3134
      %v3136 = vpop.f32.mrf.mxu0
      %v3137 = vadd.f32 0.0, %v3136
      %3138 = vmatmul.bf16.gmra.mxu0 %v3078
      %v3139 = vpop.f32.mrf.mxu0
      %v3140 = vadd.f32 0.0, %v3139
      %v3141 = vpop.f32.mrf.mxu0
      %v3142 = vadd.f32 0.0, %v3141
      %3143 = vmatmul.bf16.gmra.mxu0 %v3081
      %v3144 = vpop.f32.mrf.mxu0
      %v3145 = vadd.f32 0.0, %v3144
      %v3146 = vpop.f32.mrf.mxu0
      %v3147 = vadd.f32 0.0, %v3146
      %3148 = vmatmul.bf16.gmra.mxu0 %v3084
      %v3149 = vpop.f32.mrf.mxu0
      %v3150 = vadd.f32 0.0, %v3149
      %v3151 = vpop.f32.mrf.mxu0
      %v3152 = vadd.f32 0.0, %v3151
      %3153 = vmatmul.bf16.gmra.mxu0 %v3087
      %v3154 = vpop.f32.mrf.mxu0
      %v3155 = vadd.f32 0.0, %v3154
      %v3156 = vpop.f32.mrf.mxu0
      %v3157 = vadd.f32 0.0, %v3156
      %3158 = vmatmul.bf16.gmra.mxu0 %v3090
      %v3159 = vpop.f32.mrf.mxu0
      %v3160 = vadd.f32 0.0, %v3159
      %v3161 = vpop.f32.mrf.mxu0
      %v3162 = vadd.f32 0.0, %v3161
      %3163 = vmatmul.bf16.gmra.mxu0 %v3093
      %v3164 = vpop.f32.mrf.mxu0
      %v3165 = vadd.f32 0.0, %v3164
      %v3166 = vpop.f32.mrf.mxu0
      %v3167 = vadd.f32 0.0, %v3166
      %3168 = vmatmul.bf16.gmra.mxu0 %v3096
      %v3169 = vpop.f32.mrf.mxu0
      %v3170 = vadd.f32 0.0, %v3169
      %v3171 = vpop.f32.mrf.mxu0
      %v3172 = vadd.f32 0.0, %v3171
      %3173 = vmatmul.bf16.gmra.mxu0 %v3099
      %v3174 = vpop.f32.mrf.mxu0
      %v3175 = vadd.f32 0.0, %v3174
      %v3176 = vpop.f32.mrf.mxu0
      %v3177 = vadd.f32 0.0, %v3176
      %3178 = vmatmul.bf16.gmra.mxu0 %v3102
      %v3179 = vpop.f32.mrf.mxu0
      %v3180 = vadd.f32 0.0, %v3179
      %v3181 = vpop.f32.mrf.mxu0
      %v3182 = vadd.f32 0.0, %v3181
      %3183 = vmatmul.bf16.gmra.mxu0 %v3105
      %v3184 = vpop.f32.mrf.mxu0
      %v3185 = vadd.f32 0.0, %v3184
      %v3186 = vpop.f32.mrf.mxu0
      %v3187 = vadd.f32 0.0, %v3186
      %3188 = vmatmul.bf16.gmra.mxu0 %v3108
      %v3189 = vpop.f32.mrf.mxu0
      %v3190 = vadd.f32 0.0, %v3189
      %v3191 = vpop.f32.mrf.mxu0
      %v3192 = vadd.f32 0.0, %v3191
      %3193 = vmatmul.bf16.gmra.mxu0 %v3111
      %v3194 = vpop.f32.mrf.mxu0
      %v3195 = vadd.f32 0.0, %v3194
      %v3196 = vpop.f32.mrf.mxu0
      %v3197 = vadd.f32 0.0, %v3196
      %3198 = vmatmul.bf16.gmra.mxu0 %v3114
      %v3199 = vpop.f32.mrf.mxu0
      %v3200 = vadd.f32 0.0, %v3199
      %v3201 = vpop.f32.mrf.mxu0
      %v3202 = vadd.f32 0.0, %v3201
      %3203 = vmatmul.bf16.gmra.mxu0 %v3117
      %v3204 = vpop.f32.mrf.mxu0
      %v3205 = vadd.f32 0.0, %v3204
      %v3206 = vpop.f32.mrf.mxu0
      %v3207 = vadd.f32 0.0, %v3206
      %3208 = vmatmul.bf16.gmra.mxu0 %v3120
      %v3209 = vpop.f32.mrf.mxu0
      %v3210 = vadd.f32 0.0, %v3209
      %v3211 = vpop.f32.mrf.mxu0
      %v3212 = vadd.f32 0.0, %v3211
      %3213 = vdwg.mxu0
      %v3214 = vld [vmem:[#allocation2] sm:$0xff]
      %v3215 = vld [vmem:[#allocation2 + $0x8] sm:$0xff]
      %v3216 = vld [vmem:[#allocation2 + $0x10] sm:$0xff]
      %v3217 = vld [vmem:[#allocation2 + $0x18] sm:$0xff]
      %v3218 = vld [vmem:[#allocation2 + $0x20] sm:$0xff]
      %v3219 = vld [vmem:[#allocation2 + $0x28] sm:$0xff]
      %v3220 = vld [vmem:[#allocation2 + $0x30] sm:$0xff]
      %v3221 = vld [vmem:[#allocation2 + $0x38] sm:$0xff]
      %v3222 = vld [vmem:[#allocation2 + $0x40] sm:$0xff]
      %v3223 = vld [vmem:[#allocation2 + $0x48] sm:$0xff]
      %v3224 = vld [vmem:[#allocation2 + $0x50] sm:$0xff]
      %v3225 = vld [vmem:[#allocation2 + $0x58] sm:$0xff]
      %v3226 = vld [vmem:[#allocation2 + $0x60] sm:$0xff]
      %v3227 = vld [vmem:[#allocation2 + $0x68] sm:$0xff]
      %v3228 = vld [vmem:[#allocation2 + $0x70] sm:$0xff]
      %v3229 = vld [vmem:[#allocation2 + $0x78] sm:$0xff]
      %v3230 = vld [vmem:[#allocation2 + $0x80] sm:$0xff]
      %v3231 = vld [vmem:[#allocation2 + $0x88] sm:$0xff]
      %v3232 = vld [vmem:[#allocation2 + $0x90] sm:$0xff]
      %v3233 = vld [vmem:[#allocation2 + $0x98] sm:$0xff]
      %v3234 = vld [vmem:[#allocation2 + $0xa0] sm:$0xff]
      %v3235 = vld [vmem:[#allocation2 + $0xa8] sm:$0xff]
      %v3236 = vld [vmem:[#allocation2 + $0xb0] sm:$0xff]
      %v3237 = vld [vmem:[#allocation2 + $0xb8] sm:$0xff]
      %v3238 = vld [vmem:[#allocation2 + $0xc0] sm:$0xff]
      %v3239 = vld [vmem:[#allocation2 + $0xc8] sm:$0xff]
      %v3240 = vld [vmem:[#allocation2 + $0xd0] sm:$0xff]
      %v3241 = vld [vmem:[#allocation2 + $0xd8] sm:$0xff]
      %v3242 = vld [vmem:[#allocation2 + $0xe0] sm:$0xff]
      %v3243 = vld [vmem:[#allocation2 + $0xe8] sm:$0xff]
      %v3244 = vld [vmem:[#allocation2 + $0xf0] sm:$0xff]
      %v3245 = vld [vmem:[#allocation2 + $0xf8] sm:$0xff]
      %v3246 = vadd.f32 %v3214, %v3135
      %v3247 = vadd.f32 %v3215, %v3137
      %v3248 = vadd.f32 %v3216, %v3140
      %v3249 = vadd.f32 %v3217, %v3142
      %v3250 = vadd.f32 %v3218, %v3145
      %v3251 = vadd.f32 %v3219, %v3147
      %v3252 = vadd.f32 %v3220, %v3150
      %v3253 = vadd.f32 %v3221, %v3152
      %v3254 = vadd.f32 %v3222, %v3155
      %v3255 = vadd.f32 %v3223, %v3157
      %v3256 = vadd.f32 %v3224, %v3160
      %v3257 = vadd.f32 %v3225, %v3162
      %v3258 = vadd.f32 %v3226, %v3165
      %v3259 = vadd.f32 %v3227, %v3167
      %v3260 = vadd.f32 %v3228, %v3170
      %v3261 = vadd.f32 %v3229, %v3172
      %v3262 = vadd.f32 %v3230, %v3175
      %v3263 = vadd.f32 %v3231, %v3177
      %v3264 = vadd.f32 %v3232, %v3180
      %v3265 = vadd.f32 %v3233, %v3182
      %v3266 = vadd.f32 %v3234, %v3185
      %v3267 = vadd.f32 %v3235, %v3187
      %v3268 = vadd.f32 %v3236, %v3190
      %v3269 = vadd.f32 %v3237, %v3192
      %v3270 = vadd.f32 %v3238, %v3195
      %v3271 = vadd.f32 %v3239, %v3197
      %v3272 = vadd.f32 %v3240, %v3200
      %v3273 = vadd.f32 %v3241, %v3202
      %v3274 = vadd.f32 %v3242, %v3205
      %v3275 = vadd.f32 %v3243, %v3207
      %v3276 = vadd.f32 %v3244, %v3210
      %v3277 = vadd.f32 %v3245, %v3212
      %3278 = vst [vmem:[#allocation2] sm:$0xff] %v3246
      %3279 = vst [vmem:[#allocation2 + $0x8] sm:$0xff] %v3247
      %3280 = vst [vmem:[#allocation2 + $0x10] sm:$0xff] %v3248
      %3281 = vst [vmem:[#allocation2 + $0x18] sm:$0xff] %v3249
      %3282 = vst [vmem:[#allocation2 + $0x20] sm:$0xff] %v3250
      %3283 = vst [vmem:[#allocation2 + $0x28] sm:$0xff] %v3251
      %3284 = vst [vmem:[#allocation2 + $0x30] sm:$0xff] %v3252
      %3285 = vst [vmem:[#allocation2 + $0x38] sm:$0xff] %v3253
      %3286 = vst [vmem:[#allocation2 + $0x40] sm:$0xff] %v3254
      %3287 = vst [vmem:[#allocation2 + $0x48] sm:$0xff] %v3255
      %3288 = vst [vmem:[#allocation2 + $0x50] sm:$0xff] %v3256
      %3289 = vst [vmem:[#allocation2 + $0x58] sm:$0xff] %v3257
      %3290 = vst [vmem:[#allocation2 + $0x60] sm:$0xff] %v3258
      %3291 = vst [vmem:[#allocation2 + $0x68] sm:$0xff] %v3259
      %3292 = vst [vmem:[#allocation2 + $0x70] sm:$0xff] %v3260
      %3293 = vst [vmem:[#allocation2 + $0x78] sm:$0xff] %v3261
      %3294 = vst [vmem:[#allocation2 + $0x80] sm:$0xff] %v3262
      %3295 = vst [vmem:[#allocation2 + $0x88] sm:$0xff] %v3263
      %3296 = vst [vmem:[#allocation2 + $0x90] sm:$0xff] %v3264
      %3297 = vst [vmem:[#allocation2 + $0x98] sm:$0xff] %v3265
      %3298 = vst [vmem:[#allocation2 + $0xa0] sm:$0xff] %v3266
      %3299 = vst [vmem:[#allocation2 + $0xa8] sm:$0xff] %v3267
      %3300 = vst [vmem:[#allocation2 + $0xb0] sm:$0xff] %v3268
      %3301 = vst [vmem:[#allocation2 + $0xb8] sm:$0xff] %v3269
      %3302 = vst [vmem:[#allocation2 + $0xc0] sm:$0xff] %v3270
      %3303 = vst [vmem:[#allocation2 + $0xc8] sm:$0xff] %v3271
      %3304 = vst [vmem:[#allocation2 + $0xd0] sm:$0xff] %v3272
      %3305 = vst [vmem:[#allocation2 + $0xd8] sm:$0xff] %v3273
      %3306 = vst [vmem:[#allocation2 + $0xe0] sm:$0xff] %v3274
      %3307 = vst [vmem:[#allocation2 + $0xe8] sm:$0xff] %v3275
      %3308 = vst [vmem:[#allocation2 + $0xf0] sm:$0xff] %v3276
      %3309 = vst [vmem:[#allocation2 + $0xf8] sm:$0xff] %v3277
      %v3310 = vld [vmem:[#allocation2] sm:$0xff]
      %v3311 = vld [vmem:[#allocation2 + $0x8] sm:$0xff]
      %v3312 = vld [vmem:[#allocation2 + $0x10] sm:$0xff]
      %v3313 = vld [vmem:[#allocation2 + $0x18] sm:$0xff]
      %v3314 = vld [vmem:[#allocation2 + $0x20] sm:$0xff]
      %v3315 = vld [vmem:[#allocation2 + $0x28] sm:$0xff]
      %v3316 = vld [vmem:[#allocation2 + $0x30] sm:$0xff]
      %v3317 = vld [vmem:[#allocation2 + $0x38] sm:$0xff]
      %v3318 = vld [vmem:[#allocation2 + $0x40] sm:$0xff]
      %v3319 = vld [vmem:[#allocation2 + $0x48] sm:$0xff]
      %v3320 = vld [vmem:[#allocation2 + $0x50] sm:$0xff]
      %v3321 = vld [vmem:[#allocation2 + $0x58] sm:$0xff]
      %v3322 = vld [vmem:[#allocation2 + $0x60] sm:$0xff]
      %v3323 = vld [vmem:[#allocation2 + $0x68] sm:$0xff]
      %v3324 = vld [vmem:[#allocation2 + $0x70] sm:$0xff]
      %v3325 = vld [vmem:[#allocation2 + $0x78] sm:$0xff]
      %v3326 = vld [vmem:[#allocation2 + $0x80] sm:$0xff]
      %v3327 = vld [vmem:[#allocation2 + $0x88] sm:$0xff]
      %v3328 = vld [vmem:[#allocation2 + $0x90] sm:$0xff]
      %v3329 = vld [vmem:[#allocation2 + $0x98] sm:$0xff]
      %v3330 = vld [vmem:[#allocation2 + $0xa0] sm:$0xff]
      %v3331 = vld [vmem:[#allocation2 + $0xa8] sm:$0xff]
      %v3332 = vld [vmem:[#allocation2 + $0xb0] sm:$0xff]
      %v3333 = vld [vmem:[#allocation2 + $0xb8] sm:$0xff]
      %v3334 = vld [vmem:[#allocation2 + $0xc0] sm:$0xff]
      %v3335 = vld [vmem:[#allocation2 + $0xc8] sm:$0xff]
      %v3336 = vld [vmem:[#allocation2 + $0xd0] sm:$0xff]
      %v3337 = vld [vmem:[#allocation2 + $0xd8] sm:$0xff]
      %v3338 = vld [vmem:[#allocation2 + $0xe0] sm:$0xff]
      %v3339 = vld [vmem:[#allocation2 + $0xe8] sm:$0xff]
      %v3340 = vld [vmem:[#allocation2 + $0xf0] sm:$0xff]
      %v3341 = vld [vmem:[#allocation2 + $0xf8] sm:$0xff]
      %v3342 = vld [vmem:[%s213] sm:$0x1]
      %v3344 = vperm.slane %v3342, 0
      %v3346 = vadd.f32 %v3310, %v3344
      %v3347 = vadd.f32 %v3311, %v3344
      %v3348 = vadd.f32 %v3312, %v3344
      %v3349 = vadd.f32 %v3313, %v3344
      %v3350 = vadd.f32 %v3314, %v3344
      %v3351 = vadd.f32 %v3315, %v3344
      %v3352 = vadd.f32 %v3316, %v3344
      %v3353 = vadd.f32 %v3317, %v3344
      %v3354 = vadd.f32 %v3318, %v3344
      %v3355 = vadd.f32 %v3319, %v3344
      %v3356 = vadd.f32 %v3320, %v3344
      %v3357 = vadd.f32 %v3321, %v3344
      %v3358 = vadd.f32 %v3322, %v3344
      %v3359 = vadd.f32 %v3323, %v3344
      %v3360 = vadd.f32 %v3324, %v3344
      %v3361 = vadd.f32 %v3325, %v3344
      %v3362 = vadd.f32 %v3326, %v3344
      %v3363 = vadd.f32 %v3327, %v3344
      %v3364 = vadd.f32 %v3328, %v3344
      %v3365 = vadd.f32 %v3329, %v3344
      %v3366 = vadd.f32 %v3330, %v3344
      %v3367 = vadd.f32 %v3331, %v3344
      %v3368 = vadd.f32 %v3332, %v3344
      %v3369 = vadd.f32 %v3333, %v3344
      %v3370 = vadd.f32 %v3334, %v3344
      %v3371 = vadd.f32 %v3335, %v3344
      %v3372 = vadd.f32 %v3336, %v3344
      %v3373 = vadd.f32 %v3337, %v3344
      %v3374 = vadd.f32 %v3338, %v3344
      %v3375 = vadd.f32 %v3339, %v3344
      %v3376 = vadd.f32 %v3340, %v3344
      %v3377 = vadd.f32 %v3341, %v3344
      %v3378 = vmax.f32 %v3346, 0.0
      %v3379 = vmax.f32 %v3347, 0.0
      %v3380 = vmax.f32 %v3348, 0.0
      %v3381 = vmax.f32 %v3349, 0.0
      %v3382 = vmax.f32 %v3350, 0.0
      %v3383 = vmax.f32 %v3351, 0.0
      %v3384 = vmax.f32 %v3352, 0.0
      %v3385 = vmax.f32 %v3353, 0.0
      %v3386 = vmax.f32 %v3354, 0.0
      %v3387 = vmax.f32 %v3355, 0.0
      %v3388 = vmax.f32 %v3356, 0.0
      %v3389 = vmax.f32 %v3357, 0.0
      %v3390 = vmax.f32 %v3358, 0.0
      %v3391 = vmax.f32 %v3359, 0.0
      %v3392 = vmax.f32 %v3360, 0.0
      %v3393 = vmax.f32 %v3361, 0.0
      %v3394 = vmax.f32 %v3362, 0.0
      %v3395 = vmax.f32 %v3363, 0.0
      %v3396 = vmax.f32 %v3364, 0.0
      %v3397 = vmax.f32 %v3365, 0.0
      %v3398 = vmax.f32 %v3366, 0.0
      %v3399 = vmax.f32 %v3367, 0.0
      %v3400 = vmax.f32 %v3368, 0.0
      %v3401 = vmax.f32 %v3369, 0.0
      %v3402 = vmax.f32 %v3370, 0.0
      %v3403 = vmax.f32 %v3371, 0.0
      %v3404 = vmax.f32 %v3372, 0.0
      %v3405 = vmax.f32 %v3373, 0.0
      %v3406 = vmax.f32 %v3374, 0.0
      %v3407 = vmax.f32 %v3375, 0.0
      %v3408 = vmax.f32 %v3376, 0.0
      %v3409 = vmax.f32 %v3377, 0.0
      %v3410 = vpack.c.bf16 %v3378, %v3378
      %v3411 = vpack.c.bf16 %v3379, %v3379
      %v3412 = vpack.c.bf16 %v3380, %v3380
      %v3413 = vpack.c.bf16 %v3381, %v3381
      %v3414 = vpack.c.bf16 %v3382, %v3382
      %v3415 = vpack.c.bf16 %v3383, %v3383
      %v3416 = vpack.c.bf16 %v3384, %v3384
      %v3417 = vpack.c.bf16 %v3385, %v3385
      %v3418 = vpack.c.bf16 %v3386, %v3386
      %v3419 = vpack.c.bf16 %v3387, %v3387
      %v3420 = vpack.c.bf16 %v3388, %v3388
      %v3421 = vpack.c.bf16 %v3389, %v3389
      %v3422 = vpack.c.bf16 %v3390, %v3390
      %v3423 = vpack.c.bf16 %v3391, %v3391
      %v3424 = vpack.c.bf16 %v3392, %v3392
      %v3425 = vpack.c.bf16 %v3393, %v3393
      %v3426 = vpack.c.bf16 %v3394, %v3394
      %v3427 = vpack.c.bf16 %v3395, %v3395
      %v3428 = vpack.c.bf16 %v3396, %v3396
      %v3429 = vpack.c.bf16 %v3397, %v3397
      %v3430 = vpack.c.bf16 %v3398, %v3398
      %v3431 = vpack.c.bf16 %v3399, %v3399
      %v3432 = vpack.c.bf16 %v3400, %v3400
      %v3433 = vpack.c.bf16 %v3401, %v3401
      %v3434 = vpack.c.bf16 %v3402, %v3402
      %v3435 = vpack.c.bf16 %v3403, %v3403
      %v3436 = vpack.c.bf16 %v3404, %v3404
      %v3437 = vpack.c.bf16 %v3405, %v3405
      %v3438 = vpack.c.bf16 %v3406, %v3406
      %v3439 = vpack.c.bf16 %v3407, %v3407
      %v3440 = vpack.c.bf16 %v3408, %v3408
      %v3441 = vpack.c.bf16 %v3409, %v3409
      %3442 = vst [vmem:[%s221] sm:$0xf] %v3410
      %3443 = vst [vmem:[%s221 + $0x4] sm:$0xf] %v3411
      %3444 = vst [vmem:[%s221 + $0x8] sm:$0xf] %v3412
      %3445 = vst [vmem:[%s221 + $0xc] sm:$0xf] %v3413
      %3446 = vst [vmem:[%s221 + $0x10] sm:$0xf] %v3414
      %3447 = vst [vmem:[%s221 + $0x14] sm:$0xf] %v3415
      %3448 = vst [vmem:[%s221 + $0x18] sm:$0xf] %v3416
      %3449 = vst [vmem:[%s221 + $0x1c] sm:$0xf] %v3417
      %3450 = vst [vmem:[%s221 + $0x20] sm:$0xf] %v3418
      %3451 = vst [vmem:[%s221 + $0x24] sm:$0xf] %v3419
      %3452 = vst [vmem:[%s221 + $0x28] sm:$0xf] %v3420
      %3453 = vst [vmem:[%s221 + $0x2c] sm:$0xf] %v3421
      %3454 = vst [vmem:[%s221 + $0x30] sm:$0xf] %v3422
      %3455 = vst [vmem:[%s221 + $0x34] sm:$0xf] %v3423
      %3456 = vst [vmem:[%s221 + $0x38] sm:$0xf] %v3424
      %3457 = vst [vmem:[%s221 + $0x3c] sm:$0xf] %v3425
      %3458 = vst [vmem:[%s221 + $0x40] sm:$0xf] %v3426
      %3459 = vst [vmem:[%s221 + $0x44] sm:$0xf] %v3427
      %3460 = vst [vmem:[%s221 + $0x48] sm:$0xf] %v3428
      %3461 = vst [vmem:[%s221 + $0x4c] sm:$0xf] %v3429
      %3462 = vst [vmem:[%s221 + $0x50] sm:$0xf] %v3430
      %3463 = vst [vmem:[%s221 + $0x54] sm:$0xf] %v3431
      %3464 = vst [vmem:[%s221 + $0x58] sm:$0xf] %v3432
      %3465 = vst [vmem:[%s221 + $0x5c] sm:$0xf] %v3433
      %3466 = vst [vmem:[%s221 + $0x60] sm:$0xf] %v3434
      %3467 = vst [vmem:[%s221 + $0x64] sm:$0xf] %v3435
      %3468 = vst [vmem:[%s221 + $0x68] sm:$0xf] %v3436
      %3469 = vst [vmem:[%s221 + $0x6c] sm:$0xf] %v3437
      %3470 = vst [vmem:[%s221 + $0x70] sm:$0xf] %v3438
      %3471 = vst [vmem:[%s221 + $0x74] sm:$0xf] %v3439
      %3472 = vst [vmem:[%s221 + $0x78] sm:$0xf] %v3440
      %3473 = vst [vmem:[%s221 + $0x7c] sm:$0xf] %v3441
      %p3474 = scmp.lt.s32.totalorder %s18, 3
      %s3475 = scalar_select %p3474, %s18, 3
      %p3476 = scmp.lt.s32.totalorder %s19, 0
      %s3477 = scalar_select %p3476, %s19, 0
      %s3478 = smul.addr %s3475, 32
      %s3479 = sadd.s32 %s3477, %s3478
      %s3480 = smul.addr %s3479, 4
      %s3481 = scalar_lea.vmem %s3, %s3480
      // Predicated region
      $region33: #{cnn_custom_4_pretrain_forward.4} parent=31 // pred_check
        %p3482 = pneg %p124
      $region34: #{cnn_custom_4_pretrain_forward.4} parent=31 // pred_check_branch
        %3484 = sbr.rel (%p3482) target = $region36
      $region35: #{cnn_custom_4_pretrain_forward.4} parent=31 // pred_region
        _
      $region36: #{cnn_custom_4_pretrain_forward.4} parent=31 // pred_fallthru
        _
    $region32: #{cnn_custom_4_pretrain_forward.4} parent=5 // pred_fallthru
      _
    %p3485 = scmp.le.s32.totalorder 2, %s9
    // Predicated region
    $region37: #{cnn_custom_4_pretrain_forward.4} parent=5 // pred_check
      %p3486 = pneg %p3485
    $region38: #{cnn_custom_4_pretrain_forward.4} parent=5 // pred_check_branch
      %3488 = sbr.rel (%p3486) target = $region40
    $region39: #{cnn_custom_4_pretrain_forward.4} parent=5 // pred_region
      %s3489 = ssub.s32 %s9, 2
      // Predicated region
      $region41: #{cnn_custom_4_pretrain_forward.4} parent=39 // pred_check
        %p3490 = pneg %p130
      $region42: #{cnn_custom_4_pretrain_forward.4} parent=39 // pred_check_branch
        %3492 = sbr.rel (%p3490) target = $region44
      $region43: #{cnn_custom_4_pretrain_forward.4} parent=39 // pred_region
        %p3493 = scmp.lt.s32.totalorder %s20, 3
        %s3494 = scalar_select %p3493, %s20, 3
        %p3495 = scmp.lt.s32.totalorder %s21, 0
        %s3496 = scalar_select %p3495, %s21, 0
        %s3497 = smul.addr %s3494, 32
        %s3498 = sadd.s32 %s3496, %s3497
        %s3499 = smul.addr %s3498, 4
        %s3500 = scalar_lea.vmem %s3, %s3499
      $region44: #{cnn_custom_4_pretrain_forward.4} parent=39 // pred_fallthru
        _
    $region40: #{cnn_custom_4_pretrain_forward.4} parent=5 // pred_fallthru
      _
  $region6: #{cnn_custom_4_pretrain_forward.4} parent=0 // loop_footer
    %s13 = sadd.s32 1, %s9
  $region7: #{cnn_custom_4_pretrain_forward.4} parent=0 // loop_footer_branch
    %8 = sbr.rel target = $region3
  $region8: #{cnn_custom_4_pretrain_forward.4} parent=0 // loop_exit
    _

</llo_original>
